<compile_context>
chip_gen: v7x
topology: tpu7x:2x2x1
jax: 0.10.0
libtpu: 0.0.40
codegen_flags: <defaults>
</compile_context>

<pallas_src>
import functools

import jax
import jax.numpy as jnp
from jax import lax
from jax.experimental import pallas as pl
from jax.experimental.pallas import tpu as pltpu


# Flipped to False (once) if whole-array VMEM binding of the constant weight
# operands is rejected by the running jax/TPU combination.
_WEIGHTS_WHOLE_VMEM_OK = True


def _ref_attention_kernel(latent_ref, refs_ref,
                          wq_ref, bq_ref, wk_ref, bk_ref, wv_ref, bv_ref,
                          out_ref, *, use_bf16, lk_valid):
    latent = latent_ref[...]                       # (bt, tq, Dp)   f32
    refs = refs_ref[...]                           # (bt, Lkp, Dp)  f32 or bf16

    bt, tq, dp = latent.shape
    _, lkp, _ = refs.shape

    mm_dtype = jnp.bfloat16 if use_bf16 else jnp.float32
    # bf16 path: MXU-native operands, f32 accumulation (precision arg unused).
    # f32 path:  explicit HIGHEST so the MXU does full-precision passes.
    prec = None if use_bf16 else lax.Precision.HIGHEST

    # Weights are already pre-transposed / pre-scaled / pre-cast host-side.
    wq = wq_ref[...]; wk = wk_ref[...]; wv = wv_ref[...]   # (Dp, Dp) mm_dtype
    bq = bq_ref[...]; bk = bk_ref[...]; bv = bv_ref[...]   # (1, Dp)  f32

    # Fold batch into the GEMM M dim.  bt*tq and bt*lkp are multiples of 8
    # (wrapper guarantees it), so these reshapes are free sublane-aligned
    # collapses, not VMEM copies.
    x_q = latent.reshape(bt * tq, dp).astype(mm_dtype)
    x_kv = refs.reshape(bt * lkp, dp)              # already mm_dtype (wrapper)

    def proj(x, w, b):
        # MXU matmul with f32 accumulation, bias add in f32, then narrow so
        # q/k/v live in mm_dtype (halves vreg/VMEM pressure in the bf16 path).
        y = jnp.dot(x, w, preferred_element_type=jnp.float32, precision=prec)
        return (y + b).astype(mm_dtype)

    q = proj(x_q, wq, bq).reshape(bt, tq, dp)      # 1/sqrt(D) already folded in
    k = proj(x_kv, wk, bk).reshape(bt, lkp, dp)
    v = proj(x_kv, wv, bv).reshape(bt, lkp, dp)

    # scores = q . k^T via dot_general contraction (no explicit transpose).
    scores = jnp.einsum("bqd,bkd->bqk", q, k,
                        preferred_element_type=jnp.float32,
                        precision=prec)            # (bt, tq, lkp) f32

    if lk_valid != lkp:                            # static: mask padded keys
        kidx = lax.broadcasted_iota(jnp.int32, (bt, tq, lkp), 2)
        scores = jnp.where(kidx < lk_valid, scores, jnp.float32(-1e30))

    # Numerically stable softmax along the key axis (matches F.softmax dim=-1).
    m = jnp.max(scores, axis=-1, keepdims=True)
    e = jnp.exp(scores - m)
    denom = jnp.sum(e, axis=-1, keepdims=True)
    # approx reciprocal (EUP slot, effectively free) in the fast path only.
    probs = (e * pl.reciprocal(denom, approx=use_bf16)).astype(mm_dtype)

    attn = jnp.einsum("bqk,bkd->bqd", probs, v,
                      preferred_element_type=jnp.float32,
                      precision=prec)              # (bt, tq, dp) f32

    # TODO(synk): for very large Lk, add an 'arbitrary' Lk grid axis with
    # flash-style online-softmax accumulators instead of the full (tq, Lk) slab
    # (matters first on v7x's 64 MiB VMEM).
    out_ref[...] = latent + attn


def _round_up(x, m):
    return ((x + m - 1) // m) * m


def _tpu_config():
    """(multi_core, vmem_limit_bytes) picked per TPU generation."""
    try:
        kind = jax.devices()[0].device_kind.lower()
    except Exception:  # pragma: no cover - defensive
        kind = ""
    multi_core = any(t in kind for t in ("v7", "v4", "v5p", "v5 p"))
    if "v7" in kind:
        vmem_limit = 48 * 1024 * 1024      # 64 MiB physical -> leave headroom
    elif "v6" in kind or "v5e" in kind or "v5 lite" in kind:
        vmem_limit = 96 * 1024 * 1024      # 128 MiB physical
    else:
        vmem_limit = None                  # unknown chip: keep compiler default
    return multi_core, vmem_limit


def _pick_blocks(B, Lq, *, multi_core):
    """Choose (bt, tq, Lq_padded).

    Single-TC chips (v5e/v6e): big M blocks (amortize ~0.35us/step overhead).
    Multi-TC chips (v7x): smaller blocks + prefer an even total parallel grid
    so both TensorCores get work.
    """
    target_rows = 256 if multi_core else 512
    lq8 = _round_up(Lq, 8)
    tq = lq8 if lq8 <= target_rows else target_rows      # multiple of 8
    lqp = _round_up(Lq, tq)
    nq = lqp // tq

    cands = [bt for bt in range(1, B + 1)
             if B % bt == 0 and bt * tq <= target_rows] or [1]
    if multi_core and (B * nq) > 1:
        even = [bt for bt in cands if ((B // bt) * nq) % 2 == 0]
        if even:
            cands = even
    return max(cands), tq, lqp


def reference_attention_layer(latent_code, reference_features,
                              wq, bq, wk, bk, wv, bv, *, use_bf16=False):
    """Pallas TPU ReferenceAttentionLayer.forward.

    latent_code:        (B, Lq, D) float32
    reference_features: (B, Lk, D) float32
    wq/wk/wv:           (D, D) float32 (nn.Linear weights, y = x @ W.T + b)
    bq/bk/bv:           (D,)   float32
    use_bf16:           bf16 MXU operands / f32 accumulation (fast path)
    returns:            (B, Lq, D) float32
    """
    global _WEIGHTS_WHOLE_VMEM_OK

    B, Lq, D = latent_code.shape
    Bk, Lk, Dk = reference_features.shape
    assert B == Bk and D == Dk

    multi_core, vmem_limit = _tpu_config()
    bt, tq, Lqp = _pick_blocks(B, Lq, multi_core=multi_core)
    Dp = _round_up(D, 128)
    Lkp = _round_up(Lk, 8)
    d_pad = Dp - D

    w_dtype = jnp.bfloat16 if use_bf16 else jnp.float32
    x_dtype = jnp.bfloat16 if use_bf16 else jnp.float32

    scale = 1.0 / jnp.sqrt(jnp.float32(D))

    # Pre-transpose nn.Linear weights once host-side (kernel does plain x @ w),
    # fold the 1/sqrt(D) scale into the query weight & bias, zero-pad to
    # (Dp, Dp), and pre-cast to bf16 in the fast path (halves weight DMA bytes
    # and VMEM residency, removes per-step casts).  Biases stay f32 (the bias
    # add happens on the f32 accumulator).
    def prep_w(w, s=1.0):
        wt = jnp.asarray(w, jnp.float32).T * s
        return jnp.pad(wt, ((0, d_pad), (0, d_pad))).astype(w_dtype)

    def prep_b(b, s=1.0):
        bb = jnp.asarray(b, jnp.float32) * s
        return jnp.pad(bb, (0, d_pad)).reshape(1, Dp)

    wq_t, bq_p = prep_w(wq, scale), prep_b(bq, scale)
    wk_t, bk_p = prep_w(wk), prep_b(bk)
    wv_t, bv_p = prep_w(wv), prep_b(bv)

    # Latent stays f32 (residual add); reference features travel in bf16 in
    # the fast path (halves their HBM stream).
    lat_p = jnp.pad(jnp.asarray(latent_code, jnp.float32),
                    ((0, 0), (0, Lqp - Lq), (0, d_pad)))
    ref_p = jnp.pad(jnp.asarray(reference_features, jnp.float32),
                    ((0, 0), (0, Lkp - Lk), (0, d_pad))).astype(x_dtype)

    grid = (B // bt, Lqp // tq)
    kernel = functools.partial(_ref_attention_kernel,
                               use_bf16=use_bf16, lk_valid=Lk)

    lat_spec = pl.BlockSpec((bt, tq, Dp), lambda b, q: (b, q, 0))
    ref_spec = pl.BlockSpec((bt, Lkp, Dp), lambda b, q: (b, 0, 0))
    out_spec = pl.BlockSpec((bt, tq, Dp), lambda b, q: (b, q, 0))

    compiler_params = pltpu.CompilerParams(
        dimension_semantics=("parallel", "parallel"),
        vmem_limit_bytes=vmem_limit)

    def run(whole_vmem_weights):
        if whole_vmem_weights:
            # Single-buffered constants: whole array bound in VMEM for the
            # entire call (one copy, fetched once, no pipeline double-buffer).
            w_spec = pl.BlockSpec(memory_space=pltpu.MemorySpace.VMEM)
            b_spec = pl.BlockSpec(memory_space=pltpu.MemorySpace.VMEM)
        else:
            # Fallback: constant index_map -> fetched once by the pipeline
            # (but allocated double-buffered).
            w_spec = pl.BlockSpec((Dp, Dp), lambda b, q: (0, 0))
            b_spec = pl.BlockSpec((1, Dp), lambda b, q: (0, 0))
        return pl.pallas_call(
            kernel,
            out_shape=jax.ShapeDtypeStruct((B, Lqp, Dp), jnp.float32),
            grid_spec=pltpu.PrefetchScalarGridSpec(
                num_scalar_prefetch=0,
                grid=grid,
                in_specs=[lat_spec, ref_spec,
                          w_spec, b_spec, w_spec, b_spec, w_spec, b_spec],
                out_specs=out_spec),
            compiler_params=compiler_params,
        )(lat_p, ref_p, wq_t, bq_p, wk_t, bk_p, wv_t, bv_p)

    if _WEIGHTS_WHOLE_VMEM_OK:
        try:
            out_p = jax.block_until_ready(run(True))
            return out_p[:, :Lq, :D]
        except Exception:
            _WEIGHTS_WHOLE_VMEM_OK = False
    out_p = jax.block_until_ready(run(False))
    return out_p[:, :Lq, :D]


def _reference_jax(latent_code, reference_features, wq, bq, wk, bk, wv, bv):
    # Pure-JAX reference with explicit high precision (apples-to-apples with
    # the kernel's f32 path).
    hp = lax.Precision.HIGHEST
    q = jnp.einsum("bld,od->blo", latent_code, wq, precision=hp) + bq
    k = jnp.einsum("bld,od->blo", reference_features, wk, precision=hp) + bk
    v = jnp.einsum("bld,od->blo", reference_features, wv, precision=hp) + bv
    scale = jnp.sqrt(jnp.float32(latent_code.shape[-1]))
    scores = jnp.einsum("bqd,bkd->bqk", q, k, precision=hp) / scale
    probs = jax.nn.softmax(scores, axis=-1)
    out = jnp.einsum("bqk,bkd->bqd", probs, v, precision=hp)
    return latent_code + out


if __name__ == "__main__":
    B, Lq, Lk, D = 2, 8, 8, 32

    key = jax.random.PRNGKey(0)
    k_lat, k_ref, k_wq, k_bq, k_wk, k_bk, k_wv, k_bv = jax.random.split(key, 8)

    latent_code = jax.random.normal(k_lat, (B, Lq, D), dtype=jnp.float32)
    reference_features = jax.random.normal(k_ref, (B, Lk, D), dtype=jnp.float32)

    # nn.Linear-style parameters (uniform in [-1/sqrt(D), 1/sqrt(D)]).
    bound = 1.0 / float(D) ** 0.5
    wq = jax.random.uniform(k_wq, (D, D), jnp.float32, -bound, bound)
    bq = jax.random.uniform(k_bq, (D,), jnp.float32, -bound, bound)
    wk = jax.random.uniform(k_wk, (D, D), jnp.float32, -bound, bound)
    bk = jax.random.uniform(k_bk, (D,), jnp.float32, -bound, bound)
    wv = jax.random.uniform(k_wv, (D, D), jnp.float32, -bound, bound)
    bv = jax.random.uniform(k_bv, (D,), jnp.float32, -bound, bound)

    ref = _reference_jax(latent_code, reference_features,
                         wq, bq, wk, bk, wv, bv)

    # Exact (f32, Precision.HIGHEST) path.
    out = reference_attention_layer(latent_code, reference_features,
                                    wq, bq, wk, bk, wv, bv, use_bf16=False)
    out = jax.block_until_ready(out)
    assert out.shape == (B, Lq, D)
    assert jnp.allclose(out, ref, atol=1e-4, rtol=1e-4), \
        "f32 kernel mismatch vs pure-JAX reference"

    # Fast bf16-MXU path — looser tolerance by design.
    out_bf16 = reference_attention_layer(latent_code, reference_features,
                                         wq, bq, wk, bk, wv, bv, use_bf16=True)
    out_bf16 = jax.block_until_ready(out_bf16)
    assert jnp.allclose(out_bf16, ref, atol=5e-2, rtol=5e-2), \
        "bf16 kernel mismatch vs pure-JAX reference"

    print("KERNEL_OK")
</pallas_src>

<mosaic_0001>
module attributes {stable_mosaic.version = 11 : i64} {
  func.func @_ref_attention_kernel(%arg0: i32, %arg1: i32, %arg2: memref<2x8x128xf32, #tpu.memory_space<vmem>>, %arg3: memref<2x8x128xf32, #tpu.memory_space<vmem>>, %arg4: memref<128x128xf32, #tpu.memory_space<vmem>>, %arg5: memref<1x128xf32, #tpu.memory_space<vmem>>, %arg6: memref<128x128xf32, #tpu.memory_space<vmem>>, %arg7: memref<1x128xf32, #tpu.memory_space<vmem>>, %arg8: memref<128x128xf32, #tpu.memory_space<vmem>>, %arg9: memref<1x128xf32, #tpu.memory_space<vmem>>, %arg10: memref<2x8x128xf32, #tpu.memory_space<vmem>>) attributes {dimension_semantics = [#tpu.dimension_semantics<parallel>, #tpu.dimension_semantics<parallel>], iteration_bounds = array<i64: 1, 1>, scalar_prefetch = 0 : i64, scratch_operands = 0 : i64, tpu.core_type = #tpu.core_type<tc>, window_params = [{transform_indices = @transform_0, window_bounds = array<i64: 2, 8, 128>}, {transform_indices = @transform_1, window_bounds = array<i64: 2, 8, 128>}, {pipeline_mode = #tpu.pipeline_mode<synchronous>, transform_indices = @transform_2, window_bounds = array<i64: 128, 128>}, {pipeline_mode = #tpu.pipeline_mode<synchronous>, transform_indices = @transform_3, window_bounds = array<i64: 1, 128>}, {pipeline_mode = #tpu.pipeline_mode<synchronous>, transform_indices = @transform_4, window_bounds = array<i64: 128, 128>}, {pipeline_mode = #tpu.pipeline_mode<synchronous>, transform_indices = @transform_5, window_bounds = array<i64: 1, 128>}, {pipeline_mode = #tpu.pipeline_mode<synchronous>, transform_indices = @transform_6, window_bounds = array<i64: 128, 128>}, {pipeline_mode = #tpu.pipeline_mode<synchronous>, transform_indices = @transform_7, window_bounds = array<i64: 1, 128>}, {transform_indices = @transform_8, window_bounds = array<i64: 2, 8, 128>}]} {
    %c0 = arith.constant 0 : index
    %c0_0 = arith.constant 0 : index
    %c0_1 = arith.constant 0 : index
    %0 = vector.load %arg2[%c0, %c0_0, %c0_1] : memref<2x8x128xf32, #tpu.memory_space<vmem>>, vector<2x8x128xf32>
    %c0_2 = arith.constant 0 : index
    %c0_3 = arith.constant 0 : index
    %c0_4 = arith.constant 0 : index
    %1 = vector.load %arg3[%c0_2, %c0_3, %c0_4] : memref<2x8x128xf32, #tpu.memory_space<vmem>>, vector<2x8x128xf32>
    %c0_5 = arith.constant 0 : index
    %c0_6 = arith.constant 0 : index
    %2 = vector.load %arg4[%c0_5, %c0_6] : memref<128x128xf32, #tpu.memory_space<vmem>>, vector<128x128xf32>
    %c0_7 = arith.constant 0 : index
    %c0_8 = arith.constant 0 : index
    %3 = vector.load %arg6[%c0_7, %c0_8] : memref<128x128xf32, #tpu.memory_space<vmem>>, vector<128x128xf32>
    %c0_9 = arith.constant 0 : index
    %c0_10 = arith.constant 0 : index
    %4 = vector.load %arg8[%c0_9, %c0_10] : memref<128x128xf32, #tpu.memory_space<vmem>>, vector<128x128xf32>
    %c0_11 = arith.constant 0 : index
    %c0_12 = arith.constant 0 : index
    %5 = vector.load %arg5[%c0_11, %c0_12] : memref<1x128xf32, #tpu.memory_space<vmem>>, vector<1x128xf32>
    %c0_13 = arith.constant 0 : index
    %c0_14 = arith.constant 0 : index
    %6 = vector.load %arg7[%c0_13, %c0_14] : memref<1x128xf32, #tpu.memory_space<vmem>>, vector<1x128xf32>
    %c0_15 = arith.constant 0 : index
    %c0_16 = arith.constant 0 : index
    %7 = vector.load %arg9[%c0_15, %c0_16] : memref<1x128xf32, #tpu.memory_space<vmem>>, vector<1x128xf32>
    %8 = vector.shape_cast %0 : vector<2x8x128xf32> to vector<16x128xf32>
    %9 = vector.shape_cast %1 : vector<2x8x128xf32> to vector<16x128xf32>
    %cst = arith.constant dense<0.000000e+00> : vector<16x128xf32>
    %10 = tpu.matmul %8, %2, %cst {dimension_numbers = #tpu.dot_dimension_numbers<[1], [0], [0], [1], [0, 0, 1, 1], [], []>, precision = #tpu.contract_precision<fp32>} : vector<16x128xf32>, vector<128x128xf32>, vector<16x128xf32> -> vector<16x128xf32>
    %11 = vector.broadcast %5 : vector<1x128xf32> to vector<16x128xf32>
    %12 = arith.addf %10, %11 : vector<16x128xf32>
    %13 = vector.shape_cast %12 : vector<16x128xf32> to vector<2x8x128xf32>
    %cst_17 = arith.constant dense<0.000000e+00> : vector<16x128xf32>
    %14 = tpu.matmul %9, %3, %cst_17 {dimension_numbers = #tpu.dot_dimension_numbers<[1], [0], [0], [1], [0, 0, 1, 1], [], []>, precision = #tpu.contract_precision<fp32>} : vector<16x128xf32>, vector<128x128xf32>, vector<16x128xf32> -> vector<16x128xf32>
    %15 = vector.broadcast %6 : vector<1x128xf32> to vector<16x128xf32>
    %16 = arith.addf %14, %15 : vector<16x128xf32>
    %17 = vector.shape_cast %16 : vector<16x128xf32> to vector<2x8x128xf32>
    %cst_18 = arith.constant dense<0.000000e+00> : vector<16x128xf32>
    %18 = tpu.matmul %9, %4, %cst_18 {dimension_numbers = #tpu.dot_dimension_numbers<[1], [0], [0], [1], [0, 0, 1, 1], [], []>, precision = #tpu.contract_precision<fp32>} : vector<16x128xf32>, vector<128x128xf32>, vector<16x128xf32> -> vector<16x128xf32>
    %19 = vector.broadcast %7 : vector<1x128xf32> to vector<16x128xf32>
    %20 = arith.addf %18, %19 : vector<16x128xf32>
    %21 = vector.shape_cast %20 : vector<16x128xf32> to vector<2x8x128xf32>
    "tpu.trace_start"() <{level = 10 : i32, message = "bqd,bkd->bqk"}> : () -> ()
    %cst_19 = arith.constant dense<0.000000e+00> : vector<2x8x8xf32>
    %22 = tpu.matmul %13, %17, %cst_19 {dimension_numbers = #tpu.dot_dimension_numbers<[2], [2], [1], [1], [0, 0, 0, 1, 1, 1], [0], [0]>, precision = #tpu.contract_precision<fp32>} : vector<2x8x128xf32>, vector<2x8x128xf32>, vector<2x8x8xf32> -> vector<2x8x8xf32>
    "tpu.trace_stop"() : () -> ()
    %cst_20 = arith.constant dense<0xFF800000> : vector<2x8xf32>
    %23 = vector.multi_reduction <maximumf>, %22, %cst_20 [2] : vector<2x8x8xf32> to vector<2x8xf32>
    %24 = vector.shape_cast %23 : vector<2x8xf32> to vector<2x8x1xf32>
    %25 = vector.broadcast %24 : vector<2x8x1xf32> to vector<2x8x8xf32>
    %26 = arith.subf %22, %25 : vector<2x8x8xf32>
    %27 = math.exp %26 : vector<2x8x8xf32>
    %cst_21 = arith.constant dense<0.000000e+00> : vector<2x8xf32>
    %28 = vector.multi_reduction <add>, %27, %cst_21 [2] : vector<2x8x8xf32> to vector<2x8xf32>
    %29 = vector.shape_cast %28 : vector<2x8xf32> to vector<2x8x1xf32>
    %30 = tpu.reciprocal %29 : vector<2x8x1xf32> -> vector<2x8x1xf32>
    %31 = vector.broadcast %30 : vector<2x8x1xf32> to vector<2x8x8xf32>
    %32 = arith.mulf %27, %31 : vector<2x8x8xf32>
    "tpu.trace_start"() <{level = 10 : i32, message = "bqk,bkd->bqd"}> : () -> ()
    %cst_22 = arith.constant dense<0.000000e+00> : vector<2x8x128xf32>
    %33 = tpu.matmul %32, %21, %cst_22 {dimension_numbers = #tpu.dot_dimension_numbers<[2], [1], [1], [2], [0, 0, 0, 1, 1, 2], [0], [0]>, precision = #tpu.contract_precision<fp32>} : vector<2x8x8xf32>, vector<2x8x128xf32>, vector<2x8x128xf32> -> vector<2x8x128xf32>
    "tpu.trace_stop"() : () -> ()
    %34 = arith.addf %0, %33 : vector<2x8x128xf32>
    %c0_23 = arith.constant 0 : index
    %c0_24 = arith.constant 0 : index
    %c0_25 = arith.constant 0 : index
    %35 = vector.load %arg10[%c0_23, %c0_24, %c0_25] : memref<2x8x128xf32, #tpu.memory_space<vmem>>, vector<2x8x128xf32>
    tpu.vector_store %arg10[%c0_23, %c0_24, %c0_25], %34 {strides = array<i32>} : memref<2x8x128xf32, #tpu.memory_space<vmem>>, vector<2x8x128xf32>,
    return
  }
  func.func @transform_0(%arg0: i32, %arg1: i32) -> (i32, i32, i32) {
    %c0_i32 = arith.constant 0 : i32
    %c0_i32_0 = arith.constant 0 : i32
    return %arg0, %arg1, %c0_i32 : i32, i32, i32
  }
  func.func @transform_1(%arg0: i32, %arg1: i32) -> (i32, i32, i32) {
    %c0_i32 = arith.constant 0 : i32
    %c0_i32_0 = arith.constant 0 : i32
    %c0_i32_1 = arith.constant 0 : i32
    return %arg0, %c0_i32, %c0_i32_0 : i32, i32, i32
  }
  func.func @transform_2(%arg0: i32, %arg1: i32) -> (i32, i32) {
    %c0_i32 = arith.constant 0 : i32
    %c0_i32_0 = arith.constant 0 : i32
    %c0_i32_1 = arith.constant 0 : i32
    return %c0_i32, %c0_i32_0 : i32, i32
  }
  func.func @transform_3(%arg0: i32, %arg1: i32) -> (i32, i32) {
    %c0_i32 = arith.constant 0 : i32
    %c0_i32_0 = arith.constant 0 : i32
    %c0_i32_1 = arith.constant 0 : i32
    return %c0_i32, %c0_i32_0 : i32, i32
  }
  func.func @transform_4(%arg0: i32, %arg1: i32) -> (i32, i32) {
    %c0_i32 = arith.constant 0 : i32
    %c0_i32_0 = arith.constant 0 : i32
    %c0_i32_1 = arith.constant 0 : i32
    return %c0_i32, %c0_i32_0 : i32, i32
  }
  func.func @transform_5(%arg0: i32, %arg1: i32) -> (i32, i32) {
    %c0_i32 = arith.constant 0 : i32
    %c0_i32_0 = arith.constant 0 : i32
    %c0_i32_1 = arith.constant 0 : i32
    return %c0_i32, %c0_i32_0 : i32, i32
  }
  func.func @transform_6(%arg0: i32, %arg1: i32) -> (i32, i32) {
    %c0_i32 = arith.constant 0 : i32
    %c0_i32_0 = arith.constant 0 : i32
    %c0_i32_1 = arith.constant 0 : i32
    return %c0_i32, %c0_i32_0 : i32, i32
  }
  func.func @transform_7(%arg0: i32, %arg1: i32) -> (i32, i32) {
    %c0_i32 = arith.constant 0 : i32
    %c0_i32_0 = arith.constant 0 : i32
    %c0_i32_1 = arith.constant 0 : i32
    return %c0_i32, %c0_i32_0 : i32, i32
  }
  func.func @transform_8(%arg0: i32, %arg1: i32) -> (i32, i32, i32) {
    %c0_i32 = arith.constant 0 : i32
    %c0_i32_0 = arith.constant 0 : i32
    return %arg0, %arg1, %c0_i32 : i32, i32, i32
  }
}

module attributes {stable_mosaic.version = 11 : i64} {
  func.func @_ref_attention_kernel(%arg0: i32, %arg1: i32, %arg2: memref<2x8x128xf32, #tpu.memory_space<vmem>>, %arg3: memref<2x8x128xf32, #tpu.memory_space<vmem>>, %arg4: memref<128x128xf32, #tpu.memory_space<vmem>>, %arg5: memref<1x128xf32, #tpu.memory_space<vmem>>, %arg6: memref<128x128xf32, #tpu.memory_space<vmem>>, %arg7: memref<1x128xf32, #tpu.memory_space<vmem>>, %arg8: memref<128x128xf32, #tpu.memory_space<vmem>>, %arg9: memref<1x128xf32, #tpu.memory_space<vmem>>, %arg10: memref<2x8x128xf32, #tpu.memory_space<vmem>>) attributes {dimension_semantics = [#tpu.dimension_semantics<parallel>, #tpu.dimension_semantics<parallel>], iteration_bounds = array<i64: 1, 1>, scalar_prefetch = 0 : i64, scratch_operands = 0 : i64, tpu.core_type = #tpu.core_type<tc>, window_params = [{transform_indices = @transform_0, window_bounds = array<i64: 2, 8, 128>}, {transform_indices = @transform_1, window_bounds = array<i64: 2, 8, 128>}, {pipeline_mode = #tpu.pipeline_mode<synchronous>, transform_indices = @transform_2, window_bounds = array<i64: 128, 128>}, {pipeline_mode = #tpu.pipeline_mode<synchronous>, transform_indices = @transform_3, window_bounds = array<i64: 1, 128>}, {pipeline_mode = #tpu.pipeline_mode<synchronous>, transform_indices = @transform_4, window_bounds = array<i64: 128, 128>}, {pipeline_mode = #tpu.pipeline_mode<synchronous>, transform_indices = @transform_5, window_bounds = array<i64: 1, 128>}, {pipeline_mode = #tpu.pipeline_mode<synchronous>, transform_indices = @transform_6, window_bounds = array<i64: 128, 128>}, {pipeline_mode = #tpu.pipeline_mode<synchronous>, transform_indices = @transform_7, window_bounds = array<i64: 1, 128>}, {transform_indices = @transform_8, window_bounds = array<i64: 2, 8, 128>}]} {
    %c0 = arith.constant 0 : index
    %c0_0 = arith.constant 0 : index
    %c0_1 = arith.constant 0 : index
    %0 = vector.load %arg2[%c0, %c0_0, %c0_1] : memref<2x8x128xf32, #tpu.memory_space<vmem>>, vector<2x8x128xf32>
    %c0_2 = arith.constant 0 : index
    %c0_3 = arith.constant 0 : index
    %c0_4 = arith.constant 0 : index
    %1 = vector.load %arg3[%c0_2, %c0_3, %c0_4] : memref<2x8x128xf32, #tpu.memory_space<vmem>>, vector<2x8x128xf32>
    %c0_5 = arith.constant 0 : index
    %c0_6 = arith.constant 0 : index
    %2 = vector.load %arg4[%c0_5, %c0_6] : memref<128x128xf32, #tpu.memory_space<vmem>>, vector<128x128xf32>
    %c0_7 = arith.constant 0 : index
    %c0_8 = arith.constant 0 : index
    %3 = vector.load %arg6[%c0_7, %c0_8] : memref<128x128xf32, #tpu.memory_space<vmem>>, vector<128x128xf32>
    %c0_9 = arith.constant 0 : index
    %c0_10 = arith.constant 0 : index
    %4 = vector.load %arg8[%c0_9, %c0_10] : memref<128x128xf32, #tpu.memory_space<vmem>>, vector<128x128xf32>
    %c0_11 = arith.constant 0 : index
    %c0_12 = arith.constant 0 : index
    %5 = vector.load %arg5[%c0_11, %c0_12] : memref<1x128xf32, #tpu.memory_space<vmem>>, vector<1x128xf32>
    %c0_13 = arith.constant 0 : index
    %c0_14 = arith.constant 0 : index
    %6 = vector.load %arg7[%c0_13, %c0_14] : memref<1x128xf32, #tpu.memory_space<vmem>>, vector<1x128xf32>
    %c0_15 = arith.constant 0 : index
    %c0_16 = arith.constant 0 : index
    %7 = vector.load %arg9[%c0_15, %c0_16] : memref<1x128xf32, #tpu.memory_space<vmem>>, vector<1x128xf32>
    %8 = vector.shape_cast %0 : vector<2x8x128xf32> to vector<16x128xf32>
    %9 = vector.shape_cast %1 : vector<2x8x128xf32> to vector<16x128xf32>
    %cst = arith.constant dense<0.000000e+00> : vector<16x128xf32>
    %10 = tpu.matmul %8, %2, %cst {dimension_numbers = #tpu.dot_dimension_numbers<[1], [0], [0], [1], [0, 0, 1, 1], [], []>, precision = #tpu.contract_precision<fp32>} : vector<16x128xf32>, vector<128x128xf32>, vector<16x128xf32> -> vector<16x128xf32>
    %11 = vector.broadcast %5 : vector<1x128xf32> to vector<16x128xf32>
    %12 = arith.addf %10, %11 : vector<16x128xf32>
    %13 = vector.shape_cast %12 : vector<16x128xf32> to vector<2x8x128xf32>
    %cst_17 = arith.constant dense<0.000000e+00> : vector<16x128xf32>
    %14 = tpu.matmul %9, %3, %cst_17 {dimension_numbers = #tpu.dot_dimension_numbers<[1], [0], [0], [1], [0, 0, 1, 1], [], []>, precision = #tpu.contract_precision<fp32>} : vector<16x128xf32>, vector<128x128xf32>, vector<16x128xf32> -> vector<16x128xf32>
    %15 = vector.broadcast %6 : vector<1x128xf32> to vector<16x128xf32>
    %16 = arith.addf %14, %15 : vector<16x128xf32>
    %17 = vector.shape_cast %16 : vector<16x128xf32> to vector<2x8x128xf32>
    %cst_18 = arith.constant dense<0.000000e+00> : vector<16x128xf32>
    %18 = tpu.matmul %9, %4, %cst_18 {dimension_numbers = #tpu.dot_dimension_numbers<[1], [0], [0], [1], [0, 0, 1, 1], [], []>, precision = #tpu.contract_precision<fp32>} : vector<16x128xf32>, vector<128x128xf32>, vector<16x128xf32> -> vector<16x128xf32>
    %19 = vector.broadcast %7 : vector<1x128xf32> to vector<16x128xf32>
    %20 = arith.addf %18, %19 : vector<16x128xf32>
    %21 = vector.shape_cast %20 : vector<16x128xf32> to vector<2x8x128xf32>
    "tpu.trace_start"() <{level = 10 : i32, message = "bqd,bkd->bqk"}> : () -> ()
    %cst_19 = arith.constant dense<0.000000e+00> : vector<2x8x8xf32>
    %22 = tpu.matmul %13, %17, %cst_19 {dimension_numbers = #tpu.dot_dimension_numbers<[2], [2], [1], [1], [0, 0, 0, 1, 1, 1], [0], [0]>, precision = #tpu.contract_precision<fp32>} : vector<2x8x128xf32>, vector<2x8x128xf32>, vector<2x8x8xf32> -> vector<2x8x8xf32>
    "tpu.trace_stop"() : () -> ()
    %cst_20 = arith.constant dense<0xFF800000> : vector<2x8xf32>
    %23 = vector.multi_reduction <maximumf>, %22, %cst_20 [2] : vector<2x8x8xf32> to vector<2x8xf32>
    %24 = vector.shape_cast %23 : vector<2x8xf32> to vector<2x8x1xf32>
    %25 = vector.broadcast %24 : vector<2x8x1xf32> to vector<2x8x8xf32>
    %26 = arith.subf %22, %25 : vector<2x8x8xf32>
    %27 = math.exp %26 : vector<2x8x8xf32>
    %cst_21 = arith.constant dense<0.000000e+00> : vector<2x8xf32>
    %28 = vector.multi_reduction <add>, %27, %cst_21 [2] : vector<2x8x8xf32> to vector<2x8xf32>
    %29 = vector.shape_cast %28 : vector<2x8xf32> to vector<2x8x1xf32>
    %30 = tpu.reciprocal %29 : vector<2x8x1xf32> -> vector<2x8x1xf32>
    %31 = vector.broadcast %30 : vector<2x8x1xf32> to vector<2x8x8xf32>
    %32 = arith.mulf %27, %31 : vector<2x8x8xf32>
    "tpu.trace_start"() <{level = 10 : i32, message = "bqk,bkd->bqd"}> : () -> ()
    %cst_22 = arith.constant dense<0.000000e+00> : vector<2x8x128xf32>
    %33 = tpu.matmul %32, %21, %cst_22 {dimension_numbers = #tpu.dot_dimension_numbers<[2], [1], [1], [2], [0, 0, 0, 1, 1, 2], [0], [0]>, precision = #tpu.contract_precision<fp32>} : vector<2x8x8xf32>, vector<2x8x128xf32>, vector<2x8x128xf32> -> vector<2x8x128xf32>
    "tpu.trace_stop"() : () -> ()
    %34 = arith.addf %0, %33 : vector<2x8x128xf32>
    %c0_23 = arith.constant 0 : index
    %c0_24 = arith.constant 0 : index
    %c0_25 = arith.constant 0 : index
    %35 = vector.load %arg10[%c0_23, %c0_24, %c0_25] : memref<2x8x128xf32, #tpu.memory_space<vmem>>, vector<2x8x128xf32>
    tpu.vector_store %arg10[%c0_23, %c0_24, %c0_25], %34 {strides = array<i32>} : memref<2x8x128xf32, #tpu.memory_space<vmem>>, vector<2x8x128xf32>,
    return
  }
  func.func @transform_0(%arg0: i32, %arg1: i32) -> (i32, i32, i32) {
    %c0_i32 = arith.constant 0 : i32
    %c0_i32_0 = arith.constant 0 : i32
    return %arg0, %arg1, %c0_i32 : i32, i32, i32
  }
  func.func @transform_1(%arg0: i32, %arg1: i32) -> (i32, i32, i32) {
    %c0_i32 = arith.constant 0 : i32
    %c0_i32_0 = arith.constant 0 : i32
    %c0_i32_1 = arith.constant 0 : i32
    return %arg0, %c0_i32, %c0_i32_0 : i32, i32, i32
  }
  func.func @transform_2(%arg0: i32, %arg1: i32) -> (i32, i32) {
    %c0_i32 = arith.constant 0 : i32
    %c0_i32_0 = arith.constant 0 : i32
    %c0_i32_1 = arith.constant 0 : i32
    return %c0_i32, %c0_i32_0 : i32, i32
  }
  func.func @transform_3(%arg0: i32, %arg1: i32) -> (i32, i32) {
    %c0_i32 = arith.constant 0 : i32
    %c0_i32_0 = arith.constant 0 : i32
    %c0_i32_1 = arith.constant 0 : i32
    return %c0_i32, %c0_i32_0 : i32, i32
  }
  func.func @transform_4(%arg0: i32, %arg1: i32) -> (i32, i32) {
    %c0_i32 = arith.constant 0 : i32
    %c0_i32_0 = arith.constant 0 : i32
    %c0_i32_1 = arith.constant 0 : i32
    return %c0_i32, %c0_i32_0 : i32, i32
  }
  func.func @transform_5(%arg0: i32, %arg1: i32) -> (i32, i32) {
    %c0_i32 = arith.constant 0 : i32
    %c0_i32_0 = arith.constant 0 : i32
    %c0_i32_1 = arith.constant 0 : i32
    return %c0_i32, %c0_i32_0 : i32, i32
  }
  func.func @transform_6(%arg0: i32, %arg1: i32) -> (i32, i32) {
    %c0_i32 = arith.constant 0 : i32
    %c0_i32_0 = arith.constant 0 : i32
    %c0_i32_1 = arith.constant 0 : i32
    return %c0_i32, %c0_i32_0 : i32, i32
  }
  func.func @transform_7(%arg0: i32, %arg1: i32) -> (i32, i32) {
    %c0_i32 = arith.constant 0 : i32
    %c0_i32_0 = arith.constant 0 : i32
    %c0_i32_1 = arith.constant 0 : i32
    return %c0_i32, %c0_i32_0 : i32, i32
  }
  func.func @transform_8(%arg0: i32, %arg1: i32) -> (i32, i32, i32) {
    %c0_i32 = arith.constant 0 : i32
    %c0_i32_0 = arith.constant 0 : i32
    return %arg0, %arg1, %c0_i32 : i32, i32, i32
  }
}

</mosaic_0001>

<llo_original>
// kernel: tpu_custom_call.1
$region0: #{tpu_custom_call.1}
  #allocation0 [shape = 'u32[]', space=smem, size = 0x4, offset = 0x4, fixed_abs, tag = 'smem constant byte address 0x4 - core index']
  #allocation1 [shape = 'u32[144,128]{1,0:T(1,128)}', space=vmem, size = 0x12000, scoped, tag = 'internal scratch']
  %s0 = inlined_call_operand.hbm [shape: f32[2,8,128], index: 0, kind: input, shape index: {}]
  %s1 = inlined_call_operand.hbm [shape: f32[2,8,128], index: 1, kind: input, shape index: {}]
  %s2 = inlined_call_operand.hbm [shape: f32[128,128], index: 2, kind: input, shape index: {}]
  %s3 = inlined_call_operand.vmem [shape: f32[1,128], index: 3, kind: input, shape index: {}]
  %s4 = inlined_call_operand.hbm [shape: f32[128,128], index: 4, kind: input, shape index: {}]
  %s5 = inlined_call_operand.vmem [shape: f32[1,128], index: 5, kind: input, shape index: {}]
  %s6 = inlined_call_operand.hbm [shape: f32[128,128], index: 6, kind: input, shape index: {}]
  %s7 = inlined_call_operand.vmem [shape: f32[1,128], index: 7, kind: input, shape index: {}]
  %s8 = inlined_call_operand.hbm [shape: f32[2,8,128], index: 8, kind: output, shape index: {}]
  %s9 = sld [smem:[#allocation0]]
  $region62: #{tpu_custom_call.1} parent=0
    _
  %s11 = ssub.s32 1, %s9
  %s12 = scalar_select 0, %s11, %s9
  $region1: #{tpu_custom_call.1} parent=0
    #allocation2 [shape = 'u8[8192]{0}', space=vmem, size = 0x2000, scoped, tag = 'input window, operand 0, single buffered']
    #allocation3 [shape = 's32[1]{0}', space=sflag, size = 0x4, scoped, tag = 'scoped memory for tpu_custom_call.1']
    #allocation4 [shape = 's32[1]{0}', space=sflag, size = 0x4, scoped, tag = 'scoped memory for tpu_custom_call.1']
    #allocation5 [shape = 'u8[8192]{0}', space=vmem, size = 0x2000, scoped, tag = 'input window, operand 1, single buffered']
    #allocation6 [shape = 's32[1]{0}', space=sflag, size = 0x4, scoped, tag = 'scoped memory for tpu_custom_call.1']
    #allocation7 [shape = 'u8[65536]{0}', space=vmem, size = 0x10000, scoped, tag = 'input window, operand 2, single buffered']
    #allocation8 [shape = 'u8[65536]{0}', space=vmem, size = 0x10000, scoped, tag = 'input window, operand 4, single buffered']
    #allocation9 [shape = 's32[1]{0}', space=sflag, size = 0x4, scoped, tag = 'scoped memory for tpu_custom_call.1']
    #allocation10 [shape = 'u8[65536]{0}', space=vmem, size = 0x10000, scoped, tag = 'input window, operand 6, single buffered']
    #allocation11 [shape = 'u8[8192]{0}', space=vmem, size = 0x2000, scoped, tag = 'output window, operand 0, single buffered']
    %13 = vsyncpa [#allocation3], 0
    %14 = vsyncpa [#allocation6], 0
    %15 = vsyncpa [#allocation9], 0
    %16 = vsyncpa [#allocation4], 0
    // Predicated region
    $region2: #{tpu_custom_call.1} parent=1 // pred_check
      _
    $region3: #{tpu_custom_call.1} parent=1 // pred_check_branch
      %18 = sbr.rel (0) target = $region5
    $region4: #{tpu_custom_call.1} parent=1 // pred_region
      %s20 = ssub.s32 256, 256
      %21 = vsyncadd [#allocation3], %s20
      %s22 = sshll.u32 [#allocation2], 4
      %s23 = int_to_ptr.vmem [resolvable:$true] %s22
      %28 = dma.hbm_to_vmem [thread:$0]  %s0, 256, %s23, [#allocation3], 128, 128, 8
    $region5: #{tpu_custom_call.1} parent=1 // pred_fallthru
      _
    // Predicated region
    $region6: #{tpu_custom_call.1} parent=1 // pred_check
      _
    $region7: #{tpu_custom_call.1} parent=1 // pred_check_branch
      %30 = sbr.rel (0) target = $region9
    $region8: #{tpu_custom_call.1} parent=1 // pred_region
      %s32 = ssub.s32 256, 256
      %33 = vsyncadd [#allocation6], %s32
      %s34 = sshll.u32 [#allocation5], 4
      %s35 = int_to_ptr.vmem [resolvable:$true] %s34
      %40 = dma.hbm_to_vmem [thread:$0]  %s1, 256, %s35, [#allocation6], 128, 128, 8
    $region9: #{tpu_custom_call.1} parent=1 // pred_fallthru
      _
    // Predicated region
    $region10: #{tpu_custom_call.1} parent=1 // pred_check
      _
    $region11: #{tpu_custom_call.1} parent=1 // pred_check_branch
      %42 = sbr.rel (0) target = $region13
    $region12: #{tpu_custom_call.1} parent=1 // pred_region
      %s44 = ssub.s32 2048, 2048
      %45 = vsyncadd [#allocation6], %s44
      %s46 = sshll.u32 [#allocation7], 4
      %s47 = int_to_ptr.vmem [resolvable:$true] %s46
      %52 = dma.hbm_to_vmem [thread:$0]  %s2, 2048, %s47, [#allocation6], 128, 128, 8
    $region13: #{tpu_custom_call.1} parent=1 // pred_fallthru
      _
    // Predicated region
    $region14: #{tpu_custom_call.1} parent=1 // pred_check
      _
    $region15: #{tpu_custom_call.1} parent=1 // pred_check_branch
      %54 = sbr.rel (0) target = $region17
    $region16: #{tpu_custom_call.1} parent=1 // pred_region
      _
    $region17: #{tpu_custom_call.1} parent=1 // pred_fallthru
      _
    // Predicated region
    $region18: #{tpu_custom_call.1} parent=1 // pred_check
      _
    $region19: #{tpu_custom_call.1} parent=1 // pred_check_branch
      %56 = sbr.rel (0) target = $region21
    $region20: #{tpu_custom_call.1} parent=1 // pred_region
      %s58 = ssub.s32 2048, 2048
      %59 = vsyncadd [#allocation9], %s58
      %s60 = sshll.u32 [#allocation8], 4
      %s61 = int_to_ptr.vmem [resolvable:$true] %s60
      %66 = dma.hbm_to_vmem [thread:$0]  %s4, 2048, %s61, [#allocation9], 128, 128, 8
    $region21: #{tpu_custom_call.1} parent=1 // pred_fallthru
      _
    // Predicated region
    $region22: #{tpu_custom_call.1} parent=1 // pred_check
      _
    $region23: #{tpu_custom_call.1} parent=1 // pred_check_branch
      %68 = sbr.rel (0) target = $region25
    $region24: #{tpu_custom_call.1} parent=1 // pred_region
      _
    $region25: #{tpu_custom_call.1} parent=1 // pred_fallthru
      _
    // Predicated region
    $region26: #{tpu_custom_call.1} parent=1 // pred_check
      _
    $region27: #{tpu_custom_call.1} parent=1 // pred_check_branch
      %70 = sbr.rel (0) target = $region29
    $region28: #{tpu_custom_call.1} parent=1 // pred_region
      %s72 = ssub.s32 2048, 2048
      %73 = vsyncadd [#allocation9], %s72
      %s74 = sshll.u32 [#allocation10], 4
      %s75 = int_to_ptr.vmem [resolvable:$true] %s74
      %80 = dma.hbm_to_vmem [thread:$0]  %s6, 2048, %s75, [#allocation9], 128, 128, 8
    $region29: #{tpu_custom_call.1} parent=1 // pred_fallthru
      _
    // Predicated region
    $region30: #{tpu_custom_call.1} parent=1 // pred_check
      _
    $region31: #{tpu_custom_call.1} parent=1 // pred_check_branch
      %82 = sbr.rel (0) target = $region33
    $region32: #{tpu_custom_call.1} parent=1 // pred_region
      _
    $region33: #{tpu_custom_call.1} parent=1 // pred_fallthru
      _
    // Predicated region
    $region34: #{tpu_custom_call.1} parent=1 // pred_check
      _
    $region35: #{tpu_custom_call.1} parent=1 // pred_check_branch
      %84 = sbr.rel (0) target = $region37
    $region36: #{tpu_custom_call.1} parent=1 // pred_region
      %85 = dma.done [#allocation3], 256
    $region37: #{tpu_custom_call.1} parent=1 // pred_fallthru
      _
    // Predicated region
    $region38: #{tpu_custom_call.1} parent=1 // pred_check
      _
    $region39: #{tpu_custom_call.1} parent=1 // pred_check_branch
      %87 = sbr.rel (0) target = $region41
    $region40: #{tpu_custom_call.1} parent=1 // pred_region
      %88 = dma.done [#allocation6], 256
    $region41: #{tpu_custom_call.1} parent=1 // pred_fallthru
      _
    // Predicated region
    $region42: #{tpu_custom_call.1} parent=1 // pred_check
      _
    $region43: #{tpu_custom_call.1} parent=1 // pred_check_branch
      %90 = sbr.rel (0) target = $region45
    $region44: #{tpu_custom_call.1} parent=1 // pred_region
      %91 = dma.done [#allocation6], 2048
    $region45: #{tpu_custom_call.1} parent=1 // pred_fallthru
      _
    // Predicated region
    $region46: #{tpu_custom_call.1} parent=1 // pred_check
      _
    $region47: #{tpu_custom_call.1} parent=1 // pred_check_branch
      %93 = sbr.rel (0) target = $region49
    $region48: #{tpu_custom_call.1} parent=1 // pred_region
      %94 = dma.done [#allocation9], 2048
    $region49: #{tpu_custom_call.1} parent=1 // pred_fallthru
      _
    // Predicated region
    $region50: #{tpu_custom_call.1} parent=1 // pred_check
      _
    $region51: #{tpu_custom_call.1} parent=1 // pred_check_branch
      %96 = sbr.rel (0) target = $region53
    $region52: #{tpu_custom_call.1} parent=1 // pred_region
      %97 = dma.done [#allocation9], 2048
    $region53: #{tpu_custom_call.1} parent=1 // pred_fallthru
      _
    %v98 = vld [vmem:[#allocation2] sm:$0xff]
    %v99 = vld [vmem:[#allocation2 + $0x8] sm:$0xff]
    %v100 = vld [vmem:[#allocation5] sm:$0xff]
    %v101 = vld [vmem:[#allocation5 + $0x8] sm:$0xff]
    %v102 = vld [vmem:[#allocation7] sm:$0xff]
    %v103 = vld [vmem:[#allocation7 + $0x8] sm:$0xff]
    %v104 = vld [vmem:[#allocation7 + $0x10] sm:$0xff]
    %v105 = vld [vmem:[#allocation7 + $0x18] sm:$0xff]
    %v106 = vld [vmem:[#allocation7 + $0x20] sm:$0xff]
    %v107 = vld [vmem:[#allocation7 + $0x28] sm:$0xff]
    %v108 = vld [vmem:[#allocation7 + $0x30] sm:$0xff]
    %v109 = vld [vmem:[#allocation7 + $0x38] sm:$0xff]
    %v110 = vld [vmem:[#allocation7 + $0x40] sm:$0xff]
    %v111 = vld [vmem:[#allocation7 + $0x48] sm:$0xff]
    %v112 = vld [vmem:[#allocation7 + $0x50] sm:$0xff]
    %v113 = vld [vmem:[#allocation7 + $0x58] sm:$0xff]
    %v114 = vld [vmem:[#allocation7 + $0x60] sm:$0xff]
    %v115 = vld [vmem:[#allocation7 + $0x68] sm:$0xff]
    %v116 = vld [vmem:[#allocation7 + $0x70] sm:$0xff]
    %v117 = vld [vmem:[#allocation7 + $0x78] sm:$0xff]
    %v118 = vld [vmem:[#allocation8] sm:$0xff]
    %v119 = vld [vmem:[#allocation8 + $0x8] sm:$0xff]
    %v120 = vld [vmem:[#allocation8 + $0x10] sm:$0xff]
    %v121 = vld [vmem:[#allocation8 + $0x18] sm:$0xff]
    %v122 = vld [vmem:[#allocation8 + $0x20] sm:$0xff]
    %v123 = vld [vmem:[#allocation8 + $0x28] sm:$0xff]
    %v124 = vld [vmem:[#allocation8 + $0x30] sm:$0xff]
    %v125 = vld [vmem:[#allocation8 + $0x38] sm:$0xff]
    %v126 = vld [vmem:[#allocation8 + $0x40] sm:$0xff]
    %v127 = vld [vmem:[#allocation8 + $0x48] sm:$0xff]
    %v128 = vld [vmem:[#allocation8 + $0x50] sm:$0xff]
    %v129 = vld [vmem:[#allocation8 + $0x58] sm:$0xff]
    %v130 = vld [vmem:[#allocation8 + $0x60] sm:$0xff]
    %v131 = vld [vmem:[#allocation8 + $0x68] sm:$0xff]
    %v132 = vld [vmem:[#allocation8 + $0x70] sm:$0xff]
    %v133 = vld [vmem:[#allocation8 + $0x78] sm:$0xff]
    %v134 = vld [vmem:[#allocation10] sm:$0xff]
    %v135 = vld [vmem:[#allocation10 + $0x8] sm:$0xff]
    %v136 = vld [vmem:[#allocation10 + $0x10] sm:$0xff]
    %v137 = vld [vmem:[#allocation10 + $0x18] sm:$0xff]
    %v138 = vld [vmem:[#allocation10 + $0x20] sm:$0xff]
    %v139 = vld [vmem:[#allocation10 + $0x28] sm:$0xff]
    %v140 = vld [vmem:[#allocation10 + $0x30] sm:$0xff]
    %v141 = vld [vmem:[#allocation10 + $0x38] sm:$0xff]
    %v142 = vld [vmem:[#allocation10 + $0x40] sm:$0xff]
    %v143 = vld [vmem:[#allocation10 + $0x48] sm:$0xff]
    %v144 = vld [vmem:[#allocation10 + $0x50] sm:$0xff]
    %v145 = vld [vmem:[#allocation10 + $0x58] sm:$0xff]
    %v146 = vld [vmem:[#allocation10 + $0x60] sm:$0xff]
    %v147 = vld [vmem:[#allocation10 + $0x68] sm:$0xff]
    %v148 = vld [vmem:[#allocation10 + $0x70] sm:$0xff]
    %v149 = vld [vmem:[#allocation10 + $0x78] sm:$0xff]
    %v150 = vld [vmem:[%s3] sm:$0x1]
    %v151 = vld [vmem:[%s5] sm:$0x1]
    %v152 = vld [vmem:[%s7] sm:$0x1]
    %v154 = vlaneseq
    %v155 = vshrl.u32 %v154, 7
    %v156 = vsub.s32 0, %v155
    %v157 = vrot.slane %v150, %v156
    %159 = vmatprep.subr.mxu0 0.0
    %v160 = vand.u32 %v102, 4294901760
    %161 = vmatpush1.msra.mxu0 %v160
    %162 = vmatprep.subr.mxu0 0.0
    %v163 = vand.u32 %v103, 4294901760
    %164 = vmatpush1.msra.mxu0 %v163
    %165 = vmatprep.subr.mxu0 0.0
    %v166 = vand.u32 %v104, 4294901760
    %167 = vmatpush1.msra.mxu0 %v166
    %168 = vmatprep.subr.mxu0 0.0
    %v169 = vand.u32 %v105, 4294901760
    %170 = vmatpush1.msra.mxu0 %v169
    %171 = vmatprep.subr.mxu0 0.0
    %v172 = vand.u32 %v106, 4294901760
    %173 = vmatpush1.msra.mxu0 %v172
    %174 = vmatprep.subr.mxu0 0.0
    %v175 = vand.u32 %v107, 4294901760
    %176 = vmatpush1.msra.mxu0 %v175
    %177 = vmatprep.subr.mxu0 0.0
    %v178 = vand.u32 %v108, 4294901760
    %179 = vmatpush1.msra.mxu0 %v178
    %180 = vmatprep.subr.mxu0 0.0
    %v181 = vand.u32 %v109, 4294901760
    %182 = vmatpush1.msra.mxu0 %v181
    %183 = vmatprep.subr.mxu0 0.0
    %v184 = vand.u32 %v110, 4294901760
    %185 = vmatpush1.msra.mxu0 %v184
    %186 = vmatprep.subr.mxu0 0.0
    %v187 = vand.u32 %v111, 4294901760
    %188 = vmatpush1.msra.mxu0 %v187
    %189 = vmatprep.subr.mxu0 0.0
    %v190 = vand.u32 %v112, 4294901760
    %191 = vmatpush1.msra.mxu0 %v190
    %192 = vmatprep.subr.mxu0 0.0
    %v193 = vand.u32 %v113, 4294901760
    %194 = vmatpush1.msra.mxu0 %v193
    %195 = vmatprep.subr.mxu0 0.0
    %v196 = vand.u32 %v114, 4294901760
    %197 = vmatpush1.msra.mxu0 %v196
    %198 = vmatprep.subr.mxu0 0.0
    %v199 = vand.u32 %v115, 4294901760
    %200 = vmatpush1.msra.mxu0 %v199
    %201 = vmatprep.subr.mxu0 0.0
    %v202 = vand.u32 %v116, 4294901760
    %203 = vmatpush1.msra.mxu0 %v202
    %204 = vmatprep.subr.mxu0 0.0
    %v205 = vand.u32 %v117, 4294901760
    %206 = vmatpush1.msra.mxu0 %v205
    %207 = vmatprep.subr.mxu0 0.0
    %208 = vmatpush1.msra.mxu0 0.0
    %209 = vmatprep.subr.mxu0 0.0
    %210 = vmatpush1.msra.mxu0 0.0
    %211 = vmatprep.subr.mxu0 0.0
    %212 = vmatpush1.msra.mxu0 0.0
    %213 = vmatprep.subr.mxu0 0.0
    %214 = vmatpush1.msra.mxu0 0.0
    %215 = vmatprep.subr.mxu0 0.0
    %216 = vmatpush1.msra.mxu0 0.0
    %217 = vmatprep.subr.mxu0 0.0
    %218 = vmatpush1.msra.mxu0 0.0
    %219 = vmatprep.subr.mxu0 0.0
    %220 = vmatpush1.msra.mxu0 0.0
    %221 = vmatprep.subr.mxu0 0.0
    %222 = vmatpush1.msra.mxu0 0.0
    %223 = vmatprep.subr.mxu0 0.0
    %224 = vmatpush1.msra.mxu0 0.0
    %225 = vmatprep.subr.mxu0 0.0
    %226 = vmatpush1.msra.mxu0 0.0
    %227 = vmatprep.subr.mxu0 0.0
    %228 = vmatpush1.msra.mxu0 0.0
    %229 = vmatprep.subr.mxu0 0.0
    %230 = vmatpush1.msra.mxu0 0.0
    %231 = vmatprep.subr.mxu0 0.0
    %232 = vmatpush1.msra.mxu0 0.0
    %233 = vmatprep.subr.mxu0 0.0
    %234 = vmatpush1.msra.mxu0 0.0
    %235 = vmatprep.subr.mxu0 0.0
    %236 = vmatpush1.msra.mxu0 0.0
    %237 = vmatprep.subr.mxu0 0.0
    %238 = vmatpush1.msra.mxu0 0.0
    %239 = vmatprep.mubr.f32.mxu0 0.0
    %v240 = vand.u32 %v98, 4294901760
    %v241 = vsub.f32 %v98, %v240
    %v242 = vand.u32 %v241, 4294901760
    %v243 = vsub.f32 %v241, %v242
    %v244 = vand.u32 %v243, 4294901760
    %245 = vmatmul.mubr.f32.gmra.mrb[0].mxu0 %v244
    %v246 = vpop.f32.mrb[0].mxu0
    %v247 = vadd.f32 %v157, %v246
    %v248 = vpop.f32.mrb[0].mxu0
    %249 = vmatprep.mubr.f32.mxu0 0.0
    %v250 = vand.u32 %v99, 4294901760
    %v251 = vsub.f32 %v99, %v250
    %v252 = vand.u32 %v251, 4294901760
    %v253 = vsub.f32 %v251, %v252
    %v254 = vand.u32 %v253, 4294901760
    %255 = vmatmul.mubr.f32.gmra.mrb[0].mxu0 %v254
    %v256 = vpop.f32.mrb[0].mxu0
    %v257 = vadd.f32 %v157, %v256
    %v258 = vpop.f32.mrb[0].mxu0
    %259 = vdwg.mxu0
    %260 = vmatprep.subr.mxu0 0.0
    %v261 = vand.u32 %v102, 4294901760
    %v262 = vsub.f32 %v102, %v261
    %v263 = vand.u32 %v262, 4294901760
    %v264 = vsub.f32 %v262, %v263
    %v265 = vand.u32 %v264, 4294901760
    %266 = vmatpush1.msra.mxu0 %v265
    %267 = vmatprep.subr.mxu0 0.0
    %v268 = vand.u32 %v103, 4294901760
    %v269 = vsub.f32 %v103, %v268
    %v270 = vand.u32 %v269, 4294901760
    %v271 = vsub.f32 %v269, %v270
    %v272 = vand.u32 %v271, 4294901760
    %273 = vmatpush1.msra.mxu0 %v272
    %274 = vmatprep.subr.mxu0 0.0
    %v275 = vand.u32 %v104, 4294901760
    %v276 = vsub.f32 %v104, %v275
    %v277 = vand.u32 %v276, 4294901760
    %v278 = vsub.f32 %v276, %v277
    %v279 = vand.u32 %v278, 4294901760
    %280 = vmatpush1.msra.mxu0 %v279
    %281 = vmatprep.subr.mxu0 0.0
    %v282 = vand.u32 %v105, 4294901760
    %v283 = vsub.f32 %v105, %v282
    %v284 = vand.u32 %v283, 4294901760
    %v285 = vsub.f32 %v283, %v284
    %v286 = vand.u32 %v285, 4294901760
    %287 = vmatpush1.msra.mxu0 %v286
    %288 = vmatprep.subr.mxu0 0.0
    %v289 = vand.u32 %v106, 4294901760
    %v290 = vsub.f32 %v106, %v289
    %v291 = vand.u32 %v290, 4294901760
    %v292 = vsub.f32 %v290, %v291
    %v293 = vand.u32 %v292, 4294901760
    %294 = vmatpush1.msra.mxu0 %v293
    %295 = vmatprep.subr.mxu0 0.0
    %v296 = vand.u32 %v107, 4294901760
    %v297 = vsub.f32 %v107, %v296
    %v298 = vand.u32 %v297, 4294901760
    %v299 = vsub.f32 %v297, %v298
    %v300 = vand.u32 %v299, 4294901760
    %301 = vmatpush1.msra.mxu0 %v300
    %302 = vmatprep.subr.mxu0 0.0
    %v303 = vand.u32 %v108, 4294901760
    %v304 = vsub.f32 %v108, %v303
    %v305 = vand.u32 %v304, 4294901760
    %v306 = vsub.f32 %v304, %v305
    %v307 = vand.u32 %v306, 4294901760
    %308 = vmatpush1.msra.mxu0 %v307
    %309 = vmatprep.subr.mxu0 0.0
    %v310 = vand.u32 %v109, 4294901760
    %v311 = vsub.f32 %v109, %v310
    %v312 = vand.u32 %v311, 4294901760
    %v313 = vsub.f32 %v311, %v312
    %v314 = vand.u32 %v313, 4294901760
    %315 = vmatpush1.msra.mxu0 %v314
    %316 = vmatprep.subr.mxu0 0.0
    %v317 = vand.u32 %v110, 4294901760
    %v318 = vsub.f32 %v110, %v317
    %v319 = vand.u32 %v318, 4294901760
    %v320 = vsub.f32 %v318, %v319
    %v321 = vand.u32 %v320, 4294901760
    %322 = vmatpush1.msra.mxu0 %v321
    %323 = vmatprep.subr.mxu0 0.0
    %v324 = vand.u32 %v111, 4294901760
    %v325 = vsub.f32 %v111, %v324
    %v326 = vand.u32 %v325, 4294901760
    %v327 = vsub.f32 %v325, %v326
    %v328 = vand.u32 %v327, 4294901760
    %329 = vmatpush1.msra.mxu0 %v328
    %330 = vmatprep.subr.mxu0 0.0
    %v331 = vand.u32 %v112, 4294901760
    %v332 = vsub.f32 %v112, %v331
    %v333 = vand.u32 %v332, 4294901760
    %v334 = vsub.f32 %v332, %v333
    %v335 = vand.u32 %v334, 4294901760
    %336 = vmatpush1.msra.mxu0 %v335
    %337 = vmatprep.subr.mxu0 0.0
    %v338 = vand.u32 %v113, 4294901760
    %v339 = vsub.f32 %v113, %v338
    %v340 = vand.u32 %v339, 4294901760
    %v341 = vsub.f32 %v339, %v340
    %v342 = vand.u32 %v341, 4294901760
    %343 = vmatpush1.msra.mxu0 %v342
    %344 = vmatprep.subr.mxu0 0.0
    %v345 = vand.u32 %v114, 4294901760
    %v346 = vsub.f32 %v114, %v345
    %v347 = vand.u32 %v346, 4294901760
    %v348 = vsub.f32 %v346, %v347
    %v349 = vand.u32 %v348, 4294901760
    %350 = vmatpush1.msra.mxu0 %v349
    %351 = vmatprep.subr.mxu0 0.0
    %v352 = vand.u32 %v115, 4294901760
    %v353 = vsub.f32 %v115, %v352
    %v354 = vand.u32 %v353, 4294901760
    %v355 = vsub.f32 %v353, %v354
    %v356 = vand.u32 %v355, 4294901760
    %357 = vmatpush1.msra.mxu0 %v356
    %358 = vmatprep.subr.mxu0 0.0
    %v359 = vand.u32 %v116, 4294901760
    %v360 = vsub.f32 %v116, %v359
    %v361 = vand.u32 %v360, 4294901760
    %v362 = vsub.f32 %v360, %v361
    %v363 = vand.u32 %v362, 4294901760
    %364 = vmatpush1.msra.mxu0 %v363
    %365 = vmatprep.subr.mxu0 0.0
    %v366 = vand.u32 %v117, 4294901760
    %v367 = vsub.f32 %v117, %v366
    %v368 = vand.u32 %v367, 4294901760
    %v369 = vsub.f32 %v367, %v368
    %v370 = vand.u32 %v369, 4294901760
    %371 = vmatpush1.msra.mxu0 %v370
    %372 = vmatprep.subr.mxu0 0.0
    %373 = vmatpush1.msra.mxu0 0.0
    %374 = vmatprep.subr.mxu0 0.0
    %375 = vmatpush1.msra.mxu0 0.0
    %376 = vmatprep.subr.mxu0 0.0
    %377 = vmatpush1.msra.mxu0 0.0
    %378 = vmatprep.subr.mxu0 0.0
    %379 = vmatpush1.msra.mxu0 0.0
    %380 = vmatprep.subr.mxu0 0.0
    %381 = vmatpush1.msra.mxu0 0.0
    %382 = vmatprep.subr.mxu0 0.0
    %383 = vmatpush1.msra.mxu0 0.0
    %384 = vmatprep.subr.mxu0 0.0
    %385 = vmatpush1.msra.mxu0 0.0
    %386 = vmatprep.subr.mxu0 0.0
    %387 = vmatpush1.msra.mxu0 0.0
    %388 = vmatprep.subr.mxu0 0.0
    %389 = vmatpush1.msra.mxu0 0.0
    %390 = vmatprep.subr.mxu0 0.0
    %391 = vmatpush1.msra.mxu0 0.0
    %392 = vmatprep.subr.mxu0 0.0
    %393 = vmatpush1.msra.mxu0 0.0
    %394 = vmatprep.subr.mxu0 0.0
    %395 = vmatpush1.msra.mxu0 0.0
    %396 = vmatprep.subr.mxu0 0.0
    %397 = vmatpush1.msra.mxu0 0.0
    %398 = vmatprep.subr.mxu0 0.0
    %399 = vmatpush1.msra.mxu0 0.0
    %400 = vmatprep.subr.mxu0 0.0
    %401 = vmatpush1.msra.mxu0 0.0
    %402 = vmatprep.subr.mxu0 0.0
    %403 = vmatpush1.msra.mxu0 0.0
    %404 = vmatprep.mubr.f32.mxu0 0.0
    %v405 = vand.u32 %v98, 4294901760
    %406 = vmatmul.mubr.f32.gmra.mrb[0].mxu0 %v405
    %v407 = vpop.f32.mrb[0].mxu0
    %v408 = vadd.f32 %v247, %v407
    %v409 = vpop.f32.mrb[0].mxu0
    %410 = vmatprep.mubr.f32.mxu0 0.0
    %v411 = vand.u32 %v99, 4294901760
    %412 = vmatmul.mubr.f32.gmra.mrb[0].mxu0 %v411
    %v413 = vpop.f32.mrb[0].mxu0
    %v414 = vadd.f32 %v257, %v413
    %v415 = vpop.f32.mrb[0].mxu0
    %416 = vdwg.mxu0
    %417 = vmatprep.subr.mxu0 0.0
    %v418 = vand.u32 %v102, 4294901760
    %v419 = vsub.f32 %v102, %v418
    %420 = vmatpush1.msra.mxu0 %v419
    %421 = vmatprep.subr.mxu0 0.0
    %v422 = vand.u32 %v103, 4294901760
    %v423 = vsub.f32 %v103, %v422
    %424 = vmatpush1.msra.mxu0 %v423
    %425 = vmatprep.subr.mxu0 0.0
    %v426 = vand.u32 %v104, 4294901760
    %v427 = vsub.f32 %v104, %v426
    %428 = vmatpush1.msra.mxu0 %v427
    %429 = vmatprep.subr.mxu0 0.0
    %v430 = vand.u32 %v105, 4294901760
    %v431 = vsub.f32 %v105, %v430
    %432 = vmatpush1.msra.mxu0 %v431
    %433 = vmatprep.subr.mxu0 0.0
    %v434 = vand.u32 %v106, 4294901760
    %v435 = vsub.f32 %v106, %v434
    %436 = vmatpush1.msra.mxu0 %v435
    %437 = vmatprep.subr.mxu0 0.0
    %v438 = vand.u32 %v107, 4294901760
    %v439 = vsub.f32 %v107, %v438
    %440 = vmatpush1.msra.mxu0 %v439
    %441 = vmatprep.subr.mxu0 0.0
    %v442 = vand.u32 %v108, 4294901760
    %v443 = vsub.f32 %v108, %v442
    %444 = vmatpush1.msra.mxu0 %v443
    %445 = vmatprep.subr.mxu0 0.0
    %v446 = vand.u32 %v109, 4294901760
    %v447 = vsub.f32 %v109, %v446
    %448 = vmatpush1.msra.mxu0 %v447
    %449 = vmatprep.subr.mxu0 0.0
    %v450 = vand.u32 %v110, 4294901760
    %v451 = vsub.f32 %v110, %v450
    %452 = vmatpush1.msra.mxu0 %v451
    %453 = vmatprep.subr.mxu0 0.0
    %v454 = vand.u32 %v111, 4294901760
    %v455 = vsub.f32 %v111, %v454
    %456 = vmatpush1.msra.mxu0 %v455
    %457 = vmatprep.subr.mxu0 0.0
    %v458 = vand.u32 %v112, 4294901760
    %v459 = vsub.f32 %v112, %v458
    %460 = vmatpush1.msra.mxu0 %v459
    %461 = vmatprep.subr.mxu0 0.0
    %v462 = vand.u32 %v113, 4294901760
    %v463 = vsub.f32 %v113, %v462
    %464 = vmatpush1.msra.mxu0 %v463
    %465 = vmatprep.subr.mxu0 0.0
    %v466 = vand.u32 %v114, 4294901760
    %v467 = vsub.f32 %v114, %v466
    %468 = vmatpush1.msra.mxu0 %v467
    %469 = vmatprep.subr.mxu0 0.0
    %v470 = vand.u32 %v115, 4294901760
    %v471 = vsub.f32 %v115, %v470
    %472 = vmatpush1.msra.mxu0 %v471
    %473 = vmatprep.subr.mxu0 0.0
    %v474 = vand.u32 %v116, 4294901760
    %v475 = vsub.f32 %v116, %v474
    %476 = vmatpush1.msra.mxu0 %v475
    %477 = vmatprep.subr.mxu0 0.0
    %v478 = vand.u32 %v117, 4294901760
    %v479 = vsub.f32 %v117, %v478
    %480 = vmatpush1.msra.mxu0 %v479
    %481 = vmatprep.subr.mxu0 0.0
    %482 = vmatpush1.msra.mxu0 0.0
    %483 = vmatprep.subr.mxu0 0.0
    %484 = vmatpush1.msra.mxu0 0.0
    %485 = vmatprep.subr.mxu0 0.0
    %486 = vmatpush1.msra.mxu0 0.0
    %487 = vmatprep.subr.mxu0 0.0
    %488 = vmatpush1.msra.mxu0 0.0
    %489 = vmatprep.subr.mxu0 0.0
    %490 = vmatpush1.msra.mxu0 0.0
    %491 = vmatprep.subr.mxu0 0.0
    %492 = vmatpush1.msra.mxu0 0.0
    %493 = vmatprep.subr.mxu0 0.0
    %494 = vmatpush1.msra.mxu0 0.0
    %495 = vmatprep.subr.mxu0 0.0
    %496 = vmatpush1.msra.mxu0 0.0
    %497 = vmatprep.subr.mxu0 0.0
    %498 = vmatpush1.msra.mxu0 0.0
    %499 = vmatprep.subr.mxu0 0.0
    %500 = vmatpush1.msra.mxu0 0.0
    %501 = vmatprep.subr.mxu0 0.0
    %502 = vmatpush1.msra.mxu0 0.0
    %503 = vmatprep.subr.mxu0 0.0
    %504 = vmatpush1.msra.mxu0 0.0
    %505 = vmatprep.subr.mxu0 0.0
    %506 = vmatpush1.msra.mxu0 0.0
    %507 = vmatprep.subr.mxu0 0.0
    %508 = vmatpush1.msra.mxu0 0.0
    %509 = vmatprep.subr.mxu0 0.0
    %510 = vmatpush1.msra.mxu0 0.0
    %511 = vmatprep.subr.mxu0 0.0
    %512 = vmatpush1.msra.mxu0 0.0
    %513 = vmatprep.mubr.f32.mxu0 0.0
    %v514 = vand.u32 %v98, 4294901760
    %v515 = vsub.f32 %v98, %v514
    %516 = vmatmul.mubr.f32.gmra.mrb[0].mxu0 %v515
    %v517 = vpop.f32.mrb[0].mxu0
    %v518 = vadd.f32 %v408, %v517
    %v519 = vpop.f32.mrb[0].mxu0
    %520 = vmatprep.mubr.f32.mxu0 0.0
    %v521 = vand.u32 %v99, 4294901760
    %v522 = vsub.f32 %v99, %v521
    %523 = vmatmul.mubr.f32.gmra.mrb[0].mxu0 %v522
    %v524 = vpop.f32.mrb[0].mxu0
    %v525 = vadd.f32 %v414, %v524
    %v526 = vpop.f32.mrb[0].mxu0
    %527 = vdwg.mxu0
    %528 = vmatprep.subr.mxu0 0.0
    %v529 = vand.u32 %v102, 4294901760
    %530 = vmatpush1.msra.mxu0 %v529
    %531 = vmatprep.subr.mxu0 0.0
    %v532 = vand.u32 %v103, 4294901760
    %533 = vmatpush1.msra.mxu0 %v532
    %534 = vmatprep.subr.mxu0 0.0
    %v535 = vand.u32 %v104, 4294901760
    %536 = vmatpush1.msra.mxu0 %v535
    %537 = vmatprep.subr.mxu0 0.0
    %v538 = vand.u32 %v105, 4294901760
    %539 = vmatpush1.msra.mxu0 %v538
    %540 = vmatprep.subr.mxu0 0.0
    %v541 = vand.u32 %v106, 4294901760
    %542 = vmatpush1.msra.mxu0 %v541
    %543 = vmatprep.subr.mxu0 0.0
    %v544 = vand.u32 %v107, 4294901760
    %545 = vmatpush1.msra.mxu0 %v544
    %546 = vmatprep.subr.mxu0 0.0
    %v547 = vand.u32 %v108, 4294901760
    %548 = vmatpush1.msra.mxu0 %v547
    %549 = vmatprep.subr.mxu0 0.0
    %v550 = vand.u32 %v109, 4294901760
    %551 = vmatpush1.msra.mxu0 %v550
    %552 = vmatprep.subr.mxu0 0.0
    %v553 = vand.u32 %v110, 4294901760
    %554 = vmatpush1.msra.mxu0 %v553
    %555 = vmatprep.subr.mxu0 0.0
    %v556 = vand.u32 %v111, 4294901760
    %557 = vmatpush1.msra.mxu0 %v556
    %558 = vmatprep.subr.mxu0 0.0
    %v559 = vand.u32 %v112, 4294901760
    %560 = vmatpush1.msra.mxu0 %v559
    %561 = vmatprep.subr.mxu0 0.0
    %v562 = vand.u32 %v113, 4294901760
    %563 = vmatpush1.msra.mxu0 %v562
    %564 = vmatprep.subr.mxu0 0.0
    %v565 = vand.u32 %v114, 4294901760
    %566 = vmatpush1.msra.mxu0 %v565
    %567 = vmatprep.subr.mxu0 0.0
    %v568 = vand.u32 %v115, 4294901760
    %569 = vmatpush1.msra.mxu0 %v568
    %570 = vmatprep.subr.mxu0 0.0
    %v571 = vand.u32 %v116, 4294901760
    %572 = vmatpush1.msra.mxu0 %v571
    %573 = vmatprep.subr.mxu0 0.0
    %v574 = vand.u32 %v117, 4294901760
    %575 = vmatpush1.msra.mxu0 %v574
    %576 = vmatprep.subr.mxu0 0.0
    %577 = vmatpush1.msra.mxu0 0.0
    %578 = vmatprep.subr.mxu0 0.0
    %579 = vmatpush1.msra.mxu0 0.0
    %580 = vmatprep.subr.mxu0 0.0
    %581 = vmatpush1.msra.mxu0 0.0
    %582 = vmatprep.subr.mxu0 0.0
    %583 = vmatpush1.msra.mxu0 0.0
    %584 = vmatprep.subr.mxu0 0.0
    %585 = vmatpush1.msra.mxu0 0.0
    %586 = vmatprep.subr.mxu0 0.0
    %587 = vmatpush1.msra.mxu0 0.0
    %588 = vmatprep.subr.mxu0 0.0
    %589 = vmatpush1.msra.mxu0 0.0
    %590 = vmatprep.subr.mxu0 0.0
    %591 = vmatpush1.msra.mxu0 0.0
    %592 = vmatprep.subr.mxu0 0.0
    %593 = vmatpush1.msra.mxu0 0.0
    %594 = vmatprep.subr.mxu0 0.0
    %595 = vmatpush1.msra.mxu0 0.0
    %596 = vmatprep.subr.mxu0 0.0
    %597 = vmatpush1.msra.mxu0 0.0
    %598 = vmatprep.subr.mxu0 0.0
    %599 = vmatpush1.msra.mxu0 0.0
    %600 = vmatprep.subr.mxu0 0.0
    %601 = vmatpush1.msra.mxu0 0.0
    %602 = vmatprep.subr.mxu0 0.0
    %603 = vmatpush1.msra.mxu0 0.0
    %604 = vmatprep.subr.mxu0 0.0
    %605 = vmatpush1.msra.mxu0 0.0
    %606 = vmatprep.subr.mxu0 0.0
    %607 = vmatpush1.msra.mxu0 0.0
    %608 = vmatprep.mubr.f32.mxu0 0.0
    %v609 = vand.u32 %v98, 4294901760
    %v610 = vsub.f32 %v98, %v609
    %v611 = vand.u32 %v610, 4294901760
    %612 = vmatmul.mubr.f32.gmra.mrb[0].mxu0 %v611
    %v613 = vpop.f32.mrb[0].mxu0
    %v614 = vadd.f32 %v518, %v613
    %v615 = vpop.f32.mrb[0].mxu0
    %616 = vmatprep.mubr.f32.mxu0 0.0
    %v617 = vand.u32 %v99, 4294901760
    %v618 = vsub.f32 %v99, %v617
    %v619 = vand.u32 %v618, 4294901760
    %620 = vmatmul.mubr.f32.gmra.mrb[0].mxu0 %v619
    %v621 = vpop.f32.mrb[0].mxu0
    %v622 = vadd.f32 %v525, %v621
    %v623 = vpop.f32.mrb[0].mxu0
    %624 = vdwg.mxu0
    %625 = vmatprep.subr.mxu0 0.0
    %v626 = vand.u32 %v102, 4294901760
    %v627 = vsub.f32 %v102, %v626
    %v628 = vand.u32 %v627, 4294901760
    %629 = vmatpush1.msra.mxu0 %v628
    %630 = vmatprep.subr.mxu0 0.0
    %v631 = vand.u32 %v103, 4294901760
    %v632 = vsub.f32 %v103, %v631
    %v633 = vand.u32 %v632, 4294901760
    %634 = vmatpush1.msra.mxu0 %v633
    %635 = vmatprep.subr.mxu0 0.0
    %v636 = vand.u32 %v104, 4294901760
    %v637 = vsub.f32 %v104, %v636
    %v638 = vand.u32 %v637, 4294901760
    %639 = vmatpush1.msra.mxu0 %v638
    %640 = vmatprep.subr.mxu0 0.0
    %v641 = vand.u32 %v105, 4294901760
    %v642 = vsub.f32 %v105, %v641
    %v643 = vand.u32 %v642, 4294901760
    %644 = vmatpush1.msra.mxu0 %v643
    %645 = vmatprep.subr.mxu0 0.0
    %v646 = vand.u32 %v106, 4294901760
    %v647 = vsub.f32 %v106, %v646
    %v648 = vand.u32 %v647, 4294901760
    %649 = vmatpush1.msra.mxu0 %v648
    %650 = vmatprep.subr.mxu0 0.0
    %v651 = vand.u32 %v107, 4294901760
    %v652 = vsub.f32 %v107, %v651
    %v653 = vand.u32 %v652, 4294901760
    %654 = vmatpush1.msra.mxu0 %v653
    %655 = vmatprep.subr.mxu0 0.0
    %v656 = vand.u32 %v108, 4294901760
    %v657 = vsub.f32 %v108, %v656
    %v658 = vand.u32 %v657, 4294901760
    %659 = vmatpush1.msra.mxu0 %v658
    %660 = vmatprep.subr.mxu0 0.0
    %v661 = vand.u32 %v109, 4294901760
    %v662 = vsub.f32 %v109, %v661
    %v663 = vand.u32 %v662, 4294901760
    %664 = vmatpush1.msra.mxu0 %v663
    %665 = vmatprep.subr.mxu0 0.0
    %v666 = vand.u32 %v110, 4294901760
    %v667 = vsub.f32 %v110, %v666
    %v668 = vand.u32 %v667, 4294901760
    %669 = vmatpush1.msra.mxu0 %v668
    %670 = vmatprep.subr.mxu0 0.0
    %v671 = vand.u32 %v111, 4294901760
    %v672 = vsub.f32 %v111, %v671
    %v673 = vand.u32 %v672, 4294901760
    %674 = vmatpush1.msra.mxu0 %v673
    %675 = vmatprep.subr.mxu0 0.0
    %v676 = vand.u32 %v112, 4294901760
    %v677 = vsub.f32 %v112, %v676
    %v678 = vand.u32 %v677, 4294901760
    %679 = vmatpush1.msra.mxu0 %v678
    %680 = vmatprep.subr.mxu0 0.0
    %v681 = vand.u32 %v113, 4294901760
    %v682 = vsub.f32 %v113, %v681
    %v683 = vand.u32 %v682, 4294901760
    %684 = vmatpush1.msra.mxu0 %v683
    %685 = vmatprep.subr.mxu0 0.0
    %v686 = vand.u32 %v114, 4294901760
    %v687 = vsub.f32 %v114, %v686
    %v688 = vand.u32 %v687, 4294901760
    %689 = vmatpush1.msra.mxu0 %v688
    %690 = vmatprep.subr.mxu0 0.0
    %v691 = vand.u32 %v115, 4294901760
    %v692 = vsub.f32 %v115, %v691
    %v693 = vand.u32 %v692, 4294901760
    %694 = vmatpush1.msra.mxu0 %v693
    %695 = vmatprep.subr.mxu0 0.0
    %v696 = vand.u32 %v116, 4294901760
    %v697 = vsub.f32 %v116, %v696
    %v698 = vand.u32 %v697, 4294901760
    %699 = vmatpush1.msra.mxu0 %v698
    %700 = vmatprep.subr.mxu0 0.0
    %v701 = vand.u32 %v117, 4294901760
    %v702 = vsub.f32 %v117, %v701
    %v703 = vand.u32 %v702, 4294901760
    %704 = vmatpush1.msra.mxu0 %v703
    %705 = vmatprep.subr.mxu0 0.0
    %706 = vmatpush1.msra.mxu0 0.0
    %707 = vmatprep.subr.mxu0 0.0
    %708 = vmatpush1.msra.mxu0 0.0
    %709 = vmatprep.subr.mxu0 0.0
    %710 = vmatpush1.msra.mxu0 0.0
    %711 = vmatprep.subr.mxu0 0.0
    %712 = vmatpush1.msra.mxu0 0.0
    %713 = vmatprep.subr.mxu0 0.0
    %714 = vmatpush1.msra.mxu0 0.0
    %715 = vmatprep.subr.mxu0 0.0
    %716 = vmatpush1.msra.mxu0 0.0
    %717 = vmatprep.subr.mxu0 0.0
    %718 = vmatpush1.msra.mxu0 0.0
    %719 = vmatprep.subr.mxu0 0.0
    %720 = vmatpush1.msra.mxu0 0.0
    %721 = vmatprep.subr.mxu0 0.0
    %722 = vmatpush1.msra.mxu0 0.0
    %723 = vmatprep.subr.mxu0 0.0
    %724 = vmatpush1.msra.mxu0 0.0
    %725 = vmatprep.subr.mxu0 0.0
    %726 = vmatpush1.msra.mxu0 0.0
    %727 = vmatprep.subr.mxu0 0.0
    %728 = vmatpush1.msra.mxu0 0.0
    %729 = vmatprep.subr.mxu0 0.0
    %730 = vmatpush1.msra.mxu0 0.0
    %731 = vmatprep.subr.mxu0 0.0
    %732 = vmatpush1.msra.mxu0 0.0
    %733 = vmatprep.subr.mxu0 0.0
    %734 = vmatpush1.msra.mxu0 0.0
    %735 = vmatprep.subr.mxu0 0.0
    %736 = vmatpush1.msra.mxu0 0.0
    %737 = vmatprep.mubr.f32.mxu0 0.0
    %v738 = vand.u32 %v98, 4294901760
    %739 = vmatmul.mubr.f32.gmra.mrb[0].mxu0 %v738
    %v740 = vpop.f32.mrb[0].mxu0
    %v741 = vadd.f32 %v614, %v740
    %v742 = vpop.f32.mrb[0].mxu0
    %743 = vmatprep.mubr.f32.mxu0 0.0
    %v744 = vand.u32 %v99, 4294901760
    %745 = vmatmul.mubr.f32.gmra.mrb[0].mxu0 %v744
    %v746 = vpop.f32.mrb[0].mxu0
    %v747 = vadd.f32 %v622, %v746
    %v748 = vpop.f32.mrb[0].mxu0
    %749 = vdwg.mxu0
    %750 = vmatprep.subr.mxu0 0.0
    %v751 = vand.u32 %v102, 4294901760
    %752 = vmatpush1.msra.mxu0 %v751
    %753 = vmatprep.subr.mxu0 0.0
    %v754 = vand.u32 %v103, 4294901760
    %755 = vmatpush1.msra.mxu0 %v754
    %756 = vmatprep.subr.mxu0 0.0
    %v757 = vand.u32 %v104, 4294901760
    %758 = vmatpush1.msra.mxu0 %v757
    %759 = vmatprep.subr.mxu0 0.0
    %v760 = vand.u32 %v105, 4294901760
    %761 = vmatpush1.msra.mxu0 %v760
    %762 = vmatprep.subr.mxu0 0.0
    %v763 = vand.u32 %v106, 4294901760
    %764 = vmatpush1.msra.mxu0 %v763
    %765 = vmatprep.subr.mxu0 0.0
    %v766 = vand.u32 %v107, 4294901760
    %767 = vmatpush1.msra.mxu0 %v766
    %768 = vmatprep.subr.mxu0 0.0
    %v769 = vand.u32 %v108, 4294901760
    %770 = vmatpush1.msra.mxu0 %v769
    %771 = vmatprep.subr.mxu0 0.0
    %v772 = vand.u32 %v109, 4294901760
    %773 = vmatpush1.msra.mxu0 %v772
    %774 = vmatprep.subr.mxu0 0.0
    %v775 = vand.u32 %v110, 4294901760
    %776 = vmatpush1.msra.mxu0 %v775
    %777 = vmatprep.subr.mxu0 0.0
    %v778 = vand.u32 %v111, 4294901760
    %779 = vmatpush1.msra.mxu0 %v778
    %780 = vmatprep.subr.mxu0 0.0
    %v781 = vand.u32 %v112, 4294901760
    %782 = vmatpush1.msra.mxu0 %v781
    %783 = vmatprep.subr.mxu0 0.0
    %v784 = vand.u32 %v113, 4294901760
    %785 = vmatpush1.msra.mxu0 %v784
    %786 = vmatprep.subr.mxu0 0.0
    %v787 = vand.u32 %v114, 4294901760
    %788 = vmatpush1.msra.mxu0 %v787
    %789 = vmatprep.subr.mxu0 0.0
    %v790 = vand.u32 %v115, 4294901760
    %791 = vmatpush1.msra.mxu0 %v790
    %792 = vmatprep.subr.mxu0 0.0
    %v793 = vand.u32 %v116, 4294901760
    %794 = vmatpush1.msra.mxu0 %v793
    %795 = vmatprep.subr.mxu0 0.0
    %v796 = vand.u32 %v117, 4294901760
    %797 = vmatpush1.msra.mxu0 %v796
    %798 = vmatprep.subr.mxu0 0.0
    %799 = vmatpush1.msra.mxu0 0.0
    %800 = vmatprep.subr.mxu0 0.0
    %801 = vmatpush1.msra.mxu0 0.0
    %802 = vmatprep.subr.mxu0 0.0
    %803 = vmatpush1.msra.mxu0 0.0
    %804 = vmatprep.subr.mxu0 0.0
    %805 = vmatpush1.msra.mxu0 0.0
    %806 = vmatprep.subr.mxu0 0.0
    %807 = vmatpush1.msra.mxu0 0.0
    %808 = vmatprep.subr.mxu0 0.0
    %809 = vmatpush1.msra.mxu0 0.0
    %810 = vmatprep.subr.mxu0 0.0
    %811 = vmatpush1.msra.mxu0 0.0
    %812 = vmatprep.subr.mxu0 0.0
    %813 = vmatpush1.msra.mxu0 0.0
    %814 = vmatprep.subr.mxu0 0.0
    %815 = vmatpush1.msra.mxu0 0.0
    %816 = vmatprep.subr.mxu0 0.0
    %817 = vmatpush1.msra.mxu0 0.0
    %818 = vmatprep.subr.mxu0 0.0
    %819 = vmatpush1.msra.mxu0 0.0
    %820 = vmatprep.subr.mxu0 0.0
    %821 = vmatpush1.msra.mxu0 0.0
    %822 = vmatprep.subr.mxu0 0.0
    %823 = vmatpush1.msra.mxu0 0.0
    %824 = vmatprep.subr.mxu0 0.0
    %825 = vmatpush1.msra.mxu0 0.0
    %826 = vmatprep.subr.mxu0 0.0
    %827 = vmatpush1.msra.mxu0 0.0
    %828 = vmatprep.subr.mxu0 0.0
    %829 = vmatpush1.msra.mxu0 0.0
    %830 = vmatprep.mubr.f32.mxu0 0.0
    %v831 = vand.u32 %v98, 4294901760
    %832 = vmatmul.mubr.f32.gmra.mrb[0].mxu0 %v831
    %v833 = vpop.f32.mrb[0].mxu0
    %v834 = vadd.f32 %v741, %v833
    %v835 = vpop.f32.mrb[0].mxu0
    %836 = vmatprep.mubr.f32.mxu0 0.0
    %v837 = vand.u32 %v99, 4294901760
    %838 = vmatmul.mubr.f32.gmra.mrb[0].mxu0 %v837
    %v839 = vpop.f32.mrb[0].mxu0
    %v840 = vadd.f32 %v747, %v839
    %v841 = vpop.f32.mrb[0].mxu0
    %842 = vdwg.mxu0
    %v844 = vlaneseq
    %v845 = vshrl.u32 %v844, 7
    %v846 = vsub.s32 0, %v845
    %v847 = vrot.slane %v151, %v846
    %849 = vmatprep.subr.mxu0 0.0
    %v850 = vand.u32 %v118, 4294901760
    %851 = vmatpush1.msra.mxu0 %v850
    %852 = vmatprep.subr.mxu0 0.0
    %v853 = vand.u32 %v119, 4294901760
    %854 = vmatpush1.msra.mxu0 %v853
    %855 = vmatprep.subr.mxu0 0.0
    %v856 = vand.u32 %v120, 4294901760
    %857 = vmatpush1.msra.mxu0 %v856
    %858 = vmatprep.subr.mxu0 0.0
    %v859 = vand.u32 %v121, 4294901760
    %860 = vmatpush1.msra.mxu0 %v859
    %861 = vmatprep.subr.mxu0 0.0
    %v862 = vand.u32 %v122, 4294901760
    %863 = vmatpush1.msra.mxu0 %v862
    %864 = vmatprep.subr.mxu0 0.0
    %v865 = vand.u32 %v123, 4294901760
    %866 = vmatpush1.msra.mxu0 %v865
    %867 = vmatprep.subr.mxu0 0.0
    %v868 = vand.u32 %v124, 4294901760
    %869 = vmatpush1.msra.mxu0 %v868
    %870 = vmatprep.subr.mxu0 0.0
    %v871 = vand.u32 %v125, 4294901760
    %872 = vmatpush1.msra.mxu0 %v871
    %873 = vmatprep.subr.mxu0 0.0
    %v874 = vand.u32 %v126, 4294901760
    %875 = vmatpush1.msra.mxu0 %v874
    %876 = vmatprep.subr.mxu0 0.0
    %v877 = vand.u32 %v127, 4294901760
    %878 = vmatpush1.msra.mxu0 %v877
    %879 = vmatprep.subr.mxu0 0.0
    %v880 = vand.u32 %v128, 4294901760
    %881 = vmatpush1.msra.mxu0 %v880
    %882 = vmatprep.subr.mxu0 0.0
    %v883 = vand.u32 %v129, 4294901760
    %884 = vmatpush1.msra.mxu0 %v883
    %885 = vmatprep.subr.mxu0 0.0
    %v886 = vand.u32 %v130, 4294901760
    %887 = vmatpush1.msra.mxu0 %v886
    %888 = vmatprep.subr.mxu0 0.0
    %v889 = vand.u32 %v131, 4294901760
    %890 = vmatpush1.msra.mxu0 %v889
    %891 = vmatprep.subr.mxu0 0.0
    %v892 = vand.u32 %v132, 4294901760
    %893 = vmatpush1.msra.mxu0 %v892
    %894 = vmatprep.subr.mxu0 0.0
    %v895 = vand.u32 %v133, 4294901760
    %896 = vmatpush1.msra.mxu0 %v895
    %897 = vmatprep.subr.mxu0 0.0
    %898 = vmatpush1.msra.mxu0 0.0
    %899 = vmatprep.subr.mxu0 0.0
    %900 = vmatpush1.msra.mxu0 0.0
    %901 = vmatprep.subr.mxu0 0.0
    %902 = vmatpush1.msra.mxu0 0.0
    %903 = vmatprep.subr.mxu0 0.0
    %904 = vmatpush1.msra.mxu0 0.0
    %905 = vmatprep.subr.mxu0 0.0
    %906 = vmatpush1.msra.mxu0 0.0
    %907 = vmatprep.subr.mxu0 0.0
    %908 = vmatpush1.msra.mxu0 0.0
    %909 = vmatprep.subr.mxu0 0.0
    %910 = vmatpush1.msra.mxu0 0.0
    %911 = vmatprep.subr.mxu0 0.0
    %912 = vmatpush1.msra.mxu0 0.0
    %913 = vmatprep.subr.mxu0 0.0
    %914 = vmatpush1.msra.mxu0 0.0
    %915 = vmatprep.subr.mxu0 0.0
    %916 = vmatpush1.msra.mxu0 0.0
    %917 = vmatprep.subr.mxu0 0.0
    %918 = vmatpush1.msra.mxu0 0.0
    %919 = vmatprep.subr.mxu0 0.0
    %920 = vmatpush1.msra.mxu0 0.0
    %921 = vmatprep.subr.mxu0 0.0
    %922 = vmatpush1.msra.mxu0 0.0
    %923 = vmatprep.subr.mxu0 0.0
    %924 = vmatpush1.msra.mxu0 0.0
    %925 = vmatprep.subr.mxu0 0.0
    %926 = vmatpush1.msra.mxu0 0.0
    %927 = vmatprep.subr.mxu0 0.0
    %928 = vmatpush1.msra.mxu0 0.0
    %929 = vmatprep.mubr.f32.mxu0 0.0
    %v930 = vand.u32 %v100, 4294901760
    %v931 = vsub.f32 %v100, %v930
    %v932 = vand.u32 %v931, 4294901760
    %v933 = vsub.f32 %v931, %v932
    %v934 = vand.u32 %v933, 4294901760
    %935 = vmatmul.mubr.f32.gmra.mrb[0].mxu0 %v934
    %v936 = vpop.f32.mrb[0].mxu0
    %v937 = vadd.f32 %v847, %v936
    %v938 = vpop.f32.mrb[0].mxu0
    %939 = vmatprep.mubr.f32.mxu0 0.0
    %v940 = vand.u32 %v101, 4294901760
    %v941 = vsub.f32 %v101, %v940
    %v942 = vand.u32 %v941, 4294901760
    %v943 = vsub.f32 %v941, %v942
    %v944 = vand.u32 %v943, 4294901760
    %945 = vmatmul.mubr.f32.gmra.mrb[0].mxu0 %v944
    %v946 = vpop.f32.mrb[0].mxu0
    %v947 = vadd.f32 %v847, %v946
    %v948 = vpop.f32.mrb[0].mxu0
    %949 = vdwg.mxu0
    %950 = vmatprep.subr.mxu0 0.0
    %v951 = vand.u32 %v118, 4294901760
    %v952 = vsub.f32 %v118, %v951
    %v953 = vand.u32 %v952, 4294901760
    %v954 = vsub.f32 %v952, %v953
    %v955 = vand.u32 %v954, 4294901760
    %956 = vmatpush1.msra.mxu0 %v955
    %957 = vmatprep.subr.mxu0 0.0
    %v958 = vand.u32 %v119, 4294901760
    %v959 = vsub.f32 %v119, %v958
    %v960 = vand.u32 %v959, 4294901760
    %v961 = vsub.f32 %v959, %v960
    %v962 = vand.u32 %v961, 4294901760
    %963 = vmatpush1.msra.mxu0 %v962
    %964 = vmatprep.subr.mxu0 0.0
    %v965 = vand.u32 %v120, 4294901760
    %v966 = vsub.f32 %v120, %v965
    %v967 = vand.u32 %v966, 4294901760
    %v968 = vsub.f32 %v966, %v967
    %v969 = vand.u32 %v968, 4294901760
    %970 = vmatpush1.msra.mxu0 %v969
    %971 = vmatprep.subr.mxu0 0.0
    %v972 = vand.u32 %v121, 4294901760
    %v973 = vsub.f32 %v121, %v972
    %v974 = vand.u32 %v973, 4294901760
    %v975 = vsub.f32 %v973, %v974
    %v976 = vand.u32 %v975, 4294901760
    %977 = vmatpush1.msra.mxu0 %v976
    %978 = vmatprep.subr.mxu0 0.0
    %v979 = vand.u32 %v122, 4294901760
    %v980 = vsub.f32 %v122, %v979
    %v981 = vand.u32 %v980, 4294901760
    %v982 = vsub.f32 %v980, %v981
    %v983 = vand.u32 %v982, 4294901760
    %984 = vmatpush1.msra.mxu0 %v983
    %985 = vmatprep.subr.mxu0 0.0
    %v986 = vand.u32 %v123, 4294901760
    %v987 = vsub.f32 %v123, %v986
    %v988 = vand.u32 %v987, 4294901760
    %v989 = vsub.f32 %v987, %v988
    %v990 = vand.u32 %v989, 4294901760
    %991 = vmatpush1.msra.mxu0 %v990
    %992 = vmatprep.subr.mxu0 0.0
    %v993 = vand.u32 %v124, 4294901760
    %v994 = vsub.f32 %v124, %v993
    %v995 = vand.u32 %v994, 4294901760
    %v996 = vsub.f32 %v994, %v995
    %v997 = vand.u32 %v996, 4294901760
    %998 = vmatpush1.msra.mxu0 %v997
    %999 = vmatprep.subr.mxu0 0.0
    %v1000 = vand.u32 %v125, 4294901760
    %v1001 = vsub.f32 %v125, %v1000
    %v1002 = vand.u32 %v1001, 4294901760
    %v1003 = vsub.f32 %v1001, %v1002
    %v1004 = vand.u32 %v1003, 4294901760
    %1005 = vmatpush1.msra.mxu0 %v1004
    %1006 = vmatprep.subr.mxu0 0.0
    %v1007 = vand.u32 %v126, 4294901760
    %v1008 = vsub.f32 %v126, %v1007
    %v1009 = vand.u32 %v1008, 4294901760
    %v1010 = vsub.f32 %v1008, %v1009
    %v1011 = vand.u32 %v1010, 4294901760
    %1012 = vmatpush1.msra.mxu0 %v1011
    %1013 = vmatprep.subr.mxu0 0.0
    %v1014 = vand.u32 %v127, 4294901760
    %v1015 = vsub.f32 %v127, %v1014
    %v1016 = vand.u32 %v1015, 4294901760
    %v1017 = vsub.f32 %v1015, %v1016
    %v1018 = vand.u32 %v1017, 4294901760
    %1019 = vmatpush1.msra.mxu0 %v1018
    %1020 = vmatprep.subr.mxu0 0.0
    %v1021 = vand.u32 %v128, 4294901760
    %v1022 = vsub.f32 %v128, %v1021
    %v1023 = vand.u32 %v1022, 4294901760
    %v1024 = vsub.f32 %v1022, %v1023
    %v1025 = vand.u32 %v1024, 4294901760
    %1026 = vmatpush1.msra.mxu0 %v1025
    %1027 = vmatprep.subr.mxu0 0.0
    %v1028 = vand.u32 %v129, 4294901760
    %v1029 = vsub.f32 %v129, %v1028
    %v1030 = vand.u32 %v1029, 4294901760
    %v1031 = vsub.f32 %v1029, %v1030
    %v1032 = vand.u32 %v1031, 4294901760
    %1033 = vmatpush1.msra.mxu0 %v1032
    %1034 = vmatprep.subr.mxu0 0.0
    %v1035 = vand.u32 %v130, 4294901760
    %v1036 = vsub.f32 %v130, %v1035
    %v1037 = vand.u32 %v1036, 4294901760
    %v1038 = vsub.f32 %v1036, %v1037
    %v1039 = vand.u32 %v1038, 4294901760
    %1040 = vmatpush1.msra.mxu0 %v1039
    %1041 = vmatprep.subr.mxu0 0.0
    %v1042 = vand.u32 %v131, 4294901760
    %v1043 = vsub.f32 %v131, %v1042
    %v1044 = vand.u32 %v1043, 4294901760
    %v1045 = vsub.f32 %v1043, %v1044
    %v1046 = vand.u32 %v1045, 4294901760
    %1047 = vmatpush1.msra.mxu0 %v1046
    %1048 = vmatprep.subr.mxu0 0.0
    %v1049 = vand.u32 %v132, 4294901760
    %v1050 = vsub.f32 %v132, %v1049
    %v1051 = vand.u32 %v1050, 4294901760
    %v1052 = vsub.f32 %v1050, %v1051
    %v1053 = vand.u32 %v1052, 4294901760
    %1054 = vmatpush1.msra.mxu0 %v1053
    %1055 = vmatprep.subr.mxu0 0.0
    %v1056 = vand.u32 %v133, 4294901760
    %v1057 = vsub.f32 %v133, %v1056
    %v1058 = vand.u32 %v1057, 4294901760
    %v1059 = vsub.f32 %v1057, %v1058
    %v1060 = vand.u32 %v1059, 4294901760
    %1061 = vmatpush1.msra.mxu0 %v1060
    %1062 = vmatprep.subr.mxu0 0.0
    %1063 = vmatpush1.msra.mxu0 0.0
    %1064 = vmatprep.subr.mxu0 0.0
    %1065 = vmatpush1.msra.mxu0 0.0
    %1066 = vmatprep.subr.mxu0 0.0
    %1067 = vmatpush1.msra.mxu0 0.0
    %1068 = vmatprep.subr.mxu0 0.0
    %1069 = vmatpush1.msra.mxu0 0.0
    %1070 = vmatprep.subr.mxu0 0.0
    %1071 = vmatpush1.msra.mxu0 0.0
    %1072 = vmatprep.subr.mxu0 0.0
    %1073 = vmatpush1.msra.mxu0 0.0
    %1074 = vmatprep.subr.mxu0 0.0
    %1075 = vmatpush1.msra.mxu0 0.0
    %1076 = vmatprep.subr.mxu0 0.0
    %1077 = vmatpush1.msra.mxu0 0.0
    %1078 = vmatprep.subr.mxu0 0.0
    %1079 = vmatpush1.msra.mxu0 0.0
    %1080 = vmatprep.subr.mxu0 0.0
    %1081 = vmatpush1.msra.mxu0 0.0
    %1082 = vmatprep.subr.mxu0 0.0
    %1083 = vmatpush1.msra.mxu0 0.0
    %1084 = vmatprep.subr.mxu0 0.0
    %1085 = vmatpush1.msra.mxu0 0.0
    %1086 = vmatprep.subr.mxu0 0.0
    %1087 = vmatpush1.msra.mxu0 0.0
    %1088 = vmatprep.subr.mxu0 0.0
    %1089 = vmatpush1.msra.mxu0 0.0
    %1090 = vmatprep.subr.mxu0 0.0
    %1091 = vmatpush1.msra.mxu0 0.0
    %1092 = vmatprep.subr.mxu0 0.0
    %1093 = vmatpush1.msra.mxu0 0.0
    %1094 = vmatprep.mubr.f32.mxu0 0.0
    %v1095 = vand.u32 %v100, 4294901760
    %1096 = vmatmul.mubr.f32.gmra.mrb[0].mxu0 %v1095
    %v1097 = vpop.f32.mrb[0].mxu0
    %v1098 = vadd.f32 %v937, %v1097
    %v1099 = vpop.f32.mrb[0].mxu0
    %1100 = vmatprep.mubr.f32.mxu0 0.0
    %v1101 = vand.u32 %v101, 4294901760
    %1102 = vmatmul.mubr.f32.gmra.mrb[0].mxu0 %v1101
    %v1103 = vpop.f32.mrb[0].mxu0
    %v1104 = vadd.f32 %v947, %v1103
    %v1105 = vpop.f32.mrb[0].mxu0
    %1106 = vdwg.mxu0
    %1107 = vmatprep.subr.mxu0 0.0
    %v1108 = vand.u32 %v118, 4294901760
    %v1109 = vsub.f32 %v118, %v1108
    %1110 = vmatpush1.msra.mxu0 %v1109
    %1111 = vmatprep.subr.mxu0 0.0
    %v1112 = vand.u32 %v119, 4294901760
    %v1113 = vsub.f32 %v119, %v1112
    %1114 = vmatpush1.msra.mxu0 %v1113
    %1115 = vmatprep.subr.mxu0 0.0
    %v1116 = vand.u32 %v120, 4294901760
    %v1117 = vsub.f32 %v120, %v1116
    %1118 = vmatpush1.msra.mxu0 %v1117
    %1119 = vmatprep.subr.mxu0 0.0
    %v1120 = vand.u32 %v121, 4294901760
    %v1121 = vsub.f32 %v121, %v1120
    %1122 = vmatpush1.msra.mxu0 %v1121
    %1123 = vmatprep.subr.mxu0 0.0
    %v1124 = vand.u32 %v122, 4294901760
    %v1125 = vsub.f32 %v122, %v1124
    %1126 = vmatpush1.msra.mxu0 %v1125
    %1127 = vmatprep.subr.mxu0 0.0
    %v1128 = vand.u32 %v123, 4294901760
    %v1129 = vsub.f32 %v123, %v1128
    %1130 = vmatpush1.msra.mxu0 %v1129
    %1131 = vmatprep.subr.mxu0 0.0
    %v1132 = vand.u32 %v124, 4294901760
    %v1133 = vsub.f32 %v124, %v1132
    %1134 = vmatpush1.msra.mxu0 %v1133
    %1135 = vmatprep.subr.mxu0 0.0
    %v1136 = vand.u32 %v125, 4294901760
    %v1137 = vsub.f32 %v125, %v1136
    %1138 = vmatpush1.msra.mxu0 %v1137
    %1139 = vmatprep.subr.mxu0 0.0
    %v1140 = vand.u32 %v126, 4294901760
    %v1141 = vsub.f32 %v126, %v1140
    %1142 = vmatpush1.msra.mxu0 %v1141
    %1143 = vmatprep.subr.mxu0 0.0
    %v1144 = vand.u32 %v127, 4294901760
    %v1145 = vsub.f32 %v127, %v1144
    %1146 = vmatpush1.msra.mxu0 %v1145
    %1147 = vmatprep.subr.mxu0 0.0
    %v1148 = vand.u32 %v128, 4294901760
    %v1149 = vsub.f32 %v128, %v1148
    %1150 = vmatpush1.msra.mxu0 %v1149
    %1151 = vmatprep.subr.mxu0 0.0
    %v1152 = vand.u32 %v129, 4294901760
    %v1153 = vsub.f32 %v129, %v1152
    %1154 = vmatpush1.msra.mxu0 %v1153
    %1155 = vmatprep.subr.mxu0 0.0
    %v1156 = vand.u32 %v130, 4294901760
    %v1157 = vsub.f32 %v130, %v1156
    %1158 = vmatpush1.msra.mxu0 %v1157
    %1159 = vmatprep.subr.mxu0 0.0
    %v1160 = vand.u32 %v131, 4294901760
    %v1161 = vsub.f32 %v131, %v1160
    %1162 = vmatpush1.msra.mxu0 %v1161
    %1163 = vmatprep.subr.mxu0 0.0
    %v1164 = vand.u32 %v132, 4294901760
    %v1165 = vsub.f32 %v132, %v1164
    %1166 = vmatpush1.msra.mxu0 %v1165
    %1167 = vmatprep.subr.mxu0 0.0
    %v1168 = vand.u32 %v133, 4294901760
    %v1169 = vsub.f32 %v133, %v1168
    %1170 = vmatpush1.msra.mxu0 %v1169
    %1171 = vmatprep.subr.mxu0 0.0
    %1172 = vmatpush1.msra.mxu0 0.0
    %1173 = vmatprep.subr.mxu0 0.0
    %1174 = vmatpush1.msra.mxu0 0.0
    %1175 = vmatprep.subr.mxu0 0.0
    %1176 = vmatpush1.msra.mxu0 0.0
    %1177 = vmatprep.subr.mxu0 0.0
    %1178 = vmatpush1.msra.mxu0 0.0
    %1179 = vmatprep.subr.mxu0 0.0
    %1180 = vmatpush1.msra.mxu0 0.0
    %1181 = vmatprep.subr.mxu0 0.0
    %1182 = vmatpush1.msra.mxu0 0.0
    %1183 = vmatprep.subr.mxu0 0.0
    %1184 = vmatpush1.msra.mxu0 0.0
    %1185 = vmatprep.subr.mxu0 0.0
    %1186 = vmatpush1.msra.mxu0 0.0
    %1187 = vmatprep.subr.mxu0 0.0
    %1188 = vmatpush1.msra.mxu0 0.0
    %1189 = vmatprep.subr.mxu0 0.0
    %1190 = vmatpush1.msra.mxu0 0.0
    %1191 = vmatprep.subr.mxu0 0.0
    %1192 = vmatpush1.msra.mxu0 0.0
    %1193 = vmatprep.subr.mxu0 0.0
    %1194 = vmatpush1.msra.mxu0 0.0
    %1195 = vmatprep.subr.mxu0 0.0
    %1196 = vmatpush1.msra.mxu0 0.0
    %1197 = vmatprep.subr.mxu0 0.0
    %1198 = vmatpush1.msra.mxu0 0.0
    %1199 = vmatprep.subr.mxu0 0.0
    %1200 = vmatpush1.msra.mxu0 0.0
    %1201 = vmatprep.subr.mxu0 0.0
    %1202 = vmatpush1.msra.mxu0 0.0
    %1203 = vmatprep.mubr.f32.mxu0 0.0
    %v1204 = vand.u32 %v100, 4294901760
    %v1205 = vsub.f32 %v100, %v1204
    %1206 = vmatmul.mubr.f32.gmra.mrb[0].mxu0 %v1205
    %v1207 = vpop.f32.mrb[0].mxu0
    %v1208 = vadd.f32 %v1098, %v1207
    %v1209 = vpop.f32.mrb[0].mxu0
    %1210 = vmatprep.mubr.f32.mxu0 0.0
    %v1211 = vand.u32 %v101, 4294901760
    %v1212 = vsub.f32 %v101, %v1211
    %1213 = vmatmul.mubr.f32.gmra.mrb[0].mxu0 %v1212
    %v1214 = vpop.f32.mrb[0].mxu0
    %v1215 = vadd.f32 %v1104, %v1214
    %v1216 = vpop.f32.mrb[0].mxu0
    %1217 = vdwg.mxu0
    %1218 = vmatprep.subr.mxu0 0.0
    %v1219 = vand.u32 %v118, 4294901760
    %1220 = vmatpush1.msra.mxu0 %v1219
    %1221 = vmatprep.subr.mxu0 0.0
    %v1222 = vand.u32 %v119, 4294901760
    %1223 = vmatpush1.msra.mxu0 %v1222
    %1224 = vmatprep.subr.mxu0 0.0
    %v1225 = vand.u32 %v120, 4294901760
    %1226 = vmatpush1.msra.mxu0 %v1225
    %1227 = vmatprep.subr.mxu0 0.0
    %v1228 = vand.u32 %v121, 4294901760
    %1229 = vmatpush1.msra.mxu0 %v1228
    %1230 = vmatprep.subr.mxu0 0.0
    %v1231 = vand.u32 %v122, 4294901760
    %1232 = vmatpush1.msra.mxu0 %v1231
    %1233 = vmatprep.subr.mxu0 0.0
    %v1234 = vand.u32 %v123, 4294901760
    %1235 = vmatpush1.msra.mxu0 %v1234
    %1236 = vmatprep.subr.mxu0 0.0
    %v1237 = vand.u32 %v124, 4294901760
    %1238 = vmatpush1.msra.mxu0 %v1237
    %1239 = vmatprep.subr.mxu0 0.0
    %v1240 = vand.u32 %v125, 4294901760
    %1241 = vmatpush1.msra.mxu0 %v1240
    %1242 = vmatprep.subr.mxu0 0.0
    %v1243 = vand.u32 %v126, 4294901760
    %1244 = vmatpush1.msra.mxu0 %v1243
    %1245 = vmatprep.subr.mxu0 0.0
    %v1246 = vand.u32 %v127, 4294901760
    %1247 = vmatpush1.msra.mxu0 %v1246
    %1248 = vmatprep.subr.mxu0 0.0
    %v1249 = vand.u32 %v128, 4294901760
    %1250 = vmatpush1.msra.mxu0 %v1249
    %1251 = vmatprep.subr.mxu0 0.0
    %v1252 = vand.u32 %v129, 4294901760
    %1253 = vmatpush1.msra.mxu0 %v1252
    %1254 = vmatprep.subr.mxu0 0.0
    %v1255 = vand.u32 %v130, 4294901760
    %1256 = vmatpush1.msra.mxu0 %v1255
    %1257 = vmatprep.subr.mxu0 0.0
    %v1258 = vand.u32 %v131, 4294901760
    %1259 = vmatpush1.msra.mxu0 %v1258
    %1260 = vmatprep.subr.mxu0 0.0
    %v1261 = vand.u32 %v132, 4294901760
    %1262 = vmatpush1.msra.mxu0 %v1261
    %1263 = vmatprep.subr.mxu0 0.0
    %v1264 = vand.u32 %v133, 4294901760
    %1265 = vmatpush1.msra.mxu0 %v1264
    %1266 = vmatprep.subr.mxu0 0.0
    %1267 = vmatpush1.msra.mxu0 0.0
    %1268 = vmatprep.subr.mxu0 0.0
    %1269 = vmatpush1.msra.mxu0 0.0
    %1270 = vmatprep.subr.mxu0 0.0
    %1271 = vmatpush1.msra.mxu0 0.0
    %1272 = vmatprep.subr.mxu0 0.0
    %1273 = vmatpush1.msra.mxu0 0.0
    %1274 = vmatprep.subr.mxu0 0.0
    %1275 = vmatpush1.msra.mxu0 0.0
    %1276 = vmatprep.subr.mxu0 0.0
    %1277 = vmatpush1.msra.mxu0 0.0
    %1278 = vmatprep.subr.mxu0 0.0
    %1279 = vmatpush1.msra.mxu0 0.0
    %1280 = vmatprep.subr.mxu0 0.0
    %1281 = vmatpush1.msra.mxu0 0.0
    %1282 = vmatprep.subr.mxu0 0.0
    %1283 = vmatpush1.msra.mxu0 0.0
    %1284 = vmatprep.subr.mxu0 0.0
    %1285 = vmatpush1.msra.mxu0 0.0
    %1286 = vmatprep.subr.mxu0 0.0
    %1287 = vmatpush1.msra.mxu0 0.0
    %1288 = vmatprep.subr.mxu0 0.0
    %1289 = vmatpush1.msra.mxu0 0.0
    %1290 = vmatprep.subr.mxu0 0.0
    %1291 = vmatpush1.msra.mxu0 0.0
    %1292 = vmatprep.subr.mxu0 0.0
    %1293 = vmatpush1.msra.mxu0 0.0
    %1294 = vmatprep.subr.mxu0 0.0
    %1295 = vmatpush1.msra.mxu0 0.0
    %1296 = vmatprep.subr.mxu0 0.0
    %1297 = vmatpush1.msra.mxu0 0.0
    %1298 = vmatprep.mubr.f32.mxu0 0.0
    %v1299 = vand.u32 %v100, 4294901760
    %v1300 = vsub.f32 %v100, %v1299
    %v1301 = vand.u32 %v1300, 4294901760
    %1302 = vmatmul.mubr.f32.gmra.mrb[0].mxu0 %v1301
    %v1303 = vpop.f32.mrb[0].mxu0
    %v1304 = vadd.f32 %v1208, %v1303
    %v1305 = vpop.f32.mrb[0].mxu0
    %1306 = vmatprep.mubr.f32.mxu0 0.0
    %v1307 = vand.u32 %v101, 4294901760
    %v1308 = vsub.f32 %v101, %v1307
    %v1309 = vand.u32 %v1308, 4294901760
    %1310 = vmatmul.mubr.f32.gmra.mrb[0].mxu0 %v1309
    %v1311 = vpop.f32.mrb[0].mxu0
    %v1312 = vadd.f32 %v1215, %v1311
    %v1313 = vpop.f32.mrb[0].mxu0
    %1314 = vdwg.mxu0
    %1315 = vmatprep.subr.mxu0 0.0
    %v1316 = vand.u32 %v118, 4294901760
    %v1317 = vsub.f32 %v118, %v1316
    %v1318 = vand.u32 %v1317, 4294901760
    %1319 = vmatpush1.msra.mxu0 %v1318
    %1320 = vmatprep.subr.mxu0 0.0
    %v1321 = vand.u32 %v119, 4294901760
    %v1322 = vsub.f32 %v119, %v1321
    %v1323 = vand.u32 %v1322, 4294901760
    %1324 = vmatpush1.msra.mxu0 %v1323
    %1325 = vmatprep.subr.mxu0 0.0
    %v1326 = vand.u32 %v120, 4294901760
    %v1327 = vsub.f32 %v120, %v1326
    %v1328 = vand.u32 %v1327, 4294901760
    %1329 = vmatpush1.msra.mxu0 %v1328
    %1330 = vmatprep.subr.mxu0 0.0
    %v1331 = vand.u32 %v121, 4294901760
    %v1332 = vsub.f32 %v121, %v1331
    %v1333 = vand.u32 %v1332, 4294901760
    %1334 = vmatpush1.msra.mxu0 %v1333
    %1335 = vmatprep.subr.mxu0 0.0
    %v1336 = vand.u32 %v122, 4294901760
    %v1337 = vsub.f32 %v122, %v1336
    %v1338 = vand.u32 %v1337, 4294901760
    %1339 = vmatpush1.msra.mxu0 %v1338
    %1340 = vmatprep.subr.mxu0 0.0
    %v1341 = vand.u32 %v123, 4294901760
    %v1342 = vsub.f32 %v123, %v1341
    %v1343 = vand.u32 %v1342, 4294901760
    %1344 = vmatpush1.msra.mxu0 %v1343
    %1345 = vmatprep.subr.mxu0 0.0
    %v1346 = vand.u32 %v124, 4294901760
    %v1347 = vsub.f32 %v124, %v1346
    %v1348 = vand.u32 %v1347, 4294901760
    %1349 = vmatpush1.msra.mxu0 %v1348
    %1350 = vmatprep.subr.mxu0 0.0
    %v1351 = vand.u32 %v125, 4294901760
    %v1352 = vsub.f32 %v125, %v1351
    %v1353 = vand.u32 %v1352, 4294901760
    %1354 = vmatpush1.msra.mxu0 %v1353
    %1355 = vmatprep.subr.mxu0 0.0
    %v1356 = vand.u32 %v126, 4294901760
    %v1357 = vsub.f32 %v126, %v1356
    %v1358 = vand.u32 %v1357, 4294901760
    %1359 = vmatpush1.msra.mxu0 %v1358
    %1360 = vmatprep.subr.mxu0 0.0
    %v1361 = vand.u32 %v127, 4294901760
    %v1362 = vsub.f32 %v127, %v1361
    %v1363 = vand.u32 %v1362, 4294901760
    %1364 = vmatpush1.msra.mxu0 %v1363
    %1365 = vmatprep.subr.mxu0 0.0
    %v1366 = vand.u32 %v128, 4294901760
    %v1367 = vsub.f32 %v128, %v1366
    %v1368 = vand.u32 %v1367, 4294901760
    %1369 = vmatpush1.msra.mxu0 %v1368
    %1370 = vmatprep.subr.mxu0 0.0
    %v1371 = vand.u32 %v129, 4294901760
    %v1372 = vsub.f32 %v129, %v1371
    %v1373 = vand.u32 %v1372, 4294901760
    %1374 = vmatpush1.msra.mxu0 %v1373
    %1375 = vmatprep.subr.mxu0 0.0
    %v1376 = vand.u32 %v130, 4294901760
    %v1377 = vsub.f32 %v130, %v1376
    %v1378 = vand.u32 %v1377, 4294901760
    %1379 = vmatpush1.msra.mxu0 %v1378
    %1380 = vmatprep.subr.mxu0 0.0
    %v1381 = vand.u32 %v131, 4294901760
    %v1382 = vsub.f32 %v131, %v1381
    %v1383 = vand.u32 %v1382, 4294901760
    %1384 = vmatpush1.msra.mxu0 %v1383
    %1385 = vmatprep.subr.mxu0 0.0
    %v1386 = vand.u32 %v132, 4294901760
    %v1387 = vsub.f32 %v132, %v1386
    %v1388 = vand.u32 %v1387, 4294901760
    %1389 = vmatpush1.msra.mxu0 %v1388
    %1390 = vmatprep.subr.mxu0 0.0
    %v1391 = vand.u32 %v133, 4294901760
    %v1392 = vsub.f32 %v133, %v1391
    %v1393 = vand.u32 %v1392, 4294901760
    %1394 = vmatpush1.msra.mxu0 %v1393
    %1395 = vmatprep.subr.mxu0 0.0
    %1396 = vmatpush1.msra.mxu0 0.0
    %1397 = vmatprep.subr.mxu0 0.0
    %1398 = vmatpush1.msra.mxu0 0.0
    %1399 = vmatprep.subr.mxu0 0.0
    %1400 = vmatpush1.msra.mxu0 0.0
    %1401 = vmatprep.subr.mxu0 0.0
    %1402 = vmatpush1.msra.mxu0 0.0
    %1403 = vmatprep.subr.mxu0 0.0
    %1404 = vmatpush1.msra.mxu0 0.0
    %1405 = vmatprep.subr.mxu0 0.0
    %1406 = vmatpush1.msra.mxu0 0.0
    %1407 = vmatprep.subr.mxu0 0.0
    %1408 = vmatpush1.msra.mxu0 0.0
    %1409 = vmatprep.subr.mxu0 0.0
    %1410 = vmatpush1.msra.mxu0 0.0
    %1411 = vmatprep.subr.mxu0 0.0
    %1412 = vmatpush1.msra.mxu0 0.0
    %1413 = vmatprep.subr.mxu0 0.0
    %1414 = vmatpush1.msra.mxu0 0.0
    %1415 = vmatprep.subr.mxu0 0.0
    %1416 = vmatpush1.msra.mxu0 0.0
    %1417 = vmatprep.subr.mxu0 0.0
    %1418 = vmatpush1.msra.mxu0 0.0
    %1419 = vmatprep.subr.mxu0 0.0
    %1420 = vmatpush1.msra.mxu0 0.0
    %1421 = vmatprep.subr.mxu0 0.0
    %1422 = vmatpush1.msra.mxu0 0.0
    %1423 = vmatprep.subr.mxu0 0.0
    %1424 = vmatpush1.msra.mxu0 0.0
    %1425 = vmatprep.subr.mxu0 0.0
    %1426 = vmatpush1.msra.mxu0 0.0
    %1427 = vmatprep.mubr.f32.mxu0 0.0
    %v1428 = vand.u32 %v100, 4294901760
    %1429 = vmatmul.mubr.f32.gmra.mrb[0].mxu0 %v1428
    %v1430 = vpop.f32.mrb[0].mxu0
    %v1431 = vadd.f32 %v1304, %v1430
    %v1432 = vpop.f32.mrb[0].mxu0
    %1433 = vmatprep.mubr.f32.mxu0 0.0
    %v1434 = vand.u32 %v101, 4294901760
    %1435 = vmatmul.mubr.f32.gmra.mrb[0].mxu0 %v1434
    %v1436 = vpop.f32.mrb[0].mxu0
    %v1437 = vadd.f32 %v1312, %v1436
    %v1438 = vpop.f32.mrb[0].mxu0
    %1439 = vdwg.mxu0
    %1440 = vmatprep.subr.mxu0 0.0
    %v1441 = vand.u32 %v118, 4294901760
    %1442 = vmatpush1.msra.mxu0 %v1441
    %1443 = vmatprep.subr.mxu0 0.0
    %v1444 = vand.u32 %v119, 4294901760
    %1445 = vmatpush1.msra.mxu0 %v1444
    %1446 = vmatprep.subr.mxu0 0.0
    %v1447 = vand.u32 %v120, 4294901760
    %1448 = vmatpush1.msra.mxu0 %v1447
    %1449 = vmatprep.subr.mxu0 0.0
    %v1450 = vand.u32 %v121, 4294901760
    %1451 = vmatpush1.msra.mxu0 %v1450
    %1452 = vmatprep.subr.mxu0 0.0
    %v1453 = vand.u32 %v122, 4294901760
    %1454 = vmatpush1.msra.mxu0 %v1453
    %1455 = vmatprep.subr.mxu0 0.0
    %v1456 = vand.u32 %v123, 4294901760
    %1457 = vmatpush1.msra.mxu0 %v1456
    %1458 = vmatprep.subr.mxu0 0.0
    %v1459 = vand.u32 %v124, 4294901760
    %1460 = vmatpush1.msra.mxu0 %v1459
    %1461 = vmatprep.subr.mxu0 0.0
    %v1462 = vand.u32 %v125, 4294901760
    %1463 = vmatpush1.msra.mxu0 %v1462
    %1464 = vmatprep.subr.mxu0 0.0
    %v1465 = vand.u32 %v126, 4294901760
    %1466 = vmatpush1.msra.mxu0 %v1465
    %1467 = vmatprep.subr.mxu0 0.0
    %v1468 = vand.u32 %v127, 4294901760
    %1469 = vmatpush1.msra.mxu0 %v1468
    %1470 = vmatprep.subr.mxu0 0.0
    %v1471 = vand.u32 %v128, 4294901760
    %1472 = vmatpush1.msra.mxu0 %v1471
    %1473 = vmatprep.subr.mxu0 0.0
    %v1474 = vand.u32 %v129, 4294901760
    %1475 = vmatpush1.msra.mxu0 %v1474
    %1476 = vmatprep.subr.mxu0 0.0
    %v1477 = vand.u32 %v130, 4294901760
    %1478 = vmatpush1.msra.mxu0 %v1477
    %1479 = vmatprep.subr.mxu0 0.0
    %v1480 = vand.u32 %v131, 4294901760
    %1481 = vmatpush1.msra.mxu0 %v1480
    %1482 = vmatprep.subr.mxu0 0.0
    %v1483 = vand.u32 %v132, 4294901760
    %1484 = vmatpush1.msra.mxu0 %v1483
    %1485 = vmatprep.subr.mxu0 0.0
    %v1486 = vand.u32 %v133, 4294901760
    %1487 = vmatpush1.msra.mxu0 %v1486
    %1488 = vmatprep.subr.mxu0 0.0
    %1489 = vmatpush1.msra.mxu0 0.0
    %1490 = vmatprep.subr.mxu0 0.0
    %1491 = vmatpush1.msra.mxu0 0.0
    %1492 = vmatprep.subr.mxu0 0.0
    %1493 = vmatpush1.msra.mxu0 0.0
    %1494 = vmatprep.subr.mxu0 0.0
    %1495 = vmatpush1.msra.mxu0 0.0
    %1496 = vmatprep.subr.mxu0 0.0
    %1497 = vmatpush1.msra.mxu0 0.0
    %1498 = vmatprep.subr.mxu0 0.0
    %1499 = vmatpush1.msra.mxu0 0.0
    %1500 = vmatprep.subr.mxu0 0.0
    %1501 = vmatpush1.msra.mxu0 0.0
    %1502 = vmatprep.subr.mxu0 0.0
    %1503 = vmatpush1.msra.mxu0 0.0
    %1504 = vmatprep.subr.mxu0 0.0
    %1505 = vmatpush1.msra.mxu0 0.0
    %1506 = vmatprep.subr.mxu0 0.0
    %1507 = vmatpush1.msra.mxu0 0.0
    %1508 = vmatprep.subr.mxu0 0.0
    %1509 = vmatpush1.msra.mxu0 0.0
    %1510 = vmatprep.subr.mxu0 0.0
    %1511 = vmatpush1.msra.mxu0 0.0
    %1512 = vmatprep.subr.mxu0 0.0
    %1513 = vmatpush1.msra.mxu0 0.0
    %1514 = vmatprep.subr.mxu0 0.0
    %1515 = vmatpush1.msra.mxu0 0.0
    %1516 = vmatprep.subr.mxu0 0.0
    %1517 = vmatpush1.msra.mxu0 0.0
    %1518 = vmatprep.subr.mxu0 0.0
    %1519 = vmatpush1.msra.mxu0 0.0
    %1520 = vmatprep.mubr.f32.mxu0 0.0
    %v1521 = vand.u32 %v100, 4294901760
    %1522 = vmatmul.mubr.f32.gmra.mrb[0].mxu0 %v1521
    %v1523 = vpop.f32.mrb[0].mxu0
    %v1524 = vadd.f32 %v1431, %v1523
    %v1525 = vpop.f32.mrb[0].mxu0
    %1526 = vmatprep.mubr.f32.mxu0 0.0
    %v1527 = vand.u32 %v101, 4294901760
    %1528 = vmatmul.mubr.f32.gmra.mrb[0].mxu0 %v1527
    %v1529 = vpop.f32.mrb[0].mxu0
    %v1530 = vadd.f32 %v1437, %v1529
    %v1531 = vpop.f32.mrb[0].mxu0
    %1532 = vdwg.mxu0
    %v1534 = vlaneseq
    %v1535 = vshrl.u32 %v1534, 7
    %v1536 = vsub.s32 0, %v1535
    %v1537 = vrot.slane %v152, %v1536
    %1539 = vmatprep.subr.mxu0 0.0
    %v1540 = vand.u32 %v134, 4294901760
    %1541 = vmatpush1.msra.mxu0 %v1540
    %1542 = vmatprep.subr.mxu0 0.0
    %v1543 = vand.u32 %v135, 4294901760
    %1544 = vmatpush1.msra.mxu0 %v1543
    %1545 = vmatprep.subr.mxu0 0.0
    %v1546 = vand.u32 %v136, 4294901760
    %1547 = vmatpush1.msra.mxu0 %v1546
    %1548 = vmatprep.subr.mxu0 0.0
    %v1549 = vand.u32 %v137, 4294901760
    %1550 = vmatpush1.msra.mxu0 %v1549
    %1551 = vmatprep.subr.mxu0 0.0
    %v1552 = vand.u32 %v138, 4294901760
    %1553 = vmatpush1.msra.mxu0 %v1552
    %1554 = vmatprep.subr.mxu0 0.0
    %v1555 = vand.u32 %v139, 4294901760
    %1556 = vmatpush1.msra.mxu0 %v1555
    %1557 = vmatprep.subr.mxu0 0.0
    %v1558 = vand.u32 %v140, 4294901760
    %1559 = vmatpush1.msra.mxu0 %v1558
    %1560 = vmatprep.subr.mxu0 0.0
    %v1561 = vand.u32 %v141, 4294901760
    %1562 = vmatpush1.msra.mxu0 %v1561
    %1563 = vmatprep.subr.mxu0 0.0
    %v1564 = vand.u32 %v142, 4294901760
    %1565 = vmatpush1.msra.mxu0 %v1564
    %1566 = vmatprep.subr.mxu0 0.0
    %v1567 = vand.u32 %v143, 4294901760
    %1568 = vmatpush1.msra.mxu0 %v1567
    %1569 = vmatprep.subr.mxu0 0.0
    %v1570 = vand.u32 %v144, 4294901760
    %1571 = vmatpush1.msra.mxu0 %v1570
    %1572 = vmatprep.subr.mxu0 0.0
    %v1573 = vand.u32 %v145, 4294901760
    %1574 = vmatpush1.msra.mxu0 %v1573
    %1575 = vmatprep.subr.mxu0 0.0
    %v1576 = vand.u32 %v146, 4294901760
    %1577 = vmatpush1.msra.mxu0 %v1576
    %1578 = vmatprep.subr.mxu0 0.0
    %v1579 = vand.u32 %v147, 4294901760
    %1580 = vmatpush1.msra.mxu0 %v1579
    %1581 = vmatprep.subr.mxu0 0.0
    %v1582 = vand.u32 %v148, 4294901760
    %1583 = vmatpush1.msra.mxu0 %v1582
    %1584 = vmatprep.subr.mxu0 0.0
    %v1585 = vand.u32 %v149, 4294901760
    %1586 = vmatpush1.msra.mxu0 %v1585
    %1587 = vmatprep.subr.mxu0 0.0
    %1588 = vmatpush1.msra.mxu0 0.0
    %1589 = vmatprep.subr.mxu0 0.0
    %1590 = vmatpush1.msra.mxu0 0.0
    %1591 = vmatprep.subr.mxu0 0.0
    %1592 = vmatpush1.msra.mxu0 0.0
    %1593 = vmatprep.subr.mxu0 0.0
    %1594 = vmatpush1.msra.mxu0 0.0
    %1595 = vmatprep.subr.mxu0 0.0
    %1596 = vmatpush1.msra.mxu0 0.0
    %1597 = vmatprep.subr.mxu0 0.0
    %1598 = vmatpush1.msra.mxu0 0.0
    %1599 = vmatprep.subr.mxu0 0.0
    %1600 = vmatpush1.msra.mxu0 0.0
    %1601 = vmatprep.subr.mxu0 0.0
    %1602 = vmatpush1.msra.mxu0 0.0
    %1603 = vmatprep.subr.mxu0 0.0
    %1604 = vmatpush1.msra.mxu0 0.0
    %1605 = vmatprep.subr.mxu0 0.0
    %1606 = vmatpush1.msra.mxu0 0.0
    %1607 = vmatprep.subr.mxu0 0.0
    %1608 = vmatpush1.msra.mxu0 0.0
    %1609 = vmatprep.subr.mxu0 0.0
    %1610 = vmatpush1.msra.mxu0 0.0
    %1611 = vmatprep.subr.mxu0 0.0
    %1612 = vmatpush1.msra.mxu0 0.0
    %1613 = vmatprep.subr.mxu0 0.0
    %1614 = vmatpush1.msra.mxu0 0.0
    %1615 = vmatprep.subr.mxu0 0.0
    %1616 = vmatpush1.msra.mxu0 0.0
    %1617 = vmatprep.subr.mxu0 0.0
    %1618 = vmatpush1.msra.mxu0 0.0
    %1619 = vmatprep.mubr.f32.mxu0 0.0
    %v1620 = vand.u32 %v100, 4294901760
    %v1621 = vsub.f32 %v100, %v1620
    %v1622 = vand.u32 %v1621, 4294901760
    %v1623 = vsub.f32 %v1621, %v1622
    %v1624 = vand.u32 %v1623, 4294901760
    %1625 = vmatmul.mubr.f32.gmra.mrb[0].mxu0 %v1624
    %v1626 = vpop.f32.mrb[0].mxu0
    %v1627 = vadd.f32 %v1537, %v1626
    %v1628 = vpop.f32.mrb[0].mxu0
    %1629 = vmatprep.mubr.f32.mxu0 0.0
    %v1630 = vand.u32 %v101, 4294901760
    %v1631 = vsub.f32 %v101, %v1630
    %v1632 = vand.u32 %v1631, 4294901760
    %v1633 = vsub.f32 %v1631, %v1632
    %v1634 = vand.u32 %v1633, 4294901760
    %1635 = vmatmul.mubr.f32.gmra.mrb[0].mxu0 %v1634
    %v1636 = vpop.f32.mrb[0].mxu0
    %v1637 = vadd.f32 %v1537, %v1636
    %v1638 = vpop.f32.mrb[0].mxu0
    %1639 = vdwg.mxu0
    %1640 = vmatprep.subr.mxu0 0.0
    %v1641 = vand.u32 %v134, 4294901760
    %v1642 = vsub.f32 %v134, %v1641
    %v1643 = vand.u32 %v1642, 4294901760
    %v1644 = vsub.f32 %v1642, %v1643
    %v1645 = vand.u32 %v1644, 4294901760
    %1646 = vmatpush1.msra.mxu0 %v1645
    %1647 = vmatprep.subr.mxu0 0.0
    %v1648 = vand.u32 %v135, 4294901760
    %v1649 = vsub.f32 %v135, %v1648
    %v1650 = vand.u32 %v1649, 4294901760
    %v1651 = vsub.f32 %v1649, %v1650
    %v1652 = vand.u32 %v1651, 4294901760
    %1653 = vmatpush1.msra.mxu0 %v1652
    %1654 = vmatprep.subr.mxu0 0.0
    %v1655 = vand.u32 %v136, 4294901760
    %v1656 = vsub.f32 %v136, %v1655
    %v1657 = vand.u32 %v1656, 4294901760
    %v1658 = vsub.f32 %v1656, %v1657
    %v1659 = vand.u32 %v1658, 4294901760
    %1660 = vmatpush1.msra.mxu0 %v1659
    %1661 = vmatprep.subr.mxu0 0.0
    %v1662 = vand.u32 %v137, 4294901760
    %v1663 = vsub.f32 %v137, %v1662
    %v1664 = vand.u32 %v1663, 4294901760
    %v1665 = vsub.f32 %v1663, %v1664
    %v1666 = vand.u32 %v1665, 4294901760
    %1667 = vmatpush1.msra.mxu0 %v1666
    %1668 = vmatprep.subr.mxu0 0.0
    %v1669 = vand.u32 %v138, 4294901760
    %v1670 = vsub.f32 %v138, %v1669
    %v1671 = vand.u32 %v1670, 4294901760
    %v1672 = vsub.f32 %v1670, %v1671
    %v1673 = vand.u32 %v1672, 4294901760
    %1674 = vmatpush1.msra.mxu0 %v1673
    %1675 = vmatprep.subr.mxu0 0.0
    %v1676 = vand.u32 %v139, 4294901760
    %v1677 = vsub.f32 %v139, %v1676
    %v1678 = vand.u32 %v1677, 4294901760
    %v1679 = vsub.f32 %v1677, %v1678
    %v1680 = vand.u32 %v1679, 4294901760
    %1681 = vmatpush1.msra.mxu0 %v1680
    %1682 = vmatprep.subr.mxu0 0.0
    %v1683 = vand.u32 %v140, 4294901760
    %v1684 = vsub.f32 %v140, %v1683
    %v1685 = vand.u32 %v1684, 4294901760
    %v1686 = vsub.f32 %v1684, %v1685
    %v1687 = vand.u32 %v1686, 4294901760
    %1688 = vmatpush1.msra.mxu0 %v1687
    %1689 = vmatprep.subr.mxu0 0.0
    %v1690 = vand.u32 %v141, 4294901760
    %v1691 = vsub.f32 %v141, %v1690
    %v1692 = vand.u32 %v1691, 4294901760
    %v1693 = vsub.f32 %v1691, %v1692
    %v1694 = vand.u32 %v1693, 4294901760
    %1695 = vmatpush1.msra.mxu0 %v1694
    %1696 = vmatprep.subr.mxu0 0.0
    %v1697 = vand.u32 %v142, 4294901760
    %v1698 = vsub.f32 %v142, %v1697
    %v1699 = vand.u32 %v1698, 4294901760
    %v1700 = vsub.f32 %v1698, %v1699
    %v1701 = vand.u32 %v1700, 4294901760
    %1702 = vmatpush1.msra.mxu0 %v1701
    %1703 = vmatprep.subr.mxu0 0.0
    %v1704 = vand.u32 %v143, 4294901760
    %v1705 = vsub.f32 %v143, %v1704
    %v1706 = vand.u32 %v1705, 4294901760
    %v1707 = vsub.f32 %v1705, %v1706
    %v1708 = vand.u32 %v1707, 4294901760
    %1709 = vmatpush1.msra.mxu0 %v1708
    %1710 = vmatprep.subr.mxu0 0.0
    %v1711 = vand.u32 %v144, 4294901760
    %v1712 = vsub.f32 %v144, %v1711
    %v1713 = vand.u32 %v1712, 4294901760
    %v1714 = vsub.f32 %v1712, %v1713
    %v1715 = vand.u32 %v1714, 4294901760
    %1716 = vmatpush1.msra.mxu0 %v1715
    %1717 = vmatprep.subr.mxu0 0.0
    %v1718 = vand.u32 %v145, 4294901760
    %v1719 = vsub.f32 %v145, %v1718
    %v1720 = vand.u32 %v1719, 4294901760
    %v1721 = vsub.f32 %v1719, %v1720
    %v1722 = vand.u32 %v1721, 4294901760
    %1723 = vmatpush1.msra.mxu0 %v1722
    %1724 = vmatprep.subr.mxu0 0.0
    %v1725 = vand.u32 %v146, 4294901760
    %v1726 = vsub.f32 %v146, %v1725
    %v1727 = vand.u32 %v1726, 4294901760
    %v1728 = vsub.f32 %v1726, %v1727
    %v1729 = vand.u32 %v1728, 4294901760
    %1730 = vmatpush1.msra.mxu0 %v1729
    %1731 = vmatprep.subr.mxu0 0.0
    %v1732 = vand.u32 %v147, 4294901760
    %v1733 = vsub.f32 %v147, %v1732
    %v1734 = vand.u32 %v1733, 4294901760
    %v1735 = vsub.f32 %v1733, %v1734
    %v1736 = vand.u32 %v1735, 4294901760
    %1737 = vmatpush1.msra.mxu0 %v1736
    %1738 = vmatprep.subr.mxu0 0.0
    %v1739 = vand.u32 %v148, 4294901760
    %v1740 = vsub.f32 %v148, %v1739
    %v1741 = vand.u32 %v1740, 4294901760
    %v1742 = vsub.f32 %v1740, %v1741
    %v1743 = vand.u32 %v1742, 4294901760
    %1744 = vmatpush1.msra.mxu0 %v1743
    %1745 = vmatprep.subr.mxu0 0.0
    %v1746 = vand.u32 %v149, 4294901760
    %v1747 = vsub.f32 %v149, %v1746
    %v1748 = vand.u32 %v1747, 4294901760
    %v1749 = vsub.f32 %v1747, %v1748
    %v1750 = vand.u32 %v1749, 4294901760
    %1751 = vmatpush1.msra.mxu0 %v1750
    %1752 = vmatprep.subr.mxu0 0.0
    %1753 = vmatpush1.msra.mxu0 0.0
    %1754 = vmatprep.subr.mxu0 0.0
    %1755 = vmatpush1.msra.mxu0 0.0
    %1756 = vmatprep.subr.mxu0 0.0
    %1757 = vmatpush1.msra.mxu0 0.0
    %1758 = vmatprep.subr.mxu0 0.0
    %1759 = vmatpush1.msra.mxu0 0.0
    %1760 = vmatprep.subr.mxu0 0.0
    %1761 = vmatpush1.msra.mxu0 0.0
    %1762 = vmatprep.subr.mxu0 0.0
    %1763 = vmatpush1.msra.mxu0 0.0
    %1764 = vmatprep.subr.mxu0 0.0
    %1765 = vmatpush1.msra.mxu0 0.0
    %1766 = vmatprep.subr.mxu0 0.0
    %1767 = vmatpush1.msra.mxu0 0.0
    %1768 = vmatprep.subr.mxu0 0.0
    %1769 = vmatpush1.msra.mxu0 0.0
    %1770 = vmatprep.subr.mxu0 0.0
    %1771 = vmatpush1.msra.mxu0 0.0
    %1772 = vmatprep.subr.mxu0 0.0
    %1773 = vmatpush1.msra.mxu0 0.0
    %1774 = vmatprep.subr.mxu0 0.0
    %1775 = vmatpush1.msra.mxu0 0.0
    %1776 = vmatprep.subr.mxu0 0.0
    %1777 = vmatpush1.msra.mxu0 0.0
    %1778 = vmatprep.subr.mxu0 0.0
    %1779 = vmatpush1.msra.mxu0 0.0
    %1780 = vmatprep.subr.mxu0 0.0
    %1781 = vmatpush1.msra.mxu0 0.0
    %1782 = vmatprep.subr.mxu0 0.0
    %1783 = vmatpush1.msra.mxu0 0.0
    %1784 = vmatprep.mubr.f32.mxu0 0.0
    %v1785 = vand.u32 %v100, 4294901760
    %1786 = vmatmul.mubr.f32.gmra.mrb[0].mxu0 %v1785
    %v1787 = vpop.f32.mrb[0].mxu0
    %v1788 = vadd.f32 %v1627, %v1787
    %v1789 = vpop.f32.mrb[0].mxu0
    %1790 = vmatprep.mubr.f32.mxu0 0.0
    %v1791 = vand.u32 %v101, 4294901760
    %1792 = vmatmul.mubr.f32.gmra.mrb[0].mxu0 %v1791
    %v1793 = vpop.f32.mrb[0].mxu0
    %v1794 = vadd.f32 %v1637, %v1793
    %v1795 = vpop.f32.mrb[0].mxu0
    %1796 = vdwg.mxu0
    %1797 = vmatprep.subr.mxu0 0.0
    %v1798 = vand.u32 %v134, 4294901760
    %v1799 = vsub.f32 %v134, %v1798
    %1800 = vmatpush1.msra.mxu0 %v1799
    %1801 = vmatprep.subr.mxu0 0.0
    %v1802 = vand.u32 %v135, 4294901760
    %v1803 = vsub.f32 %v135, %v1802
    %1804 = vmatpush1.msra.mxu0 %v1803
    %1805 = vmatprep.subr.mxu0 0.0
    %v1806 = vand.u32 %v136, 4294901760
    %v1807 = vsub.f32 %v136, %v1806
    %1808 = vmatpush1.msra.mxu0 %v1807
    %1809 = vmatprep.subr.mxu0 0.0
    %v1810 = vand.u32 %v137, 4294901760
    %v1811 = vsub.f32 %v137, %v1810
    %1812 = vmatpush1.msra.mxu0 %v1811
    %1813 = vmatprep.subr.mxu0 0.0
    %v1814 = vand.u32 %v138, 4294901760
    %v1815 = vsub.f32 %v138, %v1814
    %1816 = vmatpush1.msra.mxu0 %v1815
    %1817 = vmatprep.subr.mxu0 0.0
    %v1818 = vand.u32 %v139, 4294901760
    %v1819 = vsub.f32 %v139, %v1818
    %1820 = vmatpush1.msra.mxu0 %v1819
    %1821 = vmatprep.subr.mxu0 0.0
    %v1822 = vand.u32 %v140, 4294901760
    %v1823 = vsub.f32 %v140, %v1822
    %1824 = vmatpush1.msra.mxu0 %v1823
    %1825 = vmatprep.subr.mxu0 0.0
    %v1826 = vand.u32 %v141, 4294901760
    %v1827 = vsub.f32 %v141, %v1826
    %1828 = vmatpush1.msra.mxu0 %v1827
    %1829 = vmatprep.subr.mxu0 0.0
    %v1830 = vand.u32 %v142, 4294901760
    %v1831 = vsub.f32 %v142, %v1830
    %1832 = vmatpush1.msra.mxu0 %v1831
    %1833 = vmatprep.subr.mxu0 0.0
    %v1834 = vand.u32 %v143, 4294901760
    %v1835 = vsub.f32 %v143, %v1834
    %1836 = vmatpush1.msra.mxu0 %v1835
    %1837 = vmatprep.subr.mxu0 0.0
    %v1838 = vand.u32 %v144, 4294901760
    %v1839 = vsub.f32 %v144, %v1838
    %1840 = vmatpush1.msra.mxu0 %v1839
    %1841 = vmatprep.subr.mxu0 0.0
    %v1842 = vand.u32 %v145, 4294901760
    %v1843 = vsub.f32 %v145, %v1842
    %1844 = vmatpush1.msra.mxu0 %v1843
    %1845 = vmatprep.subr.mxu0 0.0
    %v1846 = vand.u32 %v146, 4294901760
    %v1847 = vsub.f32 %v146, %v1846
    %1848 = vmatpush1.msra.mxu0 %v1847
    %1849 = vmatprep.subr.mxu0 0.0
    %v1850 = vand.u32 %v147, 4294901760
    %v1851 = vsub.f32 %v147, %v1850
    %1852 = vmatpush1.msra.mxu0 %v1851
    %1853 = vmatprep.subr.mxu0 0.0
    %v1854 = vand.u32 %v148, 4294901760
    %v1855 = vsub.f32 %v148, %v1854
    %1856 = vmatpush1.msra.mxu0 %v1855
    %1857 = vmatprep.subr.mxu0 0.0
    %v1858 = vand.u32 %v149, 4294901760
    %v1859 = vsub.f32 %v149, %v1858
    %1860 = vmatpush1.msra.mxu0 %v1859
    %1861 = vmatprep.subr.mxu0 0.0
    %1862 = vmatpush1.msra.mxu0 0.0
    %1863 = vmatprep.subr.mxu0 0.0
    %1864 = vmatpush1.msra.mxu0 0.0
    %1865 = vmatprep.subr.mxu0 0.0
    %1866 = vmatpush1.msra.mxu0 0.0
    %1867 = vmatprep.subr.mxu0 0.0
    %1868 = vmatpush1.msra.mxu0 0.0
    %1869 = vmatprep.subr.mxu0 0.0
    %1870 = vmatpush1.msra.mxu0 0.0
    %1871 = vmatprep.subr.mxu0 0.0
    %1872 = vmatpush1.msra.mxu0 0.0
    %1873 = vmatprep.subr.mxu0 0.0
    %1874 = vmatpush1.msra.mxu0 0.0
    %1875 = vmatprep.subr.mxu0 0.0
    %1876 = vmatpush1.msra.mxu0 0.0
    %1877 = vmatprep.subr.mxu0 0.0
    %1878 = vmatpush1.msra.mxu0 0.0
    %1879 = vmatprep.subr.mxu0 0.0
    %1880 = vmatpush1.msra.mxu0 0.0
    %1881 = vmatprep.subr.mxu0 0.0
    %1882 = vmatpush1.msra.mxu0 0.0
    %1883 = vmatprep.subr.mxu0 0.0
    %1884 = vmatpush1.msra.mxu0 0.0
    %1885 = vmatprep.subr.mxu0 0.0
    %1886 = vmatpush1.msra.mxu0 0.0
    %1887 = vmatprep.subr.mxu0 0.0
    %1888 = vmatpush1.msra.mxu0 0.0
    %1889 = vmatprep.subr.mxu0 0.0
    %1890 = vmatpush1.msra.mxu0 0.0
    %1891 = vmatprep.subr.mxu0 0.0
    %1892 = vmatpush1.msra.mxu0 0.0
    %1893 = vmatprep.mubr.f32.mxu0 0.0
    %v1894 = vand.u32 %v100, 4294901760
    %v1895 = vsub.f32 %v100, %v1894
    %1896 = vmatmul.mubr.f32.gmra.mrb[0].mxu0 %v1895
    %v1897 = vpop.f32.mrb[0].mxu0
    %v1898 = vadd.f32 %v1788, %v1897
    %v1899 = vpop.f32.mrb[0].mxu0
    %1900 = vmatprep.mubr.f32.mxu0 0.0
    %v1901 = vand.u32 %v101, 4294901760
    %v1902 = vsub.f32 %v101, %v1901
    %1903 = vmatmul.mubr.f32.gmra.mrb[0].mxu0 %v1902
    %v1904 = vpop.f32.mrb[0].mxu0
    %v1905 = vadd.f32 %v1794, %v1904
    %v1906 = vpop.f32.mrb[0].mxu0
    %1907 = vdwg.mxu0
    %1908 = vmatprep.subr.mxu0 0.0
    %v1909 = vand.u32 %v134, 4294901760
    %1910 = vmatpush1.msra.mxu0 %v1909
    %1911 = vmatprep.subr.mxu0 0.0
    %v1912 = vand.u32 %v135, 4294901760
    %1913 = vmatpush1.msra.mxu0 %v1912
    %1914 = vmatprep.subr.mxu0 0.0
    %v1915 = vand.u32 %v136, 4294901760
    %1916 = vmatpush1.msra.mxu0 %v1915
    %1917 = vmatprep.subr.mxu0 0.0
    %v1918 = vand.u32 %v137, 4294901760
    %1919 = vmatpush1.msra.mxu0 %v1918
    %1920 = vmatprep.subr.mxu0 0.0
    %v1921 = vand.u32 %v138, 4294901760
    %1922 = vmatpush1.msra.mxu0 %v1921
    %1923 = vmatprep.subr.mxu0 0.0
    %v1924 = vand.u32 %v139, 4294901760
    %1925 = vmatpush1.msra.mxu0 %v1924
    %1926 = vmatprep.subr.mxu0 0.0
    %v1927 = vand.u32 %v140, 4294901760
    %1928 = vmatpush1.msra.mxu0 %v1927
    %1929 = vmatprep.subr.mxu0 0.0
    %v1930 = vand.u32 %v141, 4294901760
    %1931 = vmatpush1.msra.mxu0 %v1930
    %1932 = vmatprep.subr.mxu0 0.0
    %v1933 = vand.u32 %v142, 4294901760
    %1934 = vmatpush1.msra.mxu0 %v1933
    %1935 = vmatprep.subr.mxu0 0.0
    %v1936 = vand.u32 %v143, 4294901760
    %1937 = vmatpush1.msra.mxu0 %v1936
    %1938 = vmatprep.subr.mxu0 0.0
    %v1939 = vand.u32 %v144, 4294901760
    %1940 = vmatpush1.msra.mxu0 %v1939
    %1941 = vmatprep.subr.mxu0 0.0
    %v1942 = vand.u32 %v145, 4294901760
    %1943 = vmatpush1.msra.mxu0 %v1942
    %1944 = vmatprep.subr.mxu0 0.0
    %v1945 = vand.u32 %v146, 4294901760
    %1946 = vmatpush1.msra.mxu0 %v1945
    %1947 = vmatprep.subr.mxu0 0.0
    %v1948 = vand.u32 %v147, 4294901760
    %1949 = vmatpush1.msra.mxu0 %v1948
    %1950 = vmatprep.subr.mxu0 0.0
    %v1951 = vand.u32 %v148, 4294901760
    %1952 = vmatpush1.msra.mxu0 %v1951
    %1953 = vmatprep.subr.mxu0 0.0
    %v1954 = vand.u32 %v149, 4294901760
    %1955 = vmatpush1.msra.mxu0 %v1954
    %1956 = vmatprep.subr.mxu0 0.0
    %1957 = vmatpush1.msra.mxu0 0.0
    %1958 = vmatprep.subr.mxu0 0.0
    %1959 = vmatpush1.msra.mxu0 0.0
    %1960 = vmatprep.subr.mxu0 0.0
    %1961 = vmatpush1.msra.mxu0 0.0
    %1962 = vmatprep.subr.mxu0 0.0
    %1963 = vmatpush1.msra.mxu0 0.0
    %1964 = vmatprep.subr.mxu0 0.0
    %1965 = vmatpush1.msra.mxu0 0.0
    %1966 = vmatprep.subr.mxu0 0.0
    %1967 = vmatpush1.msra.mxu0 0.0
    %1968 = vmatprep.subr.mxu0 0.0
    %1969 = vmatpush1.msra.mxu0 0.0
    %1970 = vmatprep.subr.mxu0 0.0
    %1971 = vmatpush1.msra.mxu0 0.0
    %1972 = vmatprep.subr.mxu0 0.0
    %1973 = vmatpush1.msra.mxu0 0.0
    %1974 = vmatprep.subr.mxu0 0.0
    %1975 = vmatpush1.msra.mxu0 0.0
    %1976 = vmatprep.subr.mxu0 0.0
    %1977 = vmatpush1.msra.mxu0 0.0
    %1978 = vmatprep.subr.mxu0 0.0
    %1979 = vmatpush1.msra.mxu0 0.0
    %1980 = vmatprep.subr.mxu0 0.0
    %1981 = vmatpush1.msra.mxu0 0.0
    %1982 = vmatprep.subr.mxu0 0.0
    %1983 = vmatpush1.msra.mxu0 0.0
    %1984 = vmatprep.subr.mxu0 0.0
    %1985 = vmatpush1.msra.mxu0 0.0
    %1986 = vmatprep.subr.mxu0 0.0
    %1987 = vmatpush1.msra.mxu0 0.0
    %1988 = vmatprep.mubr.f32.mxu0 0.0
    %v1989 = vand.u32 %v100, 4294901760
    %v1990 = vsub.f32 %v100, %v1989
    %v1991 = vand.u32 %v1990, 4294901760
    %1992 = vmatmul.mubr.f32.gmra.mrb[0].mxu0 %v1991
    %v1993 = vpop.f32.mrb[0].mxu0
    %v1994 = vadd.f32 %v1898, %v1993
    %v1995 = vpop.f32.mrb[0].mxu0
    %1996 = vmatprep.mubr.f32.mxu0 0.0
    %v1997 = vand.u32 %v101, 4294901760
    %v1998 = vsub.f32 %v101, %v1997
    %v1999 = vand.u32 %v1998, 4294901760
    %2000 = vmatmul.mubr.f32.gmra.mrb[0].mxu0 %v1999
    %v2001 = vpop.f32.mrb[0].mxu0
    %v2002 = vadd.f32 %v1905, %v2001
    %v2003 = vpop.f32.mrb[0].mxu0
    %2004 = vdwg.mxu0
    %2005 = vmatprep.subr.mxu0 0.0
    %v2006 = vand.u32 %v134, 4294901760
    %v2007 = vsub.f32 %v134, %v2006
    %v2008 = vand.u32 %v2007, 4294901760
    %2009 = vmatpush1.msra.mxu0 %v2008
    %2010 = vmatprep.subr.mxu0 0.0
    %v2011 = vand.u32 %v135, 4294901760
    %v2012 = vsub.f32 %v135, %v2011
    %v2013 = vand.u32 %v2012, 4294901760
    %2014 = vmatpush1.msra.mxu0 %v2013
    %2015 = vmatprep.subr.mxu0 0.0
    %v2016 = vand.u32 %v136, 4294901760
    %v2017 = vsub.f32 %v136, %v2016
    %v2018 = vand.u32 %v2017, 4294901760
    %2019 = vmatpush1.msra.mxu0 %v2018
    %2020 = vmatprep.subr.mxu0 0.0
    %v2021 = vand.u32 %v137, 4294901760
    %v2022 = vsub.f32 %v137, %v2021
    %v2023 = vand.u32 %v2022, 4294901760
    %2024 = vmatpush1.msra.mxu0 %v2023
    %2025 = vmatprep.subr.mxu0 0.0
    %v2026 = vand.u32 %v138, 4294901760
    %v2027 = vsub.f32 %v138, %v2026
    %v2028 = vand.u32 %v2027, 4294901760
    %2029 = vmatpush1.msra.mxu0 %v2028
    %2030 = vmatprep.subr.mxu0 0.0
    %v2031 = vand.u32 %v139, 4294901760
    %v2032 = vsub.f32 %v139, %v2031
    %v2033 = vand.u32 %v2032, 4294901760
    %2034 = vmatpush1.msra.mxu0 %v2033
    %2035 = vmatprep.subr.mxu0 0.0
    %v2036 = vand.u32 %v140, 4294901760
    %v2037 = vsub.f32 %v140, %v2036
    %v2038 = vand.u32 %v2037, 4294901760
    %2039 = vmatpush1.msra.mxu0 %v2038
    %2040 = vmatprep.subr.mxu0 0.0
    %v2041 = vand.u32 %v141, 4294901760
    %v2042 = vsub.f32 %v141, %v2041
    %v2043 = vand.u32 %v2042, 4294901760
    %2044 = vmatpush1.msra.mxu0 %v2043
    %2045 = vmatprep.subr.mxu0 0.0
    %v2046 = vand.u32 %v142, 4294901760
    %v2047 = vsub.f32 %v142, %v2046
    %v2048 = vand.u32 %v2047, 4294901760
    %2049 = vmatpush1.msra.mxu0 %v2048
    %2050 = vmatprep.subr.mxu0 0.0
    %v2051 = vand.u32 %v143, 4294901760
    %v2052 = vsub.f32 %v143, %v2051
    %v2053 = vand.u32 %v2052, 4294901760
    %2054 = vmatpush1.msra.mxu0 %v2053
    %2055 = vmatprep.subr.mxu0 0.0
    %v2056 = vand.u32 %v144, 4294901760
    %v2057 = vsub.f32 %v144, %v2056
    %v2058 = vand.u32 %v2057, 4294901760
    %2059 = vmatpush1.msra.mxu0 %v2058
    %2060 = vmatprep.subr.mxu0 0.0
    %v2061 = vand.u32 %v145, 4294901760
    %v2062 = vsub.f32 %v145, %v2061
    %v2063 = vand.u32 %v2062, 4294901760
    %2064 = vmatpush1.msra.mxu0 %v2063
    %2065 = vmatprep.subr.mxu0 0.0
    %v2066 = vand.u32 %v146, 4294901760
    %v2067 = vsub.f32 %v146, %v2066
    %v2068 = vand.u32 %v2067, 4294901760
    %2069 = vmatpush1.msra.mxu0 %v2068
    %2070 = vmatprep.subr.mxu0 0.0
    %v2071 = vand.u32 %v147, 4294901760
    %v2072 = vsub.f32 %v147, %v2071
    %v2073 = vand.u32 %v2072, 4294901760
    %2074 = vmatpush1.msra.mxu0 %v2073
    %2075 = vmatprep.subr.mxu0 0.0
    %v2076 = vand.u32 %v148, 4294901760
    %v2077 = vsub.f32 %v148, %v2076
    %v2078 = vand.u32 %v2077, 4294901760
    %2079 = vmatpush1.msra.mxu0 %v2078
    %2080 = vmatprep.subr.mxu0 0.0
    %v2081 = vand.u32 %v149, 4294901760
    %v2082 = vsub.f32 %v149, %v2081
    %v2083 = vand.u32 %v2082, 4294901760
    %2084 = vmatpush1.msra.mxu0 %v2083
    %2085 = vmatprep.subr.mxu0 0.0
    %2086 = vmatpush1.msra.mxu0 0.0
    %2087 = vmatprep.subr.mxu0 0.0
    %2088 = vmatpush1.msra.mxu0 0.0
    %2089 = vmatprep.subr.mxu0 0.0
    %2090 = vmatpush1.msra.mxu0 0.0
    %2091 = vmatprep.subr.mxu0 0.0
    %2092 = vmatpush1.msra.mxu0 0.0
    %2093 = vmatprep.subr.mxu0 0.0
    %2094 = vmatpush1.msra.mxu0 0.0
    %2095 = vmatprep.subr.mxu0 0.0
    %2096 = vmatpush1.msra.mxu0 0.0
    %2097 = vmatprep.subr.mxu0 0.0
    %2098 = vmatpush1.msra.mxu0 0.0
    %2099 = vmatprep.subr.mxu0 0.0
    %2100 = vmatpush1.msra.mxu0 0.0
    %2101 = vmatprep.subr.mxu0 0.0
    %2102 = vmatpush1.msra.mxu0 0.0
    %2103 = vmatprep.subr.mxu0 0.0
    %2104 = vmatpush1.msra.mxu0 0.0
    %2105 = vmatprep.subr.mxu0 0.0
    %2106 = vmatpush1.msra.mxu0 0.0
    %2107 = vmatprep.subr.mxu0 0.0
    %2108 = vmatpush1.msra.mxu0 0.0
    %2109 = vmatprep.subr.mxu0 0.0
    %2110 = vmatpush1.msra.mxu0 0.0
    %2111 = vmatprep.subr.mxu0 0.0
    %2112 = vmatpush1.msra.mxu0 0.0
    %2113 = vmatprep.subr.mxu0 0.0
    %2114 = vmatpush1.msra.mxu0 0.0
    %2115 = vmatprep.subr.mxu0 0.0
    %2116 = vmatpush1.msra.mxu0 0.0
    %2117 = vmatprep.mubr.f32.mxu0 0.0
    %v2118 = vand.u32 %v100, 4294901760
    %2119 = vmatmul.mubr.f32.gmra.mrb[0].mxu0 %v2118
    %v2120 = vpop.f32.mrb[0].mxu0
    %v2121 = vadd.f32 %v1994, %v2120
    %v2122 = vpop.f32.mrb[0].mxu0
    %2123 = vmatprep.mubr.f32.mxu0 0.0
    %v2124 = vand.u32 %v101, 4294901760
    %2125 = vmatmul.mubr.f32.gmra.mrb[0].mxu0 %v2124
    %v2126 = vpop.f32.mrb[0].mxu0
    %v2127 = vadd.f32 %v2002, %v2126
    %v2128 = vpop.f32.mrb[0].mxu0
    %2129 = vdwg.mxu0
    %2130 = vmatprep.subr.mxu0 0.0
    %v2131 = vand.u32 %v134, 4294901760
    %2132 = vmatpush1.msra.mxu0 %v2131
    %2133 = vmatprep.subr.mxu0 0.0
    %v2134 = vand.u32 %v135, 4294901760
    %2135 = vmatpush1.msra.mxu0 %v2134
    %2136 = vmatprep.subr.mxu0 0.0
    %v2137 = vand.u32 %v136, 4294901760
    %2138 = vmatpush1.msra.mxu0 %v2137
    %2139 = vmatprep.subr.mxu0 0.0
    %v2140 = vand.u32 %v137, 4294901760
    %2141 = vmatpush1.msra.mxu0 %v2140
    %2142 = vmatprep.subr.mxu0 0.0
    %v2143 = vand.u32 %v138, 4294901760
    %2144 = vmatpush1.msra.mxu0 %v2143
    %2145 = vmatprep.subr.mxu0 0.0
    %v2146 = vand.u32 %v139, 4294901760
    %2147 = vmatpush1.msra.mxu0 %v2146
    %2148 = vmatprep.subr.mxu0 0.0
    %v2149 = vand.u32 %v140, 4294901760
    %2150 = vmatpush1.msra.mxu0 %v2149
    %2151 = vmatprep.subr.mxu0 0.0
    %v2152 = vand.u32 %v141, 4294901760
    %2153 = vmatpush1.msra.mxu0 %v2152
    %2154 = vmatprep.subr.mxu0 0.0
    %v2155 = vand.u32 %v142, 4294901760
    %2156 = vmatpush1.msra.mxu0 %v2155
    %2157 = vmatprep.subr.mxu0 0.0
    %v2158 = vand.u32 %v143, 4294901760
    %2159 = vmatpush1.msra.mxu0 %v2158
    %2160 = vmatprep.subr.mxu0 0.0
    %v2161 = vand.u32 %v144, 4294901760
    %2162 = vmatpush1.msra.mxu0 %v2161
    %2163 = vmatprep.subr.mxu0 0.0
    %v2164 = vand.u32 %v145, 4294901760
    %2165 = vmatpush1.msra.mxu0 %v2164
    %2166 = vmatprep.subr.mxu0 0.0
    %v2167 = vand.u32 %v146, 4294901760
    %2168 = vmatpush1.msra.mxu0 %v2167
    %2169 = vmatprep.subr.mxu0 0.0
    %v2170 = vand.u32 %v147, 4294901760
    %2171 = vmatpush1.msra.mxu0 %v2170
    %2172 = vmatprep.subr.mxu0 0.0
    %v2173 = vand.u32 %v148, 4294901760
    %2174 = vmatpush1.msra.mxu0 %v2173
    %2175 = vmatprep.subr.mxu0 0.0
    %v2176 = vand.u32 %v149, 4294901760
    %2177 = vmatpush1.msra.mxu0 %v2176
    %2178 = vmatprep.subr.mxu0 0.0
    %2179 = vmatpush1.msra.mxu0 0.0
    %2180 = vmatprep.subr.mxu0 0.0
    %2181 = vmatpush1.msra.mxu0 0.0
    %2182 = vmatprep.subr.mxu0 0.0
    %2183 = vmatpush1.msra.mxu0 0.0
    %2184 = vmatprep.subr.mxu0 0.0
    %2185 = vmatpush1.msra.mxu0 0.0
    %2186 = vmatprep.subr.mxu0 0.0
    %2187 = vmatpush1.msra.mxu0 0.0
    %2188 = vmatprep.subr.mxu0 0.0
    %2189 = vmatpush1.msra.mxu0 0.0
    %2190 = vmatprep.subr.mxu0 0.0
    %2191 = vmatpush1.msra.mxu0 0.0
    %2192 = vmatprep.subr.mxu0 0.0
    %2193 = vmatpush1.msra.mxu0 0.0
    %2194 = vmatprep.subr.mxu0 0.0
    %2195 = vmatpush1.msra.mxu0 0.0
    %2196 = vmatprep.subr.mxu0 0.0
    %2197 = vmatpush1.msra.mxu0 0.0
    %2198 = vmatprep.subr.mxu0 0.0
    %2199 = vmatpush1.msra.mxu0 0.0
    %2200 = vmatprep.subr.mxu0 0.0
    %2201 = vmatpush1.msra.mxu0 0.0
    %2202 = vmatprep.subr.mxu0 0.0
    %2203 = vmatpush1.msra.mxu0 0.0
    %2204 = vmatprep.subr.mxu0 0.0
    %2205 = vmatpush1.msra.mxu0 0.0
    %2206 = vmatprep.subr.mxu0 0.0
    %2207 = vmatpush1.msra.mxu0 0.0
    %2208 = vmatprep.subr.mxu0 0.0
    %2209 = vmatpush1.msra.mxu0 0.0
    %2210 = vmatprep.mubr.f32.mxu0 0.0
    %v2211 = vand.u32 %v100, 4294901760
    %2212 = vmatmul.mubr.f32.gmra.mrb[0].mxu0 %v2211
    %v2213 = vpop.f32.mrb[0].mxu0
    %v2214 = vadd.f32 %v2121, %v2213
    %v2215 = vpop.f32.mrb[0].mxu0
    %2216 = vmatprep.mubr.f32.mxu0 0.0
    %v2217 = vand.u32 %v101, 4294901760
    %2218 = vmatmul.mubr.f32.gmra.mrb[0].mxu0 %v2217
    %v2219 = vpop.f32.mrb[0].mxu0
    %v2220 = vadd.f32 %v2127, %v2219
    %v2221 = vpop.f32.mrb[0].mxu0
    %2222 = vdwg.mxu0
    %2223 = vmatprep.subr.mxu0 0.0
    %v2224 = vand.u32 %v1524, 4294901760
    %2225 = vmatpush1.xpose.msra.mxu0 %v2224
    %2226 = vmatprep.subr.mxu0 0.0
    %2227 = vmatpush1.xpose.msra.mxu0 0.0
    %2228 = vmatprep.subr.mxu0 0.0
    %2229 = vmatpush1.xpose.msra.mxu0 0.0
    %2230 = vmatprep.subr.mxu0 0.0
    %2231 = vmatpush1.xpose.msra.mxu0 0.0
    %2232 = vmatprep.subr.mxu0 0.0
    %2233 = vmatpush1.xpose.msra.mxu0 0.0
    %2234 = vmatprep.subr.mxu0 0.0
    %2235 = vmatpush1.xpose.msra.mxu0 0.0
    %2236 = vmatprep.subr.mxu0 0.0
    %2237 = vmatpush1.xpose.msra.mxu0 0.0
    %2238 = vmatprep.subr.mxu0 0.0
    %2239 = vmatpush1.xpose.msra.mxu0 0.0
    %2240 = vmatprep.subr.mxu0 0.0
    %2241 = vmatpush1.xpose.msra.mxu0 0.0
    %2242 = vmatprep.subr.mxu0 0.0
    %2243 = vmatpush1.xpose.msra.mxu0 0.0
    %2244 = vmatprep.subr.mxu0 0.0
    %2245 = vmatpush1.xpose.msra.mxu0 0.0
    %2246 = vmatprep.subr.mxu0 0.0
    %2247 = vmatpush1.xpose.msra.mxu0 0.0
    %2248 = vmatprep.subr.mxu0 0.0
    %2249 = vmatpush1.xpose.msra.mxu0 0.0
    %2250 = vmatprep.subr.mxu0 0.0
    %2251 = vmatpush1.xpose.msra.mxu0 0.0
    %2252 = vmatprep.subr.mxu0 0.0
    %2253 = vmatpush1.xpose.msra.mxu0 0.0
    %2254 = vmatprep.subr.mxu0 0.0
    %2255 = vmatpush1.xpose.msra.mxu0 0.0
    %2256 = vmatprep.subr.mxu0 0.0
    %2257 = vmatpush1.xpose.msra.mxu0 0.0
    %2258 = vmatprep.subr.mxu0 0.0
    %2259 = vmatpush1.xpose.msra.mxu0 0.0
    %2260 = vmatprep.subr.mxu0 0.0
    %2261 = vmatpush1.xpose.msra.mxu0 0.0
    %2262 = vmatprep.subr.mxu0 0.0
    %2263 = vmatpush1.xpose.msra.mxu0 0.0
    %2264 = vmatprep.subr.mxu0 0.0
    %2265 = vmatpush1.xpose.msra.mxu0 0.0
    %2266 = vmatprep.subr.mxu0 0.0
    %2267 = vmatpush1.xpose.msra.mxu0 0.0
    %2268 = vmatprep.subr.mxu0 0.0
    %2269 = vmatpush1.xpose.msra.mxu0 0.0
    %2270 = vmatprep.subr.mxu0 0.0
    %2271 = vmatpush1.xpose.msra.mxu0 0.0
    %2272 = vmatprep.subr.mxu0 0.0
    %2273 = vmatpush1.xpose.msra.mxu0 0.0
    %2274 = vmatprep.subr.mxu0 0.0
    %2275 = vmatpush1.xpose.msra.mxu0 0.0
    %2276 = vmatprep.subr.mxu0 0.0
    %2277 = vmatpush1.xpose.msra.mxu0 0.0
    %2278 = vmatprep.subr.mxu0 0.0
    %2279 = vmatpush1.xpose.msra.mxu0 0.0
    %2280 = vmatprep.subr.mxu0 0.0
    %2281 = vmatpush1.xpose.msra.mxu0 0.0
    %2282 = vmatprep.subr.mxu0 0.0
    %2283 = vmatpush1.xpose.msra.mxu0 0.0
    %2284 = vmatprep.subr.mxu0 0.0
    %2285 = vmatpush1.xpose.msra.mxu0 0.0
    %2286 = vmatprep.subr.mxu0 0.0
    %2287 = vmatpush1.xpose.msra.mxu0 0.0
    %2288 = vmatprep.mubr.f32.mxu0 0.0
    %v2289 = vand.u32 %v834, 4294901760
    %v2290 = vsub.f32 %v834, %v2289
    %v2291 = vand.u32 %v2290, 4294901760
    %v2292 = vsub.f32 %v2290, %v2291
    %v2293 = vand.u32 %v2292, 4294901760
    %2294 = vmatmul.mubr.f32.gmra.mrb[0].mxu0 %v2293
    %v2295 = vpop.f32.mrb[0].mxu0
    %v2296 = vadd.f32 0.0, %v2295
    %v2297 = vpop.f32.mrb[0].mxu0
    %2298 = vdwg.mxu0
    %2299 = vmatprep.subr.mxu0 0.0
    %v2300 = vand.u32 %v1524, 4294901760
    %v2301 = vsub.f32 %v1524, %v2300
    %v2302 = vand.u32 %v2301, 4294901760
    %v2303 = vsub.f32 %v2301, %v2302
    %v2304 = vand.u32 %v2303, 4294901760
    %2305 = vmatpush1.xpose.msra.mxu0 %v2304
    %2306 = vmatprep.subr.mxu0 0.0
    %2307 = vmatpush1.xpose.msra.mxu0 0.0
    %2308 = vmatprep.subr.mxu0 0.0
    %2309 = vmatpush1.xpose.msra.mxu0 0.0
    %2310 = vmatprep.subr.mxu0 0.0
    %2311 = vmatpush1.xpose.msra.mxu0 0.0
    %2312 = vmatprep.subr.mxu0 0.0
    %2313 = vmatpush1.xpose.msra.mxu0 0.0
    %2314 = vmatprep.subr.mxu0 0.0
    %2315 = vmatpush1.xpose.msra.mxu0 0.0
    %2316 = vmatprep.subr.mxu0 0.0
    %2317 = vmatpush1.xpose.msra.mxu0 0.0
    %2318 = vmatprep.subr.mxu0 0.0
    %2319 = vmatpush1.xpose.msra.mxu0 0.0
    %2320 = vmatprep.subr.mxu0 0.0
    %2321 = vmatpush1.xpose.msra.mxu0 0.0
    %2322 = vmatprep.subr.mxu0 0.0
    %2323 = vmatpush1.xpose.msra.mxu0 0.0
    %2324 = vmatprep.subr.mxu0 0.0
    %2325 = vmatpush1.xpose.msra.mxu0 0.0
    %2326 = vmatprep.subr.mxu0 0.0
    %2327 = vmatpush1.xpose.msra.mxu0 0.0
    %2328 = vmatprep.subr.mxu0 0.0
    %2329 = vmatpush1.xpose.msra.mxu0 0.0
    %2330 = vmatprep.subr.mxu0 0.0
    %2331 = vmatpush1.xpose.msra.mxu0 0.0
    %2332 = vmatprep.subr.mxu0 0.0
    %2333 = vmatpush1.xpose.msra.mxu0 0.0
    %2334 = vmatprep.subr.mxu0 0.0
    %2335 = vmatpush1.xpose.msra.mxu0 0.0
    %2336 = vmatprep.subr.mxu0 0.0
    %2337 = vmatpush1.xpose.msra.mxu0 0.0
    %2338 = vmatprep.subr.mxu0 0.0
    %2339 = vmatpush1.xpose.msra.mxu0 0.0
    %2340 = vmatprep.subr.mxu0 0.0
    %2341 = vmatpush1.xpose.msra.mxu0 0.0
    %2342 = vmatprep.subr.mxu0 0.0
    %2343 = vmatpush1.xpose.msra.mxu0 0.0
    %2344 = vmatprep.subr.mxu0 0.0
    %2345 = vmatpush1.xpose.msra.mxu0 0.0
    %2346 = vmatprep.subr.mxu0 0.0
    %2347 = vmatpush1.xpose.msra.mxu0 0.0
    %2348 = vmatprep.subr.mxu0 0.0
    %2349 = vmatpush1.xpose.msra.mxu0 0.0
    %2350 = vmatprep.subr.mxu0 0.0
    %2351 = vmatpush1.xpose.msra.mxu0 0.0
    %2352 = vmatprep.subr.mxu0 0.0
    %2353 = vmatpush1.xpose.msra.mxu0 0.0
    %2354 = vmatprep.subr.mxu0 0.0
    %2355 = vmatpush1.xpose.msra.mxu0 0.0
    %2356 = vmatprep.subr.mxu0 0.0
    %2357 = vmatpush1.xpose.msra.mxu0 0.0
    %2358 = vmatprep.subr.mxu0 0.0
    %2359 = vmatpush1.xpose.msra.mxu0 0.0
    %2360 = vmatprep.subr.mxu0 0.0
    %2361 = vmatpush1.xpose.msra.mxu0 0.0
    %2362 = vmatprep.subr.mxu0 0.0
    %2363 = vmatpush1.xpose.msra.mxu0 0.0
    %2364 = vmatprep.subr.mxu0 0.0
    %2365 = vmatpush1.xpose.msra.mxu0 0.0
    %2366 = vmatprep.subr.mxu0 0.0
    %2367 = vmatpush1.xpose.msra.mxu0 0.0
    %2368 = vmatprep.mubr.f32.mxu0 0.0
    %v2369 = vand.u32 %v834, 4294901760
    %2370 = vmatmul.mubr.f32.gmra.mrb[0].mxu0 %v2369
    %v2371 = vpop.f32.mrb[0].mxu0
    %v2372 = vadd.f32 %v2296, %v2371
    %v2373 = vpop.f32.mrb[0].mxu0
    %2374 = vdwg.mxu0
    %2375 = vmatprep.subr.mxu0 0.0
    %v2376 = vand.u32 %v1524, 4294901760
    %v2377 = vsub.f32 %v1524, %v2376
    %2378 = vmatpush1.xpose.msra.mxu0 %v2377
    %2379 = vmatprep.subr.mxu0 0.0
    %2380 = vmatpush1.xpose.msra.mxu0 0.0
    %2381 = vmatprep.subr.mxu0 0.0
    %2382 = vmatpush1.xpose.msra.mxu0 0.0
    %2383 = vmatprep.subr.mxu0 0.0
    %2384 = vmatpush1.xpose.msra.mxu0 0.0
    %2385 = vmatprep.subr.mxu0 0.0
    %2386 = vmatpush1.xpose.msra.mxu0 0.0
    %2387 = vmatprep.subr.mxu0 0.0
    %2388 = vmatpush1.xpose.msra.mxu0 0.0
    %2389 = vmatprep.subr.mxu0 0.0
    %2390 = vmatpush1.xpose.msra.mxu0 0.0
    %2391 = vmatprep.subr.mxu0 0.0
    %2392 = vmatpush1.xpose.msra.mxu0 0.0
    %2393 = vmatprep.subr.mxu0 0.0
    %2394 = vmatpush1.xpose.msra.mxu0 0.0
    %2395 = vmatprep.subr.mxu0 0.0
    %2396 = vmatpush1.xpose.msra.mxu0 0.0
    %2397 = vmatprep.subr.mxu0 0.0
    %2398 = vmatpush1.xpose.msra.mxu0 0.0
    %2399 = vmatprep.subr.mxu0 0.0
    %2400 = vmatpush1.xpose.msra.mxu0 0.0
    %2401 = vmatprep.subr.mxu0 0.0
    %2402 = vmatpush1.xpose.msra.mxu0 0.0
    %2403 = vmatprep.subr.mxu0 0.0
    %2404 = vmatpush1.xpose.msra.mxu0 0.0
    %2405 = vmatprep.subr.mxu0 0.0
    %2406 = vmatpush1.xpose.msra.mxu0 0.0
    %2407 = vmatprep.subr.mxu0 0.0
    %2408 = vmatpush1.xpose.msra.mxu0 0.0
    %2409 = vmatprep.subr.mxu0 0.0
    %2410 = vmatpush1.xpose.msra.mxu0 0.0
    %2411 = vmatprep.subr.mxu0 0.0
    %2412 = vmatpush1.xpose.msra.mxu0 0.0
    %2413 = vmatprep.subr.mxu0 0.0
    %2414 = vmatpush1.xpose.msra.mxu0 0.0
    %2415 = vmatprep.subr.mxu0 0.0
    %2416 = vmatpush1.xpose.msra.mxu0 0.0
    %2417 = vmatprep.subr.mxu0 0.0
    %2418 = vmatpush1.xpose.msra.mxu0 0.0
    %2419 = vmatprep.subr.mxu0 0.0
    %2420 = vmatpush1.xpose.msra.mxu0 0.0
    %2421 = vmatprep.subr.mxu0 0.0
    %2422 = vmatpush1.xpose.msra.mxu0 0.0
    %2423 = vmatprep.subr.mxu0 0.0
    %2424 = vmatpush1.xpose.msra.mxu0 0.0
    %2425 = vmatprep.subr.mxu0 0.0
    %2426 = vmatpush1.xpose.msra.mxu0 0.0
    %2427 = vmatprep.subr.mxu0 0.0
    %2428 = vmatpush1.xpose.msra.mxu0 0.0
    %2429 = vmatprep.subr.mxu0 0.0
    %2430 = vmatpush1.xpose.msra.mxu0 0.0
    %2431 = vmatprep.subr.mxu0 0.0
    %2432 = vmatpush1.xpose.msra.mxu0 0.0
    %2433 = vmatprep.subr.mxu0 0.0
    %2434 = vmatpush1.xpose.msra.mxu0 0.0
    %2435 = vmatprep.subr.mxu0 0.0
    %2436 = vmatpush1.xpose.msra.mxu0 0.0
    %2437 = vmatprep.subr.mxu0 0.0
    %2438 = vmatpush1.xpose.msra.mxu0 0.0
    %2439 = vmatprep.subr.mxu0 0.0
    %2440 = vmatpush1.xpose.msra.mxu0 0.0
    %2441 = vmatprep.mubr.f32.mxu0 0.0
    %v2442 = vand.u32 %v834, 4294901760
    %v2443 = vsub.f32 %v834, %v2442
    %2444 = vmatmul.mubr.f32.gmra.mrb[0].mxu0 %v2443
    %v2445 = vpop.f32.mrb[0].mxu0
    %v2446 = vadd.f32 %v2372, %v2445
    %v2447 = vpop.f32.mrb[0].mxu0
    %2448 = vdwg.mxu0
    %2449 = vmatprep.subr.mxu0 0.0
    %v2450 = vand.u32 %v1524, 4294901760
    %2451 = vmatpush1.xpose.msra.mxu0 %v2450
    %2452 = vmatprep.subr.mxu0 0.0
    %2453 = vmatpush1.xpose.msra.mxu0 0.0
    %2454 = vmatprep.subr.mxu0 0.0
    %2455 = vmatpush1.xpose.msra.mxu0 0.0
    %2456 = vmatprep.subr.mxu0 0.0
    %2457 = vmatpush1.xpose.msra.mxu0 0.0
    %2458 = vmatprep.subr.mxu0 0.0
    %2459 = vmatpush1.xpose.msra.mxu0 0.0
    %2460 = vmatprep.subr.mxu0 0.0
    %2461 = vmatpush1.xpose.msra.mxu0 0.0
    %2462 = vmatprep.subr.mxu0 0.0
    %2463 = vmatpush1.xpose.msra.mxu0 0.0
    %2464 = vmatprep.subr.mxu0 0.0
    %2465 = vmatpush1.xpose.msra.mxu0 0.0
    %2466 = vmatprep.subr.mxu0 0.0
    %2467 = vmatpush1.xpose.msra.mxu0 0.0
    %2468 = vmatprep.subr.mxu0 0.0
    %2469 = vmatpush1.xpose.msra.mxu0 0.0
    %2470 = vmatprep.subr.mxu0 0.0
    %2471 = vmatpush1.xpose.msra.mxu0 0.0
    %2472 = vmatprep.subr.mxu0 0.0
    %2473 = vmatpush1.xpose.msra.mxu0 0.0
    %2474 = vmatprep.subr.mxu0 0.0
    %2475 = vmatpush1.xpose.msra.mxu0 0.0
    %2476 = vmatprep.subr.mxu0 0.0
    %2477 = vmatpush1.xpose.msra.mxu0 0.0
    %2478 = vmatprep.subr.mxu0 0.0
    %2479 = vmatpush1.xpose.msra.mxu0 0.0
    %2480 = vmatprep.subr.mxu0 0.0
    %2481 = vmatpush1.xpose.msra.mxu0 0.0
    %2482 = vmatprep.subr.mxu0 0.0
    %2483 = vmatpush1.xpose.msra.mxu0 0.0
    %2484 = vmatprep.subr.mxu0 0.0
    %2485 = vmatpush1.xpose.msra.mxu0 0.0
    %2486 = vmatprep.subr.mxu0 0.0
    %2487 = vmatpush1.xpose.msra.mxu0 0.0
    %2488 = vmatprep.subr.mxu0 0.0
    %2489 = vmatpush1.xpose.msra.mxu0 0.0
    %2490 = vmatprep.subr.mxu0 0.0
    %2491 = vmatpush1.xpose.msra.mxu0 0.0
    %2492 = vmatprep.subr.mxu0 0.0
    %2493 = vmatpush1.xpose.msra.mxu0 0.0
    %2494 = vmatprep.subr.mxu0 0.0
    %2495 = vmatpush1.xpose.msra.mxu0 0.0
    %2496 = vmatprep.subr.mxu0 0.0
    %2497 = vmatpush1.xpose.msra.mxu0 0.0
    %2498 = vmatprep.subr.mxu0 0.0
    %2499 = vmatpush1.xpose.msra.mxu0 0.0
    %2500 = vmatprep.subr.mxu0 0.0
    %2501 = vmatpush1.xpose.msra.mxu0 0.0
    %2502 = vmatprep.subr.mxu0 0.0
    %2503 = vmatpush1.xpose.msra.mxu0 0.0
    %2504 = vmatprep.subr.mxu0 0.0
    %2505 = vmatpush1.xpose.msra.mxu0 0.0
    %2506 = vmatprep.subr.mxu0 0.0
    %2507 = vmatpush1.xpose.msra.mxu0 0.0
    %2508 = vmatprep.subr.mxu0 0.0
    %2509 = vmatpush1.xpose.msra.mxu0 0.0
    %2510 = vmatprep.subr.mxu0 0.0
    %2511 = vmatpush1.xpose.msra.mxu0 0.0
    %2512 = vmatprep.subr.mxu0 0.0
    %2513 = vmatpush1.xpose.msra.mxu0 0.0
    %2514 = vmatprep.mubr.f32.mxu0 0.0
    %v2515 = vand.u32 %v834, 4294901760
    %v2516 = vsub.f32 %v834, %v2515
    %v2517 = vand.u32 %v2516, 4294901760
    %2518 = vmatmul.mubr.f32.gmra.mrb[0].mxu0 %v2517
    %v2519 = vpop.f32.mrb[0].mxu0
    %v2520 = vadd.f32 %v2446, %v2519
    %v2521 = vpop.f32.mrb[0].mxu0
    %2522 = vdwg.mxu0
    %2523 = vmatprep.subr.mxu0 0.0
    %v2524 = vand.u32 %v1524, 4294901760
    %v2525 = vsub.f32 %v1524, %v2524
    %v2526 = vand.u32 %v2525, 4294901760
    %2527 = vmatpush1.xpose.msra.mxu0 %v2526
    %2528 = vmatprep.subr.mxu0 0.0
    %2529 = vmatpush1.xpose.msra.mxu0 0.0
    %2530 = vmatprep.subr.mxu0 0.0
    %2531 = vmatpush1.xpose.msra.mxu0 0.0
    %2532 = vmatprep.subr.mxu0 0.0
    %2533 = vmatpush1.xpose.msra.mxu0 0.0
    %2534 = vmatprep.subr.mxu0 0.0
    %2535 = vmatpush1.xpose.msra.mxu0 0.0
    %2536 = vmatprep.subr.mxu0 0.0
    %2537 = vmatpush1.xpose.msra.mxu0 0.0
    %2538 = vmatprep.subr.mxu0 0.0
    %2539 = vmatpush1.xpose.msra.mxu0 0.0
    %2540 = vmatprep.subr.mxu0 0.0
    %2541 = vmatpush1.xpose.msra.mxu0 0.0
    %2542 = vmatprep.subr.mxu0 0.0
    %2543 = vmatpush1.xpose.msra.mxu0 0.0
    %2544 = vmatprep.subr.mxu0 0.0
    %2545 = vmatpush1.xpose.msra.mxu0 0.0
    %2546 = vmatprep.subr.mxu0 0.0
    %2547 = vmatpush1.xpose.msra.mxu0 0.0
    %2548 = vmatprep.subr.mxu0 0.0
    %2549 = vmatpush1.xpose.msra.mxu0 0.0
    %2550 = vmatprep.subr.mxu0 0.0
    %2551 = vmatpush1.xpose.msra.mxu0 0.0
    %2552 = vmatprep.subr.mxu0 0.0
    %2553 = vmatpush1.xpose.msra.mxu0 0.0
    %2554 = vmatprep.subr.mxu0 0.0
    %2555 = vmatpush1.xpose.msra.mxu0 0.0
    %2556 = vmatprep.subr.mxu0 0.0
    %2557 = vmatpush1.xpose.msra.mxu0 0.0
    %2558 = vmatprep.subr.mxu0 0.0
    %2559 = vmatpush1.xpose.msra.mxu0 0.0
    %2560 = vmatprep.subr.mxu0 0.0
    %2561 = vmatpush1.xpose.msra.mxu0 0.0
    %2562 = vmatprep.subr.mxu0 0.0
    %2563 = vmatpush1.xpose.msra.mxu0 0.0
    %2564 = vmatprep.subr.mxu0 0.0
    %2565 = vmatpush1.xpose.msra.mxu0 0.0
    %2566 = vmatprep.subr.mxu0 0.0
    %2567 = vmatpush1.xpose.msra.mxu0 0.0
    %2568 = vmatprep.subr.mxu0 0.0
    %2569 = vmatpush1.xpose.msra.mxu0 0.0
    %2570 = vmatprep.subr.mxu0 0.0
    %2571 = vmatpush1.xpose.msra.mxu0 0.0
    %2572 = vmatprep.subr.mxu0 0.0
    %2573 = vmatpush1.xpose.msra.mxu0 0.0
    %2574 = vmatprep.subr.mxu0 0.0
    %2575 = vmatpush1.xpose.msra.mxu0 0.0
    %2576 = vmatprep.subr.mxu0 0.0
    %2577 = vmatpush1.xpose.msra.mxu0 0.0
    %2578 = vmatprep.subr.mxu0 0.0
    %2579 = vmatpush1.xpose.msra.mxu0 0.0
    %2580 = vmatprep.subr.mxu0 0.0
    %2581 = vmatpush1.xpose.msra.mxu0 0.0
    %2582 = vmatprep.subr.mxu0 0.0
    %2583 = vmatpush1.xpose.msra.mxu0 0.0
    %2584 = vmatprep.subr.mxu0 0.0
    %2585 = vmatpush1.xpose.msra.mxu0 0.0
    %2586 = vmatprep.subr.mxu0 0.0
    %2587 = vmatpush1.xpose.msra.mxu0 0.0
    %2588 = vmatprep.subr.mxu0 0.0
    %2589 = vmatpush1.xpose.msra.mxu0 0.0
    %2590 = vmatprep.mubr.f32.mxu0 0.0
    %v2591 = vand.u32 %v834, 4294901760
    %2592 = vmatmul.mubr.f32.gmra.mrb[0].mxu0 %v2591
    %v2593 = vpop.f32.mrb[0].mxu0
    %v2594 = vadd.f32 %v2520, %v2593
    %v2595 = vpop.f32.mrb[0].mxu0
    %2596 = vdwg.mxu0
    %2597 = vmatprep.subr.mxu0 0.0
    %v2598 = vand.u32 %v1524, 4294901760
    %2599 = vmatpush1.xpose.msra.mxu0 %v2598
    %2600 = vmatprep.subr.mxu0 0.0
    %2601 = vmatpush1.xpose.msra.mxu0 0.0
    %2602 = vmatprep.subr.mxu0 0.0
    %2603 = vmatpush1.xpose.msra.mxu0 0.0
    %2604 = vmatprep.subr.mxu0 0.0
    %2605 = vmatpush1.xpose.msra.mxu0 0.0
    %2606 = vmatprep.subr.mxu0 0.0
    %2607 = vmatpush1.xpose.msra.mxu0 0.0
    %2608 = vmatprep.subr.mxu0 0.0
    %2609 = vmatpush1.xpose.msra.mxu0 0.0
    %2610 = vmatprep.subr.mxu0 0.0
    %2611 = vmatpush1.xpose.msra.mxu0 0.0
    %2612 = vmatprep.subr.mxu0 0.0
    %2613 = vmatpush1.xpose.msra.mxu0 0.0
    %2614 = vmatprep.subr.mxu0 0.0
    %2615 = vmatpush1.xpose.msra.mxu0 0.0
    %2616 = vmatprep.subr.mxu0 0.0
    %2617 = vmatpush1.xpose.msra.mxu0 0.0
    %2618 = vmatprep.subr.mxu0 0.0
    %2619 = vmatpush1.xpose.msra.mxu0 0.0
    %2620 = vmatprep.subr.mxu0 0.0
    %2621 = vmatpush1.xpose.msra.mxu0 0.0
    %2622 = vmatprep.subr.mxu0 0.0
    %2623 = vmatpush1.xpose.msra.mxu0 0.0
    %2624 = vmatprep.subr.mxu0 0.0
    %2625 = vmatpush1.xpose.msra.mxu0 0.0
    %2626 = vmatprep.subr.mxu0 0.0
    %2627 = vmatpush1.xpose.msra.mxu0 0.0
    %2628 = vmatprep.subr.mxu0 0.0
    %2629 = vmatpush1.xpose.msra.mxu0 0.0
    %2630 = vmatprep.subr.mxu0 0.0
    %2631 = vmatpush1.xpose.msra.mxu0 0.0
    %2632 = vmatprep.subr.mxu0 0.0
    %2633 = vmatpush1.xpose.msra.mxu0 0.0
    %2634 = vmatprep.subr.mxu0 0.0
    %2635 = vmatpush1.xpose.msra.mxu0 0.0
    %2636 = vmatprep.subr.mxu0 0.0
    %2637 = vmatpush1.xpose.msra.mxu0 0.0
    %2638 = vmatprep.subr.mxu0 0.0
    %2639 = vmatpush1.xpose.msra.mxu0 0.0
    %2640 = vmatprep.subr.mxu0 0.0
    %2641 = vmatpush1.xpose.msra.mxu0 0.0
    %2642 = vmatprep.subr.mxu0 0.0
    %2643 = vmatpush1.xpose.msra.mxu0 0.0
    %2644 = vmatprep.subr.mxu0 0.0
    %2645 = vmatpush1.xpose.msra.mxu0 0.0
    %2646 = vmatprep.subr.mxu0 0.0
    %2647 = vmatpush1.xpose.msra.mxu0 0.0
    %2648 = vmatprep.subr.mxu0 0.0
    %2649 = vmatpush1.xpose.msra.mxu0 0.0
    %2650 = vmatprep.subr.mxu0 0.0
    %2651 = vmatpush1.xpose.msra.mxu0 0.0
    %2652 = vmatprep.subr.mxu0 0.0
    %2653 = vmatpush1.xpose.msra.mxu0 0.0
    %2654 = vmatprep.subr.mxu0 0.0
    %2655 = vmatpush1.xpose.msra.mxu0 0.0
    %2656 = vmatprep.subr.mxu0 0.0
    %2657 = vmatpush1.xpose.msra.mxu0 0.0
    %2658 = vmatprep.subr.mxu0 0.0
    %2659 = vmatpush1.xpose.msra.mxu0 0.0
    %2660 = vmatprep.subr.mxu0 0.0
    %2661 = vmatpush1.xpose.msra.mxu0 0.0
    %2662 = vmatprep.mubr.f32.mxu0 0.0
    %v2663 = vand.u32 %v834, 4294901760
    %2664 = vmatmul.mubr.f32.gmra.mrb[0].mxu0 %v2663
    %v2665 = vpop.f32.mrb[0].mxu0
    %v2666 = vadd.f32 %v2594, %v2665
    %v2667 = vpop.f32.mrb[0].mxu0
    %2668 = vdwg.mxu0
    %2669 = vmatprep.subr.mxu0 0.0
    %v2670 = vand.u32 %v1530, 4294901760
    %2671 = vmatpush1.xpose.msra.mxu0 %v2670
    %2672 = vmatprep.subr.mxu0 0.0
    %2673 = vmatpush1.xpose.msra.mxu0 0.0
    %2674 = vmatprep.subr.mxu0 0.0
    %2675 = vmatpush1.xpose.msra.mxu0 0.0
    %2676 = vmatprep.subr.mxu0 0.0
    %2677 = vmatpush1.xpose.msra.mxu0 0.0
    %2678 = vmatprep.subr.mxu0 0.0
    %2679 = vmatpush1.xpose.msra.mxu0 0.0
    %2680 = vmatprep.subr.mxu0 0.0
    %2681 = vmatpush1.xpose.msra.mxu0 0.0
    %2682 = vmatprep.subr.mxu0 0.0
    %2683 = vmatpush1.xpose.msra.mxu0 0.0
    %2684 = vmatprep.subr.mxu0 0.0
    %2685 = vmatpush1.xpose.msra.mxu0 0.0
    %2686 = vmatprep.subr.mxu0 0.0
    %2687 = vmatpush1.xpose.msra.mxu0 0.0
    %2688 = vmatprep.subr.mxu0 0.0
    %2689 = vmatpush1.xpose.msra.mxu0 0.0
    %2690 = vmatprep.subr.mxu0 0.0
    %2691 = vmatpush1.xpose.msra.mxu0 0.0
    %2692 = vmatprep.subr.mxu0 0.0
    %2693 = vmatpush1.xpose.msra.mxu0 0.0
    %2694 = vmatprep.subr.mxu0 0.0
    %2695 = vmatpush1.xpose.msra.mxu0 0.0
    %2696 = vmatprep.subr.mxu0 0.0
    %2697 = vmatpush1.xpose.msra.mxu0 0.0
    %2698 = vmatprep.subr.mxu0 0.0
    %2699 = vmatpush1.xpose.msra.mxu0 0.0
    %2700 = vmatprep.subr.mxu0 0.0
    %2701 = vmatpush1.xpose.msra.mxu0 0.0
    %2702 = vmatprep.subr.mxu0 0.0
    %2703 = vmatpush1.xpose.msra.mxu0 0.0
    %2704 = vmatprep.subr.mxu0 0.0
    %2705 = vmatpush1.xpose.msra.mxu0 0.0
    %2706 = vmatprep.subr.mxu0 0.0
    %2707 = vmatpush1.xpose.msra.mxu0 0.0
    %2708 = vmatprep.subr.mxu0 0.0
    %2709 = vmatpush1.xpose.msra.mxu0 0.0
    %2710 = vmatprep.subr.mxu0 0.0
    %2711 = vmatpush1.xpose.msra.mxu0 0.0
    %2712 = vmatprep.subr.mxu0 0.0
    %2713 = vmatpush1.xpose.msra.mxu0 0.0
    %2714 = vmatprep.subr.mxu0 0.0
    %2715 = vmatpush1.xpose.msra.mxu0 0.0
    %2716 = vmatprep.subr.mxu0 0.0
    %2717 = vmatpush1.xpose.msra.mxu0 0.0
    %2718 = vmatprep.subr.mxu0 0.0
    %2719 = vmatpush1.xpose.msra.mxu0 0.0
    %2720 = vmatprep.subr.mxu0 0.0
    %2721 = vmatpush1.xpose.msra.mxu0 0.0
    %2722 = vmatprep.subr.mxu0 0.0
    %2723 = vmatpush1.xpose.msra.mxu0 0.0
    %2724 = vmatprep.subr.mxu0 0.0
    %2725 = vmatpush1.xpose.msra.mxu0 0.0
    %2726 = vmatprep.subr.mxu0 0.0
    %2727 = vmatpush1.xpose.msra.mxu0 0.0
    %2728 = vmatprep.subr.mxu0 0.0
    %2729 = vmatpush1.xpose.msra.mxu0 0.0
    %2730 = vmatprep.subr.mxu0 0.0
    %2731 = vmatpush1.xpose.msra.mxu0 0.0
    %2732 = vmatprep.subr.mxu0 0.0
    %2733 = vmatpush1.xpose.msra.mxu0 0.0
    %2734 = vmatprep.mubr.f32.mxu0 0.0
    %v2735 = vand.u32 %v840, 4294901760
    %v2736 = vsub.f32 %v840, %v2735
    %v2737 = vand.u32 %v2736, 4294901760
    %v2738 = vsub.f32 %v2736, %v2737
    %v2739 = vand.u32 %v2738, 4294901760
    %2740 = vmatmul.mubr.f32.gmra.mrb[0].mxu0 %v2739
    %v2741 = vpop.f32.mrb[0].mxu0
    %v2742 = vadd.f32 0.0, %v2741
    %v2743 = vpop.f32.mrb[0].mxu0
    %2744 = vdwg.mxu0
    %2745 = vmatprep.subr.mxu0 0.0
    %v2746 = vand.u32 %v1530, 4294901760
    %v2747 = vsub.f32 %v1530, %v2746
    %v2748 = vand.u32 %v2747, 4294901760
    %v2749 = vsub.f32 %v2747, %v2748
    %v2750 = vand.u32 %v2749, 4294901760
    %2751 = vmatpush1.xpose.msra.mxu0 %v2750
    %2752 = vmatprep.subr.mxu0 0.0
    %2753 = vmatpush1.xpose.msra.mxu0 0.0
    %2754 = vmatprep.subr.mxu0 0.0
    %2755 = vmatpush1.xpose.msra.mxu0 0.0
    %2756 = vmatprep.subr.mxu0 0.0
    %2757 = vmatpush1.xpose.msra.mxu0 0.0
    %2758 = vmatprep.subr.mxu0 0.0
    %2759 = vmatpush1.xpose.msra.mxu0 0.0
    %2760 = vmatprep.subr.mxu0 0.0
    %2761 = vmatpush1.xpose.msra.mxu0 0.0
    %2762 = vmatprep.subr.mxu0 0.0
    %2763 = vmatpush1.xpose.msra.mxu0 0.0
    %2764 = vmatprep.subr.mxu0 0.0
    %2765 = vmatpush1.xpose.msra.mxu0 0.0
    %2766 = vmatprep.subr.mxu0 0.0
    %2767 = vmatpush1.xpose.msra.mxu0 0.0
    %2768 = vmatprep.subr.mxu0 0.0
    %2769 = vmatpush1.xpose.msra.mxu0 0.0
    %2770 = vmatprep.subr.mxu0 0.0
    %2771 = vmatpush1.xpose.msra.mxu0 0.0
    %2772 = vmatprep.subr.mxu0 0.0
    %2773 = vmatpush1.xpose.msra.mxu0 0.0
    %2774 = vmatprep.subr.mxu0 0.0
    %2775 = vmatpush1.xpose.msra.mxu0 0.0
    %2776 = vmatprep.subr.mxu0 0.0
    %2777 = vmatpush1.xpose.msra.mxu0 0.0
    %2778 = vmatprep.subr.mxu0 0.0
    %2779 = vmatpush1.xpose.msra.mxu0 0.0
    %2780 = vmatprep.subr.mxu0 0.0
    %2781 = vmatpush1.xpose.msra.mxu0 0.0
    %2782 = vmatprep.subr.mxu0 0.0
    %2783 = vmatpush1.xpose.msra.mxu0 0.0
    %2784 = vmatprep.subr.mxu0 0.0
    %2785 = vmatpush1.xpose.msra.mxu0 0.0
    %2786 = vmatprep.subr.mxu0 0.0
    %2787 = vmatpush1.xpose.msra.mxu0 0.0
    %2788 = vmatprep.subr.mxu0 0.0
    %2789 = vmatpush1.xpose.msra.mxu0 0.0
    %2790 = vmatprep.subr.mxu0 0.0
    %2791 = vmatpush1.xpose.msra.mxu0 0.0
    %2792 = vmatprep.subr.mxu0 0.0
    %2793 = vmatpush1.xpose.msra.mxu0 0.0
    %2794 = vmatprep.subr.mxu0 0.0
    %2795 = vmatpush1.xpose.msra.mxu0 0.0
    %2796 = vmatprep.subr.mxu0 0.0
    %2797 = vmatpush1.xpose.msra.mxu0 0.0
    %2798 = vmatprep.subr.mxu0 0.0
    %2799 = vmatpush1.xpose.msra.mxu0 0.0
    %2800 = vmatprep.subr.mxu0 0.0
    %2801 = vmatpush1.xpose.msra.mxu0 0.0
    %2802 = vmatprep.subr.mxu0 0.0
    %2803 = vmatpush1.xpose.msra.mxu0 0.0
    %2804 = vmatprep.subr.mxu0 0.0
    %2805 = vmatpush1.xpose.msra.mxu0 0.0
    %2806 = vmatprep.subr.mxu0 0.0
    %2807 = vmatpush1.xpose.msra.mxu0 0.0
    %2808 = vmatprep.subr.mxu0 0.0
    %2809 = vmatpush1.xpose.msra.mxu0 0.0
    %2810 = vmatprep.subr.mxu0 0.0
    %2811 = vmatpush1.xpose.msra.mxu0 0.0
    %2812 = vmatprep.subr.mxu0 0.0
    %2813 = vmatpush1.xpose.msra.mxu0 0.0
    %2814 = vmatprep.mubr.f32.mxu0 0.0
    %v2815 = vand.u32 %v840, 4294901760
    %2816 = vmatmul.mubr.f32.gmra.mrb[0].mxu0 %v2815
    %v2817 = vpop.f32.mrb[0].mxu0
    %v2818 = vadd.f32 %v2742, %v2817
    %v2819 = vpop.f32.mrb[0].mxu0
    %2820 = vdwg.mxu0
    %2821 = vmatprep.subr.mxu0 0.0
    %v2822 = vand.u32 %v1530, 4294901760
    %v2823 = vsub.f32 %v1530, %v2822
    %2824 = vmatpush1.xpose.msra.mxu0 %v2823
    %2825 = vmatprep.subr.mxu0 0.0
    %2826 = vmatpush1.xpose.msra.mxu0 0.0
    %2827 = vmatprep.subr.mxu0 0.0
    %2828 = vmatpush1.xpose.msra.mxu0 0.0
    %2829 = vmatprep.subr.mxu0 0.0
    %2830 = vmatpush1.xpose.msra.mxu0 0.0
    %2831 = vmatprep.subr.mxu0 0.0
    %2832 = vmatpush1.xpose.msra.mxu0 0.0
    %2833 = vmatprep.subr.mxu0 0.0
    %2834 = vmatpush1.xpose.msra.mxu0 0.0
    %2835 = vmatprep.subr.mxu0 0.0
    %2836 = vmatpush1.xpose.msra.mxu0 0.0
    %2837 = vmatprep.subr.mxu0 0.0
    %2838 = vmatpush1.xpose.msra.mxu0 0.0
    %2839 = vmatprep.subr.mxu0 0.0
    %2840 = vmatpush1.xpose.msra.mxu0 0.0
    %2841 = vmatprep.subr.mxu0 0.0
    %2842 = vmatpush1.xpose.msra.mxu0 0.0
    %2843 = vmatprep.subr.mxu0 0.0
    %2844 = vmatpush1.xpose.msra.mxu0 0.0
    %2845 = vmatprep.subr.mxu0 0.0
    %2846 = vmatpush1.xpose.msra.mxu0 0.0
    %2847 = vmatprep.subr.mxu0 0.0
    %2848 = vmatpush1.xpose.msra.mxu0 0.0
    %2849 = vmatprep.subr.mxu0 0.0
    %2850 = vmatpush1.xpose.msra.mxu0 0.0
    %2851 = vmatprep.subr.mxu0 0.0
    %2852 = vmatpush1.xpose.msra.mxu0 0.0
    %2853 = vmatprep.subr.mxu0 0.0
    %2854 = vmatpush1.xpose.msra.mxu0 0.0
    %2855 = vmatprep.subr.mxu0 0.0
    %2856 = vmatpush1.xpose.msra.mxu0 0.0
    %2857 = vmatprep.subr.mxu0 0.0
    %2858 = vmatpush1.xpose.msra.mxu0 0.0
    %2859 = vmatprep.subr.mxu0 0.0
    %2860 = vmatpush1.xpose.msra.mxu0 0.0
    %2861 = vmatprep.subr.mxu0 0.0
    %2862 = vmatpush1.xpose.msra.mxu0 0.0
    %2863 = vmatprep.subr.mxu0 0.0
    %2864 = vmatpush1.xpose.msra.mxu0 0.0
    %2865 = vmatprep.subr.mxu0 0.0
    %2866 = vmatpush1.xpose.msra.mxu0 0.0
    %2867 = vmatprep.subr.mxu0 0.0
    %2868 = vmatpush1.xpose.msra.mxu0 0.0
    %2869 = vmatprep.subr.mxu0 0.0
    %2870 = vmatpush1.xpose.msra.mxu0 0.0
    %2871 = vmatprep.subr.mxu0 0.0
    %2872 = vmatpush1.xpose.msra.mxu0 0.0
    %2873 = vmatprep.subr.mxu0 0.0
    %2874 = vmatpush1.xpose.msra.mxu0 0.0
    %2875 = vmatprep.subr.mxu0 0.0
    %2876 = vmatpush1.xpose.msra.mxu0 0.0
    %2877 = vmatprep.subr.mxu0 0.0
    %2878 = vmatpush1.xpose.msra.mxu0 0.0
    %2879 = vmatprep.subr.mxu0 0.0
    %2880 = vmatpush1.xpose.msra.mxu0 0.0
    %2881 = vmatprep.subr.mxu0 0.0
    %2882 = vmatpush1.xpose.msra.mxu0 0.0
    %2883 = vmatprep.subr.mxu0 0.0
    %2884 = vmatpush1.xpose.msra.mxu0 0.0
    %2885 = vmatprep.subr.mxu0 0.0
    %2886 = vmatpush1.xpose.msra.mxu0 0.0
    %2887 = vmatprep.mubr.f32.mxu0 0.0
    %v2888 = vand.u32 %v840, 4294901760
    %v2889 = vsub.f32 %v840, %v2888
    %2890 = vmatmul.mubr.f32.gmra.mrb[0].mxu0 %v2889
    %v2891 = vpop.f32.mrb[0].mxu0
    %v2892 = vadd.f32 %v2818, %v2891
    %v2893 = vpop.f32.mrb[0].mxu0
    %2894 = vdwg.mxu0
    %2895 = vmatprep.subr.mxu0 0.0
    %v2896 = vand.u32 %v1530, 4294901760
    %2897 = vmatpush1.xpose.msra.mxu0 %v2896
    %2898 = vmatprep.subr.mxu0 0.0
    %2899 = vmatpush1.xpose.msra.mxu0 0.0
    %2900 = vmatprep.subr.mxu0 0.0
    %2901 = vmatpush1.xpose.msra.mxu0 0.0
    %2902 = vmatprep.subr.mxu0 0.0
    %2903 = vmatpush1.xpose.msra.mxu0 0.0
    %2904 = vmatprep.subr.mxu0 0.0
    %2905 = vmatpush1.xpose.msra.mxu0 0.0
    %2906 = vmatprep.subr.mxu0 0.0
    %2907 = vmatpush1.xpose.msra.mxu0 0.0
    %2908 = vmatprep.subr.mxu0 0.0
    %2909 = vmatpush1.xpose.msra.mxu0 0.0
    %2910 = vmatprep.subr.mxu0 0.0
    %2911 = vmatpush1.xpose.msra.mxu0 0.0
    %2912 = vmatprep.subr.mxu0 0.0
    %2913 = vmatpush1.xpose.msra.mxu0 0.0
    %2914 = vmatprep.subr.mxu0 0.0
    %2915 = vmatpush1.xpose.msra.mxu0 0.0
    %2916 = vmatprep.subr.mxu0 0.0
    %2917 = vmatpush1.xpose.msra.mxu0 0.0
    %2918 = vmatprep.subr.mxu0 0.0
    %2919 = vmatpush1.xpose.msra.mxu0 0.0
    %2920 = vmatprep.subr.mxu0 0.0
    %2921 = vmatpush1.xpose.msra.mxu0 0.0
    %2922 = vmatprep.subr.mxu0 0.0
    %2923 = vmatpush1.xpose.msra.mxu0 0.0
    %2924 = vmatprep.subr.mxu0 0.0
    %2925 = vmatpush1.xpose.msra.mxu0 0.0
    %2926 = vmatprep.subr.mxu0 0.0
    %2927 = vmatpush1.xpose.msra.mxu0 0.0
    %2928 = vmatprep.subr.mxu0 0.0
    %2929 = vmatpush1.xpose.msra.mxu0 0.0
    %2930 = vmatprep.subr.mxu0 0.0
    %2931 = vmatpush1.xpose.msra.mxu0 0.0
    %2932 = vmatprep.subr.mxu0 0.0
    %2933 = vmatpush1.xpose.msra.mxu0 0.0
    %2934 = vmatprep.subr.mxu0 0.0
    %2935 = vmatpush1.xpose.msra.mxu0 0.0
    %2936 = vmatprep.subr.mxu0 0.0
    %2937 = vmatpush1.xpose.msra.mxu0 0.0
    %2938 = vmatprep.subr.mxu0 0.0
    %2939 = vmatpush1.xpose.msra.mxu0 0.0
    %2940 = vmatprep.subr.mxu0 0.0
    %2941 = vmatpush1.xpose.msra.mxu0 0.0
    %2942 = vmatprep.subr.mxu0 0.0
    %2943 = vmatpush1.xpose.msra.mxu0 0.0
    %2944 = vmatprep.subr.mxu0 0.0
    %2945 = vmatpush1.xpose.msra.mxu0 0.0
    %2946 = vmatprep.subr.mxu0 0.0
    %2947 = vmatpush1.xpose.msra.mxu0 0.0
    %2948 = vmatprep.subr.mxu0 0.0
    %2949 = vmatpush1.xpose.msra.mxu0 0.0
    %2950 = vmatprep.subr.mxu0 0.0
    %2951 = vmatpush1.xpose.msra.mxu0 0.0
    %2952 = vmatprep.subr.mxu0 0.0
    %2953 = vmatpush1.xpose.msra.mxu0 0.0
    %2954 = vmatprep.subr.mxu0 0.0
    %2955 = vmatpush1.xpose.msra.mxu0 0.0
    %2956 = vmatprep.subr.mxu0 0.0
    %2957 = vmatpush1.xpose.msra.mxu0 0.0
    %2958 = vmatprep.subr.mxu0 0.0
    %2959 = vmatpush1.xpose.msra.mxu0 0.0
    %2960 = vmatprep.mubr.f32.mxu0 0.0
    %v2961 = vand.u32 %v840, 4294901760
    %v2962 = vsub.f32 %v840, %v2961
    %v2963 = vand.u32 %v2962, 4294901760
    %2964 = vmatmul.mubr.f32.gmra.mrb[0].mxu0 %v2963
    %v2965 = vpop.f32.mrb[0].mxu0
    %v2966 = vadd.f32 %v2892, %v2965
    %v2967 = vpop.f32.mrb[0].mxu0
    %2968 = vdwg.mxu0
    %2969 = vmatprep.subr.mxu0 0.0
    %v2970 = vand.u32 %v1530, 4294901760
    %v2971 = vsub.f32 %v1530, %v2970
    %v2972 = vand.u32 %v2971, 4294901760
    %2973 = vmatpush1.xpose.msra.mxu0 %v2972
    %2974 = vmatprep.subr.mxu0 0.0
    %2975 = vmatpush1.xpose.msra.mxu0 0.0
    %2976 = vmatprep.subr.mxu0 0.0
    %2977 = vmatpush1.xpose.msra.mxu0 0.0
    %2978 = vmatprep.subr.mxu0 0.0
    %2979 = vmatpush1.xpose.msra.mxu0 0.0
    %2980 = vmatprep.subr.mxu0 0.0
    %2981 = vmatpush1.xpose.msra.mxu0 0.0
    %2982 = vmatprep.subr.mxu0 0.0
    %2983 = vmatpush1.xpose.msra.mxu0 0.0
    %2984 = vmatprep.subr.mxu0 0.0
    %2985 = vmatpush1.xpose.msra.mxu0 0.0
    %2986 = vmatprep.subr.mxu0 0.0
    %2987 = vmatpush1.xpose.msra.mxu0 0.0
    %2988 = vmatprep.subr.mxu0 0.0
    %2989 = vmatpush1.xpose.msra.mxu0 0.0
    %2990 = vmatprep.subr.mxu0 0.0
    %2991 = vmatpush1.xpose.msra.mxu0 0.0
    %2992 = vmatprep.subr.mxu0 0.0
    %2993 = vmatpush1.xpose.msra.mxu0 0.0
    %2994 = vmatprep.subr.mxu0 0.0
    %2995 = vmatpush1.xpose.msra.mxu0 0.0
    %2996 = vmatprep.subr.mxu0 0.0
    %2997 = vmatpush1.xpose.msra.mxu0 0.0
    %2998 = vmatprep.subr.mxu0 0.0
    %2999 = vmatpush1.xpose.msra.mxu0 0.0
    %3000 = vmatprep.subr.mxu0 0.0
    %3001 = vmatpush1.xpose.msra.mxu0 0.0
    %3002 = vmatprep.subr.mxu0 0.0
    %3003 = vmatpush1.xpose.msra.mxu0 0.0
    %3004 = vmatprep.subr.mxu0 0.0
    %3005 = vmatpush1.xpose.msra.mxu0 0.0
    %3006 = vmatprep.subr.mxu0 0.0
    %3007 = vmatpush1.xpose.msra.mxu0 0.0
    %3008 = vmatprep.subr.mxu0 0.0
    %3009 = vmatpush1.xpose.msra.mxu0 0.0
    %3010 = vmatprep.subr.mxu0 0.0
    %3011 = vmatpush1.xpose.msra.mxu0 0.0
    %3012 = vmatprep.subr.mxu0 0.0
    %3013 = vmatpush1.xpose.msra.mxu0 0.0
    %3014 = vmatprep.subr.mxu0 0.0
    %3015 = vmatpush1.xpose.msra.mxu0 0.0
    %3016 = vmatprep.subr.mxu0 0.0
    %3017 = vmatpush1.xpose.msra.mxu0 0.0
    %3018 = vmatprep.subr.mxu0 0.0
    %3019 = vmatpush1.xpose.msra.mxu0 0.0
    %3020 = vmatprep.subr.mxu0 0.0
    %3021 = vmatpush1.xpose.msra.mxu0 0.0
    %3022 = vmatprep.subr.mxu0 0.0
    %3023 = vmatpush1.xpose.msra.mxu0 0.0
    %3024 = vmatprep.subr.mxu0 0.0
    %3025 = vmatpush1.xpose.msra.mxu0 0.0
    %3026 = vmatprep.subr.mxu0 0.0
    %3027 = vmatpush1.xpose.msra.mxu0 0.0
    %3028 = vmatprep.subr.mxu0 0.0
    %3029 = vmatpush1.xpose.msra.mxu0 0.0
    %3030 = vmatprep.subr.mxu0 0.0
    %3031 = vmatpush1.xpose.msra.mxu0 0.0
    %3032 = vmatprep.subr.mxu0 0.0
    %3033 = vmatpush1.xpose.msra.mxu0 0.0
    %3034 = vmatprep.subr.mxu0 0.0
    %3035 = vmatpush1.xpose.msra.mxu0 0.0
    %3036 = vmatprep.mubr.f32.mxu0 0.0
    %v3037 = vand.u32 %v840, 4294901760
    %3038 = vmatmul.mubr.f32.gmra.mrb[0].mxu0 %v3037
    %v3039 = vpop.f32.mrb[0].mxu0
    %v3040 = vadd.f32 %v2966, %v3039
    %v3041 = vpop.f32.mrb[0].mxu0
    %3042 = vdwg.mxu0
    %3043 = vmatprep.subr.mxu0 0.0
    %v3044 = vand.u32 %v1530, 4294901760
    %3045 = vmatpush1.xpose.msra.mxu0 %v3044
    %3046 = vmatprep.subr.mxu0 0.0
    %3047 = vmatpush1.xpose.msra.mxu0 0.0
    %3048 = vmatprep.subr.mxu0 0.0
    %3049 = vmatpush1.xpose.msra.mxu0 0.0
    %3050 = vmatprep.subr.mxu0 0.0
    %3051 = vmatpush1.xpose.msra.mxu0 0.0
    %3052 = vmatprep.subr.mxu0 0.0
    %3053 = vmatpush1.xpose.msra.mxu0 0.0
    %3054 = vmatprep.subr.mxu0 0.0
    %3055 = vmatpush1.xpose.msra.mxu0 0.0
    %3056 = vmatprep.subr.mxu0 0.0
    %3057 = vmatpush1.xpose.msra.mxu0 0.0
    %3058 = vmatprep.subr.mxu0 0.0
    %3059 = vmatpush1.xpose.msra.mxu0 0.0
    %3060 = vmatprep.subr.mxu0 0.0
    %3061 = vmatpush1.xpose.msra.mxu0 0.0
    %3062 = vmatprep.subr.mxu0 0.0
    %3063 = vmatpush1.xpose.msra.mxu0 0.0
    %3064 = vmatprep.subr.mxu0 0.0
    %3065 = vmatpush1.xpose.msra.mxu0 0.0
    %3066 = vmatprep.subr.mxu0 0.0
    %3067 = vmatpush1.xpose.msra.mxu0 0.0
    %3068 = vmatprep.subr.mxu0 0.0
    %3069 = vmatpush1.xpose.msra.mxu0 0.0
    %3070 = vmatprep.subr.mxu0 0.0
    %3071 = vmatpush1.xpose.msra.mxu0 0.0
    %3072 = vmatprep.subr.mxu0 0.0
    %3073 = vmatpush1.xpose.msra.mxu0 0.0
    %3074 = vmatprep.subr.mxu0 0.0
    %3075 = vmatpush1.xpose.msra.mxu0 0.0
    %3076 = vmatprep.subr.mxu0 0.0
    %3077 = vmatpush1.xpose.msra.mxu0 0.0
    %3078 = vmatprep.subr.mxu0 0.0
    %3079 = vmatpush1.xpose.msra.mxu0 0.0
    %3080 = vmatprep.subr.mxu0 0.0
    %3081 = vmatpush1.xpose.msra.mxu0 0.0
    %3082 = vmatprep.subr.mxu0 0.0
    %3083 = vmatpush1.xpose.msra.mxu0 0.0
    %3084 = vmatprep.subr.mxu0 0.0
    %3085 = vmatpush1.xpose.msra.mxu0 0.0
    %3086 = vmatprep.subr.mxu0 0.0
    %3087 = vmatpush1.xpose.msra.mxu0 0.0
    %3088 = vmatprep.subr.mxu0 0.0
    %3089 = vmatpush1.xpose.msra.mxu0 0.0
    %3090 = vmatprep.subr.mxu0 0.0
    %3091 = vmatpush1.xpose.msra.mxu0 0.0
    %3092 = vmatprep.subr.mxu0 0.0
    %3093 = vmatpush1.xpose.msra.mxu0 0.0
    %3094 = vmatprep.subr.mxu0 0.0
    %3095 = vmatpush1.xpose.msra.mxu0 0.0
    %3096 = vmatprep.subr.mxu0 0.0
    %3097 = vmatpush1.xpose.msra.mxu0 0.0
    %3098 = vmatprep.subr.mxu0 0.0
    %3099 = vmatpush1.xpose.msra.mxu0 0.0
    %3100 = vmatprep.subr.mxu0 0.0
    %3101 = vmatpush1.xpose.msra.mxu0 0.0
    %3102 = vmatprep.subr.mxu0 0.0
    %3103 = vmatpush1.xpose.msra.mxu0 0.0
    %3104 = vmatprep.subr.mxu0 0.0
    %3105 = vmatpush1.xpose.msra.mxu0 0.0
    %3106 = vmatprep.subr.mxu0 0.0
    %3107 = vmatpush1.xpose.msra.mxu0 0.0
    %3108 = vmatprep.mubr.f32.mxu0 0.0
    %v3109 = vand.u32 %v840, 4294901760
    %3110 = vmatmul.mubr.f32.gmra.mrb[0].mxu0 %v3109
    %v3111 = vpop.f32.mrb[0].mxu0
    %v3112 = vadd.f32 %v3040, %v3111
    %v3113 = vpop.f32.mrb[0].mxu0
    %3114 = vdwg.mxu0
    %vm3115 = vcmask 64512
    %v3116 = vsel %vm3115, %v2666, -inf
    %3117 = vmax.xlane.f32.xlu0 %v3116
    %v3118 = vpop.xlane.xlu0 %3117
    %v3119 = vsel %vm3115, %v3112, -inf
    %3120 = vmax.xlane.f32.xlu0 %v3119
    %v3121 = vpop.xlane.xlu0 %3120
    %v3122 = vsub.f32 %v2666, %v3118
    %v3123 = vsub.f32 %v3112, %v3121
    %v3124 = vmul.f32 %v3122, 1.442695
    %v3125 = vpow.pop %v3124
    %v3126 = vmul.f32 %v3123, 1.442695
    %v3127 = vpow.pop %v3126
    %v3128 = vsel %vm3115, %v3125, 0.0
    %3129 = vadd.xlane.f32.xlu0 %v3128
    %v3130 = vpop.xlane.xlu0 %3129
    %v3131 = vsel %vm3115, %v3127, 0.0
    %3132 = vadd.xlane.f32.xlu0 %v3131
    %v3133 = vpop.xlane.xlu0 %3132
    %v3134 = vrcp.pop %v3130
    %v3135 = vrcp.pop %v3133
    %v3136 = vmul.f32 %v3125, %v3134
    %v3137 = vmul.f32 %v3127, %v3135
    %v3139 = vsel %vm3115, %v3136, 0
    %3141 = vmatprep.subr.mxu0 0.0
    %v3142 = vand.u32 %v2214, 4294901760
    %3143 = vmatpush1.msra.mxu0 %v3142
    %3144 = vmatprep.subr.mxu0 0.0
    %3145 = vmatpush1.msra.mxu0 0.0
    %3146 = vmatprep.subr.mxu0 0.0
    %3147 = vmatpush1.msra.mxu0 0.0
    %3148 = vmatprep.subr.mxu0 0.0
    %3149 = vmatpush1.msra.mxu0 0.0
    %3150 = vmatprep.subr.mxu0 0.0
    %3151 = vmatpush1.msra.mxu0 0.0
    %3152 = vmatprep.subr.mxu0 0.0
    %3153 = vmatpush1.msra.mxu0 0.0
    %3154 = vmatprep.subr.mxu0 0.0
    %3155 = vmatpush1.msra.mxu0 0.0
    %3156 = vmatprep.subr.mxu0 0.0
    %3157 = vmatpush1.msra.mxu0 0.0
    %3158 = vmatprep.subr.mxu0 0.0
    %3159 = vmatpush1.msra.mxu0 0.0
    %3160 = vmatprep.subr.mxu0 0.0
    %3161 = vmatpush1.msra.mxu0 0.0
    %3162 = vmatprep.subr.mxu0 0.0
    %3163 = vmatpush1.msra.mxu0 0.0
    %3164 = vmatprep.subr.mxu0 0.0
    %3165 = vmatpush1.msra.mxu0 0.0
    %3166 = vmatprep.subr.mxu0 0.0
    %3167 = vmatpush1.msra.mxu0 0.0
    %3168 = vmatprep.subr.mxu0 0.0
    %3169 = vmatpush1.msra.mxu0 0.0
    %3170 = vmatprep.subr.mxu0 0.0
    %3171 = vmatpush1.msra.mxu0 0.0
    %3172 = vmatprep.subr.mxu0 0.0
    %3173 = vmatpush1.msra.mxu0 0.0
    %3174 = vmatprep.subr.mxu0 0.0
    %3175 = vmatpush1.msra.mxu0 0.0
    %3176 = vmatprep.subr.mxu0 0.0
    %3177 = vmatpush1.msra.mxu0 0.0
    %3178 = vmatprep.subr.mxu0 0.0
    %3179 = vmatpush1.msra.mxu0 0.0
    %3180 = vmatprep.subr.mxu0 0.0
    %3181 = vmatpush1.msra.mxu0 0.0
    %3182 = vmatprep.subr.mxu0 0.0
    %3183 = vmatpush1.msra.mxu0 0.0
    %3184 = vmatprep.subr.mxu0 0.0
    %3185 = vmatpush1.msra.mxu0 0.0
    %3186 = vmatprep.subr.mxu0 0.0
    %3187 = vmatpush1.msra.mxu0 0.0
    %3188 = vmatprep.subr.mxu0 0.0
    %3189 = vmatpush1.msra.mxu0 0.0
    %3190 = vmatprep.subr.mxu0 0.0
    %3191 = vmatpush1.msra.mxu0 0.0
    %3192 = vmatprep.subr.mxu0 0.0
    %3193 = vmatpush1.msra.mxu0 0.0
    %3194 = vmatprep.subr.mxu0 0.0
    %3195 = vmatpush1.msra.mxu0 0.0
    %3196 = vmatprep.subr.mxu0 0.0
    %3197 = vmatpush1.msra.mxu0 0.0
    %3198 = vmatprep.subr.mxu0 0.0
    %3199 = vmatpush1.msra.mxu0 0.0
    %3200 = vmatprep.subr.mxu0 0.0
    %3201 = vmatpush1.msra.mxu0 0.0
    %3202 = vmatprep.subr.mxu0 0.0
    %3203 = vmatpush1.msra.mxu0 0.0
    %3204 = vmatprep.subr.mxu0 0.0
    %3205 = vmatpush1.msra.mxu0 0.0
    %3206 = vmatprep.mubr.f32.mxu0 0.0
    %v3207 = vand.u32 %v3139, 4294901760
    %v3208 = vsub.f32 %v3139, %v3207
    %v3209 = vand.u32 %v3208, 4294901760
    %v3210 = vsub.f32 %v3208, %v3209
    %v3211 = vand.u32 %v3210, 4294901760
    %3212 = vmatmul.mubr.f32.gmra.mrb[0].mxu0 %v3211
    %v3213 = vpop.f32.mrb[0].mxu0
    %v3214 = vadd.f32 0.0, %v3213
    %v3215 = vpop.f32.mrb[0].mxu0
    %3216 = vdwg.mxu0
    %3217 = vmatprep.subr.mxu0 0.0
    %v3218 = vand.u32 %v2214, 4294901760
    %v3219 = vsub.f32 %v2214, %v3218
    %v3220 = vand.u32 %v3219, 4294901760
    %v3221 = vsub.f32 %v3219, %v3220
    %v3222 = vand.u32 %v3221, 4294901760
    %3223 = vmatpush1.msra.mxu0 %v3222
    %3224 = vmatprep.subr.mxu0 0.0
    %3225 = vmatpush1.msra.mxu0 0.0
    %3226 = vmatprep.subr.mxu0 0.0
    %3227 = vmatpush1.msra.mxu0 0.0
    %3228 = vmatprep.subr.mxu0 0.0
    %3229 = vmatpush1.msra.mxu0 0.0
    %3230 = vmatprep.subr.mxu0 0.0
    %3231 = vmatpush1.msra.mxu0 0.0
    %3232 = vmatprep.subr.mxu0 0.0
    %3233 = vmatpush1.msra.mxu0 0.0
    %3234 = vmatprep.subr.mxu0 0.0
    %3235 = vmatpush1.msra.mxu0 0.0
    %3236 = vmatprep.subr.mxu0 0.0
    %3237 = vmatpush1.msra.mxu0 0.0
    %3238 = vmatprep.subr.mxu0 0.0
    %3239 = vmatpush1.msra.mxu0 0.0
    %3240 = vmatprep.subr.mxu0 0.0
    %3241 = vmatpush1.msra.mxu0 0.0
    %3242 = vmatprep.subr.mxu0 0.0
    %3243 = vmatpush1.msra.mxu0 0.0
    %3244 = vmatprep.subr.mxu0 0.0
    %3245 = vmatpush1.msra.mxu0 0.0
    %3246 = vmatprep.subr.mxu0 0.0
    %3247 = vmatpush1.msra.mxu0 0.0
    %3248 = vmatprep.subr.mxu0 0.0
    %3249 = vmatpush1.msra.mxu0 0.0
    %3250 = vmatprep.subr.mxu0 0.0
    %3251 = vmatpush1.msra.mxu0 0.0
    %3252 = vmatprep.subr.mxu0 0.0
    %3253 = vmatpush1.msra.mxu0 0.0
    %3254 = vmatprep.subr.mxu0 0.0
    %3255 = vmatpush1.msra.mxu0 0.0
    %3256 = vmatprep.subr.mxu0 0.0
    %3257 = vmatpush1.msra.mxu0 0.0
    %3258 = vmatprep.subr.mxu0 0.0
    %3259 = vmatpush1.msra.mxu0 0.0
    %3260 = vmatprep.subr.mxu0 0.0
    %3261 = vmatpush1.msra.mxu0 0.0
    %3262 = vmatprep.subr.mxu0 0.0
    %3263 = vmatpush1.msra.mxu0 0.0
    %3264 = vmatprep.subr.mxu0 0.0
    %3265 = vmatpush1.msra.mxu0 0.0
    %3266 = vmatprep.subr.mxu0 0.0
    %3267 = vmatpush1.msra.mxu0 0.0
    %3268 = vmatprep.subr.mxu0 0.0
    %3269 = vmatpush1.msra.mxu0 0.0
    %3270 = vmatprep.subr.mxu0 0.0
    %3271 = vmatpush1.msra.mxu0 0.0
    %3272 = vmatprep.subr.mxu0 0.0
    %3273 = vmatpush1.msra.mxu0 0.0
    %3274 = vmatprep.subr.mxu0 0.0
    %3275 = vmatpush1.msra.mxu0 0.0
    %3276 = vmatprep.subr.mxu0 0.0
    %3277 = vmatpush1.msra.mxu0 0.0
    %3278 = vmatprep.subr.mxu0 0.0
    %3279 = vmatpush1.msra.mxu0 0.0
    %3280 = vmatprep.subr.mxu0 0.0
    %3281 = vmatpush1.msra.mxu0 0.0
    %3282 = vmatprep.subr.mxu0 0.0
    %3283 = vmatpush1.msra.mxu0 0.0
    %3284 = vmatprep.subr.mxu0 0.0
    %3285 = vmatpush1.msra.mxu0 0.0
    %3286 = vmatprep.mubr.f32.mxu0 0.0
    %v3287 = vand.u32 %v3139, 4294901760
    %3288 = vmatmul.mubr.f32.gmra.mrb[0].mxu0 %v3287
    %v3289 = vpop.f32.mrb[0].mxu0
    %v3290 = vadd.f32 %v3214, %v3289
    %v3291 = vpop.f32.mrb[0].mxu0
    %3292 = vdwg.mxu0
    %3293 = vmatprep.subr.mxu0 0.0
    %v3294 = vand.u32 %v2214, 4294901760
    %v3295 = vsub.f32 %v2214, %v3294
    %3296 = vmatpush1.msra.mxu0 %v3295
    %3297 = vmatprep.subr.mxu0 0.0
    %3298 = vmatpush1.msra.mxu0 0.0
    %3299 = vmatprep.subr.mxu0 0.0
    %3300 = vmatpush1.msra.mxu0 0.0
    %3301 = vmatprep.subr.mxu0 0.0
    %3302 = vmatpush1.msra.mxu0 0.0
    %3303 = vmatprep.subr.mxu0 0.0
    %3304 = vmatpush1.msra.mxu0 0.0
    %3305 = vmatprep.subr.mxu0 0.0
    %3306 = vmatpush1.msra.mxu0 0.0
    %3307 = vmatprep.subr.mxu0 0.0
    %3308 = vmatpush1.msra.mxu0 0.0
    %3309 = vmatprep.subr.mxu0 0.0
    %3310 = vmatpush1.msra.mxu0 0.0
    %3311 = vmatprep.subr.mxu0 0.0
    %3312 = vmatpush1.msra.mxu0 0.0
    %3313 = vmatprep.subr.mxu0 0.0
    %3314 = vmatpush1.msra.mxu0 0.0
    %3315 = vmatprep.subr.mxu0 0.0
    %3316 = vmatpush1.msra.mxu0 0.0
    %3317 = vmatprep.subr.mxu0 0.0
    %3318 = vmatpush1.msra.mxu0 0.0
    %3319 = vmatprep.subr.mxu0 0.0
    %3320 = vmatpush1.msra.mxu0 0.0
    %3321 = vmatprep.subr.mxu0 0.0
    %3322 = vmatpush1.msra.mxu0 0.0
    %3323 = vmatprep.subr.mxu0 0.0
    %3324 = vmatpush1.msra.mxu0 0.0
    %3325 = vmatprep.subr.mxu0 0.0
    %3326 = vmatpush1.msra.mxu0 0.0
    %3327 = vmatprep.subr.mxu0 0.0
    %3328 = vmatpush1.msra.mxu0 0.0
    %3329 = vmatprep.subr.mxu0 0.0
    %3330 = vmatpush1.msra.mxu0 0.0
    %3331 = vmatprep.subr.mxu0 0.0
    %3332 = vmatpush1.msra.mxu0 0.0
    %3333 = vmatprep.subr.mxu0 0.0
    %3334 = vmatpush1.msra.mxu0 0.0
    %3335 = vmatprep.subr.mxu0 0.0
    %3336 = vmatpush1.msra.mxu0 0.0
    %3337 = vmatprep.subr.mxu0 0.0
    %3338 = vmatpush1.msra.mxu0 0.0
    %3339 = vmatprep.subr.mxu0 0.0
    %3340 = vmatpush1.msra.mxu0 0.0
    %3341 = vmatprep.subr.mxu0 0.0
    %3342 = vmatpush1.msra.mxu0 0.0
    %3343 = vmatprep.subr.mxu0 0.0
    %3344 = vmatpush1.msra.mxu0 0.0
    %3345 = vmatprep.subr.mxu0 0.0
    %3346 = vmatpush1.msra.mxu0 0.0
    %3347 = vmatprep.subr.mxu0 0.0
    %3348 = vmatpush1.msra.mxu0 0.0
    %3349 = vmatprep.subr.mxu0 0.0
    %3350 = vmatpush1.msra.mxu0 0.0
    %3351 = vmatprep.subr.mxu0 0.0
    %3352 = vmatpush1.msra.mxu0 0.0
    %3353 = vmatprep.subr.mxu0 0.0
    %3354 = vmatpush1.msra.mxu0 0.0
    %3355 = vmatprep.subr.mxu0 0.0
    %3356 = vmatpush1.msra.mxu0 0.0
    %3357 = vmatprep.subr.mxu0 0.0
    %3358 = vmatpush1.msra.mxu0 0.0
    %3359 = vmatprep.mubr.f32.mxu0 0.0
    %v3360 = vand.u32 %v3139, 4294901760
    %v3361 = vsub.f32 %v3139, %v3360
    %3362 = vmatmul.mubr.f32.gmra.mrb[0].mxu0 %v3361
    %v3363 = vpop.f32.mrb[0].mxu0
    %v3364 = vadd.f32 %v3290, %v3363
    %v3365 = vpop.f32.mrb[0].mxu0
    %3366 = vdwg.mxu0
    %3367 = vmatprep.subr.mxu0 0.0
    %v3368 = vand.u32 %v2214, 4294901760
    %3369 = vmatpush1.msra.mxu0 %v3368
    %3370 = vmatprep.subr.mxu0 0.0
    %3371 = vmatpush1.msra.mxu0 0.0
    %3372 = vmatprep.subr.mxu0 0.0
    %3373 = vmatpush1.msra.mxu0 0.0
    %3374 = vmatprep.subr.mxu0 0.0
    %3375 = vmatpush1.msra.mxu0 0.0
    %3376 = vmatprep.subr.mxu0 0.0
    %3377 = vmatpush1.msra.mxu0 0.0
    %3378 = vmatprep.subr.mxu0 0.0
    %3379 = vmatpush1.msra.mxu0 0.0
    %3380 = vmatprep.subr.mxu0 0.0
    %3381 = vmatpush1.msra.mxu0 0.0
    %3382 = vmatprep.subr.mxu0 0.0
    %3383 = vmatpush1.msra.mxu0 0.0
    %3384 = vmatprep.subr.mxu0 0.0
    %3385 = vmatpush1.msra.mxu0 0.0
    %3386 = vmatprep.subr.mxu0 0.0
    %3387 = vmatpush1.msra.mxu0 0.0
    %3388 = vmatprep.subr.mxu0 0.0
    %3389 = vmatpush1.msra.mxu0 0.0
    %3390 = vmatprep.subr.mxu0 0.0
    %3391 = vmatpush1.msra.mxu0 0.0
    %3392 = vmatprep.subr.mxu0 0.0
    %3393 = vmatpush1.msra.mxu0 0.0
    %3394 = vmatprep.subr.mxu0 0.0
    %3395 = vmatpush1.msra.mxu0 0.0
    %3396 = vmatprep.subr.mxu0 0.0
    %3397 = vmatpush1.msra.mxu0 0.0
    %3398 = vmatprep.subr.mxu0 0.0
    %3399 = vmatpush1.msra.mxu0 0.0
    %3400 = vmatprep.subr.mxu0 0.0
    %3401 = vmatpush1.msra.mxu0 0.0
    %3402 = vmatprep.subr.mxu0 0.0
    %3403 = vmatpush1.msra.mxu0 0.0
    %3404 = vmatprep.subr.mxu0 0.0
    %3405 = vmatpush1.msra.mxu0 0.0
    %3406 = vmatprep.subr.mxu0 0.0
    %3407 = vmatpush1.msra.mxu0 0.0
    %3408 = vmatprep.subr.mxu0 0.0
    %3409 = vmatpush1.msra.mxu0 0.0
    %3410 = vmatprep.subr.mxu0 0.0
    %3411 = vmatpush1.msra.mxu0 0.0
    %3412 = vmatprep.subr.mxu0 0.0
    %3413 = vmatpush1.msra.mxu0 0.0
    %3414 = vmatprep.subr.mxu0 0.0
    %3415 = vmatpush1.msra.mxu0 0.0
    %3416 = vmatprep.subr.mxu0 0.0
    %3417 = vmatpush1.msra.mxu0 0.0
    %3418 = vmatprep.subr.mxu0 0.0
    %3419 = vmatpush1.msra.mxu0 0.0
    %3420 = vmatprep.subr.mxu0 0.0
    %3421 = vmatpush1.msra.mxu0 0.0
    %3422 = vmatprep.subr.mxu0 0.0
    %3423 = vmatpush1.msra.mxu0 0.0
    %3424 = vmatprep.subr.mxu0 0.0
    %3425 = vmatpush1.msra.mxu0 0.0
    %3426 = vmatprep.subr.mxu0 0.0
    %3427 = vmatpush1.msra.mxu0 0.0
    %3428 = vmatprep.subr.mxu0 0.0
    %3429 = vmatpush1.msra.mxu0 0.0
    %3430 = vmatprep.subr.mxu0 0.0
    %3431 = vmatpush1.msra.mxu0 0.0
    %3432 = vmatprep.mubr.f32.mxu0 0.0
    %v3433 = vand.u32 %v3139, 4294901760
    %v3434 = vsub.f32 %v3139, %v3433
    %v3435 = vand.u32 %v3434, 4294901760
    %3436 = vmatmul.mubr.f32.gmra.mrb[0].mxu0 %v3435
    %v3437 = vpop.f32.mrb[0].mxu0
    %v3438 = vadd.f32 %v3364, %v3437
    %v3439 = vpop.f32.mrb[0].mxu0
    %3440 = vdwg.mxu0
    %3441 = vmatprep.subr.mxu0 0.0
    %v3442 = vand.u32 %v2214, 4294901760
    %v3443 = vsub.f32 %v2214, %v3442
    %v3444 = vand.u32 %v3443, 4294901760
    %3445 = vmatpush1.msra.mxu0 %v3444
    %3446 = vmatprep.subr.mxu0 0.0
    %3447 = vmatpush1.msra.mxu0 0.0
    %3448 = vmatprep.subr.mxu0 0.0
    %3449 = vmatpush1.msra.mxu0 0.0
    %3450 = vmatprep.subr.mxu0 0.0
    %3451 = vmatpush1.msra.mxu0 0.0
    %3452 = vmatprep.subr.mxu0 0.0
    %3453 = vmatpush1.msra.mxu0 0.0
    %3454 = vmatprep.subr.mxu0 0.0
    %3455 = vmatpush1.msra.mxu0 0.0
    %3456 = vmatprep.subr.mxu0 0.0
    %3457 = vmatpush1.msra.mxu0 0.0
    %3458 = vmatprep.subr.mxu0 0.0
    %3459 = vmatpush1.msra.mxu0 0.0
    %3460 = vmatprep.subr.mxu0 0.0
    %3461 = vmatpush1.msra.mxu0 0.0
    %3462 = vmatprep.subr.mxu0 0.0
    %3463 = vmatpush1.msra.mxu0 0.0
    %3464 = vmatprep.subr.mxu0 0.0
    %3465 = vmatpush1.msra.mxu0 0.0
    %3466 = vmatprep.subr.mxu0 0.0
    %3467 = vmatpush1.msra.mxu0 0.0
    %3468 = vmatprep.subr.mxu0 0.0
    %3469 = vmatpush1.msra.mxu0 0.0
    %3470 = vmatprep.subr.mxu0 0.0
    %3471 = vmatpush1.msra.mxu0 0.0
    %3472 = vmatprep.subr.mxu0 0.0
    %3473 = vmatpush1.msra.mxu0 0.0
    %3474 = vmatprep.subr.mxu0 0.0
    %3475 = vmatpush1.msra.mxu0 0.0
    %3476 = vmatprep.subr.mxu0 0.0
    %3477 = vmatpush1.msra.mxu0 0.0
    %3478 = vmatprep.subr.mxu0 0.0
    %3479 = vmatpush1.msra.mxu0 0.0
    %3480 = vmatprep.subr.mxu0 0.0
    %3481 = vmatpush1.msra.mxu0 0.0
    %3482 = vmatprep.subr.mxu0 0.0
    %3483 = vmatpush1.msra.mxu0 0.0
    %3484 = vmatprep.subr.mxu0 0.0
    %3485 = vmatpush1.msra.mxu0 0.0
    %3486 = vmatprep.subr.mxu0 0.0
    %3487 = vmatpush1.msra.mxu0 0.0
    %3488 = vmatprep.subr.mxu0 0.0
    %3489 = vmatpush1.msra.mxu0 0.0
    %3490 = vmatprep.subr.mxu0 0.0
    %3491 = vmatpush1.msra.mxu0 0.0
    %3492 = vmatprep.subr.mxu0 0.0
    %3493 = vmatpush1.msra.mxu0 0.0
    %3494 = vmatprep.subr.mxu0 0.0
    %3495 = vmatpush1.msra.mxu0 0.0
    %3496 = vmatprep.subr.mxu0 0.0
    %3497 = vmatpush1.msra.mxu0 0.0
    %3498 = vmatprep.subr.mxu0 0.0
    %3499 = vmatpush1.msra.mxu0 0.0
    %3500 = vmatprep.subr.mxu0 0.0
    %3501 = vmatpush1.msra.mxu0 0.0
    %3502 = vmatprep.subr.mxu0 0.0
    %3503 = vmatpush1.msra.mxu0 0.0
    %3504 = vmatprep.subr.mxu0 0.0
    %3505 = vmatpush1.msra.mxu0 0.0
    %3506 = vmatprep.subr.mxu0 0.0
    %3507 = vmatpush1.msra.mxu0 0.0
    %3508 = vmatprep.mubr.f32.mxu0 0.0
    %v3509 = vand.u32 %v3139, 4294901760
    %3510 = vmatmul.mubr.f32.gmra.mrb[0].mxu0 %v3509
    %v3511 = vpop.f32.mrb[0].mxu0
    %v3512 = vadd.f32 %v3438, %v3511
    %v3513 = vpop.f32.mrb[0].mxu0
    %3514 = vdwg.mxu0
    %3515 = vmatprep.subr.mxu0 0.0
    %v3516 = vand.u32 %v2214, 4294901760
    %3517 = vmatpush1.msra.mxu0 %v3516
    %3518 = vmatprep.subr.mxu0 0.0
    %3519 = vmatpush1.msra.mxu0 0.0
    %3520 = vmatprep.subr.mxu0 0.0
    %3521 = vmatpush1.msra.mxu0 0.0
    %3522 = vmatprep.subr.mxu0 0.0
    %3523 = vmatpush1.msra.mxu0 0.0
    %3524 = vmatprep.subr.mxu0 0.0
    %3525 = vmatpush1.msra.mxu0 0.0
    %3526 = vmatprep.subr.mxu0 0.0
    %3527 = vmatpush1.msra.mxu0 0.0
    %3528 = vmatprep.subr.mxu0 0.0
    %3529 = vmatpush1.msra.mxu0 0.0
    %3530 = vmatprep.subr.mxu0 0.0
    %3531 = vmatpush1.msra.mxu0 0.0
    %3532 = vmatprep.subr.mxu0 0.0
    %3533 = vmatpush1.msra.mxu0 0.0
    %3534 = vmatprep.subr.mxu0 0.0
    %3535 = vmatpush1.msra.mxu0 0.0
    %3536 = vmatprep.subr.mxu0 0.0
    %3537 = vmatpush1.msra.mxu0 0.0
    %3538 = vmatprep.subr.mxu0 0.0
    %3539 = vmatpush1.msra.mxu0 0.0
    %3540 = vmatprep.subr.mxu0 0.0
    %3541 = vmatpush1.msra.mxu0 0.0
    %3542 = vmatprep.subr.mxu0 0.0
    %3543 = vmatpush1.msra.mxu0 0.0
    %3544 = vmatprep.subr.mxu0 0.0
    %3545 = vmatpush1.msra.mxu0 0.0
    %3546 = vmatprep.subr.mxu0 0.0
    %3547 = vmatpush1.msra.mxu0 0.0
    %3548 = vmatprep.subr.mxu0 0.0
    %3549 = vmatpush1.msra.mxu0 0.0
    %3550 = vmatprep.subr.mxu0 0.0
    %3551 = vmatpush1.msra.mxu0 0.0
    %3552 = vmatprep.subr.mxu0 0.0
    %3553 = vmatpush1.msra.mxu0 0.0
    %3554 = vmatprep.subr.mxu0 0.0
    %3555 = vmatpush1.msra.mxu0 0.0
    %3556 = vmatprep.subr.mxu0 0.0
    %3557 = vmatpush1.msra.mxu0 0.0
    %3558 = vmatprep.subr.mxu0 0.0
    %3559 = vmatpush1.msra.mxu0 0.0
    %3560 = vmatprep.subr.mxu0 0.0
    %3561 = vmatpush1.msra.mxu0 0.0
    %3562 = vmatprep.subr.mxu0 0.0
    %3563 = vmatpush1.msra.mxu0 0.0
    %3564 = vmatprep.subr.mxu0 0.0
    %3565 = vmatpush1.msra.mxu0 0.0
    %3566 = vmatprep.subr.mxu0 0.0
    %3567 = vmatpush1.msra.mxu0 0.0
    %3568 = vmatprep.subr.mxu0 0.0
    %3569 = vmatpush1.msra.mxu0 0.0
    %3570 = vmatprep.subr.mxu0 0.0
    %3571 = vmatpush1.msra.mxu0 0.0
    %3572 = vmatprep.subr.mxu0 0.0
    %3573 = vmatpush1.msra.mxu0 0.0
    %3574 = vmatprep.subr.mxu0 0.0
    %3575 = vmatpush1.msra.mxu0 0.0
    %3576 = vmatprep.subr.mxu0 0.0
    %3577 = vmatpush1.msra.mxu0 0.0
    %3578 = vmatprep.subr.mxu0 0.0
    %3579 = vmatpush1.msra.mxu0 0.0
    %3580 = vmatprep.mubr.f32.mxu0 0.0
    %v3581 = vand.u32 %v3139, 4294901760
    %3582 = vmatmul.mubr.f32.gmra.mrb[0].mxu0 %v3581
    %v3583 = vpop.f32.mrb[0].mxu0
    %v3584 = vadd.f32 %v3512, %v3583
    %v3585 = vpop.f32.mrb[0].mxu0
    %3586 = vdwg.mxu0
    %v3588 = vsel %vm3115, %v3137, 0
    %3590 = vmatprep.subr.mxu0 0.0
    %v3591 = vand.u32 %v2220, 4294901760
    %3592 = vmatpush1.msra.mxu0 %v3591
    %3593 = vmatprep.subr.mxu0 0.0
    %3594 = vmatpush1.msra.mxu0 0.0
    %3595 = vmatprep.subr.mxu0 0.0
    %3596 = vmatpush1.msra.mxu0 0.0
    %3597 = vmatprep.subr.mxu0 0.0
    %3598 = vmatpush1.msra.mxu0 0.0
    %3599 = vmatprep.subr.mxu0 0.0
    %3600 = vmatpush1.msra.mxu0 0.0
    %3601 = vmatprep.subr.mxu0 0.0
    %3602 = vmatpush1.msra.mxu0 0.0
    %3603 = vmatprep.subr.mxu0 0.0
    %3604 = vmatpush1.msra.mxu0 0.0
    %3605 = vmatprep.subr.mxu0 0.0
    %3606 = vmatpush1.msra.mxu0 0.0
    %3607 = vmatprep.subr.mxu0 0.0
    %3608 = vmatpush1.msra.mxu0 0.0
    %3609 = vmatprep.subr.mxu0 0.0
    %3610 = vmatpush1.msra.mxu0 0.0
    %3611 = vmatprep.subr.mxu0 0.0
    %3612 = vmatpush1.msra.mxu0 0.0
    %3613 = vmatprep.subr.mxu0 0.0
    %3614 = vmatpush1.msra.mxu0 0.0
    %3615 = vmatprep.subr.mxu0 0.0
    %3616 = vmatpush1.msra.mxu0 0.0
    %3617 = vmatprep.subr.mxu0 0.0
    %3618 = vmatpush1.msra.mxu0 0.0
    %3619 = vmatprep.subr.mxu0 0.0
    %3620 = vmatpush1.msra.mxu0 0.0
    %3621 = vmatprep.subr.mxu0 0.0
    %3622 = vmatpush1.msra.mxu0 0.0
    %3623 = vmatprep.subr.mxu0 0.0
    %3624 = vmatpush1.msra.mxu0 0.0
    %3625 = vmatprep.subr.mxu0 0.0
    %3626 = vmatpush1.msra.mxu0 0.0
    %3627 = vmatprep.subr.mxu0 0.0
    %3628 = vmatpush1.msra.mxu0 0.0
    %3629 = vmatprep.subr.mxu0 0.0
    %3630 = vmatpush1.msra.mxu0 0.0
    %3631 = vmatprep.subr.mxu0 0.0
    %3632 = vmatpush1.msra.mxu0 0.0
    %3633 = vmatprep.subr.mxu0 0.0
    %3634 = vmatpush1.msra.mxu0 0.0
    %3635 = vmatprep.subr.mxu0 0.0
    %3636 = vmatpush1.msra.mxu0 0.0
    %3637 = vmatprep.subr.mxu0 0.0
    %3638 = vmatpush1.msra.mxu0 0.0
    %3639 = vmatprep.subr.mxu0 0.0
    %3640 = vmatpush1.msra.mxu0 0.0
    %3641 = vmatprep.subr.mxu0 0.0
    %3642 = vmatpush1.msra.mxu0 0.0
    %3643 = vmatprep.subr.mxu0 0.0
    %3644 = vmatpush1.msra.mxu0 0.0
    %3645 = vmatprep.subr.mxu0 0.0
    %3646 = vmatpush1.msra.mxu0 0.0
    %3647 = vmatprep.subr.mxu0 0.0
    %3648 = vmatpush1.msra.mxu0 0.0
    %3649 = vmatprep.subr.mxu0 0.0
    %3650 = vmatpush1.msra.mxu0 0.0
    %3651 = vmatprep.subr.mxu0 0.0
    %3652 = vmatpush1.msra.mxu0 0.0
    %3653 = vmatprep.subr.mxu0 0.0
    %3654 = vmatpush1.msra.mxu0 0.0
    %3655 = vmatprep.mubr.f32.mxu0 0.0
    %v3656 = vand.u32 %v3588, 4294901760
    %v3657 = vsub.f32 %v3588, %v3656
    %v3658 = vand.u32 %v3657, 4294901760
    %v3659 = vsub.f32 %v3657, %v3658
    %v3660 = vand.u32 %v3659, 4294901760
    %3661 = vmatmul.mubr.f32.gmra.mrb[0].mxu0 %v3660
    %v3662 = vpop.f32.mrb[0].mxu0
    %v3663 = vadd.f32 0.0, %v3662
    %v3664 = vpop.f32.mrb[0].mxu0
    %3665 = vdwg.mxu0
    %3666 = vmatprep.subr.mxu0 0.0
    %v3667 = vand.u32 %v2220, 4294901760
    %v3668 = vsub.f32 %v2220, %v3667
    %v3669 = vand.u32 %v3668, 4294901760
    %v3670 = vsub.f32 %v3668, %v3669
    %v3671 = vand.u32 %v3670, 4294901760
    %3672 = vmatpush1.msra.mxu0 %v3671
    %3673 = vmatprep.subr.mxu0 0.0
    %3674 = vmatpush1.msra.mxu0 0.0
    %3675 = vmatprep.subr.mxu0 0.0
    %3676 = vmatpush1.msra.mxu0 0.0
    %3677 = vmatprep.subr.mxu0 0.0
    %3678 = vmatpush1.msra.mxu0 0.0
    %3679 = vmatprep.subr.mxu0 0.0
    %3680 = vmatpush1.msra.mxu0 0.0
    %3681 = vmatprep.subr.mxu0 0.0
    %3682 = vmatpush1.msra.mxu0 0.0
    %3683 = vmatprep.subr.mxu0 0.0
    %3684 = vmatpush1.msra.mxu0 0.0
    %3685 = vmatprep.subr.mxu0 0.0
    %3686 = vmatpush1.msra.mxu0 0.0
    %3687 = vmatprep.subr.mxu0 0.0
    %3688 = vmatpush1.msra.mxu0 0.0
    %3689 = vmatprep.subr.mxu0 0.0
    %3690 = vmatpush1.msra.mxu0 0.0
    %3691 = vmatprep.subr.mxu0 0.0
    %3692 = vmatpush1.msra.mxu0 0.0
    %3693 = vmatprep.subr.mxu0 0.0
    %3694 = vmatpush1.msra.mxu0 0.0
    %3695 = vmatprep.subr.mxu0 0.0
    %3696 = vmatpush1.msra.mxu0 0.0
    %3697 = vmatprep.subr.mxu0 0.0
    %3698 = vmatpush1.msra.mxu0 0.0
    %3699 = vmatprep.subr.mxu0 0.0
    %3700 = vmatpush1.msra.mxu0 0.0
    %3701 = vmatprep.subr.mxu0 0.0
    %3702 = vmatpush1.msra.mxu0 0.0
    %3703 = vmatprep.subr.mxu0 0.0
    %3704 = vmatpush1.msra.mxu0 0.0
    %3705 = vmatprep.subr.mxu0 0.0
    %3706 = vmatpush1.msra.mxu0 0.0
    %3707 = vmatprep.subr.mxu0 0.0
    %3708 = vmatpush1.msra.mxu0 0.0
    %3709 = vmatprep.subr.mxu0 0.0
    %3710 = vmatpush1.msra.mxu0 0.0
    %3711 = vmatprep.subr.mxu0 0.0
    %3712 = vmatpush1.msra.mxu0 0.0
    %3713 = vmatprep.subr.mxu0 0.0
    %3714 = vmatpush1.msra.mxu0 0.0
    %3715 = vmatprep.subr.mxu0 0.0
    %3716 = vmatpush1.msra.mxu0 0.0
    %3717 = vmatprep.subr.mxu0 0.0
    %3718 = vmatpush1.msra.mxu0 0.0
    %3719 = vmatprep.subr.mxu0 0.0
    %3720 = vmatpush1.msra.mxu0 0.0
    %3721 = vmatprep.subr.mxu0 0.0
    %3722 = vmatpush1.msra.mxu0 0.0
    %3723 = vmatprep.subr.mxu0 0.0
    %3724 = vmatpush1.msra.mxu0 0.0
    %3725 = vmatprep.subr.mxu0 0.0
    %3726 = vmatpush1.msra.mxu0 0.0
    %3727 = vmatprep.subr.mxu0 0.0
    %3728 = vmatpush1.msra.mxu0 0.0
    %3729 = vmatprep.subr.mxu0 0.0
    %3730 = vmatpush1.msra.mxu0 0.0
    %3731 = vmatprep.subr.mxu0 0.0
    %3732 = vmatpush1.msra.mxu0 0.0
    %3733 = vmatprep.subr.mxu0 0.0
    %3734 = vmatpush1.msra.mxu0 0.0
    %3735 = vmatprep.mubr.f32.mxu0 0.0
    %v3736 = vand.u32 %v3588, 4294901760
    %3737 = vmatmul.mubr.f32.gmra.mrb[0].mxu0 %v3736
    %v3738 = vpop.f32.mrb[0].mxu0
    %v3739 = vadd.f32 %v3663, %v3738
    %v3740 = vpop.f32.mrb[0].mxu0
    %3741 = vdwg.mxu0
    %3742 = vmatprep.subr.mxu0 0.0
    %v3743 = vand.u32 %v2220, 4294901760
    %v3744 = vsub.f32 %v2220, %v3743
    %3745 = vmatpush1.msra.mxu0 %v3744
    %3746 = vmatprep.subr.mxu0 0.0
    %3747 = vmatpush1.msra.mxu0 0.0
    %3748 = vmatprep.subr.mxu0 0.0
    %3749 = vmatpush1.msra.mxu0 0.0
    %3750 = vmatprep.subr.mxu0 0.0
    %3751 = vmatpush1.msra.mxu0 0.0
    %3752 = vmatprep.subr.mxu0 0.0
    %3753 = vmatpush1.msra.mxu0 0.0
    %3754 = vmatprep.subr.mxu0 0.0
    %3755 = vmatpush1.msra.mxu0 0.0
    %3756 = vmatprep.subr.mxu0 0.0
    %3757 = vmatpush1.msra.mxu0 0.0
    %3758 = vmatprep.subr.mxu0 0.0
    %3759 = vmatpush1.msra.mxu0 0.0
    %3760 = vmatprep.subr.mxu0 0.0
    %3761 = vmatpush1.msra.mxu0 0.0
    %3762 = vmatprep.subr.mxu0 0.0
    %3763 = vmatpush1.msra.mxu0 0.0
    %3764 = vmatprep.subr.mxu0 0.0
    %3765 = vmatpush1.msra.mxu0 0.0
    %3766 = vmatprep.subr.mxu0 0.0
    %3767 = vmatpush1.msra.mxu0 0.0
    %3768 = vmatprep.subr.mxu0 0.0
    %3769 = vmatpush1.msra.mxu0 0.0
    %3770 = vmatprep.subr.mxu0 0.0
    %3771 = vmatpush1.msra.mxu0 0.0
    %3772 = vmatprep.subr.mxu0 0.0
    %3773 = vmatpush1.msra.mxu0 0.0
    %3774 = vmatprep.subr.mxu0 0.0
    %3775 = vmatpush1.msra.mxu0 0.0
    %3776 = vmatprep.subr.mxu0 0.0
    %3777 = vmatpush1.msra.mxu0 0.0
    %3778 = vmatprep.subr.mxu0 0.0
    %3779 = vmatpush1.msra.mxu0 0.0
    %3780 = vmatprep.subr.mxu0 0.0
    %3781 = vmatpush1.msra.mxu0 0.0
    %3782 = vmatprep.subr.mxu0 0.0
    %3783 = vmatpush1.msra.mxu0 0.0
    %3784 = vmatprep.subr.mxu0 0.0
    %3785 = vmatpush1.msra.mxu0 0.0
    %3786 = vmatprep.subr.mxu0 0.0
    %3787 = vmatpush1.msra.mxu0 0.0
    %3788 = vmatprep.subr.mxu0 0.0
    %3789 = vmatpush1.msra.mxu0 0.0
    %3790 = vmatprep.subr.mxu0 0.0
    %3791 = vmatpush1.msra.mxu0 0.0
    %3792 = vmatprep.subr.mxu0 0.0
    %3793 = vmatpush1.msra.mxu0 0.0
    %3794 = vmatprep.subr.mxu0 0.0
    %3795 = vmatpush1.msra.mxu0 0.0
    %3796 = vmatprep.subr.mxu0 0.0
    %3797 = vmatpush1.msra.mxu0 0.0
    %3798 = vmatprep.subr.mxu0 0.0
    %3799 = vmatpush1.msra.mxu0 0.0
    %3800 = vmatprep.subr.mxu0 0.0
    %3801 = vmatpush1.msra.mxu0 0.0
    %3802 = vmatprep.subr.mxu0 0.0
    %3803 = vmatpush1.msra.mxu0 0.0
    %3804 = vmatprep.subr.mxu0 0.0
    %3805 = vmatpush1.msra.mxu0 0.0
    %3806 = vmatprep.subr.mxu0 0.0
    %3807 = vmatpush1.msra.mxu0 0.0
    %3808 = vmatprep.mubr.f32.mxu0 0.0
    %v3809 = vand.u32 %v3588, 4294901760
    %v3810 = vsub.f32 %v3588, %v3809
    %3811 = vmatmul.mubr.f32.gmra.mrb[0].mxu0 %v3810
    %v3812 = vpop.f32.mrb[0].mxu0
    %v3813 = vadd.f32 %v3739, %v3812
    %v3814 = vpop.f32.mrb[0].mxu0
    %3815 = vdwg.mxu0
    %3816 = vmatprep.subr.mxu0 0.0
    %v3817 = vand.u32 %v2220, 4294901760
    %3818 = vmatpush1.msra.mxu0 %v3817
    %3819 = vmatprep.subr.mxu0 0.0
    %3820 = vmatpush1.msra.mxu0 0.0
    %3821 = vmatprep.subr.mxu0 0.0
    %3822 = vmatpush1.msra.mxu0 0.0
    %3823 = vmatprep.subr.mxu0 0.0
    %3824 = vmatpush1.msra.mxu0 0.0
    %3825 = vmatprep.subr.mxu0 0.0
    %3826 = vmatpush1.msra.mxu0 0.0
    %3827 = vmatprep.subr.mxu0 0.0
    %3828 = vmatpush1.msra.mxu0 0.0
    %3829 = vmatprep.subr.mxu0 0.0
    %3830 = vmatpush1.msra.mxu0 0.0
    %3831 = vmatprep.subr.mxu0 0.0
    %3832 = vmatpush1.msra.mxu0 0.0
    %3833 = vmatprep.subr.mxu0 0.0
    %3834 = vmatpush1.msra.mxu0 0.0
    %3835 = vmatprep.subr.mxu0 0.0
    %3836 = vmatpush1.msra.mxu0 0.0
    %3837 = vmatprep.subr.mxu0 0.0
    %3838 = vmatpush1.msra.mxu0 0.0
    %3839 = vmatprep.subr.mxu0 0.0
    %3840 = vmatpush1.msra.mxu0 0.0
    %3841 = vmatprep.subr.mxu0 0.0
    %3842 = vmatpush1.msra.mxu0 0.0
    %3843 = vmatprep.subr.mxu0 0.0
    %3844 = vmatpush1.msra.mxu0 0.0
    %3845 = vmatprep.subr.mxu0 0.0
    %3846 = vmatpush1.msra.mxu0 0.0
    %3847 = vmatprep.subr.mxu0 0.0
    %3848 = vmatpush1.msra.mxu0 0.0
    %3849 = vmatprep.subr.mxu0 0.0
    %3850 = vmatpush1.msra.mxu0 0.0
    %3851 = vmatprep.subr.mxu0 0.0
    %3852 = vmatpush1.msra.mxu0 0.0
    %3853 = vmatprep.subr.mxu0 0.0
    %3854 = vmatpush1.msra.mxu0 0.0
    %3855 = vmatprep.subr.mxu0 0.0
    %3856 = vmatpush1.msra.mxu0 0.0
    %3857 = vmatprep.subr.mxu0 0.0
    %3858 = vmatpush1.msra.mxu0 0.0
    %3859 = vmatprep.subr.mxu0 0.0
    %3860 = vmatpush1.msra.mxu0 0.0
    %3861 = vmatprep.subr.mxu0 0.0
    %3862 = vmatpush1.msra.mxu0 0.0
    %3863 = vmatprep.subr.mxu0 0.0
    %3864 = vmatpush1.msra.mxu0 0.0
    %3865 = vmatprep.subr.mxu0 0.0
    %3866 = vmatpush1.msra.mxu0 0.0
    %3867 = vmatprep.subr.mxu0 0.0
    %3868 = vmatpush1.msra.mxu0 0.0
    %3869 = vmatprep.subr.mxu0 0.0
    %3870 = vmatpush1.msra.mxu0 0.0
    %3871 = vmatprep.subr.mxu0 0.0
    %3872 = vmatpush1.msra.mxu0 0.0
    %3873 = vmatprep.subr.mxu0 0.0
    %3874 = vmatpush1.msra.mxu0 0.0
    %3875 = vmatprep.subr.mxu0 0.0
    %3876 = vmatpush1.msra.mxu0 0.0
    %3877 = vmatprep.subr.mxu0 0.0
    %3878 = vmatpush1.msra.mxu0 0.0
    %3879 = vmatprep.subr.mxu0 0.0
    %3880 = vmatpush1.msra.mxu0 0.0
    %3881 = vmatprep.mubr.f32.mxu0 0.0
    %v3882 = vand.u32 %v3588, 4294901760
    %v3883 = vsub.f32 %v3588, %v3882
    %v3884 = vand.u32 %v3883, 4294901760
    %3885 = vmatmul.mubr.f32.gmra.mrb[0].mxu0 %v3884
    %v3886 = vpop.f32.mrb[0].mxu0
    %v3887 = vadd.f32 %v3813, %v3886
    %v3888 = vpop.f32.mrb[0].mxu0
    %3889 = vdwg.mxu0
    %3890 = vmatprep.subr.mxu0 0.0
    %v3891 = vand.u32 %v2220, 4294901760
    %v3892 = vsub.f32 %v2220, %v3891
    %v3893 = vand.u32 %v3892, 4294901760
    %3894 = vmatpush1.msra.mxu0 %v3893
    %3895 = vmatprep.subr.mxu0 0.0
    %3896 = vmatpush1.msra.mxu0 0.0
    %3897 = vmatprep.subr.mxu0 0.0
    %3898 = vmatpush1.msra.mxu0 0.0
    %3899 = vmatprep.subr.mxu0 0.0
    %3900 = vmatpush1.msra.mxu0 0.0
    %3901 = vmatprep.subr.mxu0 0.0
    %3902 = vmatpush1.msra.mxu0 0.0
    %3903 = vmatprep.subr.mxu0 0.0
    %3904 = vmatpush1.msra.mxu0 0.0
    %3905 = vmatprep.subr.mxu0 0.0
    %3906 = vmatpush1.msra.mxu0 0.0
    %3907 = vmatprep.subr.mxu0 0.0
    %3908 = vmatpush1.msra.mxu0 0.0
    %3909 = vmatprep.subr.mxu0 0.0
    %3910 = vmatpush1.msra.mxu0 0.0
    %3911 = vmatprep.subr.mxu0 0.0
    %3912 = vmatpush1.msra.mxu0 0.0
    %3913 = vmatprep.subr.mxu0 0.0
    %3914 = vmatpush1.msra.mxu0 0.0
    %3915 = vmatprep.subr.mxu0 0.0
    %3916 = vmatpush1.msra.mxu0 0.0
    %3917 = vmatprep.subr.mxu0 0.0
    %3918 = vmatpush1.msra.mxu0 0.0
    %3919 = vmatprep.subr.mxu0 0.0
    %3920 = vmatpush1.msra.mxu0 0.0
    %3921 = vmatprep.subr.mxu0 0.0
    %3922 = vmatpush1.msra.mxu0 0.0
    %3923 = vmatprep.subr.mxu0 0.0
    %3924 = vmatpush1.msra.mxu0 0.0
    %3925 = vmatprep.subr.mxu0 0.0
    %3926 = vmatpush1.msra.mxu0 0.0
    %3927 = vmatprep.subr.mxu0 0.0
    %3928 = vmatpush1.msra.mxu0 0.0
    %3929 = vmatprep.subr.mxu0 0.0
    %3930 = vmatpush1.msra.mxu0 0.0
    %3931 = vmatprep.subr.mxu0 0.0
    %3932 = vmatpush1.msra.mxu0 0.0
    %3933 = vmatprep.subr.mxu0 0.0
    %3934 = vmatpush1.msra.mxu0 0.0
    %3935 = vmatprep.subr.mxu0 0.0
    %3936 = vmatpush1.msra.mxu0 0.0
    %3937 = vmatprep.subr.mxu0 0.0
    %3938 = vmatpush1.msra.mxu0 0.0
    %3939 = vmatprep.subr.mxu0 0.0
    %3940 = vmatpush1.msra.mxu0 0.0
    %3941 = vmatprep.subr.mxu0 0.0
    %3942 = vmatpush1.msra.mxu0 0.0
    %3943 = vmatprep.subr.mxu0 0.0
    %3944 = vmatpush1.msra.mxu0 0.0
    %3945 = vmatprep.subr.mxu0 0.0
    %3946 = vmatpush1.msra.mxu0 0.0
    %3947 = vmatprep.subr.mxu0 0.0
    %3948 = vmatpush1.msra.mxu0 0.0
    %3949 = vmatprep.subr.mxu0 0.0
    %3950 = vmatpush1.msra.mxu0 0.0
    %3951 = vmatprep.subr.mxu0 0.0
    %3952 = vmatpush1.msra.mxu0 0.0
    %3953 = vmatprep.subr.mxu0 0.0
    %3954 = vmatpush1.msra.mxu0 0.0
    %3955 = vmatprep.subr.mxu0 0.0
    %3956 = vmatpush1.msra.mxu0 0.0
    %3957 = vmatprep.mubr.f32.mxu0 0.0
    %v3958 = vand.u32 %v3588, 4294901760
    %3959 = vmatmul.mubr.f32.gmra.mrb[0].mxu0 %v3958
    %v3960 = vpop.f32.mrb[0].mxu0
    %v3961 = vadd.f32 %v3887, %v3960
    %v3962 = vpop.f32.mrb[0].mxu0
    %3963 = vdwg.mxu0
    %3964 = vmatprep.subr.mxu0 0.0
    %v3965 = vand.u32 %v2220, 4294901760
    %3966 = vmatpush1.msra.mxu0 %v3965
    %3967 = vmatprep.subr.mxu0 0.0
    %3968 = vmatpush1.msra.mxu0 0.0
    %3969 = vmatprep.subr.mxu0 0.0
    %3970 = vmatpush1.msra.mxu0 0.0
    %3971 = vmatprep.subr.mxu0 0.0
    %3972 = vmatpush1.msra.mxu0 0.0
    %3973 = vmatprep.subr.mxu0 0.0
    %3974 = vmatpush1.msra.mxu0 0.0
    %3975 = vmatprep.subr.mxu0 0.0
    %3976 = vmatpush1.msra.mxu0 0.0
    %3977 = vmatprep.subr.mxu0 0.0
    %3978 = vmatpush1.msra.mxu0 0.0
    %3979 = vmatprep.subr.mxu0 0.0
    %3980 = vmatpush1.msra.mxu0 0.0
    %3981 = vmatprep.subr.mxu0 0.0
    %3982 = vmatpush1.msra.mxu0 0.0
    %3983 = vmatprep.subr.mxu0 0.0
    %3984 = vmatpush1.msra.mxu0 0.0
    %3985 = vmatprep.subr.mxu0 0.0
    %3986 = vmatpush1.msra.mxu0 0.0
    %3987 = vmatprep.subr.mxu0 0.0
    %3988 = vmatpush1.msra.mxu0 0.0
    %3989 = vmatprep.subr.mxu0 0.0
    %3990 = vmatpush1.msra.mxu0 0.0
    %3991 = vmatprep.subr.mxu0 0.0
    %3992 = vmatpush1.msra.mxu0 0.0
    %3993 = vmatprep.subr.mxu0 0.0
    %3994 = vmatpush1.msra.mxu0 0.0
    %3995 = vmatprep.subr.mxu0 0.0
    %3996 = vmatpush1.msra.mxu0 0.0
    %3997 = vmatprep.subr.mxu0 0.0
    %3998 = vmatpush1.msra.mxu0 0.0
    %3999 = vmatprep.subr.mxu0 0.0
    %4000 = vmatpush1.msra.mxu0 0.0
    %4001 = vmatprep.subr.mxu0 0.0
    %4002 = vmatpush1.msra.mxu0 0.0
    %4003 = vmatprep.subr.mxu0 0.0
    %4004 = vmatpush1.msra.mxu0 0.0
    %4005 = vmatprep.subr.mxu0 0.0
    %4006 = vmatpush1.msra.mxu0 0.0
    %4007 = vmatprep.subr.mxu0 0.0
    %4008 = vmatpush1.msra.mxu0 0.0
    %4009 = vmatprep.subr.mxu0 0.0
    %4010 = vmatpush1.msra.mxu0 0.0
    %4011 = vmatprep.subr.mxu0 0.0
    %4012 = vmatpush1.msra.mxu0 0.0
    %4013 = vmatprep.subr.mxu0 0.0
    %4014 = vmatpush1.msra.mxu0 0.0
    %4015 = vmatprep.subr.mxu0 0.0
    %4016 = vmatpush1.msra.mxu0 0.0
    %4017 = vmatprep.subr.mxu0 0.0
    %4018 = vmatpush1.msra.mxu0 0.0
    %4019 = vmatprep.subr.mxu0 0.0
    %4020 = vmatpush1.msra.mxu0 0.0
    %4021 = vmatprep.subr.mxu0 0.0
    %4022 = vmatpush1.msra.mxu0 0.0
    %4023 = vmatprep.subr.mxu0 0.0
    %4024 = vmatpush1.msra.mxu0 0.0
    %4025 = vmatprep.subr.mxu0 0.0
    %4026 = vmatpush1.msra.mxu0 0.0
    %4027 = vmatprep.subr.mxu0 0.0
    %4028 = vmatpush1.msra.mxu0 0.0
    %4029 = vmatprep.mubr.f32.mxu0 0.0
    %v4030 = vand.u32 %v3588, 4294901760
    %4031 = vmatmul.mubr.f32.gmra.mrb[0].mxu0 %v4030
    %v4032 = vpop.f32.mrb[0].mxu0
    %v4033 = vadd.f32 %v3961, %v4032
    %v4034 = vpop.f32.mrb[0].mxu0
    %4035 = vdwg.mxu0
    %v4036 = vadd.f32 %v98, %v3584
    %v4037 = vadd.f32 %v99, %v4033
    %4038 = vst [vmem:[#allocation11] sm:$0xff] %v4036
    %4039 = vst [vmem:[#allocation11 + $0x8] sm:$0xff] %v4037
    // Predicated region
    $region54: #{tpu_custom_call.1} parent=1 // pred_check
      _
    $region55: #{tpu_custom_call.1} parent=1 // pred_check_branch
      %4041 = sbr.rel (0) target = $region57
    $region56: #{tpu_custom_call.1} parent=1 // pred_region
      %s4043 = ssub.s32 256, 256
      %4044 = vsyncadd [#allocation4], %s4043
      %s4045 = sshll.u32 [#allocation11], 4
      %s4046 = int_to_ptr.vmem [resolvable:$true] %s4045
      %4051 = dma.vmem_to_hbm [thread:$0]  %s4046, 256, %s8, [#allocation4], 128, 128, 8
    $region57: #{tpu_custom_call.1} parent=1 // pred_fallthru
      _
    // Predicated region
    $region58: #{tpu_custom_call.1} parent=1 // pred_check
      _
    $region59: #{tpu_custom_call.1} parent=1 // pred_check_branch
      %4053 = sbr.rel (0) target = $region61
    $region60: #{tpu_custom_call.1} parent=1 // pred_region
      %4054 = dma.done [#allocation4], 256
    $region61: #{tpu_custom_call.1} parent=1 // pred_fallthru
      _
    %4055 = vsyncpa [#allocation3], 1
    %4056 = vsyncpa [#allocation6], 1
    %4057 = vsyncpa [#allocation9], 1
    %4058 = vsyncpa [#allocation4], 1

// kernel: tpu_custom_call.1
$region0: #{tpu_custom_call.1}
  #allocation0 [shape = 'u32[]', space=smem, size = 0x4, offset = 0x4, fixed_abs, tag = 'smem constant byte address 0x4 - core index']
  #allocation1 [shape = 'u32[144,128]{1,0:T(1,128)}', space=vmem, size = 0x12000, scoped, tag = 'internal scratch']
  %s0 = inlined_call_operand.hbm [shape: f32[2,8,128], index: 0, kind: input, shape index: {}]
  %s1 = inlined_call_operand.hbm [shape: f32[2,8,128], index: 1, kind: input, shape index: {}]
  %s2 = inlined_call_operand.hbm [shape: f32[128,128], index: 2, kind: input, shape index: {}]
  %s3 = inlined_call_operand.vmem [shape: f32[1,128], index: 3, kind: input, shape index: {}]
  %s4 = inlined_call_operand.hbm [shape: f32[128,128], index: 4, kind: input, shape index: {}]
  %s5 = inlined_call_operand.vmem [shape: f32[1,128], index: 5, kind: input, shape index: {}]
  %s6 = inlined_call_operand.hbm [shape: f32[128,128], index: 6, kind: input, shape index: {}]
  %s7 = inlined_call_operand.vmem [shape: f32[1,128], index: 7, kind: input, shape index: {}]
  %s8 = inlined_call_operand.hbm [shape: f32[2,8,128], index: 8, kind: output, shape index: {}]
  %s9 = sld [smem:[#allocation0]]
  $region62: #{tpu_custom_call.1} parent=0
    _
  %s11 = ssub.s32 1, %s9
  %s12 = scalar_select 0, %s11, %s9
  $region1: #{tpu_custom_call.1} parent=0
    #allocation2 [shape = 'u8[8192]{0}', space=vmem, size = 0x2000, scoped, tag = 'input window, operand 0, single buffered']
    #allocation3 [shape = 's32[1]{0}', space=sflag, size = 0x4, scoped, tag = 'scoped memory for tpu_custom_call.1']
    #allocation4 [shape = 's32[1]{0}', space=sflag, size = 0x4, scoped, tag = 'scoped memory for tpu_custom_call.1']
    #allocation5 [shape = 'u8[8192]{0}', space=vmem, size = 0x2000, scoped, tag = 'input window, operand 1, single buffered']
    #allocation6 [shape = 's32[1]{0}', space=sflag, size = 0x4, scoped, tag = 'scoped memory for tpu_custom_call.1']
    #allocation7 [shape = 'u8[65536]{0}', space=vmem, size = 0x10000, scoped, tag = 'input window, operand 2, single buffered']
    #allocation8 [shape = 'u8[65536]{0}', space=vmem, size = 0x10000, scoped, tag = 'input window, operand 4, single buffered']
    #allocation9 [shape = 's32[1]{0}', space=sflag, size = 0x4, scoped, tag = 'scoped memory for tpu_custom_call.1']
    #allocation10 [shape = 'u8[65536]{0}', space=vmem, size = 0x10000, scoped, tag = 'input window, operand 6, single buffered']
    #allocation11 [shape = 'u8[8192]{0}', space=vmem, size = 0x2000, scoped, tag = 'output window, operand 0, single buffered']
    %13 = vsyncpa [#allocation3], 0
    %14 = vsyncpa [#allocation6], 0
    %15 = vsyncpa [#allocation9], 0
    %16 = vsyncpa [#allocation4], 0
    // Predicated region
    $region2: #{tpu_custom_call.1} parent=1 // pred_check
      _
    $region3: #{tpu_custom_call.1} parent=1 // pred_check_branch
      %18 = sbr.rel (0) target = $region5
    $region4: #{tpu_custom_call.1} parent=1 // pred_region
      %s20 = ssub.s32 256, 256
      %21 = vsyncadd [#allocation3], %s20
      %s22 = sshll.u32 [#allocation2], 4
      %s23 = int_to_ptr.vmem [resolvable:$true] %s22
      %28 = dma.hbm_to_vmem [thread:$0]  %s0, 256, %s23, [#allocation3], 128, 128, 8
    $region5: #{tpu_custom_call.1} parent=1 // pred_fallthru
      _
    // Predicated region
    $region6: #{tpu_custom_call.1} parent=1 // pred_check
      _
    $region7: #{tpu_custom_call.1} parent=1 // pred_check_branch
      %30 = sbr.rel (0) target = $region9
    $region8: #{tpu_custom_call.1} parent=1 // pred_region
      %s32 = ssub.s32 256, 256
      %33 = vsyncadd [#allocation6], %s32
      %s34 = sshll.u32 [#allocation5], 4
      %s35 = int_to_ptr.vmem [resolvable:$true] %s34
      %40 = dma.hbm_to_vmem [thread:$0]  %s1, 256, %s35, [#allocation6], 128, 128, 8
    $region9: #{tpu_custom_call.1} parent=1 // pred_fallthru
      _
    // Predicated region
    $region10: #{tpu_custom_call.1} parent=1 // pred_check
      _
    $region11: #{tpu_custom_call.1} parent=1 // pred_check_branch
      %42 = sbr.rel (0) target = $region13
    $region12: #{tpu_custom_call.1} parent=1 // pred_region
      %s44 = ssub.s32 2048, 2048
      %45 = vsyncadd [#allocation6], %s44
      %s46 = sshll.u32 [#allocation7], 4
      %s47 = int_to_ptr.vmem [resolvable:$true] %s46
      %52 = dma.hbm_to_vmem [thread:$0]  %s2, 2048, %s47, [#allocation6], 128, 128, 8
    $region13: #{tpu_custom_call.1} parent=1 // pred_fallthru
      _
    // Predicated region
    $region14: #{tpu_custom_call.1} parent=1 // pred_check
      _
    $region15: #{tpu_custom_call.1} parent=1 // pred_check_branch
      %54 = sbr.rel (0) target = $region17
    $region16: #{tpu_custom_call.1} parent=1 // pred_region
      _
    $region17: #{tpu_custom_call.1} parent=1 // pred_fallthru
      _
    // Predicated region
    $region18: #{tpu_custom_call.1} parent=1 // pred_check
      _
    $region19: #{tpu_custom_call.1} parent=1 // pred_check_branch
      %56 = sbr.rel (0) target = $region21
    $region20: #{tpu_custom_call.1} parent=1 // pred_region
      %s58 = ssub.s32 2048, 2048
      %59 = vsyncadd [#allocation9], %s58
      %s60 = sshll.u32 [#allocation8], 4
      %s61 = int_to_ptr.vmem [resolvable:$true] %s60
      %66 = dma.hbm_to_vmem [thread:$0]  %s4, 2048, %s61, [#allocation9], 128, 128, 8
    $region21: #{tpu_custom_call.1} parent=1 // pred_fallthru
      _
    // Predicated region
    $region22: #{tpu_custom_call.1} parent=1 // pred_check
      _
    $region23: #{tpu_custom_call.1} parent=1 // pred_check_branch
      %68 = sbr.rel (0) target = $region25
    $region24: #{tpu_custom_call.1} parent=1 // pred_region
      _
    $region25: #{tpu_custom_call.1} parent=1 // pred_fallthru
      _
    // Predicated region
    $region26: #{tpu_custom_call.1} parent=1 // pred_check
      _
    $region27: #{tpu_custom_call.1} parent=1 // pred_check_branch
      %70 = sbr.rel (0) target = $region29
    $region28: #{tpu_custom_call.1} parent=1 // pred_region
      %s72 = ssub.s32 2048, 2048
      %73 = vsyncadd [#allocation9], %s72
      %s74 = sshll.u32 [#allocation10], 4
      %s75 = int_to_ptr.vmem [resolvable:$true] %s74
      %80 = dma.hbm_to_vmem [thread:$0]  %s6, 2048, %s75, [#allocation9], 128, 128, 8
    $region29: #{tpu_custom_call.1} parent=1 // pred_fallthru
      _
    // Predicated region
    $region30: #{tpu_custom_call.1} parent=1 // pred_check
      _
    $region31: #{tpu_custom_call.1} parent=1 // pred_check_branch
      %82 = sbr.rel (0) target = $region33
    $region32: #{tpu_custom_call.1} parent=1 // pred_region
      _
    $region33: #{tpu_custom_call.1} parent=1 // pred_fallthru
      _
    // Predicated region
    $region34: #{tpu_custom_call.1} parent=1 // pred_check
      _
    $region35: #{tpu_custom_call.1} parent=1 // pred_check_branch
      %84 = sbr.rel (0) target = $region37
    $region36: #{tpu_custom_call.1} parent=1 // pred_region
      %85 = dma.done [#allocation3], 256
    $region37: #{tpu_custom_call.1} parent=1 // pred_fallthru
      _
    // Predicated region
    $region38: #{tpu_custom_call.1} parent=1 // pred_check
      _
    $region39: #{tpu_custom_call.1} parent=1 // pred_check_branch
      %87 = sbr.rel (0) target = $region41
    $region40: #{tpu_custom_call.1} parent=1 // pred_region
      %88 = dma.done [#allocation6], 256
    $region41: #{tpu_custom_call.1} parent=1 // pred_fallthru
      _
    // Predicated region
    $region42: #{tpu_custom_call.1} parent=1 // pred_check
      _
    $region43: #{tpu_custom_call.1} parent=1 // pred_check_branch
      %90 = sbr.rel (0) target = $region45
    $region44: #{tpu_custom_call.1} parent=1 // pred_region
      %91 = dma.done [#allocation6], 2048
    $region45: #{tpu_custom_call.1} parent=1 // pred_fallthru
      _
    // Predicated region
    $region46: #{tpu_custom_call.1} parent=1 // pred_check
      _
    $region47: #{tpu_custom_call.1} parent=1 // pred_check_branch
      %93 = sbr.rel (0) target = $region49
    $region48: #{tpu_custom_call.1} parent=1 // pred_region
      %94 = dma.done [#allocation9], 2048
    $region49: #{tpu_custom_call.1} parent=1 // pred_fallthru
      _
    // Predicated region
    $region50: #{tpu_custom_call.1} parent=1 // pred_check
      _
    $region51: #{tpu_custom_call.1} parent=1 // pred_check_branch
      %96 = sbr.rel (0) target = $region53
    $region52: #{tpu_custom_call.1} parent=1 // pred_region
      %97 = dma.done [#allocation9], 2048
    $region53: #{tpu_custom_call.1} parent=1 // pred_fallthru
      _
    %v98 = vld [vmem:[#allocation2] sm:$0xff]
    %v99 = vld [vmem:[#allocation2 + $0x8] sm:$0xff]
    %v100 = vld [vmem:[#allocation5] sm:$0xff]
    %v101 = vld [vmem:[#allocation5 + $0x8] sm:$0xff]
    %v102 = vld [vmem:[#allocation7] sm:$0xff]
    %v103 = vld [vmem:[#allocation7 + $0x8] sm:$0xff]
    %v104 = vld [vmem:[#allocation7 + $0x10] sm:$0xff]
    %v105 = vld [vmem:[#allocation7 + $0x18] sm:$0xff]
    %v106 = vld [vmem:[#allocation7 + $0x20] sm:$0xff]
    %v107 = vld [vmem:[#allocation7 + $0x28] sm:$0xff]
    %v108 = vld [vmem:[#allocation7 + $0x30] sm:$0xff]
    %v109 = vld [vmem:[#allocation7 + $0x38] sm:$0xff]
    %v110 = vld [vmem:[#allocation7 + $0x40] sm:$0xff]
    %v111 = vld [vmem:[#allocation7 + $0x48] sm:$0xff]
    %v112 = vld [vmem:[#allocation7 + $0x50] sm:$0xff]
    %v113 = vld [vmem:[#allocation7 + $0x58] sm:$0xff]
    %v114 = vld [vmem:[#allocation7 + $0x60] sm:$0xff]
    %v115 = vld [vmem:[#allocation7 + $0x68] sm:$0xff]
    %v116 = vld [vmem:[#allocation7 + $0x70] sm:$0xff]
    %v117 = vld [vmem:[#allocation7 + $0x78] sm:$0xff]
    %v118 = vld [vmem:[#allocation8] sm:$0xff]
    %v119 = vld [vmem:[#allocation8 + $0x8] sm:$0xff]
    %v120 = vld [vmem:[#allocation8 + $0x10] sm:$0xff]
    %v121 = vld [vmem:[#allocation8 + $0x18] sm:$0xff]
    %v122 = vld [vmem:[#allocation8 + $0x20] sm:$0xff]
    %v123 = vld [vmem:[#allocation8 + $0x28] sm:$0xff]
    %v124 = vld [vmem:[#allocation8 + $0x30] sm:$0xff]
    %v125 = vld [vmem:[#allocation8 + $0x38] sm:$0xff]
    %v126 = vld [vmem:[#allocation8 + $0x40] sm:$0xff]
    %v127 = vld [vmem:[#allocation8 + $0x48] sm:$0xff]
    %v128 = vld [vmem:[#allocation8 + $0x50] sm:$0xff]
    %v129 = vld [vmem:[#allocation8 + $0x58] sm:$0xff]
    %v130 = vld [vmem:[#allocation8 + $0x60] sm:$0xff]
    %v131 = vld [vmem:[#allocation8 + $0x68] sm:$0xff]
    %v132 = vld [vmem:[#allocation8 + $0x70] sm:$0xff]
    %v133 = vld [vmem:[#allocation8 + $0x78] sm:$0xff]
    %v134 = vld [vmem:[#allocation10] sm:$0xff]
    %v135 = vld [vmem:[#allocation10 + $0x8] sm:$0xff]
    %v136 = vld [vmem:[#allocation10 + $0x10] sm:$0xff]
    %v137 = vld [vmem:[#allocation10 + $0x18] sm:$0xff]
    %v138 = vld [vmem:[#allocation10 + $0x20] sm:$0xff]
    %v139 = vld [vmem:[#allocation10 + $0x28] sm:$0xff]
    %v140 = vld [vmem:[#allocation10 + $0x30] sm:$0xff]
    %v141 = vld [vmem:[#allocation10 + $0x38] sm:$0xff]
    %v142 = vld [vmem:[#allocation10 + $0x40] sm:$0xff]
    %v143 = vld [vmem:[#allocation10 + $0x48] sm:$0xff]
    %v144 = vld [vmem:[#allocation10 + $0x50] sm:$0xff]
    %v145 = vld [vmem:[#allocation10 + $0x58] sm:$0xff]
    %v146 = vld [vmem:[#allocation10 + $0x60] sm:$0xff]
    %v147 = vld [vmem:[#allocation10 + $0x68] sm:$0xff]
    %v148 = vld [vmem:[#allocation10 + $0x70] sm:$0xff]
    %v149 = vld [vmem:[#allocation10 + $0x78] sm:$0xff]
    %v150 = vld [vmem:[%s3] sm:$0x1]
    %v151 = vld [vmem:[%s5] sm:$0x1]
    %v152 = vld [vmem:[%s7] sm:$0x1]
    %v154 = vlaneseq
    %v155 = vshrl.u32 %v154, 7
    %v156 = vsub.s32 0, %v155
    %v157 = vrot.slane %v150, %v156
    %159 = vmatprep.subr.mxu0 0.0
    %v160 = vand.u32 %v102, 4294901760
    %161 = vmatpush1.msra.mxu0 %v160
    %162 = vmatprep.subr.mxu0 0.0
    %v163 = vand.u32 %v103, 4294901760
    %164 = vmatpush1.msra.mxu0 %v163
    %165 = vmatprep.subr.mxu0 0.0
    %v166 = vand.u32 %v104, 4294901760
    %167 = vmatpush1.msra.mxu0 %v166
    %168 = vmatprep.subr.mxu0 0.0
    %v169 = vand.u32 %v105, 4294901760
    %170 = vmatpush1.msra.mxu0 %v169
    %171 = vmatprep.subr.mxu0 0.0
    %v172 = vand.u32 %v106, 4294901760
    %173 = vmatpush1.msra.mxu0 %v172
    %174 = vmatprep.subr.mxu0 0.0
    %v175 = vand.u32 %v107, 4294901760
    %176 = vmatpush1.msra.mxu0 %v175
    %177 = vmatprep.subr.mxu0 0.0
    %v178 = vand.u32 %v108, 4294901760
    %179 = vmatpush1.msra.mxu0 %v178
    %180 = vmatprep.subr.mxu0 0.0
    %v181 = vand.u32 %v109, 4294901760
    %182 = vmatpush1.msra.mxu0 %v181
    %183 = vmatprep.subr.mxu0 0.0
    %v184 = vand.u32 %v110, 4294901760
    %185 = vmatpush1.msra.mxu0 %v184
    %186 = vmatprep.subr.mxu0 0.0
    %v187 = vand.u32 %v111, 4294901760
    %188 = vmatpush1.msra.mxu0 %v187
    %189 = vmatprep.subr.mxu0 0.0
    %v190 = vand.u32 %v112, 4294901760
    %191 = vmatpush1.msra.mxu0 %v190
    %192 = vmatprep.subr.mxu0 0.0
    %v193 = vand.u32 %v113, 4294901760
    %194 = vmatpush1.msra.mxu0 %v193
    %195 = vmatprep.subr.mxu0 0.0
    %v196 = vand.u32 %v114, 4294901760
    %197 = vmatpush1.msra.mxu0 %v196
    %198 = vmatprep.subr.mxu0 0.0
    %v199 = vand.u32 %v115, 4294901760
    %200 = vmatpush1.msra.mxu0 %v199
    %201 = vmatprep.subr.mxu0 0.0
    %v202 = vand.u32 %v116, 4294901760
    %203 = vmatpush1.msra.mxu0 %v202
    %204 = vmatprep.subr.mxu0 0.0
    %v205 = vand.u32 %v117, 4294901760
    %206 = vmatpush1.msra.mxu0 %v205
    %207 = vmatprep.subr.mxu0 0.0
    %208 = vmatpush1.msra.mxu0 0.0
    %209 = vmatprep.subr.mxu0 0.0
    %210 = vmatpush1.msra.mxu0 0.0
    %211 = vmatprep.subr.mxu0 0.0
    %212 = vmatpush1.msra.mxu0 0.0
    %213 = vmatprep.subr.mxu0 0.0
    %214 = vmatpush1.msra.mxu0 0.0
    %215 = vmatprep.subr.mxu0 0.0
    %216 = vmatpush1.msra.mxu0 0.0
    %217 = vmatprep.subr.mxu0 0.0
    %218 = vmatpush1.msra.mxu0 0.0
    %219 = vmatprep.subr.mxu0 0.0
    %220 = vmatpush1.msra.mxu0 0.0
    %221 = vmatprep.subr.mxu0 0.0
    %222 = vmatpush1.msra.mxu0 0.0
    %223 = vmatprep.subr.mxu0 0.0
    %224 = vmatpush1.msra.mxu0 0.0
    %225 = vmatprep.subr.mxu0 0.0
    %226 = vmatpush1.msra.mxu0 0.0
    %227 = vmatprep.subr.mxu0 0.0
    %228 = vmatpush1.msra.mxu0 0.0
    %229 = vmatprep.subr.mxu0 0.0
    %230 = vmatpush1.msra.mxu0 0.0
    %231 = vmatprep.subr.mxu0 0.0
    %232 = vmatpush1.msra.mxu0 0.0
    %233 = vmatprep.subr.mxu0 0.0
    %234 = vmatpush1.msra.mxu0 0.0
    %235 = vmatprep.subr.mxu0 0.0
    %236 = vmatpush1.msra.mxu0 0.0
    %237 = vmatprep.subr.mxu0 0.0
    %238 = vmatpush1.msra.mxu0 0.0
    %239 = vmatprep.mubr.f32.mxu0 0.0
    %v240 = vand.u32 %v98, 4294901760
    %v241 = vsub.f32 %v98, %v240
    %v242 = vand.u32 %v241, 4294901760
    %v243 = vsub.f32 %v241, %v242
    %v244 = vand.u32 %v243, 4294901760
    %245 = vmatmul.mubr.f32.gmra.mrb[0].mxu0 %v244
    %v246 = vpop.f32.mrb[0].mxu0
    %v247 = vadd.f32 %v157, %v246
    %v248 = vpop.f32.mrb[0].mxu0
    %249 = vmatprep.mubr.f32.mxu0 0.0
    %v250 = vand.u32 %v99, 4294901760
    %v251 = vsub.f32 %v99, %v250
    %v252 = vand.u32 %v251, 4294901760
    %v253 = vsub.f32 %v251, %v252
    %v254 = vand.u32 %v253, 4294901760
    %255 = vmatmul.mubr.f32.gmra.mrb[0].mxu0 %v254
    %v256 = vpop.f32.mrb[0].mxu0
    %v257 = vadd.f32 %v157, %v256
    %v258 = vpop.f32.mrb[0].mxu0
    %259 = vdwg.mxu0
    %260 = vmatprep.subr.mxu0 0.0
    %v261 = vand.u32 %v102, 4294901760
    %v262 = vsub.f32 %v102, %v261
    %v263 = vand.u32 %v262, 4294901760
    %v264 = vsub.f32 %v262, %v263
    %v265 = vand.u32 %v264, 4294901760
    %266 = vmatpush1.msra.mxu0 %v265
    %267 = vmatprep.subr.mxu0 0.0
    %v268 = vand.u32 %v103, 4294901760
    %v269 = vsub.f32 %v103, %v268
    %v270 = vand.u32 %v269, 4294901760
    %v271 = vsub.f32 %v269, %v270
    %v272 = vand.u32 %v271, 4294901760
    %273 = vmatpush1.msra.mxu0 %v272
    %274 = vmatprep.subr.mxu0 0.0
    %v275 = vand.u32 %v104, 4294901760
    %v276 = vsub.f32 %v104, %v275
    %v277 = vand.u32 %v276, 4294901760
    %v278 = vsub.f32 %v276, %v277
    %v279 = vand.u32 %v278, 4294901760
    %280 = vmatpush1.msra.mxu0 %v279
    %281 = vmatprep.subr.mxu0 0.0
    %v282 = vand.u32 %v105, 4294901760
    %v283 = vsub.f32 %v105, %v282
    %v284 = vand.u32 %v283, 4294901760
    %v285 = vsub.f32 %v283, %v284
    %v286 = vand.u32 %v285, 4294901760
    %287 = vmatpush1.msra.mxu0 %v286
    %288 = vmatprep.subr.mxu0 0.0
    %v289 = vand.u32 %v106, 4294901760
    %v290 = vsub.f32 %v106, %v289
    %v291 = vand.u32 %v290, 4294901760
    %v292 = vsub.f32 %v290, %v291
    %v293 = vand.u32 %v292, 4294901760
    %294 = vmatpush1.msra.mxu0 %v293
    %295 = vmatprep.subr.mxu0 0.0
    %v296 = vand.u32 %v107, 4294901760
    %v297 = vsub.f32 %v107, %v296
    %v298 = vand.u32 %v297, 4294901760
    %v299 = vsub.f32 %v297, %v298
    %v300 = vand.u32 %v299, 4294901760
    %301 = vmatpush1.msra.mxu0 %v300
    %302 = vmatprep.subr.mxu0 0.0
    %v303 = vand.u32 %v108, 4294901760
    %v304 = vsub.f32 %v108, %v303
    %v305 = vand.u32 %v304, 4294901760
    %v306 = vsub.f32 %v304, %v305
    %v307 = vand.u32 %v306, 4294901760
    %308 = vmatpush1.msra.mxu0 %v307
    %309 = vmatprep.subr.mxu0 0.0
    %v310 = vand.u32 %v109, 4294901760
    %v311 = vsub.f32 %v109, %v310
    %v312 = vand.u32 %v311, 4294901760
    %v313 = vsub.f32 %v311, %v312
    %v314 = vand.u32 %v313, 4294901760
    %315 = vmatpush1.msra.mxu0 %v314
    %316 = vmatprep.subr.mxu0 0.0
    %v317 = vand.u32 %v110, 4294901760
    %v318 = vsub.f32 %v110, %v317
    %v319 = vand.u32 %v318, 4294901760
    %v320 = vsub.f32 %v318, %v319
    %v321 = vand.u32 %v320, 4294901760
    %322 = vmatpush1.msra.mxu0 %v321
    %323 = vmatprep.subr.mxu0 0.0
    %v324 = vand.u32 %v111, 4294901760
    %v325 = vsub.f32 %v111, %v324
    %v326 = vand.u32 %v325, 4294901760
    %v327 = vsub.f32 %v325, %v326
    %v328 = vand.u32 %v327, 4294901760
    %329 = vmatpush1.msra.mxu0 %v328
    %330 = vmatprep.subr.mxu0 0.0
    %v331 = vand.u32 %v112, 4294901760
    %v332 = vsub.f32 %v112, %v331
    %v333 = vand.u32 %v332, 4294901760
    %v334 = vsub.f32 %v332, %v333
    %v335 = vand.u32 %v334, 4294901760
    %336 = vmatpush1.msra.mxu0 %v335
    %337 = vmatprep.subr.mxu0 0.0
    %v338 = vand.u32 %v113, 4294901760
    %v339 = vsub.f32 %v113, %v338
    %v340 = vand.u32 %v339, 4294901760
    %v341 = vsub.f32 %v339, %v340
    %v342 = vand.u32 %v341, 4294901760
    %343 = vmatpush1.msra.mxu0 %v342
    %344 = vmatprep.subr.mxu0 0.0
    %v345 = vand.u32 %v114, 4294901760
    %v346 = vsub.f32 %v114, %v345
    %v347 = vand.u32 %v346, 4294901760
    %v348 = vsub.f32 %v346, %v347
    %v349 = vand.u32 %v348, 4294901760
    %350 = vmatpush1.msra.mxu0 %v349
    %351 = vmatprep.subr.mxu0 0.0
    %v352 = vand.u32 %v115, 4294901760
    %v353 = vsub.f32 %v115, %v352
    %v354 = vand.u32 %v353, 4294901760
    %v355 = vsub.f32 %v353, %v354
    %v356 = vand.u32 %v355, 4294901760
    %357 = vmatpush1.msra.mxu0 %v356
    %358 = vmatprep.subr.mxu0 0.0
    %v359 = vand.u32 %v116, 4294901760
    %v360 = vsub.f32 %v116, %v359
    %v361 = vand.u32 %v360, 4294901760
    %v362 = vsub.f32 %v360, %v361
    %v363 = vand.u32 %v362, 4294901760
    %364 = vmatpush1.msra.mxu0 %v363
    %365 = vmatprep.subr.mxu0 0.0
    %v366 = vand.u32 %v117, 4294901760
    %v367 = vsub.f32 %v117, %v366
    %v368 = vand.u32 %v367, 4294901760
    %v369 = vsub.f32 %v367, %v368
    %v370 = vand.u32 %v369, 4294901760
    %371 = vmatpush1.msra.mxu0 %v370
    %372 = vmatprep.subr.mxu0 0.0
    %373 = vmatpush1.msra.mxu0 0.0
    %374 = vmatprep.subr.mxu0 0.0
    %375 = vmatpush1.msra.mxu0 0.0
    %376 = vmatprep.subr.mxu0 0.0
    %377 = vmatpush1.msra.mxu0 0.0
    %378 = vmatprep.subr.mxu0 0.0
    %379 = vmatpush1.msra.mxu0 0.0
    %380 = vmatprep.subr.mxu0 0.0
    %381 = vmatpush1.msra.mxu0 0.0
    %382 = vmatprep.subr.mxu0 0.0
    %383 = vmatpush1.msra.mxu0 0.0
    %384 = vmatprep.subr.mxu0 0.0
    %385 = vmatpush1.msra.mxu0 0.0
    %386 = vmatprep.subr.mxu0 0.0
    %387 = vmatpush1.msra.mxu0 0.0
    %388 = vmatprep.subr.mxu0 0.0
    %389 = vmatpush1.msra.mxu0 0.0
    %390 = vmatprep.subr.mxu0 0.0
    %391 = vmatpush1.msra.mxu0 0.0
    %392 = vmatprep.subr.mxu0 0.0
    %393 = vmatpush1.msra.mxu0 0.0
    %394 = vmatprep.subr.mxu0 0.0
    %395 = vmatpush1.msra.mxu0 0.0
    %396 = vmatprep.subr.mxu0 0.0
    %397 = vmatpush1.msra.mxu0 0.0
    %398 = vmatprep.subr.mxu0 0.0
    %399 = vmatpush1.msra.mxu0 0.0
    %400 = vmatprep.subr.mxu0 0.0
    %401 = vmatpush1.msra.mxu0 0.0
    %402 = vmatprep.subr.mxu0 0.0
    %403 = vmatpush1.msra.mxu0 0.0
    %404 = vmatprep.mubr.f32.mxu0 0.0
    %v405 = vand.u32 %v98, 4294901760
    %406 = vmatmul.mubr.f32.gmra.mrb[0].mxu0 %v405
    %v407 = vpop.f32.mrb[0].mxu0
    %v408 = vadd.f32 %v247, %v407
    %v409 = vpop.f32.mrb[0].mxu0
    %410 = vmatprep.mubr.f32.mxu0 0.0
    %v411 = vand.u32 %v99, 4294901760
    %412 = vmatmul.mubr.f32.gmra.mrb[0].mxu0 %v411
    %v413 = vpop.f32.mrb[0].mxu0
    %v414 = vadd.f32 %v257, %v413
    %v415 = vpop.f32.mrb[0].mxu0
    %416 = vdwg.mxu0
    %417 = vmatprep.subr.mxu0 0.0
    %v418 = vand.u32 %v102, 4294901760
    %v419 = vsub.f32 %v102, %v418
    %420 = vmatpush1.msra.mxu0 %v419
    %421 = vmatprep.subr.mxu0 0.0
    %v422 = vand.u32 %v103, 4294901760
    %v423 = vsub.f32 %v103, %v422
    %424 = vmatpush1.msra.mxu0 %v423
    %425 = vmatprep.subr.mxu0 0.0
    %v426 = vand.u32 %v104, 4294901760
    %v427 = vsub.f32 %v104, %v426
    %428 = vmatpush1.msra.mxu0 %v427
    %429 = vmatprep.subr.mxu0 0.0
    %v430 = vand.u32 %v105, 4294901760
    %v431 = vsub.f32 %v105, %v430
    %432 = vmatpush1.msra.mxu0 %v431
    %433 = vmatprep.subr.mxu0 0.0
    %v434 = vand.u32 %v106, 4294901760
    %v435 = vsub.f32 %v106, %v434
    %436 = vmatpush1.msra.mxu0 %v435
    %437 = vmatprep.subr.mxu0 0.0
    %v438 = vand.u32 %v107, 4294901760
    %v439 = vsub.f32 %v107, %v438
    %440 = vmatpush1.msra.mxu0 %v439
    %441 = vmatprep.subr.mxu0 0.0
    %v442 = vand.u32 %v108, 4294901760
    %v443 = vsub.f32 %v108, %v442
    %444 = vmatpush1.msra.mxu0 %v443
    %445 = vmatprep.subr.mxu0 0.0
    %v446 = vand.u32 %v109, 4294901760
    %v447 = vsub.f32 %v109, %v446
    %448 = vmatpush1.msra.mxu0 %v447
    %449 = vmatprep.subr.mxu0 0.0
    %v450 = vand.u32 %v110, 4294901760
    %v451 = vsub.f32 %v110, %v450
    %452 = vmatpush1.msra.mxu0 %v451
    %453 = vmatprep.subr.mxu0 0.0
    %v454 = vand.u32 %v111, 4294901760
    %v455 = vsub.f32 %v111, %v454
    %456 = vmatpush1.msra.mxu0 %v455
    %457 = vmatprep.subr.mxu0 0.0
    %v458 = vand.u32 %v112, 4294901760
    %v459 = vsub.f32 %v112, %v458
    %460 = vmatpush1.msra.mxu0 %v459
    %461 = vmatprep.subr.mxu0 0.0
    %v462 = vand.u32 %v113, 4294901760
    %v463 = vsub.f32 %v113, %v462
    %464 = vmatpush1.msra.mxu0 %v463
    %465 = vmatprep.subr.mxu0 0.0
    %v466 = vand.u32 %v114, 4294901760
    %v467 = vsub.f32 %v114, %v466
    %468 = vmatpush1.msra.mxu0 %v467
    %469 = vmatprep.subr.mxu0 0.0
    %v470 = vand.u32 %v115, 4294901760
    %v471 = vsub.f32 %v115, %v470
    %472 = vmatpush1.msra.mxu0 %v471
    %473 = vmatprep.subr.mxu0 0.0
    %v474 = vand.u32 %v116, 4294901760
    %v475 = vsub.f32 %v116, %v474
    %476 = vmatpush1.msra.mxu0 %v475
    %477 = vmatprep.subr.mxu0 0.0
    %v478 = vand.u32 %v117, 4294901760
    %v479 = vsub.f32 %v117, %v478
    %480 = vmatpush1.msra.mxu0 %v479
    %481 = vmatprep.subr.mxu0 0.0
    %482 = vmatpush1.msra.mxu0 0.0
    %483 = vmatprep.subr.mxu0 0.0
    %484 = vmatpush1.msra.mxu0 0.0
    %485 = vmatprep.subr.mxu0 0.0
    %486 = vmatpush1.msra.mxu0 0.0
    %487 = vmatprep.subr.mxu0 0.0
    %488 = vmatpush1.msra.mxu0 0.0
    %489 = vmatprep.subr.mxu0 0.0
    %490 = vmatpush1.msra.mxu0 0.0
    %491 = vmatprep.subr.mxu0 0.0
    %492 = vmatpush1.msra.mxu0 0.0
    %493 = vmatprep.subr.mxu0 0.0
    %494 = vmatpush1.msra.mxu0 0.0
    %495 = vmatprep.subr.mxu0 0.0
    %496 = vmatpush1.msra.mxu0 0.0
    %497 = vmatprep.subr.mxu0 0.0
    %498 = vmatpush1.msra.mxu0 0.0
    %499 = vmatprep.subr.mxu0 0.0
    %500 = vmatpush1.msra.mxu0 0.0
    %501 = vmatprep.subr.mxu0 0.0
    %502 = vmatpush1.msra.mxu0 0.0
    %503 = vmatprep.subr.mxu0 0.0
    %504 = vmatpush1.msra.mxu0 0.0
    %505 = vmatprep.subr.mxu0 0.0
    %506 = vmatpush1.msra.mxu0 0.0
    %507 = vmatprep.subr.mxu0 0.0
    %508 = vmatpush1.msra.mxu0 0.0
    %509 = vmatprep.subr.mxu0 0.0
    %510 = vmatpush1.msra.mxu0 0.0
    %511 = vmatprep.subr.mxu0 0.0
    %512 = vmatpush1.msra.mxu0 0.0
    %513 = vmatprep.mubr.f32.mxu0 0.0
    %v514 = vand.u32 %v98, 4294901760
    %v515 = vsub.f32 %v98, %v514
    %516 = vmatmul.mubr.f32.gmra.mrb[0].mxu0 %v515
    %v517 = vpop.f32.mrb[0].mxu0
    %v518 = vadd.f32 %v408, %v517
    %v519 = vpop.f32.mrb[0].mxu0
    %520 = vmatprep.mubr.f32.mxu0 0.0
    %v521 = vand.u32 %v99, 4294901760
    %v522 = vsub.f32 %v99, %v521
    %523 = vmatmul.mubr.f32.gmra.mrb[0].mxu0 %v522
    %v524 = vpop.f32.mrb[0].mxu0
    %v525 = vadd.f32 %v414, %v524
    %v526 = vpop.f32.mrb[0].mxu0
    %527 = vdwg.mxu0
    %528 = vmatprep.subr.mxu0 0.0
    %v529 = vand.u32 %v102, 4294901760
    %530 = vmatpush1.msra.mxu0 %v529
    %531 = vmatprep.subr.mxu0 0.0
    %v532 = vand.u32 %v103, 4294901760
    %533 = vmatpush1.msra.mxu0 %v532
    %534 = vmatprep.subr.mxu0 0.0
    %v535 = vand.u32 %v104, 4294901760
    %536 = vmatpush1.msra.mxu0 %v535
    %537 = vmatprep.subr.mxu0 0.0
    %v538 = vand.u32 %v105, 4294901760
    %539 = vmatpush1.msra.mxu0 %v538
    %540 = vmatprep.subr.mxu0 0.0
    %v541 = vand.u32 %v106, 4294901760
    %542 = vmatpush1.msra.mxu0 %v541
    %543 = vmatprep.subr.mxu0 0.0
    %v544 = vand.u32 %v107, 4294901760
    %545 = vmatpush1.msra.mxu0 %v544
    %546 = vmatprep.subr.mxu0 0.0
    %v547 = vand.u32 %v108, 4294901760
    %548 = vmatpush1.msra.mxu0 %v547
    %549 = vmatprep.subr.mxu0 0.0
    %v550 = vand.u32 %v109, 4294901760
    %551 = vmatpush1.msra.mxu0 %v550
    %552 = vmatprep.subr.mxu0 0.0
    %v553 = vand.u32 %v110, 4294901760
    %554 = vmatpush1.msra.mxu0 %v553
    %555 = vmatprep.subr.mxu0 0.0
    %v556 = vand.u32 %v111, 4294901760
    %557 = vmatpush1.msra.mxu0 %v556
    %558 = vmatprep.subr.mxu0 0.0
    %v559 = vand.u32 %v112, 4294901760
    %560 = vmatpush1.msra.mxu0 %v559
    %561 = vmatprep.subr.mxu0 0.0
    %v562 = vand.u32 %v113, 4294901760
    %563 = vmatpush1.msra.mxu0 %v562
    %564 = vmatprep.subr.mxu0 0.0
    %v565 = vand.u32 %v114, 4294901760
    %566 = vmatpush1.msra.mxu0 %v565
    %567 = vmatprep.subr.mxu0 0.0
    %v568 = vand.u32 %v115, 4294901760
    %569 = vmatpush1.msra.mxu0 %v568
    %570 = vmatprep.subr.mxu0 0.0
    %v571 = vand.u32 %v116, 4294901760
    %572 = vmatpush1.msra.mxu0 %v571
    %573 = vmatprep.subr.mxu0 0.0
    %v574 = vand.u32 %v117, 4294901760
    %575 = vmatpush1.msra.mxu0 %v574
    %576 = vmatprep.subr.mxu0 0.0
    %577 = vmatpush1.msra.mxu0 0.0
    %578 = vmatprep.subr.mxu0 0.0
    %579 = vmatpush1.msra.mxu0 0.0
    %580 = vmatprep.subr.mxu0 0.0
    %581 = vmatpush1.msra.mxu0 0.0
    %582 = vmatprep.subr.mxu0 0.0
    %583 = vmatpush1.msra.mxu0 0.0
    %584 = vmatprep.subr.mxu0 0.0
    %585 = vmatpush1.msra.mxu0 0.0
    %586 = vmatprep.subr.mxu0 0.0
    %587 = vmatpush1.msra.mxu0 0.0
    %588 = vmatprep.subr.mxu0 0.0
    %589 = vmatpush1.msra.mxu0 0.0
    %590 = vmatprep.subr.mxu0 0.0
    %591 = vmatpush1.msra.mxu0 0.0
    %592 = vmatprep.subr.mxu0 0.0
    %593 = vmatpush1.msra.mxu0 0.0
    %594 = vmatprep.subr.mxu0 0.0
    %595 = vmatpush1.msra.mxu0 0.0
    %596 = vmatprep.subr.mxu0 0.0
    %597 = vmatpush1.msra.mxu0 0.0
    %598 = vmatprep.subr.mxu0 0.0
    %599 = vmatpush1.msra.mxu0 0.0
    %600 = vmatprep.subr.mxu0 0.0
    %601 = vmatpush1.msra.mxu0 0.0
    %602 = vmatprep.subr.mxu0 0.0
    %603 = vmatpush1.msra.mxu0 0.0
    %604 = vmatprep.subr.mxu0 0.0
    %605 = vmatpush1.msra.mxu0 0.0
    %606 = vmatprep.subr.mxu0 0.0
    %607 = vmatpush1.msra.mxu0 0.0
    %608 = vmatprep.mubr.f32.mxu0 0.0
    %v609 = vand.u32 %v98, 4294901760
    %v610 = vsub.f32 %v98, %v609
    %v611 = vand.u32 %v610, 4294901760
    %612 = vmatmul.mubr.f32.gmra.mrb[0].mxu0 %v611
    %v613 = vpop.f32.mrb[0].mxu0
    %v614 = vadd.f32 %v518, %v613
    %v615 = vpop.f32.mrb[0].mxu0
    %616 = vmatprep.mubr.f32.mxu0 0.0
    %v617 = vand.u32 %v99, 4294901760
    %v618 = vsub.f32 %v99, %v617
    %v619 = vand.u32 %v618, 4294901760
    %620 = vmatmul.mubr.f32.gmra.mrb[0].mxu0 %v619
    %v621 = vpop.f32.mrb[0].mxu0
    %v622 = vadd.f32 %v525, %v621
    %v623 = vpop.f32.mrb[0].mxu0
    %624 = vdwg.mxu0
    %625 = vmatprep.subr.mxu0 0.0
    %v626 = vand.u32 %v102, 4294901760
    %v627 = vsub.f32 %v102, %v626
    %v628 = vand.u32 %v627, 4294901760
    %629 = vmatpush1.msra.mxu0 %v628
    %630 = vmatprep.subr.mxu0 0.0
    %v631 = vand.u32 %v103, 4294901760
    %v632 = vsub.f32 %v103, %v631
    %v633 = vand.u32 %v632, 4294901760
    %634 = vmatpush1.msra.mxu0 %v633
    %635 = vmatprep.subr.mxu0 0.0
    %v636 = vand.u32 %v104, 4294901760
    %v637 = vsub.f32 %v104, %v636
    %v638 = vand.u32 %v637, 4294901760
    %639 = vmatpush1.msra.mxu0 %v638
    %640 = vmatprep.subr.mxu0 0.0
    %v641 = vand.u32 %v105, 4294901760
    %v642 = vsub.f32 %v105, %v641
    %v643 = vand.u32 %v642, 4294901760
    %644 = vmatpush1.msra.mxu0 %v643
    %645 = vmatprep.subr.mxu0 0.0
    %v646 = vand.u32 %v106, 4294901760
    %v647 = vsub.f32 %v106, %v646
    %v648 = vand.u32 %v647, 4294901760
    %649 = vmatpush1.msra.mxu0 %v648
    %650 = vmatprep.subr.mxu0 0.0
    %v651 = vand.u32 %v107, 4294901760
    %v652 = vsub.f32 %v107, %v651
    %v653 = vand.u32 %v652, 4294901760
    %654 = vmatpush1.msra.mxu0 %v653
    %655 = vmatprep.subr.mxu0 0.0
    %v656 = vand.u32 %v108, 4294901760
    %v657 = vsub.f32 %v108, %v656
    %v658 = vand.u32 %v657, 4294901760
    %659 = vmatpush1.msra.mxu0 %v658
    %660 = vmatprep.subr.mxu0 0.0
    %v661 = vand.u32 %v109, 4294901760
    %v662 = vsub.f32 %v109, %v661
    %v663 = vand.u32 %v662, 4294901760
    %664 = vmatpush1.msra.mxu0 %v663
    %665 = vmatprep.subr.mxu0 0.0
    %v666 = vand.u32 %v110, 4294901760
    %v667 = vsub.f32 %v110, %v666
    %v668 = vand.u32 %v667, 4294901760
    %669 = vmatpush1.msra.mxu0 %v668
    %670 = vmatprep.subr.mxu0 0.0
    %v671 = vand.u32 %v111, 4294901760
    %v672 = vsub.f32 %v111, %v671
    %v673 = vand.u32 %v672, 4294901760
    %674 = vmatpush1.msra.mxu0 %v673
    %675 = vmatprep.subr.mxu0 0.0
    %v676 = vand.u32 %v112, 4294901760
    %v677 = vsub.f32 %v112, %v676
    %v678 = vand.u32 %v677, 4294901760
    %679 = vmatpush1.msra.mxu0 %v678
    %680 = vmatprep.subr.mxu0 0.0
    %v681 = vand.u32 %v113, 4294901760
    %v682 = vsub.f32 %v113, %v681
    %v683 = vand.u32 %v682, 4294901760
    %684 = vmatpush1.msra.mxu0 %v683
    %685 = vmatprep.subr.mxu0 0.0
    %v686 = vand.u32 %v114, 4294901760
    %v687 = vsub.f32 %v114, %v686
    %v688 = vand.u32 %v687, 4294901760
    %689 = vmatpush1.msra.mxu0 %v688
    %690 = vmatprep.subr.mxu0 0.0
    %v691 = vand.u32 %v115, 4294901760
    %v692 = vsub.f32 %v115, %v691
    %v693 = vand.u32 %v692, 4294901760
    %694 = vmatpush1.msra.mxu0 %v693
    %695 = vmatprep.subr.mxu0 0.0
    %v696 = vand.u32 %v116, 4294901760
    %v697 = vsub.f32 %v116, %v696
    %v698 = vand.u32 %v697, 4294901760
    %699 = vmatpush1.msra.mxu0 %v698
    %700 = vmatprep.subr.mxu0 0.0
    %v701 = vand.u32 %v117, 4294901760
    %v702 = vsub.f32 %v117, %v701
    %v703 = vand.u32 %v702, 4294901760
    %704 = vmatpush1.msra.mxu0 %v703
    %705 = vmatprep.subr.mxu0 0.0
    %706 = vmatpush1.msra.mxu0 0.0
    %707 = vmatprep.subr.mxu0 0.0
    %708 = vmatpush1.msra.mxu0 0.0
    %709 = vmatprep.subr.mxu0 0.0
    %710 = vmatpush1.msra.mxu0 0.0
    %711 = vmatprep.subr.mxu0 0.0
    %712 = vmatpush1.msra.mxu0 0.0
    %713 = vmatprep.subr.mxu0 0.0
    %714 = vmatpush1.msra.mxu0 0.0
    %715 = vmatprep.subr.mxu0 0.0
    %716 = vmatpush1.msra.mxu0 0.0
    %717 = vmatprep.subr.mxu0 0.0
    %718 = vmatpush1.msra.mxu0 0.0
    %719 = vmatprep.subr.mxu0 0.0
    %720 = vmatpush1.msra.mxu0 0.0
    %721 = vmatprep.subr.mxu0 0.0
    %722 = vmatpush1.msra.mxu0 0.0
    %723 = vmatprep.subr.mxu0 0.0
    %724 = vmatpush1.msra.mxu0 0.0
    %725 = vmatprep.subr.mxu0 0.0
    %726 = vmatpush1.msra.mxu0 0.0
    %727 = vmatprep.subr.mxu0 0.0
    %728 = vmatpush1.msra.mxu0 0.0
    %729 = vmatprep.subr.mxu0 0.0
    %730 = vmatpush1.msra.mxu0 0.0
    %731 = vmatprep.subr.mxu0 0.0
    %732 = vmatpush1.msra.mxu0 0.0
    %733 = vmatprep.subr.mxu0 0.0
    %734 = vmatpush1.msra.mxu0 0.0
    %735 = vmatprep.subr.mxu0 0.0
    %736 = vmatpush1.msra.mxu0 0.0
    %737 = vmatprep.mubr.f32.mxu0 0.0
    %v738 = vand.u32 %v98, 4294901760
    %739 = vmatmul.mubr.f32.gmra.mrb[0].mxu0 %v738
    %v740 = vpop.f32.mrb[0].mxu0
    %v741 = vadd.f32 %v614, %v740
    %v742 = vpop.f32.mrb[0].mxu0
    %743 = vmatprep.mubr.f32.mxu0 0.0
    %v744 = vand.u32 %v99, 4294901760
    %745 = vmatmul.mubr.f32.gmra.mrb[0].mxu0 %v744
    %v746 = vpop.f32.mrb[0].mxu0
    %v747 = vadd.f32 %v622, %v746
    %v748 = vpop.f32.mrb[0].mxu0
    %749 = vdwg.mxu0
    %750 = vmatprep.subr.mxu0 0.0
    %v751 = vand.u32 %v102, 4294901760
    %752 = vmatpush1.msra.mxu0 %v751
    %753 = vmatprep.subr.mxu0 0.0
    %v754 = vand.u32 %v103, 4294901760
    %755 = vmatpush1.msra.mxu0 %v754
    %756 = vmatprep.subr.mxu0 0.0
    %v757 = vand.u32 %v104, 4294901760
    %758 = vmatpush1.msra.mxu0 %v757
    %759 = vmatprep.subr.mxu0 0.0
    %v760 = vand.u32 %v105, 4294901760
    %761 = vmatpush1.msra.mxu0 %v760
    %762 = vmatprep.subr.mxu0 0.0
    %v763 = vand.u32 %v106, 4294901760
    %764 = vmatpush1.msra.mxu0 %v763
    %765 = vmatprep.subr.mxu0 0.0
    %v766 = vand.u32 %v107, 4294901760
    %767 = vmatpush1.msra.mxu0 %v766
    %768 = vmatprep.subr.mxu0 0.0
    %v769 = vand.u32 %v108, 4294901760
    %770 = vmatpush1.msra.mxu0 %v769
    %771 = vmatprep.subr.mxu0 0.0
    %v772 = vand.u32 %v109, 4294901760
    %773 = vmatpush1.msra.mxu0 %v772
    %774 = vmatprep.subr.mxu0 0.0
    %v775 = vand.u32 %v110, 4294901760
    %776 = vmatpush1.msra.mxu0 %v775
    %777 = vmatprep.subr.mxu0 0.0
    %v778 = vand.u32 %v111, 4294901760
    %779 = vmatpush1.msra.mxu0 %v778
    %780 = vmatprep.subr.mxu0 0.0
    %v781 = vand.u32 %v112, 4294901760
    %782 = vmatpush1.msra.mxu0 %v781
    %783 = vmatprep.subr.mxu0 0.0
    %v784 = vand.u32 %v113, 4294901760
    %785 = vmatpush1.msra.mxu0 %v784
    %786 = vmatprep.subr.mxu0 0.0
    %v787 = vand.u32 %v114, 4294901760
    %788 = vmatpush1.msra.mxu0 %v787
    %789 = vmatprep.subr.mxu0 0.0
    %v790 = vand.u32 %v115, 4294901760
    %791 = vmatpush1.msra.mxu0 %v790
    %792 = vmatprep.subr.mxu0 0.0
    %v793 = vand.u32 %v116, 4294901760
    %794 = vmatpush1.msra.mxu0 %v793
    %795 = vmatprep.subr.mxu0 0.0
    %v796 = vand.u32 %v117, 4294901760
    %797 = vmatpush1.msra.mxu0 %v796
    %798 = vmatprep.subr.mxu0 0.0
    %799 = vmatpush1.msra.mxu0 0.0
    %800 = vmatprep.subr.mxu0 0.0
    %801 = vmatpush1.msra.mxu0 0.0
    %802 = vmatprep.subr.mxu0 0.0
    %803 = vmatpush1.msra.mxu0 0.0
    %804 = vmatprep.subr.mxu0 0.0
    %805 = vmatpush1.msra.mxu0 0.0
    %806 = vmatprep.subr.mxu0 0.0
    %807 = vmatpush1.msra.mxu0 0.0
    %808 = vmatprep.subr.mxu0 0.0
    %809 = vmatpush1.msra.mxu0 0.0
    %810 = vmatprep.subr.mxu0 0.0
    %811 = vmatpush1.msra.mxu0 0.0
    %812 = vmatprep.subr.mxu0 0.0
    %813 = vmatpush1.msra.mxu0 0.0
    %814 = vmatprep.subr.mxu0 0.0
    %815 = vmatpush1.msra.mxu0 0.0
    %816 = vmatprep.subr.mxu0 0.0
    %817 = vmatpush1.msra.mxu0 0.0
    %818 = vmatprep.subr.mxu0 0.0
    %819 = vmatpush1.msra.mxu0 0.0
    %820 = vmatprep.subr.mxu0 0.0
    %821 = vmatpush1.msra.mxu0 0.0
    %822 = vmatprep.subr.mxu0 0.0
    %823 = vmatpush1.msra.mxu0 0.0
    %824 = vmatprep.subr.mxu0 0.0
    %825 = vmatpush1.msra.mxu0 0.0
    %826 = vmatprep.subr.mxu0 0.0
    %827 = vmatpush1.msra.mxu0 0.0
    %828 = vmatprep.subr.mxu0 0.0
    %829 = vmatpush1.msra.mxu0 0.0
    %830 = vmatprep.mubr.f32.mxu0 0.0
    %v831 = vand.u32 %v98, 4294901760
    %832 = vmatmul.mubr.f32.gmra.mrb[0].mxu0 %v831
    %v833 = vpop.f32.mrb[0].mxu0
    %v834 = vadd.f32 %v741, %v833
    %v835 = vpop.f32.mrb[0].mxu0
    %836 = vmatprep.mubr.f32.mxu0 0.0
    %v837 = vand.u32 %v99, 4294901760
    %838 = vmatmul.mubr.f32.gmra.mrb[0].mxu0 %v837
    %v839 = vpop.f32.mrb[0].mxu0
    %v840 = vadd.f32 %v747, %v839
    %v841 = vpop.f32.mrb[0].mxu0
    %842 = vdwg.mxu0
    %v844 = vlaneseq
    %v845 = vshrl.u32 %v844, 7
    %v846 = vsub.s32 0, %v845
    %v847 = vrot.slane %v151, %v846
    %849 = vmatprep.subr.mxu0 0.0
    %v850 = vand.u32 %v118, 4294901760
    %851 = vmatpush1.msra.mxu0 %v850
    %852 = vmatprep.subr.mxu0 0.0
    %v853 = vand.u32 %v119, 4294901760
    %854 = vmatpush1.msra.mxu0 %v853
    %855 = vmatprep.subr.mxu0 0.0
    %v856 = vand.u32 %v120, 4294901760
    %857 = vmatpush1.msra.mxu0 %v856
    %858 = vmatprep.subr.mxu0 0.0
    %v859 = vand.u32 %v121, 4294901760
    %860 = vmatpush1.msra.mxu0 %v859
    %861 = vmatprep.subr.mxu0 0.0
    %v862 = vand.u32 %v122, 4294901760
    %863 = vmatpush1.msra.mxu0 %v862
    %864 = vmatprep.subr.mxu0 0.0
    %v865 = vand.u32 %v123, 4294901760
    %866 = vmatpush1.msra.mxu0 %v865
    %867 = vmatprep.subr.mxu0 0.0
    %v868 = vand.u32 %v124, 4294901760
    %869 = vmatpush1.msra.mxu0 %v868
    %870 = vmatprep.subr.mxu0 0.0
    %v871 = vand.u32 %v125, 4294901760
    %872 = vmatpush1.msra.mxu0 %v871
    %873 = vmatprep.subr.mxu0 0.0
    %v874 = vand.u32 %v126, 4294901760
    %875 = vmatpush1.msra.mxu0 %v874
    %876 = vmatprep.subr.mxu0 0.0
    %v877 = vand.u32 %v127, 4294901760
    %878 = vmatpush1.msra.mxu0 %v877
    %879 = vmatprep.subr.mxu0 0.0
    %v880 = vand.u32 %v128, 4294901760
    %881 = vmatpush1.msra.mxu0 %v880
    %882 = vmatprep.subr.mxu0 0.0
    %v883 = vand.u32 %v129, 4294901760
    %884 = vmatpush1.msra.mxu0 %v883
    %885 = vmatprep.subr.mxu0 0.0
    %v886 = vand.u32 %v130, 4294901760
    %887 = vmatpush1.msra.mxu0 %v886
    %888 = vmatprep.subr.mxu0 0.0
    %v889 = vand.u32 %v131, 4294901760
    %890 = vmatpush1.msra.mxu0 %v889
    %891 = vmatprep.subr.mxu0 0.0
    %v892 = vand.u32 %v132, 4294901760
    %893 = vmatpush1.msra.mxu0 %v892
    %894 = vmatprep.subr.mxu0 0.0
    %v895 = vand.u32 %v133, 4294901760
    %896 = vmatpush1.msra.mxu0 %v895
    %897 = vmatprep.subr.mxu0 0.0
    %898 = vmatpush1.msra.mxu0 0.0
    %899 = vmatprep.subr.mxu0 0.0
    %900 = vmatpush1.msra.mxu0 0.0
    %901 = vmatprep.subr.mxu0 0.0
    %902 = vmatpush1.msra.mxu0 0.0
    %903 = vmatprep.subr.mxu0 0.0
    %904 = vmatpush1.msra.mxu0 0.0
    %905 = vmatprep.subr.mxu0 0.0
    %906 = vmatpush1.msra.mxu0 0.0
    %907 = vmatprep.subr.mxu0 0.0
    %908 = vmatpush1.msra.mxu0 0.0
    %909 = vmatprep.subr.mxu0 0.0
    %910 = vmatpush1.msra.mxu0 0.0
    %911 = vmatprep.subr.mxu0 0.0
    %912 = vmatpush1.msra.mxu0 0.0
    %913 = vmatprep.subr.mxu0 0.0
    %914 = vmatpush1.msra.mxu0 0.0
    %915 = vmatprep.subr.mxu0 0.0
    %916 = vmatpush1.msra.mxu0 0.0
    %917 = vmatprep.subr.mxu0 0.0
    %918 = vmatpush1.msra.mxu0 0.0
    %919 = vmatprep.subr.mxu0 0.0
    %920 = vmatpush1.msra.mxu0 0.0
    %921 = vmatprep.subr.mxu0 0.0
    %922 = vmatpush1.msra.mxu0 0.0
    %923 = vmatprep.subr.mxu0 0.0
    %924 = vmatpush1.msra.mxu0 0.0
    %925 = vmatprep.subr.mxu0 0.0
    %926 = vmatpush1.msra.mxu0 0.0
    %927 = vmatprep.subr.mxu0 0.0
    %928 = vmatpush1.msra.mxu0 0.0
    %929 = vmatprep.mubr.f32.mxu0 0.0
    %v930 = vand.u32 %v100, 4294901760
    %v931 = vsub.f32 %v100, %v930
    %v932 = vand.u32 %v931, 4294901760
    %v933 = vsub.f32 %v931, %v932
    %v934 = vand.u32 %v933, 4294901760
    %935 = vmatmul.mubr.f32.gmra.mrb[0].mxu0 %v934
    %v936 = vpop.f32.mrb[0].mxu0
    %v937 = vadd.f32 %v847, %v936
    %v938 = vpop.f32.mrb[0].mxu0
    %939 = vmatprep.mubr.f32.mxu0 0.0
    %v940 = vand.u32 %v101, 4294901760
    %v941 = vsub.f32 %v101, %v940
    %v942 = vand.u32 %v941, 4294901760
    %v943 = vsub.f32 %v941, %v942
    %v944 = vand.u32 %v943, 4294901760
    %945 = vmatmul.mubr.f32.gmra.mrb[0].mxu0 %v944
    %v946 = vpop.f32.mrb[0].mxu0
    %v947 = vadd.f32 %v847, %v946
    %v948 = vpop.f32.mrb[0].mxu0
    %949 = vdwg.mxu0
    %950 = vmatprep.subr.mxu0 0.0
    %v951 = vand.u32 %v118, 4294901760
    %v952 = vsub.f32 %v118, %v951
    %v953 = vand.u32 %v952, 4294901760
    %v954 = vsub.f32 %v952, %v953
    %v955 = vand.u32 %v954, 4294901760
    %956 = vmatpush1.msra.mxu0 %v955
    %957 = vmatprep.subr.mxu0 0.0
    %v958 = vand.u32 %v119, 4294901760
    %v959 = vsub.f32 %v119, %v958
    %v960 = vand.u32 %v959, 4294901760
    %v961 = vsub.f32 %v959, %v960
    %v962 = vand.u32 %v961, 4294901760
    %963 = vmatpush1.msra.mxu0 %v962
    %964 = vmatprep.subr.mxu0 0.0
    %v965 = vand.u32 %v120, 4294901760
    %v966 = vsub.f32 %v120, %v965
    %v967 = vand.u32 %v966, 4294901760
    %v968 = vsub.f32 %v966, %v967
    %v969 = vand.u32 %v968, 4294901760
    %970 = vmatpush1.msra.mxu0 %v969
    %971 = vmatprep.subr.mxu0 0.0
    %v972 = vand.u32 %v121, 4294901760
    %v973 = vsub.f32 %v121, %v972
    %v974 = vand.u32 %v973, 4294901760
    %v975 = vsub.f32 %v973, %v974
    %v976 = vand.u32 %v975, 4294901760
    %977 = vmatpush1.msra.mxu0 %v976
    %978 = vmatprep.subr.mxu0 0.0
    %v979 = vand.u32 %v122, 4294901760
    %v980 = vsub.f32 %v122, %v979
    %v981 = vand.u32 %v980, 4294901760
    %v982 = vsub.f32 %v980, %v981
    %v983 = vand.u32 %v982, 4294901760
    %984 = vmatpush1.msra.mxu0 %v983
    %985 = vmatprep.subr.mxu0 0.0
    %v986 = vand.u32 %v123, 4294901760
    %v987 = vsub.f32 %v123, %v986
    %v988 = vand.u32 %v987, 4294901760
    %v989 = vsub.f32 %v987, %v988
    %v990 = vand.u32 %v989, 4294901760
    %991 = vmatpush1.msra.mxu0 %v990
    %992 = vmatprep.subr.mxu0 0.0
    %v993 = vand.u32 %v124, 4294901760
    %v994 = vsub.f32 %v124, %v993
    %v995 = vand.u32 %v994, 4294901760
    %v996 = vsub.f32 %v994, %v995
    %v997 = vand.u32 %v996, 4294901760
    %998 = vmatpush1.msra.mxu0 %v997
    %999 = vmatprep.subr.mxu0 0.0
    %v1000 = vand.u32 %v125, 4294901760
    %v1001 = vsub.f32 %v125, %v1000
    %v1002 = vand.u32 %v1001, 4294901760
    %v1003 = vsub.f32 %v1001, %v1002
    %v1004 = vand.u32 %v1003, 4294901760
    %1005 = vmatpush1.msra.mxu0 %v1004
    %1006 = vmatprep.subr.mxu0 0.0
    %v1007 = vand.u32 %v126, 4294901760
    %v1008 = vsub.f32 %v126, %v1007
    %v1009 = vand.u32 %v1008, 4294901760
    %v1010 = vsub.f32 %v1008, %v1009
    %v1011 = vand.u32 %v1010, 4294901760
    %1012 = vmatpush1.msra.mxu0 %v1011
    %1013 = vmatprep.subr.mxu0 0.0
    %v1014 = vand.u32 %v127, 4294901760
    %v1015 = vsub.f32 %v127, %v1014
    %v1016 = vand.u32 %v1015, 4294901760
    %v1017 = vsub.f32 %v1015, %v1016
    %v1018 = vand.u32 %v1017, 4294901760
    %1019 = vmatpush1.msra.mxu0 %v1018
    %1020 = vmatprep.subr.mxu0 0.0
    %v1021 = vand.u32 %v128, 4294901760
    %v1022 = vsub.f32 %v128, %v1021
    %v1023 = vand.u32 %v1022, 4294901760
    %v1024 = vsub.f32 %v1022, %v1023
    %v1025 = vand.u32 %v1024, 4294901760
    %1026 = vmatpush1.msra.mxu0 %v1025
    %1027 = vmatprep.subr.mxu0 0.0
    %v1028 = vand.u32 %v129, 4294901760
    %v1029 = vsub.f32 %v129, %v1028
    %v1030 = vand.u32 %v1029, 4294901760
    %v1031 = vsub.f32 %v1029, %v1030
    %v1032 = vand.u32 %v1031, 4294901760
    %1033 = vmatpush1.msra.mxu0 %v1032
    %1034 = vmatprep.subr.mxu0 0.0
    %v1035 = vand.u32 %v130, 4294901760
    %v1036 = vsub.f32 %v130, %v1035
    %v1037 = vand.u32 %v1036, 4294901760
    %v1038 = vsub.f32 %v1036, %v1037
    %v1039 = vand.u32 %v1038, 4294901760
    %1040 = vmatpush1.msra.mxu0 %v1039
    %1041 = vmatprep.subr.mxu0 0.0
    %v1042 = vand.u32 %v131, 4294901760
    %v1043 = vsub.f32 %v131, %v1042
    %v1044 = vand.u32 %v1043, 4294901760
    %v1045 = vsub.f32 %v1043, %v1044
    %v1046 = vand.u32 %v1045, 4294901760
    %1047 = vmatpush1.msra.mxu0 %v1046
    %1048 = vmatprep.subr.mxu0 0.0
    %v1049 = vand.u32 %v132, 4294901760
    %v1050 = vsub.f32 %v132, %v1049
    %v1051 = vand.u32 %v1050, 4294901760
    %v1052 = vsub.f32 %v1050, %v1051
    %v1053 = vand.u32 %v1052, 4294901760
    %1054 = vmatpush1.msra.mxu0 %v1053
    %1055 = vmatprep.subr.mxu0 0.0
    %v1056 = vand.u32 %v133, 4294901760
    %v1057 = vsub.f32 %v133, %v1056
    %v1058 = vand.u32 %v1057, 4294901760
    %v1059 = vsub.f32 %v1057, %v1058
    %v1060 = vand.u32 %v1059, 4294901760
    %1061 = vmatpush1.msra.mxu0 %v1060
    %1062 = vmatprep.subr.mxu0 0.0
    %1063 = vmatpush1.msra.mxu0 0.0
    %1064 = vmatprep.subr.mxu0 0.0
    %1065 = vmatpush1.msra.mxu0 0.0
    %1066 = vmatprep.subr.mxu0 0.0
    %1067 = vmatpush1.msra.mxu0 0.0
    %1068 = vmatprep.subr.mxu0 0.0
    %1069 = vmatpush1.msra.mxu0 0.0
    %1070 = vmatprep.subr.mxu0 0.0
    %1071 = vmatpush1.msra.mxu0 0.0
    %1072 = vmatprep.subr.mxu0 0.0
    %1073 = vmatpush1.msra.mxu0 0.0
    %1074 = vmatprep.subr.mxu0 0.0
    %1075 = vmatpush1.msra.mxu0 0.0
    %1076 = vmatprep.subr.mxu0 0.0
    %1077 = vmatpush1.msra.mxu0 0.0
    %1078 = vmatprep.subr.mxu0 0.0
    %1079 = vmatpush1.msra.mxu0 0.0
    %1080 = vmatprep.subr.mxu0 0.0
    %1081 = vmatpush1.msra.mxu0 0.0
    %1082 = vmatprep.subr.mxu0 0.0
    %1083 = vmatpush1.msra.mxu0 0.0
    %1084 = vmatprep.subr.mxu0 0.0
    %1085 = vmatpush1.msra.mxu0 0.0
    %1086 = vmatprep.subr.mxu0 0.0
    %1087 = vmatpush1.msra.mxu0 0.0
    %1088 = vmatprep.subr.mxu0 0.0
    %1089 = vmatpush1.msra.mxu0 0.0
    %1090 = vmatprep.subr.mxu0 0.0
    %1091 = vmatpush1.msra.mxu0 0.0
    %1092 = vmatprep.subr.mxu0 0.0
    %1093 = vmatpush1.msra.mxu0 0.0
    %1094 = vmatprep.mubr.f32.mxu0 0.0
    %v1095 = vand.u32 %v100, 4294901760
    %1096 = vmatmul.mubr.f32.gmra.mrb[0].mxu0 %v1095
    %v1097 = vpop.f32.mrb[0].mxu0
    %v1098 = vadd.f32 %v937, %v1097
    %v1099 = vpop.f32.mrb[0].mxu0
    %1100 = vmatprep.mubr.f32.mxu0 0.0
    %v1101 = vand.u32 %v101, 4294901760
    %1102 = vmatmul.mubr.f32.gmra.mrb[0].mxu0 %v1101
    %v1103 = vpop.f32.mrb[0].mxu0
    %v1104 = vadd.f32 %v947, %v1103
    %v1105 = vpop.f32.mrb[0].mxu0
    %1106 = vdwg.mxu0
    %1107 = vmatprep.subr.mxu0 0.0
    %v1108 = vand.u32 %v118, 4294901760
    %v1109 = vsub.f32 %v118, %v1108
    %1110 = vmatpush1.msra.mxu0 %v1109
    %1111 = vmatprep.subr.mxu0 0.0
    %v1112 = vand.u32 %v119, 4294901760
    %v1113 = vsub.f32 %v119, %v1112
    %1114 = vmatpush1.msra.mxu0 %v1113
    %1115 = vmatprep.subr.mxu0 0.0
    %v1116 = vand.u32 %v120, 4294901760
    %v1117 = vsub.f32 %v120, %v1116
    %1118 = vmatpush1.msra.mxu0 %v1117
    %1119 = vmatprep.subr.mxu0 0.0
    %v1120 = vand.u32 %v121, 4294901760
    %v1121 = vsub.f32 %v121, %v1120
    %1122 = vmatpush1.msra.mxu0 %v1121
    %1123 = vmatprep.subr.mxu0 0.0
    %v1124 = vand.u32 %v122, 4294901760
    %v1125 = vsub.f32 %v122, %v1124
    %1126 = vmatpush1.msra.mxu0 %v1125
    %1127 = vmatprep.subr.mxu0 0.0
    %v1128 = vand.u32 %v123, 4294901760
    %v1129 = vsub.f32 %v123, %v1128
    %1130 = vmatpush1.msra.mxu0 %v1129
    %1131 = vmatprep.subr.mxu0 0.0
    %v1132 = vand.u32 %v124, 4294901760
    %v1133 = vsub.f32 %v124, %v1132
    %1134 = vmatpush1.msra.mxu0 %v1133
    %1135 = vmatprep.subr.mxu0 0.0
    %v1136 = vand.u32 %v125, 4294901760
    %v1137 = vsub.f32 %v125, %v1136
    %1138 = vmatpush1.msra.mxu0 %v1137
    %1139 = vmatprep.subr.mxu0 0.0
    %v1140 = vand.u32 %v126, 4294901760
    %v1141 = vsub.f32 %v126, %v1140
    %1142 = vmatpush1.msra.mxu0 %v1141
    %1143 = vmatprep.subr.mxu0 0.0
    %v1144 = vand.u32 %v127, 4294901760
    %v1145 = vsub.f32 %v127, %v1144
    %1146 = vmatpush1.msra.mxu0 %v1145
    %1147 = vmatprep.subr.mxu0 0.0
    %v1148 = vand.u32 %v128, 4294901760
    %v1149 = vsub.f32 %v128, %v1148
    %1150 = vmatpush1.msra.mxu0 %v1149
    %1151 = vmatprep.subr.mxu0 0.0
    %v1152 = vand.u32 %v129, 4294901760
    %v1153 = vsub.f32 %v129, %v1152
    %1154 = vmatpush1.msra.mxu0 %v1153
    %1155 = vmatprep.subr.mxu0 0.0
    %v1156 = vand.u32 %v130, 4294901760
    %v1157 = vsub.f32 %v130, %v1156
    %1158 = vmatpush1.msra.mxu0 %v1157
    %1159 = vmatprep.subr.mxu0 0.0
    %v1160 = vand.u32 %v131, 4294901760
    %v1161 = vsub.f32 %v131, %v1160
    %1162 = vmatpush1.msra.mxu0 %v1161
    %1163 = vmatprep.subr.mxu0 0.0
    %v1164 = vand.u32 %v132, 4294901760
    %v1165 = vsub.f32 %v132, %v1164
    %1166 = vmatpush1.msra.mxu0 %v1165
    %1167 = vmatprep.subr.mxu0 0.0
    %v1168 = vand.u32 %v133, 4294901760
    %v1169 = vsub.f32 %v133, %v1168
    %1170 = vmatpush1.msra.mxu0 %v1169
    %1171 = vmatprep.subr.mxu0 0.0
    %1172 = vmatpush1.msra.mxu0 0.0
    %1173 = vmatprep.subr.mxu0 0.0
    %1174 = vmatpush1.msra.mxu0 0.0
    %1175 = vmatprep.subr.mxu0 0.0
    %1176 = vmatpush1.msra.mxu0 0.0
    %1177 = vmatprep.subr.mxu0 0.0
    %1178 = vmatpush1.msra.mxu0 0.0
    %1179 = vmatprep.subr.mxu0 0.0
    %1180 = vmatpush1.msra.mxu0 0.0
    %1181 = vmatprep.subr.mxu0 0.0
    %1182 = vmatpush1.msra.mxu0 0.0
    %1183 = vmatprep.subr.mxu0 0.0
    %1184 = vmatpush1.msra.mxu0 0.0
    %1185 = vmatprep.subr.mxu0 0.0
    %1186 = vmatpush1.msra.mxu0 0.0
    %1187 = vmatprep.subr.mxu0 0.0
    %1188 = vmatpush1.msra.mxu0 0.0
    %1189 = vmatprep.subr.mxu0 0.0
    %1190 = vmatpush1.msra.mxu0 0.0
    %1191 = vmatprep.subr.mxu0 0.0
    %1192 = vmatpush1.msra.mxu0 0.0
    %1193 = vmatprep.subr.mxu0 0.0
    %1194 = vmatpush1.msra.mxu0 0.0
    %1195 = vmatprep.subr.mxu0 0.0
    %1196 = vmatpush1.msra.mxu0 0.0
    %1197 = vmatprep.subr.mxu0 0.0
    %1198 = vmatpush1.msra.mxu0 0.0
    %1199 = vmatprep.subr.mxu0 0.0
    %1200 = vmatpush1.msra.mxu0 0.0
    %1201 = vmatprep.subr.mxu0 0.0
    %1202 = vmatpush1.msra.mxu0 0.0
    %1203 = vmatprep.mubr.f32.mxu0 0.0
    %v1204 = vand.u32 %v100, 4294901760
    %v1205 = vsub.f32 %v100, %v1204
    %1206 = vmatmul.mubr.f32.gmra.mrb[0].mxu0 %v1205
    %v1207 = vpop.f32.mrb[0].mxu0
    %v1208 = vadd.f32 %v1098, %v1207
    %v1209 = vpop.f32.mrb[0].mxu0
    %1210 = vmatprep.mubr.f32.mxu0 0.0
    %v1211 = vand.u32 %v101, 4294901760
    %v1212 = vsub.f32 %v101, %v1211
    %1213 = vmatmul.mubr.f32.gmra.mrb[0].mxu0 %v1212
    %v1214 = vpop.f32.mrb[0].mxu0
    %v1215 = vadd.f32 %v1104, %v1214
    %v1216 = vpop.f32.mrb[0].mxu0
    %1217 = vdwg.mxu0
    %1218 = vmatprep.subr.mxu0 0.0
    %v1219 = vand.u32 %v118, 4294901760
    %1220 = vmatpush1.msra.mxu0 %v1219
    %1221 = vmatprep.subr.mxu0 0.0
    %v1222 = vand.u32 %v119, 4294901760
    %1223 = vmatpush1.msra.mxu0 %v1222
    %1224 = vmatprep.subr.mxu0 0.0
    %v1225 = vand.u32 %v120, 4294901760
    %1226 = vmatpush1.msra.mxu0 %v1225
    %1227 = vmatprep.subr.mxu0 0.0
    %v1228 = vand.u32 %v121, 4294901760
    %1229 = vmatpush1.msra.mxu0 %v1228
    %1230 = vmatprep.subr.mxu0 0.0
    %v1231 = vand.u32 %v122, 4294901760
    %1232 = vmatpush1.msra.mxu0 %v1231
    %1233 = vmatprep.subr.mxu0 0.0
    %v1234 = vand.u32 %v123, 4294901760
    %1235 = vmatpush1.msra.mxu0 %v1234
    %1236 = vmatprep.subr.mxu0 0.0
    %v1237 = vand.u32 %v124, 4294901760
    %1238 = vmatpush1.msra.mxu0 %v1237
    %1239 = vmatprep.subr.mxu0 0.0
    %v1240 = vand.u32 %v125, 4294901760
    %1241 = vmatpush1.msra.mxu0 %v1240
    %1242 = vmatprep.subr.mxu0 0.0
    %v1243 = vand.u32 %v126, 4294901760
    %1244 = vmatpush1.msra.mxu0 %v1243
    %1245 = vmatprep.subr.mxu0 0.0
    %v1246 = vand.u32 %v127, 4294901760
    %1247 = vmatpush1.msra.mxu0 %v1246
    %1248 = vmatprep.subr.mxu0 0.0
    %v1249 = vand.u32 %v128, 4294901760
    %1250 = vmatpush1.msra.mxu0 %v1249
    %1251 = vmatprep.subr.mxu0 0.0
    %v1252 = vand.u32 %v129, 4294901760
    %1253 = vmatpush1.msra.mxu0 %v1252
    %1254 = vmatprep.subr.mxu0 0.0
    %v1255 = vand.u32 %v130, 4294901760
    %1256 = vmatpush1.msra.mxu0 %v1255
    %1257 = vmatprep.subr.mxu0 0.0
    %v1258 = vand.u32 %v131, 4294901760
    %1259 = vmatpush1.msra.mxu0 %v1258
    %1260 = vmatprep.subr.mxu0 0.0
    %v1261 = vand.u32 %v132, 4294901760
    %1262 = vmatpush1.msra.mxu0 %v1261
    %1263 = vmatprep.subr.mxu0 0.0
    %v1264 = vand.u32 %v133, 4294901760
    %1265 = vmatpush1.msra.mxu0 %v1264
    %1266 = vmatprep.subr.mxu0 0.0
    %1267 = vmatpush1.msra.mxu0 0.0
    %1268 = vmatprep.subr.mxu0 0.0
    %1269 = vmatpush1.msra.mxu0 0.0
    %1270 = vmatprep.subr.mxu0 0.0
    %1271 = vmatpush1.msra.mxu0 0.0
    %1272 = vmatprep.subr.mxu0 0.0
    %1273 = vmatpush1.msra.mxu0 0.0
    %1274 = vmatprep.subr.mxu0 0.0
    %1275 = vmatpush1.msra.mxu0 0.0
    %1276 = vmatprep.subr.mxu0 0.0
    %1277 = vmatpush1.msra.mxu0 0.0
    %1278 = vmatprep.subr.mxu0 0.0
    %1279 = vmatpush1.msra.mxu0 0.0
    %1280 = vmatprep.subr.mxu0 0.0
    %1281 = vmatpush1.msra.mxu0 0.0
    %1282 = vmatprep.subr.mxu0 0.0
    %1283 = vmatpush1.msra.mxu0 0.0
    %1284 = vmatprep.subr.mxu0 0.0
    %1285 = vmatpush1.msra.mxu0 0.0
    %1286 = vmatprep.subr.mxu0 0.0
    %1287 = vmatpush1.msra.mxu0 0.0
    %1288 = vmatprep.subr.mxu0 0.0
    %1289 = vmatpush1.msra.mxu0 0.0
    %1290 = vmatprep.subr.mxu0 0.0
    %1291 = vmatpush1.msra.mxu0 0.0
    %1292 = vmatprep.subr.mxu0 0.0
    %1293 = vmatpush1.msra.mxu0 0.0
    %1294 = vmatprep.subr.mxu0 0.0
    %1295 = vmatpush1.msra.mxu0 0.0
    %1296 = vmatprep.subr.mxu0 0.0
    %1297 = vmatpush1.msra.mxu0 0.0
    %1298 = vmatprep.mubr.f32.mxu0 0.0
    %v1299 = vand.u32 %v100, 4294901760
    %v1300 = vsub.f32 %v100, %v1299
    %v1301 = vand.u32 %v1300, 4294901760
    %1302 = vmatmul.mubr.f32.gmra.mrb[0].mxu0 %v1301
    %v1303 = vpop.f32.mrb[0].mxu0
    %v1304 = vadd.f32 %v1208, %v1303
    %v1305 = vpop.f32.mrb[0].mxu0
    %1306 = vmatprep.mubr.f32.mxu0 0.0
    %v1307 = vand.u32 %v101, 4294901760
    %v1308 = vsub.f32 %v101, %v1307
    %v1309 = vand.u32 %v1308, 4294901760
    %1310 = vmatmul.mubr.f32.gmra.mrb[0].mxu0 %v1309
    %v1311 = vpop.f32.mrb[0].mxu0
    %v1312 = vadd.f32 %v1215, %v1311
    %v1313 = vpop.f32.mrb[0].mxu0
    %1314 = vdwg.mxu0
    %1315 = vmatprep.subr.mxu0 0.0
    %v1316 = vand.u32 %v118, 4294901760
    %v1317 = vsub.f32 %v118, %v1316
    %v1318 = vand.u32 %v1317, 4294901760
    %1319 = vmatpush1.msra.mxu0 %v1318
    %1320 = vmatprep.subr.mxu0 0.0
    %v1321 = vand.u32 %v119, 4294901760
    %v1322 = vsub.f32 %v119, %v1321
    %v1323 = vand.u32 %v1322, 4294901760
    %1324 = vmatpush1.msra.mxu0 %v1323
    %1325 = vmatprep.subr.mxu0 0.0
    %v1326 = vand.u32 %v120, 4294901760
    %v1327 = vsub.f32 %v120, %v1326
    %v1328 = vand.u32 %v1327, 4294901760
    %1329 = vmatpush1.msra.mxu0 %v1328
    %1330 = vmatprep.subr.mxu0 0.0
    %v1331 = vand.u32 %v121, 4294901760
    %v1332 = vsub.f32 %v121, %v1331
    %v1333 = vand.u32 %v1332, 4294901760
    %1334 = vmatpush1.msra.mxu0 %v1333
    %1335 = vmatprep.subr.mxu0 0.0
    %v1336 = vand.u32 %v122, 4294901760
    %v1337 = vsub.f32 %v122, %v1336
    %v1338 = vand.u32 %v1337, 4294901760
    %1339 = vmatpush1.msra.mxu0 %v1338
    %1340 = vmatprep.subr.mxu0 0.0
    %v1341 = vand.u32 %v123, 4294901760
    %v1342 = vsub.f32 %v123, %v1341
    %v1343 = vand.u32 %v1342, 4294901760
    %1344 = vmatpush1.msra.mxu0 %v1343
    %1345 = vmatprep.subr.mxu0 0.0
    %v1346 = vand.u32 %v124, 4294901760
    %v1347 = vsub.f32 %v124, %v1346
    %v1348 = vand.u32 %v1347, 4294901760
    %1349 = vmatpush1.msra.mxu0 %v1348
    %1350 = vmatprep.subr.mxu0 0.0
    %v1351 = vand.u32 %v125, 4294901760
    %v1352 = vsub.f32 %v125, %v1351
    %v1353 = vand.u32 %v1352, 4294901760
    %1354 = vmatpush1.msra.mxu0 %v1353
    %1355 = vmatprep.subr.mxu0 0.0
    %v1356 = vand.u32 %v126, 4294901760
    %v1357 = vsub.f32 %v126, %v1356
    %v1358 = vand.u32 %v1357, 4294901760
    %1359 = vmatpush1.msra.mxu0 %v1358
    %1360 = vmatprep.subr.mxu0 0.0
    %v1361 = vand.u32 %v127, 4294901760
    %v1362 = vsub.f32 %v127, %v1361
    %v1363 = vand.u32 %v1362, 4294901760
    %1364 = vmatpush1.msra.mxu0 %v1363
    %1365 = vmatprep.subr.mxu0 0.0
    %v1366 = vand.u32 %v128, 4294901760
    %v1367 = vsub.f32 %v128, %v1366
    %v1368 = vand.u32 %v1367, 4294901760
    %1369 = vmatpush1.msra.mxu0 %v1368
    %1370 = vmatprep.subr.mxu0 0.0
    %v1371 = vand.u32 %v129, 4294901760
    %v1372 = vsub.f32 %v129, %v1371
    %v1373 = vand.u32 %v1372, 4294901760
    %1374 = vmatpush1.msra.mxu0 %v1373
    %1375 = vmatprep.subr.mxu0 0.0
    %v1376 = vand.u32 %v130, 4294901760
    %v1377 = vsub.f32 %v130, %v1376
    %v1378 = vand.u32 %v1377, 4294901760
    %1379 = vmatpush1.msra.mxu0 %v1378
    %1380 = vmatprep.subr.mxu0 0.0
    %v1381 = vand.u32 %v131, 4294901760
    %v1382 = vsub.f32 %v131, %v1381
    %v1383 = vand.u32 %v1382, 4294901760
    %1384 = vmatpush1.msra.mxu0 %v1383
    %1385 = vmatprep.subr.mxu0 0.0
    %v1386 = vand.u32 %v132, 4294901760
    %v1387 = vsub.f32 %v132, %v1386
    %v1388 = vand.u32 %v1387, 4294901760
    %1389 = vmatpush1.msra.mxu0 %v1388
    %1390 = vmatprep.subr.mxu0 0.0
    %v1391 = vand.u32 %v133, 4294901760
    %v1392 = vsub.f32 %v133, %v1391
    %v1393 = vand.u32 %v1392, 4294901760
    %1394 = vmatpush1.msra.mxu0 %v1393
    %1395 = vmatprep.subr.mxu0 0.0
    %1396 = vmatpush1.msra.mxu0 0.0
    %1397 = vmatprep.subr.mxu0 0.0
    %1398 = vmatpush1.msra.mxu0 0.0
    %1399 = vmatprep.subr.mxu0 0.0
    %1400 = vmatpush1.msra.mxu0 0.0
    %1401 = vmatprep.subr.mxu0 0.0
    %1402 = vmatpush1.msra.mxu0 0.0
    %1403 = vmatprep.subr.mxu0 0.0
    %1404 = vmatpush1.msra.mxu0 0.0
    %1405 = vmatprep.subr.mxu0 0.0
    %1406 = vmatpush1.msra.mxu0 0.0
    %1407 = vmatprep.subr.mxu0 0.0
    %1408 = vmatpush1.msra.mxu0 0.0
    %1409 = vmatprep.subr.mxu0 0.0
    %1410 = vmatpush1.msra.mxu0 0.0
    %1411 = vmatprep.subr.mxu0 0.0
    %1412 = vmatpush1.msra.mxu0 0.0
    %1413 = vmatprep.subr.mxu0 0.0
    %1414 = vmatpush1.msra.mxu0 0.0
    %1415 = vmatprep.subr.mxu0 0.0
    %1416 = vmatpush1.msra.mxu0 0.0
    %1417 = vmatprep.subr.mxu0 0.0
    %1418 = vmatpush1.msra.mxu0 0.0
    %1419 = vmatprep.subr.mxu0 0.0
    %1420 = vmatpush1.msra.mxu0 0.0
    %1421 = vmatprep.subr.mxu0 0.0
    %1422 = vmatpush1.msra.mxu0 0.0
    %1423 = vmatprep.subr.mxu0 0.0
    %1424 = vmatpush1.msra.mxu0 0.0
    %1425 = vmatprep.subr.mxu0 0.0
    %1426 = vmatpush1.msra.mxu0 0.0
    %1427 = vmatprep.mubr.f32.mxu0 0.0
    %v1428 = vand.u32 %v100, 4294901760
    %1429 = vmatmul.mubr.f32.gmra.mrb[0].mxu0 %v1428
    %v1430 = vpop.f32.mrb[0].mxu0
    %v1431 = vadd.f32 %v1304, %v1430
    %v1432 = vpop.f32.mrb[0].mxu0
    %1433 = vmatprep.mubr.f32.mxu0 0.0
    %v1434 = vand.u32 %v101, 4294901760
    %1435 = vmatmul.mubr.f32.gmra.mrb[0].mxu0 %v1434
    %v1436 = vpop.f32.mrb[0].mxu0
    %v1437 = vadd.f32 %v1312, %v1436
    %v1438 = vpop.f32.mrb[0].mxu0
    %1439 = vdwg.mxu0
    %1440 = vmatprep.subr.mxu0 0.0
    %v1441 = vand.u32 %v118, 4294901760
    %1442 = vmatpush1.msra.mxu0 %v1441
    %1443 = vmatprep.subr.mxu0 0.0
    %v1444 = vand.u32 %v119, 4294901760
    %1445 = vmatpush1.msra.mxu0 %v1444
    %1446 = vmatprep.subr.mxu0 0.0
    %v1447 = vand.u32 %v120, 4294901760
    %1448 = vmatpush1.msra.mxu0 %v1447
    %1449 = vmatprep.subr.mxu0 0.0
    %v1450 = vand.u32 %v121, 4294901760
    %1451 = vmatpush1.msra.mxu0 %v1450
    %1452 = vmatprep.subr.mxu0 0.0
    %v1453 = vand.u32 %v122, 4294901760
    %1454 = vmatpush1.msra.mxu0 %v1453
    %1455 = vmatprep.subr.mxu0 0.0
    %v1456 = vand.u32 %v123, 4294901760
    %1457 = vmatpush1.msra.mxu0 %v1456
    %1458 = vmatprep.subr.mxu0 0.0
    %v1459 = vand.u32 %v124, 4294901760
    %1460 = vmatpush1.msra.mxu0 %v1459
    %1461 = vmatprep.subr.mxu0 0.0
    %v1462 = vand.u32 %v125, 4294901760
    %1463 = vmatpush1.msra.mxu0 %v1462
    %1464 = vmatprep.subr.mxu0 0.0
    %v1465 = vand.u32 %v126, 4294901760
    %1466 = vmatpush1.msra.mxu0 %v1465
    %1467 = vmatprep.subr.mxu0 0.0
    %v1468 = vand.u32 %v127, 4294901760
    %1469 = vmatpush1.msra.mxu0 %v1468
    %1470 = vmatprep.subr.mxu0 0.0
    %v1471 = vand.u32 %v128, 4294901760
    %1472 = vmatpush1.msra.mxu0 %v1471
    %1473 = vmatprep.subr.mxu0 0.0
    %v1474 = vand.u32 %v129, 4294901760
    %1475 = vmatpush1.msra.mxu0 %v1474
    %1476 = vmatprep.subr.mxu0 0.0
    %v1477 = vand.u32 %v130, 4294901760
    %1478 = vmatpush1.msra.mxu0 %v1477
    %1479 = vmatprep.subr.mxu0 0.0
    %v1480 = vand.u32 %v131, 4294901760
    %1481 = vmatpush1.msra.mxu0 %v1480
    %1482 = vmatprep.subr.mxu0 0.0
    %v1483 = vand.u32 %v132, 4294901760
    %1484 = vmatpush1.msra.mxu0 %v1483
    %1485 = vmatprep.subr.mxu0 0.0
    %v1486 = vand.u32 %v133, 4294901760
    %1487 = vmatpush1.msra.mxu0 %v1486
    %1488 = vmatprep.subr.mxu0 0.0
    %1489 = vmatpush1.msra.mxu0 0.0
    %1490 = vmatprep.subr.mxu0 0.0
    %1491 = vmatpush1.msra.mxu0 0.0
    %1492 = vmatprep.subr.mxu0 0.0
    %1493 = vmatpush1.msra.mxu0 0.0
    %1494 = vmatprep.subr.mxu0 0.0
    %1495 = vmatpush1.msra.mxu0 0.0
    %1496 = vmatprep.subr.mxu0 0.0
    %1497 = vmatpush1.msra.mxu0 0.0
    %1498 = vmatprep.subr.mxu0 0.0
    %1499 = vmatpush1.msra.mxu0 0.0
    %1500 = vmatprep.subr.mxu0 0.0
    %1501 = vmatpush1.msra.mxu0 0.0
    %1502 = vmatprep.subr.mxu0 0.0
    %1503 = vmatpush1.msra.mxu0 0.0
    %1504 = vmatprep.subr.mxu0 0.0
    %1505 = vmatpush1.msra.mxu0 0.0
    %1506 = vmatprep.subr.mxu0 0.0
    %1507 = vmatpush1.msra.mxu0 0.0
    %1508 = vmatprep.subr.mxu0 0.0
    %1509 = vmatpush1.msra.mxu0 0.0
    %1510 = vmatprep.subr.mxu0 0.0
    %1511 = vmatpush1.msra.mxu0 0.0
    %1512 = vmatprep.subr.mxu0 0.0
    %1513 = vmatpush1.msra.mxu0 0.0
    %1514 = vmatprep.subr.mxu0 0.0
    %1515 = vmatpush1.msra.mxu0 0.0
    %1516 = vmatprep.subr.mxu0 0.0
    %1517 = vmatpush1.msra.mxu0 0.0
    %1518 = vmatprep.subr.mxu0 0.0
    %1519 = vmatpush1.msra.mxu0 0.0
    %1520 = vmatprep.mubr.f32.mxu0 0.0
    %v1521 = vand.u32 %v100, 4294901760
    %1522 = vmatmul.mubr.f32.gmra.mrb[0].mxu0 %v1521
    %v1523 = vpop.f32.mrb[0].mxu0
    %v1524 = vadd.f32 %v1431, %v1523
    %v1525 = vpop.f32.mrb[0].mxu0
    %1526 = vmatprep.mubr.f32.mxu0 0.0
    %v1527 = vand.u32 %v101, 4294901760
    %1528 = vmatmul.mubr.f32.gmra.mrb[0].mxu0 %v1527
    %v1529 = vpop.f32.mrb[0].mxu0
    %v1530 = vadd.f32 %v1437, %v1529
    %v1531 = vpop.f32.mrb[0].mxu0
    %1532 = vdwg.mxu0
    %v1534 = vlaneseq
    %v1535 = vshrl.u32 %v1534, 7
    %v1536 = vsub.s32 0, %v1535
    %v1537 = vrot.slane %v152, %v1536
    %1539 = vmatprep.subr.mxu0 0.0
    %v1540 = vand.u32 %v134, 4294901760
    %1541 = vmatpush1.msra.mxu0 %v1540
    %1542 = vmatprep.subr.mxu0 0.0
    %v1543 = vand.u32 %v135, 4294901760
    %1544 = vmatpush1.msra.mxu0 %v1543
    %1545 = vmatprep.subr.mxu0 0.0
    %v1546 = vand.u32 %v136, 4294901760
    %1547 = vmatpush1.msra.mxu0 %v1546
    %1548 = vmatprep.subr.mxu0 0.0
    %v1549 = vand.u32 %v137, 4294901760
    %1550 = vmatpush1.msra.mxu0 %v1549
    %1551 = vmatprep.subr.mxu0 0.0
    %v1552 = vand.u32 %v138, 4294901760
    %1553 = vmatpush1.msra.mxu0 %v1552
    %1554 = vmatprep.subr.mxu0 0.0
    %v1555 = vand.u32 %v139, 4294901760
    %1556 = vmatpush1.msra.mxu0 %v1555
    %1557 = vmatprep.subr.mxu0 0.0
    %v1558 = vand.u32 %v140, 4294901760
    %1559 = vmatpush1.msra.mxu0 %v1558
    %1560 = vmatprep.subr.mxu0 0.0
    %v1561 = vand.u32 %v141, 4294901760
    %1562 = vmatpush1.msra.mxu0 %v1561
    %1563 = vmatprep.subr.mxu0 0.0
    %v1564 = vand.u32 %v142, 4294901760
    %1565 = vmatpush1.msra.mxu0 %v1564
    %1566 = vmatprep.subr.mxu0 0.0
    %v1567 = vand.u32 %v143, 4294901760
    %1568 = vmatpush1.msra.mxu0 %v1567
    %1569 = vmatprep.subr.mxu0 0.0
    %v1570 = vand.u32 %v144, 4294901760
    %1571 = vmatpush1.msra.mxu0 %v1570
    %1572 = vmatprep.subr.mxu0 0.0
    %v1573 = vand.u32 %v145, 4294901760
    %1574 = vmatpush1.msra.mxu0 %v1573
    %1575 = vmatprep.subr.mxu0 0.0
    %v1576 = vand.u32 %v146, 4294901760
    %1577 = vmatpush1.msra.mxu0 %v1576
    %1578 = vmatprep.subr.mxu0 0.0
    %v1579 = vand.u32 %v147, 4294901760
    %1580 = vmatpush1.msra.mxu0 %v1579
    %1581 = vmatprep.subr.mxu0 0.0
    %v1582 = vand.u32 %v148, 4294901760
    %1583 = vmatpush1.msra.mxu0 %v1582
    %1584 = vmatprep.subr.mxu0 0.0
    %v1585 = vand.u32 %v149, 4294901760
    %1586 = vmatpush1.msra.mxu0 %v1585
    %1587 = vmatprep.subr.mxu0 0.0
    %1588 = vmatpush1.msra.mxu0 0.0
    %1589 = vmatprep.subr.mxu0 0.0
    %1590 = vmatpush1.msra.mxu0 0.0
    %1591 = vmatprep.subr.mxu0 0.0
    %1592 = vmatpush1.msra.mxu0 0.0
    %1593 = vmatprep.subr.mxu0 0.0
    %1594 = vmatpush1.msra.mxu0 0.0
    %1595 = vmatprep.subr.mxu0 0.0
    %1596 = vmatpush1.msra.mxu0 0.0
    %1597 = vmatprep.subr.mxu0 0.0
    %1598 = vmatpush1.msra.mxu0 0.0
    %1599 = vmatprep.subr.mxu0 0.0
    %1600 = vmatpush1.msra.mxu0 0.0
    %1601 = vmatprep.subr.mxu0 0.0
    %1602 = vmatpush1.msra.mxu0 0.0
    %1603 = vmatprep.subr.mxu0 0.0
    %1604 = vmatpush1.msra.mxu0 0.0
    %1605 = vmatprep.subr.mxu0 0.0
    %1606 = vmatpush1.msra.mxu0 0.0
    %1607 = vmatprep.subr.mxu0 0.0
    %1608 = vmatpush1.msra.mxu0 0.0
    %1609 = vmatprep.subr.mxu0 0.0
    %1610 = vmatpush1.msra.mxu0 0.0
    %1611 = vmatprep.subr.mxu0 0.0
    %1612 = vmatpush1.msra.mxu0 0.0
    %1613 = vmatprep.subr.mxu0 0.0
    %1614 = vmatpush1.msra.mxu0 0.0
    %1615 = vmatprep.subr.mxu0 0.0
    %1616 = vmatpush1.msra.mxu0 0.0
    %1617 = vmatprep.subr.mxu0 0.0
    %1618 = vmatpush1.msra.mxu0 0.0
    %1619 = vmatprep.mubr.f32.mxu0 0.0
    %v1620 = vand.u32 %v100, 4294901760
    %v1621 = vsub.f32 %v100, %v1620
    %v1622 = vand.u32 %v1621, 4294901760
    %v1623 = vsub.f32 %v1621, %v1622
    %v1624 = vand.u32 %v1623, 4294901760
    %1625 = vmatmul.mubr.f32.gmra.mrb[0].mxu0 %v1624
    %v1626 = vpop.f32.mrb[0].mxu0
    %v1627 = vadd.f32 %v1537, %v1626
    %v1628 = vpop.f32.mrb[0].mxu0
    %1629 = vmatprep.mubr.f32.mxu0 0.0
    %v1630 = vand.u32 %v101, 4294901760
    %v1631 = vsub.f32 %v101, %v1630
    %v1632 = vand.u32 %v1631, 4294901760
    %v1633 = vsub.f32 %v1631, %v1632
    %v1634 = vand.u32 %v1633, 4294901760
    %1635 = vmatmul.mubr.f32.gmra.mrb[0].mxu0 %v1634
    %v1636 = vpop.f32.mrb[0].mxu0
    %v1637 = vadd.f32 %v1537, %v1636
    %v1638 = vpop.f32.mrb[0].mxu0
    %1639 = vdwg.mxu0
    %1640 = vmatprep.subr.mxu0 0.0
    %v1641 = vand.u32 %v134, 4294901760
    %v1642 = vsub.f32 %v134, %v1641
    %v1643 = vand.u32 %v1642, 4294901760
    %v1644 = vsub.f32 %v1642, %v1643
    %v1645 = vand.u32 %v1644, 4294901760
    %1646 = vmatpush1.msra.mxu0 %v1645
    %1647 = vmatprep.subr.mxu0 0.0
    %v1648 = vand.u32 %v135, 4294901760
    %v1649 = vsub.f32 %v135, %v1648
    %v1650 = vand.u32 %v1649, 4294901760
    %v1651 = vsub.f32 %v1649, %v1650
    %v1652 = vand.u32 %v1651, 4294901760
    %1653 = vmatpush1.msra.mxu0 %v1652
    %1654 = vmatprep.subr.mxu0 0.0
    %v1655 = vand.u32 %v136, 4294901760
    %v1656 = vsub.f32 %v136, %v1655
    %v1657 = vand.u32 %v1656, 4294901760
    %v1658 = vsub.f32 %v1656, %v1657
    %v1659 = vand.u32 %v1658, 4294901760
    %1660 = vmatpush1.msra.mxu0 %v1659
    %1661 = vmatprep.subr.mxu0 0.0
    %v1662 = vand.u32 %v137, 4294901760
    %v1663 = vsub.f32 %v137, %v1662
    %v1664 = vand.u32 %v1663, 4294901760
    %v1665 = vsub.f32 %v1663, %v1664
    %v1666 = vand.u32 %v1665, 4294901760
    %1667 = vmatpush1.msra.mxu0 %v1666
    %1668 = vmatprep.subr.mxu0 0.0
    %v1669 = vand.u32 %v138, 4294901760
    %v1670 = vsub.f32 %v138, %v1669
    %v1671 = vand.u32 %v1670, 4294901760
    %v1672 = vsub.f32 %v1670, %v1671
    %v1673 = vand.u32 %v1672, 4294901760
    %1674 = vmatpush1.msra.mxu0 %v1673
    %1675 = vmatprep.subr.mxu0 0.0
    %v1676 = vand.u32 %v139, 4294901760
    %v1677 = vsub.f32 %v139, %v1676
    %v1678 = vand.u32 %v1677, 4294901760
    %v1679 = vsub.f32 %v1677, %v1678
    %v1680 = vand.u32 %v1679, 4294901760
    %1681 = vmatpush1.msra.mxu0 %v1680
    %1682 = vmatprep.subr.mxu0 0.0
    %v1683 = vand.u32 %v140, 4294901760
    %v1684 = vsub.f32 %v140, %v1683
    %v1685 = vand.u32 %v1684, 4294901760
    %v1686 = vsub.f32 %v1684, %v1685
    %v1687 = vand.u32 %v1686, 4294901760
    %1688 = vmatpush1.msra.mxu0 %v1687
    %1689 = vmatprep.subr.mxu0 0.0
    %v1690 = vand.u32 %v141, 4294901760
    %v1691 = vsub.f32 %v141, %v1690
    %v1692 = vand.u32 %v1691, 4294901760
    %v1693 = vsub.f32 %v1691, %v1692
    %v1694 = vand.u32 %v1693, 4294901760
    %1695 = vmatpush1.msra.mxu0 %v1694
    %1696 = vmatprep.subr.mxu0 0.0
    %v1697 = vand.u32 %v142, 4294901760
    %v1698 = vsub.f32 %v142, %v1697
    %v1699 = vand.u32 %v1698, 4294901760
    %v1700 = vsub.f32 %v1698, %v1699
    %v1701 = vand.u32 %v1700, 4294901760
    %1702 = vmatpush1.msra.mxu0 %v1701
    %1703 = vmatprep.subr.mxu0 0.0
    %v1704 = vand.u32 %v143, 4294901760
    %v1705 = vsub.f32 %v143, %v1704
    %v1706 = vand.u32 %v1705, 4294901760
    %v1707 = vsub.f32 %v1705, %v1706
    %v1708 = vand.u32 %v1707, 4294901760
    %1709 = vmatpush1.msra.mxu0 %v1708
    %1710 = vmatprep.subr.mxu0 0.0
    %v1711 = vand.u32 %v144, 4294901760
    %v1712 = vsub.f32 %v144, %v1711
    %v1713 = vand.u32 %v1712, 4294901760
    %v1714 = vsub.f32 %v1712, %v1713
    %v1715 = vand.u32 %v1714, 4294901760
    %1716 = vmatpush1.msra.mxu0 %v1715
    %1717 = vmatprep.subr.mxu0 0.0
    %v1718 = vand.u32 %v145, 4294901760
    %v1719 = vsub.f32 %v145, %v1718
    %v1720 = vand.u32 %v1719, 4294901760
    %v1721 = vsub.f32 %v1719, %v1720
    %v1722 = vand.u32 %v1721, 4294901760
    %1723 = vmatpush1.msra.mxu0 %v1722
    %1724 = vmatprep.subr.mxu0 0.0
    %v1725 = vand.u32 %v146, 4294901760
    %v1726 = vsub.f32 %v146, %v1725
    %v1727 = vand.u32 %v1726, 4294901760
    %v1728 = vsub.f32 %v1726, %v1727
    %v1729 = vand.u32 %v1728, 4294901760
    %1730 = vmatpush1.msra.mxu0 %v1729
    %1731 = vmatprep.subr.mxu0 0.0
    %v1732 = vand.u32 %v147, 4294901760
    %v1733 = vsub.f32 %v147, %v1732
    %v1734 = vand.u32 %v1733, 4294901760
    %v1735 = vsub.f32 %v1733, %v1734
    %v1736 = vand.u32 %v1735, 4294901760
    %1737 = vmatpush1.msra.mxu0 %v1736
    %1738 = vmatprep.subr.mxu0 0.0
    %v1739 = vand.u32 %v148, 4294901760
    %v1740 = vsub.f32 %v148, %v1739
    %v1741 = vand.u32 %v1740, 4294901760
    %v1742 = vsub.f32 %v1740, %v1741
    %v1743 = vand.u32 %v1742, 4294901760
    %1744 = vmatpush1.msra.mxu0 %v1743
    %1745 = vmatprep.subr.mxu0 0.0
    %v1746 = vand.u32 %v149, 4294901760
    %v1747 = vsub.f32 %v149, %v1746
    %v1748 = vand.u32 %v1747, 4294901760
    %v1749 = vsub.f32 %v1747, %v1748
    %v1750 = vand.u32 %v1749, 4294901760
    %1751 = vmatpush1.msra.mxu0 %v1750
    %1752 = vmatprep.subr.mxu0 0.0
    %1753 = vmatpush1.msra.mxu0 0.0
    %1754 = vmatprep.subr.mxu0 0.0
    %1755 = vmatpush1.msra.mxu0 0.0
    %1756 = vmatprep.subr.mxu0 0.0
    %1757 = vmatpush1.msra.mxu0 0.0
    %1758 = vmatprep.subr.mxu0 0.0
    %1759 = vmatpush1.msra.mxu0 0.0
    %1760 = vmatprep.subr.mxu0 0.0
    %1761 = vmatpush1.msra.mxu0 0.0
    %1762 = vmatprep.subr.mxu0 0.0
    %1763 = vmatpush1.msra.mxu0 0.0
    %1764 = vmatprep.subr.mxu0 0.0
    %1765 = vmatpush1.msra.mxu0 0.0
    %1766 = vmatprep.subr.mxu0 0.0
    %1767 = vmatpush1.msra.mxu0 0.0
    %1768 = vmatprep.subr.mxu0 0.0
    %1769 = vmatpush1.msra.mxu0 0.0
    %1770 = vmatprep.subr.mxu0 0.0
    %1771 = vmatpush1.msra.mxu0 0.0
    %1772 = vmatprep.subr.mxu0 0.0
    %1773 = vmatpush1.msra.mxu0 0.0
    %1774 = vmatprep.subr.mxu0 0.0
    %1775 = vmatpush1.msra.mxu0 0.0
    %1776 = vmatprep.subr.mxu0 0.0
    %1777 = vmatpush1.msra.mxu0 0.0
    %1778 = vmatprep.subr.mxu0 0.0
    %1779 = vmatpush1.msra.mxu0 0.0
    %1780 = vmatprep.subr.mxu0 0.0
    %1781 = vmatpush1.msra.mxu0 0.0
    %1782 = vmatprep.subr.mxu0 0.0
    %1783 = vmatpush1.msra.mxu0 0.0
    %1784 = vmatprep.mubr.f32.mxu0 0.0
    %v1785 = vand.u32 %v100, 4294901760
    %1786 = vmatmul.mubr.f32.gmra.mrb[0].mxu0 %v1785
    %v1787 = vpop.f32.mrb[0].mxu0
    %v1788 = vadd.f32 %v1627, %v1787
    %v1789 = vpop.f32.mrb[0].mxu0
    %1790 = vmatprep.mubr.f32.mxu0 0.0
    %v1791 = vand.u32 %v101, 4294901760
    %1792 = vmatmul.mubr.f32.gmra.mrb[0].mxu0 %v1791
    %v1793 = vpop.f32.mrb[0].mxu0
    %v1794 = vadd.f32 %v1637, %v1793
    %v1795 = vpop.f32.mrb[0].mxu0
    %1796 = vdwg.mxu0
    %1797 = vmatprep.subr.mxu0 0.0
    %v1798 = vand.u32 %v134, 4294901760
    %v1799 = vsub.f32 %v134, %v1798
    %1800 = vmatpush1.msra.mxu0 %v1799
    %1801 = vmatprep.subr.mxu0 0.0
    %v1802 = vand.u32 %v135, 4294901760
    %v1803 = vsub.f32 %v135, %v1802
    %1804 = vmatpush1.msra.mxu0 %v1803
    %1805 = vmatprep.subr.mxu0 0.0
    %v1806 = vand.u32 %v136, 4294901760
    %v1807 = vsub.f32 %v136, %v1806
    %1808 = vmatpush1.msra.mxu0 %v1807
    %1809 = vmatprep.subr.mxu0 0.0
    %v1810 = vand.u32 %v137, 4294901760
    %v1811 = vsub.f32 %v137, %v1810
    %1812 = vmatpush1.msra.mxu0 %v1811
    %1813 = vmatprep.subr.mxu0 0.0
    %v1814 = vand.u32 %v138, 4294901760
    %v1815 = vsub.f32 %v138, %v1814
    %1816 = vmatpush1.msra.mxu0 %v1815
    %1817 = vmatprep.subr.mxu0 0.0
    %v1818 = vand.u32 %v139, 4294901760
    %v1819 = vsub.f32 %v139, %v1818
    %1820 = vmatpush1.msra.mxu0 %v1819
    %1821 = vmatprep.subr.mxu0 0.0
    %v1822 = vand.u32 %v140, 4294901760
    %v1823 = vsub.f32 %v140, %v1822
    %1824 = vmatpush1.msra.mxu0 %v1823
    %1825 = vmatprep.subr.mxu0 0.0
    %v1826 = vand.u32 %v141, 4294901760
    %v1827 = vsub.f32 %v141, %v1826
    %1828 = vmatpush1.msra.mxu0 %v1827
    %1829 = vmatprep.subr.mxu0 0.0
    %v1830 = vand.u32 %v142, 4294901760
    %v1831 = vsub.f32 %v142, %v1830
    %1832 = vmatpush1.msra.mxu0 %v1831
    %1833 = vmatprep.subr.mxu0 0.0
    %v1834 = vand.u32 %v143, 4294901760
    %v1835 = vsub.f32 %v143, %v1834
    %1836 = vmatpush1.msra.mxu0 %v1835
    %1837 = vmatprep.subr.mxu0 0.0
    %v1838 = vand.u32 %v144, 4294901760
    %v1839 = vsub.f32 %v144, %v1838
    %1840 = vmatpush1.msra.mxu0 %v1839
    %1841 = vmatprep.subr.mxu0 0.0
    %v1842 = vand.u32 %v145, 4294901760
    %v1843 = vsub.f32 %v145, %v1842
    %1844 = vmatpush1.msra.mxu0 %v1843
    %1845 = vmatprep.subr.mxu0 0.0
    %v1846 = vand.u32 %v146, 4294901760
    %v1847 = vsub.f32 %v146, %v1846
    %1848 = vmatpush1.msra.mxu0 %v1847
    %1849 = vmatprep.subr.mxu0 0.0
    %v1850 = vand.u32 %v147, 4294901760
    %v1851 = vsub.f32 %v147, %v1850
    %1852 = vmatpush1.msra.mxu0 %v1851
    %1853 = vmatprep.subr.mxu0 0.0
    %v1854 = vand.u32 %v148, 4294901760
    %v1855 = vsub.f32 %v148, %v1854
    %1856 = vmatpush1.msra.mxu0 %v1855
    %1857 = vmatprep.subr.mxu0 0.0
    %v1858 = vand.u32 %v149, 4294901760
    %v1859 = vsub.f32 %v149, %v1858
    %1860 = vmatpush1.msra.mxu0 %v1859
    %1861 = vmatprep.subr.mxu0 0.0
    %1862 = vmatpush1.msra.mxu0 0.0
    %1863 = vmatprep.subr.mxu0 0.0
    %1864 = vmatpush1.msra.mxu0 0.0
    %1865 = vmatprep.subr.mxu0 0.0
    %1866 = vmatpush1.msra.mxu0 0.0
    %1867 = vmatprep.subr.mxu0 0.0
    %1868 = vmatpush1.msra.mxu0 0.0
    %1869 = vmatprep.subr.mxu0 0.0
    %1870 = vmatpush1.msra.mxu0 0.0
    %1871 = vmatprep.subr.mxu0 0.0
    %1872 = vmatpush1.msra.mxu0 0.0
    %1873 = vmatprep.subr.mxu0 0.0
    %1874 = vmatpush1.msra.mxu0 0.0
    %1875 = vmatprep.subr.mxu0 0.0
    %1876 = vmatpush1.msra.mxu0 0.0
    %1877 = vmatprep.subr.mxu0 0.0
    %1878 = vmatpush1.msra.mxu0 0.0
    %1879 = vmatprep.subr.mxu0 0.0
    %1880 = vmatpush1.msra.mxu0 0.0
    %1881 = vmatprep.subr.mxu0 0.0
    %1882 = vmatpush1.msra.mxu0 0.0
    %1883 = vmatprep.subr.mxu0 0.0
    %1884 = vmatpush1.msra.mxu0 0.0
    %1885 = vmatprep.subr.mxu0 0.0
    %1886 = vmatpush1.msra.mxu0 0.0
    %1887 = vmatprep.subr.mxu0 0.0
    %1888 = vmatpush1.msra.mxu0 0.0
    %1889 = vmatprep.subr.mxu0 0.0
    %1890 = vmatpush1.msra.mxu0 0.0
    %1891 = vmatprep.subr.mxu0 0.0
    %1892 = vmatpush1.msra.mxu0 0.0
    %1893 = vmatprep.mubr.f32.mxu0 0.0
    %v1894 = vand.u32 %v100, 4294901760
    %v1895 = vsub.f32 %v100, %v1894
    %1896 = vmatmul.mubr.f32.gmra.mrb[0].mxu0 %v1895
    %v1897 = vpop.f32.mrb[0].mxu0
    %v1898 = vadd.f32 %v1788, %v1897
    %v1899 = vpop.f32.mrb[0].mxu0
    %1900 = vmatprep.mubr.f32.mxu0 0.0
    %v1901 = vand.u32 %v101, 4294901760
    %v1902 = vsub.f32 %v101, %v1901
    %1903 = vmatmul.mubr.f32.gmra.mrb[0].mxu0 %v1902
    %v1904 = vpop.f32.mrb[0].mxu0
    %v1905 = vadd.f32 %v1794, %v1904
    %v1906 = vpop.f32.mrb[0].mxu0
    %1907 = vdwg.mxu0
    %1908 = vmatprep.subr.mxu0 0.0
    %v1909 = vand.u32 %v134, 4294901760
    %1910 = vmatpush1.msra.mxu0 %v1909
    %1911 = vmatprep.subr.mxu0 0.0
    %v1912 = vand.u32 %v135, 4294901760
    %1913 = vmatpush1.msra.mxu0 %v1912
    %1914 = vmatprep.subr.mxu0 0.0
    %v1915 = vand.u32 %v136, 4294901760
    %1916 = vmatpush1.msra.mxu0 %v1915
    %1917 = vmatprep.subr.mxu0 0.0
    %v1918 = vand.u32 %v137, 4294901760
    %1919 = vmatpush1.msra.mxu0 %v1918
    %1920 = vmatprep.subr.mxu0 0.0
    %v1921 = vand.u32 %v138, 4294901760
    %1922 = vmatpush1.msra.mxu0 %v1921
    %1923 = vmatprep.subr.mxu0 0.0
    %v1924 = vand.u32 %v139, 4294901760
    %1925 = vmatpush1.msra.mxu0 %v1924
    %1926 = vmatprep.subr.mxu0 0.0
    %v1927 = vand.u32 %v140, 4294901760
    %1928 = vmatpush1.msra.mxu0 %v1927
    %1929 = vmatprep.subr.mxu0 0.0
    %v1930 = vand.u32 %v141, 4294901760
    %1931 = vmatpush1.msra.mxu0 %v1930
    %1932 = vmatprep.subr.mxu0 0.0
    %v1933 = vand.u32 %v142, 4294901760
    %1934 = vmatpush1.msra.mxu0 %v1933
    %1935 = vmatprep.subr.mxu0 0.0
    %v1936 = vand.u32 %v143, 4294901760
    %1937 = vmatpush1.msra.mxu0 %v1936
    %1938 = vmatprep.subr.mxu0 0.0
    %v1939 = vand.u32 %v144, 4294901760
    %1940 = vmatpush1.msra.mxu0 %v1939
    %1941 = vmatprep.subr.mxu0 0.0
    %v1942 = vand.u32 %v145, 4294901760
    %1943 = vmatpush1.msra.mxu0 %v1942
    %1944 = vmatprep.subr.mxu0 0.0
    %v1945 = vand.u32 %v146, 4294901760
    %1946 = vmatpush1.msra.mxu0 %v1945
    %1947 = vmatprep.subr.mxu0 0.0
    %v1948 = vand.u32 %v147, 4294901760
    %1949 = vmatpush1.msra.mxu0 %v1948
    %1950 = vmatprep.subr.mxu0 0.0
    %v1951 = vand.u32 %v148, 4294901760
    %1952 = vmatpush1.msra.mxu0 %v1951
    %1953 = vmatprep.subr.mxu0 0.0
    %v1954 = vand.u32 %v149, 4294901760
    %1955 = vmatpush1.msra.mxu0 %v1954
    %1956 = vmatprep.subr.mxu0 0.0
    %1957 = vmatpush1.msra.mxu0 0.0
    %1958 = vmatprep.subr.mxu0 0.0
    %1959 = vmatpush1.msra.mxu0 0.0
    %1960 = vmatprep.subr.mxu0 0.0
    %1961 = vmatpush1.msra.mxu0 0.0
    %1962 = vmatprep.subr.mxu0 0.0
    %1963 = vmatpush1.msra.mxu0 0.0
    %1964 = vmatprep.subr.mxu0 0.0
    %1965 = vmatpush1.msra.mxu0 0.0
    %1966 = vmatprep.subr.mxu0 0.0
    %1967 = vmatpush1.msra.mxu0 0.0
    %1968 = vmatprep.subr.mxu0 0.0
    %1969 = vmatpush1.msra.mxu0 0.0
    %1970 = vmatprep.subr.mxu0 0.0
    %1971 = vmatpush1.msra.mxu0 0.0
    %1972 = vmatprep.subr.mxu0 0.0
    %1973 = vmatpush1.msra.mxu0 0.0
    %1974 = vmatprep.subr.mxu0 0.0
    %1975 = vmatpush1.msra.mxu0 0.0
    %1976 = vmatprep.subr.mxu0 0.0
    %1977 = vmatpush1.msra.mxu0 0.0
    %1978 = vmatprep.subr.mxu0 0.0
    %1979 = vmatpush1.msra.mxu0 0.0
    %1980 = vmatprep.subr.mxu0 0.0
    %1981 = vmatpush1.msra.mxu0 0.0
    %1982 = vmatprep.subr.mxu0 0.0
    %1983 = vmatpush1.msra.mxu0 0.0
    %1984 = vmatprep.subr.mxu0 0.0
    %1985 = vmatpush1.msra.mxu0 0.0
    %1986 = vmatprep.subr.mxu0 0.0
    %1987 = vmatpush1.msra.mxu0 0.0
    %1988 = vmatprep.mubr.f32.mxu0 0.0
    %v1989 = vand.u32 %v100, 4294901760
    %v1990 = vsub.f32 %v100, %v1989
    %v1991 = vand.u32 %v1990, 4294901760
    %1992 = vmatmul.mubr.f32.gmra.mrb[0].mxu0 %v1991
    %v1993 = vpop.f32.mrb[0].mxu0
    %v1994 = vadd.f32 %v1898, %v1993
    %v1995 = vpop.f32.mrb[0].mxu0
    %1996 = vmatprep.mubr.f32.mxu0 0.0
    %v1997 = vand.u32 %v101, 4294901760
    %v1998 = vsub.f32 %v101, %v1997
    %v1999 = vand.u32 %v1998, 4294901760
    %2000 = vmatmul.mubr.f32.gmra.mrb[0].mxu0 %v1999
    %v2001 = vpop.f32.mrb[0].mxu0
    %v2002 = vadd.f32 %v1905, %v2001
    %v2003 = vpop.f32.mrb[0].mxu0
    %2004 = vdwg.mxu0
    %2005 = vmatprep.subr.mxu0 0.0
    %v2006 = vand.u32 %v134, 4294901760
    %v2007 = vsub.f32 %v134, %v2006
    %v2008 = vand.u32 %v2007, 4294901760
    %2009 = vmatpush1.msra.mxu0 %v2008
    %2010 = vmatprep.subr.mxu0 0.0
    %v2011 = vand.u32 %v135, 4294901760
    %v2012 = vsub.f32 %v135, %v2011
    %v2013 = vand.u32 %v2012, 4294901760
    %2014 = vmatpush1.msra.mxu0 %v2013
    %2015 = vmatprep.subr.mxu0 0.0
    %v2016 = vand.u32 %v136, 4294901760
    %v2017 = vsub.f32 %v136, %v2016
    %v2018 = vand.u32 %v2017, 4294901760
    %2019 = vmatpush1.msra.mxu0 %v2018
    %2020 = vmatprep.subr.mxu0 0.0
    %v2021 = vand.u32 %v137, 4294901760
    %v2022 = vsub.f32 %v137, %v2021
    %v2023 = vand.u32 %v2022, 4294901760
    %2024 = vmatpush1.msra.mxu0 %v2023
    %2025 = vmatprep.subr.mxu0 0.0
    %v2026 = vand.u32 %v138, 4294901760
    %v2027 = vsub.f32 %v138, %v2026
    %v2028 = vand.u32 %v2027, 4294901760
    %2029 = vmatpush1.msra.mxu0 %v2028
    %2030 = vmatprep.subr.mxu0 0.0
    %v2031 = vand.u32 %v139, 4294901760
    %v2032 = vsub.f32 %v139, %v2031
    %v2033 = vand.u32 %v2032, 4294901760
    %2034 = vmatpush1.msra.mxu0 %v2033
    %2035 = vmatprep.subr.mxu0 0.0
    %v2036 = vand.u32 %v140, 4294901760
    %v2037 = vsub.f32 %v140, %v2036
    %v2038 = vand.u32 %v2037, 4294901760
    %2039 = vmatpush1.msra.mxu0 %v2038
    %2040 = vmatprep.subr.mxu0 0.0
    %v2041 = vand.u32 %v141, 4294901760
    %v2042 = vsub.f32 %v141, %v2041
    %v2043 = vand.u32 %v2042, 4294901760
    %2044 = vmatpush1.msra.mxu0 %v2043
    %2045 = vmatprep.subr.mxu0 0.0
    %v2046 = vand.u32 %v142, 4294901760
    %v2047 = vsub.f32 %v142, %v2046
    %v2048 = vand.u32 %v2047, 4294901760
    %2049 = vmatpush1.msra.mxu0 %v2048
    %2050 = vmatprep.subr.mxu0 0.0
    %v2051 = vand.u32 %v143, 4294901760
    %v2052 = vsub.f32 %v143, %v2051
    %v2053 = vand.u32 %v2052, 4294901760
    %2054 = vmatpush1.msra.mxu0 %v2053
    %2055 = vmatprep.subr.mxu0 0.0
    %v2056 = vand.u32 %v144, 4294901760
    %v2057 = vsub.f32 %v144, %v2056
    %v2058 = vand.u32 %v2057, 4294901760
    %2059 = vmatpush1.msra.mxu0 %v2058
    %2060 = vmatprep.subr.mxu0 0.0
    %v2061 = vand.u32 %v145, 4294901760
    %v2062 = vsub.f32 %v145, %v2061
    %v2063 = vand.u32 %v2062, 4294901760
    %2064 = vmatpush1.msra.mxu0 %v2063
    %2065 = vmatprep.subr.mxu0 0.0
    %v2066 = vand.u32 %v146, 4294901760
    %v2067 = vsub.f32 %v146, %v2066
    %v2068 = vand.u32 %v2067, 4294901760
    %2069 = vmatpush1.msra.mxu0 %v2068
    %2070 = vmatprep.subr.mxu0 0.0
    %v2071 = vand.u32 %v147, 4294901760
    %v2072 = vsub.f32 %v147, %v2071
    %v2073 = vand.u32 %v2072, 4294901760
    %2074 = vmatpush1.msra.mxu0 %v2073
    %2075 = vmatprep.subr.mxu0 0.0
    %v2076 = vand.u32 %v148, 4294901760
    %v2077 = vsub.f32 %v148, %v2076
    %v2078 = vand.u32 %v2077, 4294901760
    %2079 = vmatpush1.msra.mxu0 %v2078
    %2080 = vmatprep.subr.mxu0 0.0
    %v2081 = vand.u32 %v149, 4294901760
    %v2082 = vsub.f32 %v149, %v2081
    %v2083 = vand.u32 %v2082, 4294901760
    %2084 = vmatpush1.msra.mxu0 %v2083
    %2085 = vmatprep.subr.mxu0 0.0
    %2086 = vmatpush1.msra.mxu0 0.0
    %2087 = vmatprep.subr.mxu0 0.0
    %2088 = vmatpush1.msra.mxu0 0.0
    %2089 = vmatprep.subr.mxu0 0.0
    %2090 = vmatpush1.msra.mxu0 0.0
    %2091 = vmatprep.subr.mxu0 0.0
    %2092 = vmatpush1.msra.mxu0 0.0
    %2093 = vmatprep.subr.mxu0 0.0
    %2094 = vmatpush1.msra.mxu0 0.0
    %2095 = vmatprep.subr.mxu0 0.0
    %2096 = vmatpush1.msra.mxu0 0.0
    %2097 = vmatprep.subr.mxu0 0.0
    %2098 = vmatpush1.msra.mxu0 0.0
    %2099 = vmatprep.subr.mxu0 0.0
    %2100 = vmatpush1.msra.mxu0 0.0
    %2101 = vmatprep.subr.mxu0 0.0
    %2102 = vmatpush1.msra.mxu0 0.0
    %2103 = vmatprep.subr.mxu0 0.0
    %2104 = vmatpush1.msra.mxu0 0.0
    %2105 = vmatprep.subr.mxu0 0.0
    %2106 = vmatpush1.msra.mxu0 0.0
    %2107 = vmatprep.subr.mxu0 0.0
    %2108 = vmatpush1.msra.mxu0 0.0
    %2109 = vmatprep.subr.mxu0 0.0
    %2110 = vmatpush1.msra.mxu0 0.0
    %2111 = vmatprep.subr.mxu0 0.0
    %2112 = vmatpush1.msra.mxu0 0.0
    %2113 = vmatprep.subr.mxu0 0.0
    %2114 = vmatpush1.msra.mxu0 0.0
    %2115 = vmatprep.subr.mxu0 0.0
    %2116 = vmatpush1.msra.mxu0 0.0
    %2117 = vmatprep.mubr.f32.mxu0 0.0
    %v2118 = vand.u32 %v100, 4294901760
    %2119 = vmatmul.mubr.f32.gmra.mrb[0].mxu0 %v2118
    %v2120 = vpop.f32.mrb[0].mxu0
    %v2121 = vadd.f32 %v1994, %v2120
    %v2122 = vpop.f32.mrb[0].mxu0
    %2123 = vmatprep.mubr.f32.mxu0 0.0
    %v2124 = vand.u32 %v101, 4294901760
    %2125 = vmatmul.mubr.f32.gmra.mrb[0].mxu0 %v2124
    %v2126 = vpop.f32.mrb[0].mxu0
    %v2127 = vadd.f32 %v2002, %v2126
    %v2128 = vpop.f32.mrb[0].mxu0
    %2129 = vdwg.mxu0
    %2130 = vmatprep.subr.mxu0 0.0
    %v2131 = vand.u32 %v134, 4294901760
    %2132 = vmatpush1.msra.mxu0 %v2131
    %2133 = vmatprep.subr.mxu0 0.0
    %v2134 = vand.u32 %v135, 4294901760
    %2135 = vmatpush1.msra.mxu0 %v2134
    %2136 = vmatprep.subr.mxu0 0.0
    %v2137 = vand.u32 %v136, 4294901760
    %2138 = vmatpush1.msra.mxu0 %v2137
    %2139 = vmatprep.subr.mxu0 0.0
    %v2140 = vand.u32 %v137, 4294901760
    %2141 = vmatpush1.msra.mxu0 %v2140
    %2142 = vmatprep.subr.mxu0 0.0
    %v2143 = vand.u32 %v138, 4294901760
    %2144 = vmatpush1.msra.mxu0 %v2143
    %2145 = vmatprep.subr.mxu0 0.0
    %v2146 = vand.u32 %v139, 4294901760
    %2147 = vmatpush1.msra.mxu0 %v2146
    %2148 = vmatprep.subr.mxu0 0.0
    %v2149 = vand.u32 %v140, 4294901760
    %2150 = vmatpush1.msra.mxu0 %v2149
    %2151 = vmatprep.subr.mxu0 0.0
    %v2152 = vand.u32 %v141, 4294901760
    %2153 = vmatpush1.msra.mxu0 %v2152
    %2154 = vmatprep.subr.mxu0 0.0
    %v2155 = vand.u32 %v142, 4294901760
    %2156 = vmatpush1.msra.mxu0 %v2155
    %2157 = vmatprep.subr.mxu0 0.0
    %v2158 = vand.u32 %v143, 4294901760
    %2159 = vmatpush1.msra.mxu0 %v2158
    %2160 = vmatprep.subr.mxu0 0.0
    %v2161 = vand.u32 %v144, 4294901760
    %2162 = vmatpush1.msra.mxu0 %v2161
    %2163 = vmatprep.subr.mxu0 0.0
    %v2164 = vand.u32 %v145, 4294901760
    %2165 = vmatpush1.msra.mxu0 %v2164
    %2166 = vmatprep.subr.mxu0 0.0
    %v2167 = vand.u32 %v146, 4294901760
    %2168 = vmatpush1.msra.mxu0 %v2167
    %2169 = vmatprep.subr.mxu0 0.0
    %v2170 = vand.u32 %v147, 4294901760
    %2171 = vmatpush1.msra.mxu0 %v2170
    %2172 = vmatprep.subr.mxu0 0.0
    %v2173 = vand.u32 %v148, 4294901760
    %2174 = vmatpush1.msra.mxu0 %v2173
    %2175 = vmatprep.subr.mxu0 0.0
    %v2176 = vand.u32 %v149, 4294901760
    %2177 = vmatpush1.msra.mxu0 %v2176
    %2178 = vmatprep.subr.mxu0 0.0
    %2179 = vmatpush1.msra.mxu0 0.0
    %2180 = vmatprep.subr.mxu0 0.0
    %2181 = vmatpush1.msra.mxu0 0.0
    %2182 = vmatprep.subr.mxu0 0.0
    %2183 = vmatpush1.msra.mxu0 0.0
    %2184 = vmatprep.subr.mxu0 0.0
    %2185 = vmatpush1.msra.mxu0 0.0
    %2186 = vmatprep.subr.mxu0 0.0
    %2187 = vmatpush1.msra.mxu0 0.0
    %2188 = vmatprep.subr.mxu0 0.0
    %2189 = vmatpush1.msra.mxu0 0.0
    %2190 = vmatprep.subr.mxu0 0.0
    %2191 = vmatpush1.msra.mxu0 0.0
    %2192 = vmatprep.subr.mxu0 0.0
    %2193 = vmatpush1.msra.mxu0 0.0
    %2194 = vmatprep.subr.mxu0 0.0
    %2195 = vmatpush1.msra.mxu0 0.0
    %2196 = vmatprep.subr.mxu0 0.0
    %2197 = vmatpush1.msra.mxu0 0.0
    %2198 = vmatprep.subr.mxu0 0.0
    %2199 = vmatpush1.msra.mxu0 0.0
    %2200 = vmatprep.subr.mxu0 0.0
    %2201 = vmatpush1.msra.mxu0 0.0
    %2202 = vmatprep.subr.mxu0 0.0
    %2203 = vmatpush1.msra.mxu0 0.0
    %2204 = vmatprep.subr.mxu0 0.0
    %2205 = vmatpush1.msra.mxu0 0.0
    %2206 = vmatprep.subr.mxu0 0.0
    %2207 = vmatpush1.msra.mxu0 0.0
    %2208 = vmatprep.subr.mxu0 0.0
    %2209 = vmatpush1.msra.mxu0 0.0
    %2210 = vmatprep.mubr.f32.mxu0 0.0
    %v2211 = vand.u32 %v100, 4294901760
    %2212 = vmatmul.mubr.f32.gmra.mrb[0].mxu0 %v2211
    %v2213 = vpop.f32.mrb[0].mxu0
    %v2214 = vadd.f32 %v2121, %v2213
    %v2215 = vpop.f32.mrb[0].mxu0
    %2216 = vmatprep.mubr.f32.mxu0 0.0
    %v2217 = vand.u32 %v101, 4294901760
    %2218 = vmatmul.mubr.f32.gmra.mrb[0].mxu0 %v2217
    %v2219 = vpop.f32.mrb[0].mxu0
    %v2220 = vadd.f32 %v2127, %v2219
    %v2221 = vpop.f32.mrb[0].mxu0
    %2222 = vdwg.mxu0
    %2223 = vmatprep.subr.mxu0 0.0
    %v2224 = vand.u32 %v1524, 4294901760
    %2225 = vmatpush1.xpose.msra.mxu0 %v2224
    %2226 = vmatprep.subr.mxu0 0.0
    %2227 = vmatpush1.xpose.msra.mxu0 0.0
    %2228 = vmatprep.subr.mxu0 0.0
    %2229 = vmatpush1.xpose.msra.mxu0 0.0
    %2230 = vmatprep.subr.mxu0 0.0
    %2231 = vmatpush1.xpose.msra.mxu0 0.0
    %2232 = vmatprep.subr.mxu0 0.0
    %2233 = vmatpush1.xpose.msra.mxu0 0.0
    %2234 = vmatprep.subr.mxu0 0.0
    %2235 = vmatpush1.xpose.msra.mxu0 0.0
    %2236 = vmatprep.subr.mxu0 0.0
    %2237 = vmatpush1.xpose.msra.mxu0 0.0
    %2238 = vmatprep.subr.mxu0 0.0
    %2239 = vmatpush1.xpose.msra.mxu0 0.0
    %2240 = vmatprep.subr.mxu0 0.0
    %2241 = vmatpush1.xpose.msra.mxu0 0.0
    %2242 = vmatprep.subr.mxu0 0.0
    %2243 = vmatpush1.xpose.msra.mxu0 0.0
    %2244 = vmatprep.subr.mxu0 0.0
    %2245 = vmatpush1.xpose.msra.mxu0 0.0
    %2246 = vmatprep.subr.mxu0 0.0
    %2247 = vmatpush1.xpose.msra.mxu0 0.0
    %2248 = vmatprep.subr.mxu0 0.0
    %2249 = vmatpush1.xpose.msra.mxu0 0.0
    %2250 = vmatprep.subr.mxu0 0.0
    %2251 = vmatpush1.xpose.msra.mxu0 0.0
    %2252 = vmatprep.subr.mxu0 0.0
    %2253 = vmatpush1.xpose.msra.mxu0 0.0
    %2254 = vmatprep.subr.mxu0 0.0
    %2255 = vmatpush1.xpose.msra.mxu0 0.0
    %2256 = vmatprep.subr.mxu0 0.0
    %2257 = vmatpush1.xpose.msra.mxu0 0.0
    %2258 = vmatprep.subr.mxu0 0.0
    %2259 = vmatpush1.xpose.msra.mxu0 0.0
    %2260 = vmatprep.subr.mxu0 0.0
    %2261 = vmatpush1.xpose.msra.mxu0 0.0
    %2262 = vmatprep.subr.mxu0 0.0
    %2263 = vmatpush1.xpose.msra.mxu0 0.0
    %2264 = vmatprep.subr.mxu0 0.0
    %2265 = vmatpush1.xpose.msra.mxu0 0.0
    %2266 = vmatprep.subr.mxu0 0.0
    %2267 = vmatpush1.xpose.msra.mxu0 0.0
    %2268 = vmatprep.subr.mxu0 0.0
    %2269 = vmatpush1.xpose.msra.mxu0 0.0
    %2270 = vmatprep.subr.mxu0 0.0
    %2271 = vmatpush1.xpose.msra.mxu0 0.0
    %2272 = vmatprep.subr.mxu0 0.0
    %2273 = vmatpush1.xpose.msra.mxu0 0.0
    %2274 = vmatprep.subr.mxu0 0.0
    %2275 = vmatpush1.xpose.msra.mxu0 0.0
    %2276 = vmatprep.subr.mxu0 0.0
    %2277 = vmatpush1.xpose.msra.mxu0 0.0
    %2278 = vmatprep.subr.mxu0 0.0
    %2279 = vmatpush1.xpose.msra.mxu0 0.0
    %2280 = vmatprep.subr.mxu0 0.0
    %2281 = vmatpush1.xpose.msra.mxu0 0.0
    %2282 = vmatprep.subr.mxu0 0.0
    %2283 = vmatpush1.xpose.msra.mxu0 0.0
    %2284 = vmatprep.subr.mxu0 0.0
    %2285 = vmatpush1.xpose.msra.mxu0 0.0
    %2286 = vmatprep.subr.mxu0 0.0
    %2287 = vmatpush1.xpose.msra.mxu0 0.0
    %2288 = vmatprep.mubr.f32.mxu0 0.0
    %v2289 = vand.u32 %v834, 4294901760
    %v2290 = vsub.f32 %v834, %v2289
    %v2291 = vand.u32 %v2290, 4294901760
    %v2292 = vsub.f32 %v2290, %v2291
    %v2293 = vand.u32 %v2292, 4294901760
    %2294 = vmatmul.mubr.f32.gmra.mrb[0].mxu0 %v2293
    %v2295 = vpop.f32.mrb[0].mxu0
    %v2296 = vadd.f32 0.0, %v2295
    %v2297 = vpop.f32.mrb[0].mxu0
    %2298 = vdwg.mxu0
    %2299 = vmatprep.subr.mxu0 0.0
    %v2300 = vand.u32 %v1524, 4294901760
    %v2301 = vsub.f32 %v1524, %v2300
    %v2302 = vand.u32 %v2301, 4294901760
    %v2303 = vsub.f32 %v2301, %v2302
    %v2304 = vand.u32 %v2303, 4294901760
    %2305 = vmatpush1.xpose.msra.mxu0 %v2304
    %2306 = vmatprep.subr.mxu0 0.0
    %2307 = vmatpush1.xpose.msra.mxu0 0.0
    %2308 = vmatprep.subr.mxu0 0.0
    %2309 = vmatpush1.xpose.msra.mxu0 0.0
    %2310 = vmatprep.subr.mxu0 0.0
    %2311 = vmatpush1.xpose.msra.mxu0 0.0
    %2312 = vmatprep.subr.mxu0 0.0
    %2313 = vmatpush1.xpose.msra.mxu0 0.0
    %2314 = vmatprep.subr.mxu0 0.0
    %2315 = vmatpush1.xpose.msra.mxu0 0.0
    %2316 = vmatprep.subr.mxu0 0.0
    %2317 = vmatpush1.xpose.msra.mxu0 0.0
    %2318 = vmatprep.subr.mxu0 0.0
    %2319 = vmatpush1.xpose.msra.mxu0 0.0
    %2320 = vmatprep.subr.mxu0 0.0
    %2321 = vmatpush1.xpose.msra.mxu0 0.0
    %2322 = vmatprep.subr.mxu0 0.0
    %2323 = vmatpush1.xpose.msra.mxu0 0.0
    %2324 = vmatprep.subr.mxu0 0.0
    %2325 = vmatpush1.xpose.msra.mxu0 0.0
    %2326 = vmatprep.subr.mxu0 0.0
    %2327 = vmatpush1.xpose.msra.mxu0 0.0
    %2328 = vmatprep.subr.mxu0 0.0
    %2329 = vmatpush1.xpose.msra.mxu0 0.0
    %2330 = vmatprep.subr.mxu0 0.0
    %2331 = vmatpush1.xpose.msra.mxu0 0.0
    %2332 = vmatprep.subr.mxu0 0.0
    %2333 = vmatpush1.xpose.msra.mxu0 0.0
    %2334 = vmatprep.subr.mxu0 0.0
    %2335 = vmatpush1.xpose.msra.mxu0 0.0
    %2336 = vmatprep.subr.mxu0 0.0
    %2337 = vmatpush1.xpose.msra.mxu0 0.0
    %2338 = vmatprep.subr.mxu0 0.0
    %2339 = vmatpush1.xpose.msra.mxu0 0.0
    %2340 = vmatprep.subr.mxu0 0.0
    %2341 = vmatpush1.xpose.msra.mxu0 0.0
    %2342 = vmatprep.subr.mxu0 0.0
    %2343 = vmatpush1.xpose.msra.mxu0 0.0
    %2344 = vmatprep.subr.mxu0 0.0
    %2345 = vmatpush1.xpose.msra.mxu0 0.0
    %2346 = vmatprep.subr.mxu0 0.0
    %2347 = vmatpush1.xpose.msra.mxu0 0.0
    %2348 = vmatprep.subr.mxu0 0.0
    %2349 = vmatpush1.xpose.msra.mxu0 0.0
    %2350 = vmatprep.subr.mxu0 0.0
    %2351 = vmatpush1.xpose.msra.mxu0 0.0
    %2352 = vmatprep.subr.mxu0 0.0
    %2353 = vmatpush1.xpose.msra.mxu0 0.0
    %2354 = vmatprep.subr.mxu0 0.0
    %2355 = vmatpush1.xpose.msra.mxu0 0.0
    %2356 = vmatprep.subr.mxu0 0.0
    %2357 = vmatpush1.xpose.msra.mxu0 0.0
    %2358 = vmatprep.subr.mxu0 0.0
    %2359 = vmatpush1.xpose.msra.mxu0 0.0
    %2360 = vmatprep.subr.mxu0 0.0
    %2361 = vmatpush1.xpose.msra.mxu0 0.0
    %2362 = vmatprep.subr.mxu0 0.0
    %2363 = vmatpush1.xpose.msra.mxu0 0.0
    %2364 = vmatprep.subr.mxu0 0.0
    %2365 = vmatpush1.xpose.msra.mxu0 0.0
    %2366 = vmatprep.subr.mxu0 0.0
    %2367 = vmatpush1.xpose.msra.mxu0 0.0
    %2368 = vmatprep.mubr.f32.mxu0 0.0
    %v2369 = vand.u32 %v834, 4294901760
    %2370 = vmatmul.mubr.f32.gmra.mrb[0].mxu0 %v2369
    %v2371 = vpop.f32.mrb[0].mxu0
    %v2372 = vadd.f32 %v2296, %v2371
    %v2373 = vpop.f32.mrb[0].mxu0
    %2374 = vdwg.mxu0
    %2375 = vmatprep.subr.mxu0 0.0
    %v2376 = vand.u32 %v1524, 4294901760
    %v2377 = vsub.f32 %v1524, %v2376
    %2378 = vmatpush1.xpose.msra.mxu0 %v2377
    %2379 = vmatprep.subr.mxu0 0.0
    %2380 = vmatpush1.xpose.msra.mxu0 0.0
    %2381 = vmatprep.subr.mxu0 0.0
    %2382 = vmatpush1.xpose.msra.mxu0 0.0
    %2383 = vmatprep.subr.mxu0 0.0
    %2384 = vmatpush1.xpose.msra.mxu0 0.0
    %2385 = vmatprep.subr.mxu0 0.0
    %2386 = vmatpush1.xpose.msra.mxu0 0.0
    %2387 = vmatprep.subr.mxu0 0.0
    %2388 = vmatpush1.xpose.msra.mxu0 0.0
    %2389 = vmatprep.subr.mxu0 0.0
    %2390 = vmatpush1.xpose.msra.mxu0 0.0
    %2391 = vmatprep.subr.mxu0 0.0
    %2392 = vmatpush1.xpose.msra.mxu0 0.0
    %2393 = vmatprep.subr.mxu0 0.0
    %2394 = vmatpush1.xpose.msra.mxu0 0.0
    %2395 = vmatprep.subr.mxu0 0.0
    %2396 = vmatpush1.xpose.msra.mxu0 0.0
    %2397 = vmatprep.subr.mxu0 0.0
    %2398 = vmatpush1.xpose.msra.mxu0 0.0
    %2399 = vmatprep.subr.mxu0 0.0
    %2400 = vmatpush1.xpose.msra.mxu0 0.0
    %2401 = vmatprep.subr.mxu0 0.0
    %2402 = vmatpush1.xpose.msra.mxu0 0.0
    %2403 = vmatprep.subr.mxu0 0.0
    %2404 = vmatpush1.xpose.msra.mxu0 0.0
    %2405 = vmatprep.subr.mxu0 0.0
    %2406 = vmatpush1.xpose.msra.mxu0 0.0
    %2407 = vmatprep.subr.mxu0 0.0
    %2408 = vmatpush1.xpose.msra.mxu0 0.0
    %2409 = vmatprep.subr.mxu0 0.0
    %2410 = vmatpush1.xpose.msra.mxu0 0.0
    %2411 = vmatprep.subr.mxu0 0.0
    %2412 = vmatpush1.xpose.msra.mxu0 0.0
    %2413 = vmatprep.subr.mxu0 0.0
    %2414 = vmatpush1.xpose.msra.mxu0 0.0
    %2415 = vmatprep.subr.mxu0 0.0
    %2416 = vmatpush1.xpose.msra.mxu0 0.0
    %2417 = vmatprep.subr.mxu0 0.0
    %2418 = vmatpush1.xpose.msra.mxu0 0.0
    %2419 = vmatprep.subr.mxu0 0.0
    %2420 = vmatpush1.xpose.msra.mxu0 0.0
    %2421 = vmatprep.subr.mxu0 0.0
    %2422 = vmatpush1.xpose.msra.mxu0 0.0
    %2423 = vmatprep.subr.mxu0 0.0
    %2424 = vmatpush1.xpose.msra.mxu0 0.0
    %2425 = vmatprep.subr.mxu0 0.0
    %2426 = vmatpush1.xpose.msra.mxu0 0.0
    %2427 = vmatprep.subr.mxu0 0.0
    %2428 = vmatpush1.xpose.msra.mxu0 0.0
    %2429 = vmatprep.subr.mxu0 0.0
    %2430 = vmatpush1.xpose.msra.mxu0 0.0
    %2431 = vmatprep.subr.mxu0 0.0
    %2432 = vmatpush1.xpose.msra.mxu0 0.0
    %2433 = vmatprep.subr.mxu0 0.0
    %2434 = vmatpush1.xpose.msra.mxu0 0.0
    %2435 = vmatprep.subr.mxu0 0.0
    %2436 = vmatpush1.xpose.msra.mxu0 0.0
    %2437 = vmatprep.subr.mxu0 0.0
    %2438 = vmatpush1.xpose.msra.mxu0 0.0
    %2439 = vmatprep.subr.mxu0 0.0
    %2440 = vmatpush1.xpose.msra.mxu0 0.0
    %2441 = vmatprep.mubr.f32.mxu0 0.0
    %v2442 = vand.u32 %v834, 4294901760
    %v2443 = vsub.f32 %v834, %v2442
    %2444 = vmatmul.mubr.f32.gmra.mrb[0].mxu0 %v2443
    %v2445 = vpop.f32.mrb[0].mxu0
    %v2446 = vadd.f32 %v2372, %v2445
    %v2447 = vpop.f32.mrb[0].mxu0
    %2448 = vdwg.mxu0
    %2449 = vmatprep.subr.mxu0 0.0
    %v2450 = vand.u32 %v1524, 4294901760
    %2451 = vmatpush1.xpose.msra.mxu0 %v2450
    %2452 = vmatprep.subr.mxu0 0.0
    %2453 = vmatpush1.xpose.msra.mxu0 0.0
    %2454 = vmatprep.subr.mxu0 0.0
    %2455 = vmatpush1.xpose.msra.mxu0 0.0
    %2456 = vmatprep.subr.mxu0 0.0
    %2457 = vmatpush1.xpose.msra.mxu0 0.0
    %2458 = vmatprep.subr.mxu0 0.0
    %2459 = vmatpush1.xpose.msra.mxu0 0.0
    %2460 = vmatprep.subr.mxu0 0.0
    %2461 = vmatpush1.xpose.msra.mxu0 0.0
    %2462 = vmatprep.subr.mxu0 0.0
    %2463 = vmatpush1.xpose.msra.mxu0 0.0
    %2464 = vmatprep.subr.mxu0 0.0
    %2465 = vmatpush1.xpose.msra.mxu0 0.0
    %2466 = vmatprep.subr.mxu0 0.0
    %2467 = vmatpush1.xpose.msra.mxu0 0.0
    %2468 = vmatprep.subr.mxu0 0.0
    %2469 = vmatpush1.xpose.msra.mxu0 0.0
    %2470 = vmatprep.subr.mxu0 0.0
    %2471 = vmatpush1.xpose.msra.mxu0 0.0
    %2472 = vmatprep.subr.mxu0 0.0
    %2473 = vmatpush1.xpose.msra.mxu0 0.0
    %2474 = vmatprep.subr.mxu0 0.0
    %2475 = vmatpush1.xpose.msra.mxu0 0.0
    %2476 = vmatprep.subr.mxu0 0.0
    %2477 = vmatpush1.xpose.msra.mxu0 0.0
    %2478 = vmatprep.subr.mxu0 0.0
    %2479 = vmatpush1.xpose.msra.mxu0 0.0
    %2480 = vmatprep.subr.mxu0 0.0
    %2481 = vmatpush1.xpose.msra.mxu0 0.0
    %2482 = vmatprep.subr.mxu0 0.0
    %2483 = vmatpush1.xpose.msra.mxu0 0.0
    %2484 = vmatprep.subr.mxu0 0.0
    %2485 = vmatpush1.xpose.msra.mxu0 0.0
    %2486 = vmatprep.subr.mxu0 0.0
    %2487 = vmatpush1.xpose.msra.mxu0 0.0
    %2488 = vmatprep.subr.mxu0 0.0
    %2489 = vmatpush1.xpose.msra.mxu0 0.0
    %2490 = vmatprep.subr.mxu0 0.0
    %2491 = vmatpush1.xpose.msra.mxu0 0.0
    %2492 = vmatprep.subr.mxu0 0.0
    %2493 = vmatpush1.xpose.msra.mxu0 0.0
    %2494 = vmatprep.subr.mxu0 0.0
    %2495 = vmatpush1.xpose.msra.mxu0 0.0
    %2496 = vmatprep.subr.mxu0 0.0
    %2497 = vmatpush1.xpose.msra.mxu0 0.0
    %2498 = vmatprep.subr.mxu0 0.0
    %2499 = vmatpush1.xpose.msra.mxu0 0.0
    %2500 = vmatprep.subr.mxu0 0.0
    %2501 = vmatpush1.xpose.msra.mxu0 0.0
    %2502 = vmatprep.subr.mxu0 0.0
    %2503 = vmatpush1.xpose.msra.mxu0 0.0
    %2504 = vmatprep.subr.mxu0 0.0
    %2505 = vmatpush1.xpose.msra.mxu0 0.0
    %2506 = vmatprep.subr.mxu0 0.0
    %2507 = vmatpush1.xpose.msra.mxu0 0.0
    %2508 = vmatprep.subr.mxu0 0.0
    %2509 = vmatpush1.xpose.msra.mxu0 0.0
    %2510 = vmatprep.subr.mxu0 0.0
    %2511 = vmatpush1.xpose.msra.mxu0 0.0
    %2512 = vmatprep.subr.mxu0 0.0
    %2513 = vmatpush1.xpose.msra.mxu0 0.0
    %2514 = vmatprep.mubr.f32.mxu0 0.0
    %v2515 = vand.u32 %v834, 4294901760
    %v2516 = vsub.f32 %v834, %v2515
    %v2517 = vand.u32 %v2516, 4294901760
    %2518 = vmatmul.mubr.f32.gmra.mrb[0].mxu0 %v2517
    %v2519 = vpop.f32.mrb[0].mxu0
    %v2520 = vadd.f32 %v2446, %v2519
    %v2521 = vpop.f32.mrb[0].mxu0
    %2522 = vdwg.mxu0
    %2523 = vmatprep.subr.mxu0 0.0
    %v2524 = vand.u32 %v1524, 4294901760
    %v2525 = vsub.f32 %v1524, %v2524
    %v2526 = vand.u32 %v2525, 4294901760
    %2527 = vmatpush1.xpose.msra.mxu0 %v2526
    %2528 = vmatprep.subr.mxu0 0.0
    %2529 = vmatpush1.xpose.msra.mxu0 0.0
    %2530 = vmatprep.subr.mxu0 0.0
    %2531 = vmatpush1.xpose.msra.mxu0 0.0
    %2532 = vmatprep.subr.mxu0 0.0
    %2533 = vmatpush1.xpose.msra.mxu0 0.0
    %2534 = vmatprep.subr.mxu0 0.0
    %2535 = vmatpush1.xpose.msra.mxu0 0.0
    %2536 = vmatprep.subr.mxu0 0.0
    %2537 = vmatpush1.xpose.msra.mxu0 0.0
    %2538 = vmatprep.subr.mxu0 0.0
    %2539 = vmatpush1.xpose.msra.mxu0 0.0
    %2540 = vmatprep.subr.mxu0 0.0
    %2541 = vmatpush1.xpose.msra.mxu0 0.0
    %2542 = vmatprep.subr.mxu0 0.0
    %2543 = vmatpush1.xpose.msra.mxu0 0.0
    %2544 = vmatprep.subr.mxu0 0.0
    %2545 = vmatpush1.xpose.msra.mxu0 0.0
    %2546 = vmatprep.subr.mxu0 0.0
    %2547 = vmatpush1.xpose.msra.mxu0 0.0
    %2548 = vmatprep.subr.mxu0 0.0
    %2549 = vmatpush1.xpose.msra.mxu0 0.0
    %2550 = vmatprep.subr.mxu0 0.0
    %2551 = vmatpush1.xpose.msra.mxu0 0.0
    %2552 = vmatprep.subr.mxu0 0.0
    %2553 = vmatpush1.xpose.msra.mxu0 0.0
    %2554 = vmatprep.subr.mxu0 0.0
    %2555 = vmatpush1.xpose.msra.mxu0 0.0
    %2556 = vmatprep.subr.mxu0 0.0
    %2557 = vmatpush1.xpose.msra.mxu0 0.0
    %2558 = vmatprep.subr.mxu0 0.0
    %2559 = vmatpush1.xpose.msra.mxu0 0.0
    %2560 = vmatprep.subr.mxu0 0.0
    %2561 = vmatpush1.xpose.msra.mxu0 0.0
    %2562 = vmatprep.subr.mxu0 0.0
    %2563 = vmatpush1.xpose.msra.mxu0 0.0
    %2564 = vmatprep.subr.mxu0 0.0
    %2565 = vmatpush1.xpose.msra.mxu0 0.0
    %2566 = vmatprep.subr.mxu0 0.0
    %2567 = vmatpush1.xpose.msra.mxu0 0.0
    %2568 = vmatprep.subr.mxu0 0.0
    %2569 = vmatpush1.xpose.msra.mxu0 0.0
    %2570 = vmatprep.subr.mxu0 0.0
    %2571 = vmatpush1.xpose.msra.mxu0 0.0
    %2572 = vmatprep.subr.mxu0 0.0
    %2573 = vmatpush1.xpose.msra.mxu0 0.0
    %2574 = vmatprep.subr.mxu0 0.0
    %2575 = vmatpush1.xpose.msra.mxu0 0.0
    %2576 = vmatprep.subr.mxu0 0.0
    %2577 = vmatpush1.xpose.msra.mxu0 0.0
    %2578 = vmatprep.subr.mxu0 0.0
    %2579 = vmatpush1.xpose.msra.mxu0 0.0
    %2580 = vmatprep.subr.mxu0 0.0
    %2581 = vmatpush1.xpose.msra.mxu0 0.0
    %2582 = vmatprep.subr.mxu0 0.0
    %2583 = vmatpush1.xpose.msra.mxu0 0.0
    %2584 = vmatprep.subr.mxu0 0.0
    %2585 = vmatpush1.xpose.msra.mxu0 0.0
    %2586 = vmatprep.subr.mxu0 0.0
    %2587 = vmatpush1.xpose.msra.mxu0 0.0
    %2588 = vmatprep.subr.mxu0 0.0
    %2589 = vmatpush1.xpose.msra.mxu0 0.0
    %2590 = vmatprep.mubr.f32.mxu0 0.0
    %v2591 = vand.u32 %v834, 4294901760
    %2592 = vmatmul.mubr.f32.gmra.mrb[0].mxu0 %v2591
    %v2593 = vpop.f32.mrb[0].mxu0
    %v2594 = vadd.f32 %v2520, %v2593
    %v2595 = vpop.f32.mrb[0].mxu0
    %2596 = vdwg.mxu0
    %2597 = vmatprep.subr.mxu0 0.0
    %v2598 = vand.u32 %v1524, 4294901760
    %2599 = vmatpush1.xpose.msra.mxu0 %v2598
    %2600 = vmatprep.subr.mxu0 0.0
    %2601 = vmatpush1.xpose.msra.mxu0 0.0
    %2602 = vmatprep.subr.mxu0 0.0
    %2603 = vmatpush1.xpose.msra.mxu0 0.0
    %2604 = vmatprep.subr.mxu0 0.0
    %2605 = vmatpush1.xpose.msra.mxu0 0.0
    %2606 = vmatprep.subr.mxu0 0.0
    %2607 = vmatpush1.xpose.msra.mxu0 0.0
    %2608 = vmatprep.subr.mxu0 0.0
    %2609 = vmatpush1.xpose.msra.mxu0 0.0
    %2610 = vmatprep.subr.mxu0 0.0
    %2611 = vmatpush1.xpose.msra.mxu0 0.0
    %2612 = vmatprep.subr.mxu0 0.0
    %2613 = vmatpush1.xpose.msra.mxu0 0.0
    %2614 = vmatprep.subr.mxu0 0.0
    %2615 = vmatpush1.xpose.msra.mxu0 0.0
    %2616 = vmatprep.subr.mxu0 0.0
    %2617 = vmatpush1.xpose.msra.mxu0 0.0
    %2618 = vmatprep.subr.mxu0 0.0
    %2619 = vmatpush1.xpose.msra.mxu0 0.0
    %2620 = vmatprep.subr.mxu0 0.0
    %2621 = vmatpush1.xpose.msra.mxu0 0.0
    %2622 = vmatprep.subr.mxu0 0.0
    %2623 = vmatpush1.xpose.msra.mxu0 0.0
    %2624 = vmatprep.subr.mxu0 0.0
    %2625 = vmatpush1.xpose.msra.mxu0 0.0
    %2626 = vmatprep.subr.mxu0 0.0
    %2627 = vmatpush1.xpose.msra.mxu0 0.0
    %2628 = vmatprep.subr.mxu0 0.0
    %2629 = vmatpush1.xpose.msra.mxu0 0.0
    %2630 = vmatprep.subr.mxu0 0.0
    %2631 = vmatpush1.xpose.msra.mxu0 0.0
    %2632 = vmatprep.subr.mxu0 0.0
    %2633 = vmatpush1.xpose.msra.mxu0 0.0
    %2634 = vmatprep.subr.mxu0 0.0
    %2635 = vmatpush1.xpose.msra.mxu0 0.0
    %2636 = vmatprep.subr.mxu0 0.0
    %2637 = vmatpush1.xpose.msra.mxu0 0.0
    %2638 = vmatprep.subr.mxu0 0.0
    %2639 = vmatpush1.xpose.msra.mxu0 0.0
    %2640 = vmatprep.subr.mxu0 0.0
    %2641 = vmatpush1.xpose.msra.mxu0 0.0
    %2642 = vmatprep.subr.mxu0 0.0
    %2643 = vmatpush1.xpose.msra.mxu0 0.0
    %2644 = vmatprep.subr.mxu0 0.0
    %2645 = vmatpush1.xpose.msra.mxu0 0.0
    %2646 = vmatprep.subr.mxu0 0.0
    %2647 = vmatpush1.xpose.msra.mxu0 0.0
    %2648 = vmatprep.subr.mxu0 0.0
    %2649 = vmatpush1.xpose.msra.mxu0 0.0
    %2650 = vmatprep.subr.mxu0 0.0
    %2651 = vmatpush1.xpose.msra.mxu0 0.0
    %2652 = vmatprep.subr.mxu0 0.0
    %2653 = vmatpush1.xpose.msra.mxu0 0.0
    %2654 = vmatprep.subr.mxu0 0.0
    %2655 = vmatpush1.xpose.msra.mxu0 0.0
    %2656 = vmatprep.subr.mxu0 0.0
    %2657 = vmatpush1.xpose.msra.mxu0 0.0
    %2658 = vmatprep.subr.mxu0 0.0
    %2659 = vmatpush1.xpose.msra.mxu0 0.0
    %2660 = vmatprep.subr.mxu0 0.0
    %2661 = vmatpush1.xpose.msra.mxu0 0.0
    %2662 = vmatprep.mubr.f32.mxu0 0.0
    %v2663 = vand.u32 %v834, 4294901760
    %2664 = vmatmul.mubr.f32.gmra.mrb[0].mxu0 %v2663
    %v2665 = vpop.f32.mrb[0].mxu0
    %v2666 = vadd.f32 %v2594, %v2665
    %v2667 = vpop.f32.mrb[0].mxu0
    %2668 = vdwg.mxu0
    %2669 = vmatprep.subr.mxu0 0.0
    %v2670 = vand.u32 %v1530, 4294901760
    %2671 = vmatpush1.xpose.msra.mxu0 %v2670
    %2672 = vmatprep.subr.mxu0 0.0
    %2673 = vmatpush1.xpose.msra.mxu0 0.0
    %2674 = vmatprep.subr.mxu0 0.0
    %2675 = vmatpush1.xpose.msra.mxu0 0.0
    %2676 = vmatprep.subr.mxu0 0.0
    %2677 = vmatpush1.xpose.msra.mxu0 0.0
    %2678 = vmatprep.subr.mxu0 0.0
    %2679 = vmatpush1.xpose.msra.mxu0 0.0
    %2680 = vmatprep.subr.mxu0 0.0
    %2681 = vmatpush1.xpose.msra.mxu0 0.0
    %2682 = vmatprep.subr.mxu0 0.0
    %2683 = vmatpush1.xpose.msra.mxu0 0.0
    %2684 = vmatprep.subr.mxu0 0.0
    %2685 = vmatpush1.xpose.msra.mxu0 0.0
    %2686 = vmatprep.subr.mxu0 0.0
    %2687 = vmatpush1.xpose.msra.mxu0 0.0
    %2688 = vmatprep.subr.mxu0 0.0
    %2689 = vmatpush1.xpose.msra.mxu0 0.0
    %2690 = vmatprep.subr.mxu0 0.0
    %2691 = vmatpush1.xpose.msra.mxu0 0.0
    %2692 = vmatprep.subr.mxu0 0.0
    %2693 = vmatpush1.xpose.msra.mxu0 0.0
    %2694 = vmatprep.subr.mxu0 0.0
    %2695 = vmatpush1.xpose.msra.mxu0 0.0
    %2696 = vmatprep.subr.mxu0 0.0
    %2697 = vmatpush1.xpose.msra.mxu0 0.0
    %2698 = vmatprep.subr.mxu0 0.0
    %2699 = vmatpush1.xpose.msra.mxu0 0.0
    %2700 = vmatprep.subr.mxu0 0.0
    %2701 = vmatpush1.xpose.msra.mxu0 0.0
    %2702 = vmatprep.subr.mxu0 0.0
    %2703 = vmatpush1.xpose.msra.mxu0 0.0
    %2704 = vmatprep.subr.mxu0 0.0
    %2705 = vmatpush1.xpose.msra.mxu0 0.0
    %2706 = vmatprep.subr.mxu0 0.0
    %2707 = vmatpush1.xpose.msra.mxu0 0.0
    %2708 = vmatprep.subr.mxu0 0.0
    %2709 = vmatpush1.xpose.msra.mxu0 0.0
    %2710 = vmatprep.subr.mxu0 0.0
    %2711 = vmatpush1.xpose.msra.mxu0 0.0
    %2712 = vmatprep.subr.mxu0 0.0
    %2713 = vmatpush1.xpose.msra.mxu0 0.0
    %2714 = vmatprep.subr.mxu0 0.0
    %2715 = vmatpush1.xpose.msra.mxu0 0.0
    %2716 = vmatprep.subr.mxu0 0.0
    %2717 = vmatpush1.xpose.msra.mxu0 0.0
    %2718 = vmatprep.subr.mxu0 0.0
    %2719 = vmatpush1.xpose.msra.mxu0 0.0
    %2720 = vmatprep.subr.mxu0 0.0
    %2721 = vmatpush1.xpose.msra.mxu0 0.0
    %2722 = vmatprep.subr.mxu0 0.0
    %2723 = vmatpush1.xpose.msra.mxu0 0.0
    %2724 = vmatprep.subr.mxu0 0.0
    %2725 = vmatpush1.xpose.msra.mxu0 0.0
    %2726 = vmatprep.subr.mxu0 0.0
    %2727 = vmatpush1.xpose.msra.mxu0 0.0
    %2728 = vmatprep.subr.mxu0 0.0
    %2729 = vmatpush1.xpose.msra.mxu0 0.0
    %2730 = vmatprep.subr.mxu0 0.0
    %2731 = vmatpush1.xpose.msra.mxu0 0.0
    %2732 = vmatprep.subr.mxu0 0.0
    %2733 = vmatpush1.xpose.msra.mxu0 0.0
    %2734 = vmatprep.mubr.f32.mxu0 0.0
    %v2735 = vand.u32 %v840, 4294901760
    %v2736 = vsub.f32 %v840, %v2735
    %v2737 = vand.u32 %v2736, 4294901760
    %v2738 = vsub.f32 %v2736, %v2737
    %v2739 = vand.u32 %v2738, 4294901760
    %2740 = vmatmul.mubr.f32.gmra.mrb[0].mxu0 %v2739
    %v2741 = vpop.f32.mrb[0].mxu0
    %v2742 = vadd.f32 0.0, %v2741
    %v2743 = vpop.f32.mrb[0].mxu0
    %2744 = vdwg.mxu0
    %2745 = vmatprep.subr.mxu0 0.0
    %v2746 = vand.u32 %v1530, 4294901760
    %v2747 = vsub.f32 %v1530, %v2746
    %v2748 = vand.u32 %v2747, 4294901760
    %v2749 = vsub.f32 %v2747, %v2748
    %v2750 = vand.u32 %v2749, 4294901760
    %2751 = vmatpush1.xpose.msra.mxu0 %v2750
    %2752 = vmatprep.subr.mxu0 0.0
    %2753 = vmatpush1.xpose.msra.mxu0 0.0
    %2754 = vmatprep.subr.mxu0 0.0
    %2755 = vmatpush1.xpose.msra.mxu0 0.0
    %2756 = vmatprep.subr.mxu0 0.0
    %2757 = vmatpush1.xpose.msra.mxu0 0.0
    %2758 = vmatprep.subr.mxu0 0.0
    %2759 = vmatpush1.xpose.msra.mxu0 0.0
    %2760 = vmatprep.subr.mxu0 0.0
    %2761 = vmatpush1.xpose.msra.mxu0 0.0
    %2762 = vmatprep.subr.mxu0 0.0
    %2763 = vmatpush1.xpose.msra.mxu0 0.0
    %2764 = vmatprep.subr.mxu0 0.0
    %2765 = vmatpush1.xpose.msra.mxu0 0.0
    %2766 = vmatprep.subr.mxu0 0.0
    %2767 = vmatpush1.xpose.msra.mxu0 0.0
    %2768 = vmatprep.subr.mxu0 0.0
    %2769 = vmatpush1.xpose.msra.mxu0 0.0
    %2770 = vmatprep.subr.mxu0 0.0
    %2771 = vmatpush1.xpose.msra.mxu0 0.0
    %2772 = vmatprep.subr.mxu0 0.0
    %2773 = vmatpush1.xpose.msra.mxu0 0.0
    %2774 = vmatprep.subr.mxu0 0.0
    %2775 = vmatpush1.xpose.msra.mxu0 0.0
    %2776 = vmatprep.subr.mxu0 0.0
    %2777 = vmatpush1.xpose.msra.mxu0 0.0
    %2778 = vmatprep.subr.mxu0 0.0
    %2779 = vmatpush1.xpose.msra.mxu0 0.0
    %2780 = vmatprep.subr.mxu0 0.0
    %2781 = vmatpush1.xpose.msra.mxu0 0.0
    %2782 = vmatprep.subr.mxu0 0.0
    %2783 = vmatpush1.xpose.msra.mxu0 0.0
    %2784 = vmatprep.subr.mxu0 0.0
    %2785 = vmatpush1.xpose.msra.mxu0 0.0
    %2786 = vmatprep.subr.mxu0 0.0
    %2787 = vmatpush1.xpose.msra.mxu0 0.0
    %2788 = vmatprep.subr.mxu0 0.0
    %2789 = vmatpush1.xpose.msra.mxu0 0.0
    %2790 = vmatprep.subr.mxu0 0.0
    %2791 = vmatpush1.xpose.msra.mxu0 0.0
    %2792 = vmatprep.subr.mxu0 0.0
    %2793 = vmatpush1.xpose.msra.mxu0 0.0
    %2794 = vmatprep.subr.mxu0 0.0
    %2795 = vmatpush1.xpose.msra.mxu0 0.0
    %2796 = vmatprep.subr.mxu0 0.0
    %2797 = vmatpush1.xpose.msra.mxu0 0.0
    %2798 = vmatprep.subr.mxu0 0.0
    %2799 = vmatpush1.xpose.msra.mxu0 0.0
    %2800 = vmatprep.subr.mxu0 0.0
    %2801 = vmatpush1.xpose.msra.mxu0 0.0
    %2802 = vmatprep.subr.mxu0 0.0
    %2803 = vmatpush1.xpose.msra.mxu0 0.0
    %2804 = vmatprep.subr.mxu0 0.0
    %2805 = vmatpush1.xpose.msra.mxu0 0.0
    %2806 = vmatprep.subr.mxu0 0.0
    %2807 = vmatpush1.xpose.msra.mxu0 0.0
    %2808 = vmatprep.subr.mxu0 0.0
    %2809 = vmatpush1.xpose.msra.mxu0 0.0
    %2810 = vmatprep.subr.mxu0 0.0
    %2811 = vmatpush1.xpose.msra.mxu0 0.0
    %2812 = vmatprep.subr.mxu0 0.0
    %2813 = vmatpush1.xpose.msra.mxu0 0.0
    %2814 = vmatprep.mubr.f32.mxu0 0.0
    %v2815 = vand.u32 %v840, 4294901760
    %2816 = vmatmul.mubr.f32.gmra.mrb[0].mxu0 %v2815
    %v2817 = vpop.f32.mrb[0].mxu0
    %v2818 = vadd.f32 %v2742, %v2817
    %v2819 = vpop.f32.mrb[0].mxu0
    %2820 = vdwg.mxu0
    %2821 = vmatprep.subr.mxu0 0.0
    %v2822 = vand.u32 %v1530, 4294901760
    %v2823 = vsub.f32 %v1530, %v2822
    %2824 = vmatpush1.xpose.msra.mxu0 %v2823
    %2825 = vmatprep.subr.mxu0 0.0
    %2826 = vmatpush1.xpose.msra.mxu0 0.0
    %2827 = vmatprep.subr.mxu0 0.0
    %2828 = vmatpush1.xpose.msra.mxu0 0.0
    %2829 = vmatprep.subr.mxu0 0.0
    %2830 = vmatpush1.xpose.msra.mxu0 0.0
    %2831 = vmatprep.subr.mxu0 0.0
    %2832 = vmatpush1.xpose.msra.mxu0 0.0
    %2833 = vmatprep.subr.mxu0 0.0
    %2834 = vmatpush1.xpose.msra.mxu0 0.0
    %2835 = vmatprep.subr.mxu0 0.0
    %2836 = vmatpush1.xpose.msra.mxu0 0.0
    %2837 = vmatprep.subr.mxu0 0.0
    %2838 = vmatpush1.xpose.msra.mxu0 0.0
    %2839 = vmatprep.subr.mxu0 0.0
    %2840 = vmatpush1.xpose.msra.mxu0 0.0
    %2841 = vmatprep.subr.mxu0 0.0
    %2842 = vmatpush1.xpose.msra.mxu0 0.0
    %2843 = vmatprep.subr.mxu0 0.0
    %2844 = vmatpush1.xpose.msra.mxu0 0.0
    %2845 = vmatprep.subr.mxu0 0.0
    %2846 = vmatpush1.xpose.msra.mxu0 0.0
    %2847 = vmatprep.subr.mxu0 0.0
    %2848 = vmatpush1.xpose.msra.mxu0 0.0
    %2849 = vmatprep.subr.mxu0 0.0
    %2850 = vmatpush1.xpose.msra.mxu0 0.0
    %2851 = vmatprep.subr.mxu0 0.0
    %2852 = vmatpush1.xpose.msra.mxu0 0.0
    %2853 = vmatprep.subr.mxu0 0.0
    %2854 = vmatpush1.xpose.msra.mxu0 0.0
    %2855 = vmatprep.subr.mxu0 0.0
    %2856 = vmatpush1.xpose.msra.mxu0 0.0
    %2857 = vmatprep.subr.mxu0 0.0
    %2858 = vmatpush1.xpose.msra.mxu0 0.0
    %2859 = vmatprep.subr.mxu0 0.0
    %2860 = vmatpush1.xpose.msra.mxu0 0.0
    %2861 = vmatprep.subr.mxu0 0.0
    %2862 = vmatpush1.xpose.msra.mxu0 0.0
    %2863 = vmatprep.subr.mxu0 0.0
    %2864 = vmatpush1.xpose.msra.mxu0 0.0
    %2865 = vmatprep.subr.mxu0 0.0
    %2866 = vmatpush1.xpose.msra.mxu0 0.0
    %2867 = vmatprep.subr.mxu0 0.0
    %2868 = vmatpush1.xpose.msra.mxu0 0.0
    %2869 = vmatprep.subr.mxu0 0.0
    %2870 = vmatpush1.xpose.msra.mxu0 0.0
    %2871 = vmatprep.subr.mxu0 0.0
    %2872 = vmatpush1.xpose.msra.mxu0 0.0
    %2873 = vmatprep.subr.mxu0 0.0
    %2874 = vmatpush1.xpose.msra.mxu0 0.0
    %2875 = vmatprep.subr.mxu0 0.0
    %2876 = vmatpush1.xpose.msra.mxu0 0.0
    %2877 = vmatprep.subr.mxu0 0.0
    %2878 = vmatpush1.xpose.msra.mxu0 0.0
    %2879 = vmatprep.subr.mxu0 0.0
    %2880 = vmatpush1.xpose.msra.mxu0 0.0
    %2881 = vmatprep.subr.mxu0 0.0
    %2882 = vmatpush1.xpose.msra.mxu0 0.0
    %2883 = vmatprep.subr.mxu0 0.0
    %2884 = vmatpush1.xpose.msra.mxu0 0.0
    %2885 = vmatprep.subr.mxu0 0.0
    %2886 = vmatpush1.xpose.msra.mxu0 0.0
    %2887 = vmatprep.mubr.f32.mxu0 0.0
    %v2888 = vand.u32 %v840, 4294901760
    %v2889 = vsub.f32 %v840, %v2888
    %2890 = vmatmul.mubr.f32.gmra.mrb[0].mxu0 %v2889
    %v2891 = vpop.f32.mrb[0].mxu0
    %v2892 = vadd.f32 %v2818, %v2891
    %v2893 = vpop.f32.mrb[0].mxu0
    %2894 = vdwg.mxu0
    %2895 = vmatprep.subr.mxu0 0.0
    %v2896 = vand.u32 %v1530, 4294901760
    %2897 = vmatpush1.xpose.msra.mxu0 %v2896
    %2898 = vmatprep.subr.mxu0 0.0
    %2899 = vmatpush1.xpose.msra.mxu0 0.0
    %2900 = vmatprep.subr.mxu0 0.0
    %2901 = vmatpush1.xpose.msra.mxu0 0.0
    %2902 = vmatprep.subr.mxu0 0.0
    %2903 = vmatpush1.xpose.msra.mxu0 0.0
    %2904 = vmatprep.subr.mxu0 0.0
    %2905 = vmatpush1.xpose.msra.mxu0 0.0
    %2906 = vmatprep.subr.mxu0 0.0
    %2907 = vmatpush1.xpose.msra.mxu0 0.0
    %2908 = vmatprep.subr.mxu0 0.0
    %2909 = vmatpush1.xpose.msra.mxu0 0.0
    %2910 = vmatprep.subr.mxu0 0.0
    %2911 = vmatpush1.xpose.msra.mxu0 0.0
    %2912 = vmatprep.subr.mxu0 0.0
    %2913 = vmatpush1.xpose.msra.mxu0 0.0
    %2914 = vmatprep.subr.mxu0 0.0
    %2915 = vmatpush1.xpose.msra.mxu0 0.0
    %2916 = vmatprep.subr.mxu0 0.0
    %2917 = vmatpush1.xpose.msra.mxu0 0.0
    %2918 = vmatprep.subr.mxu0 0.0
    %2919 = vmatpush1.xpose.msra.mxu0 0.0
    %2920 = vmatprep.subr.mxu0 0.0
    %2921 = vmatpush1.xpose.msra.mxu0 0.0
    %2922 = vmatprep.subr.mxu0 0.0
    %2923 = vmatpush1.xpose.msra.mxu0 0.0
    %2924 = vmatprep.subr.mxu0 0.0
    %2925 = vmatpush1.xpose.msra.mxu0 0.0
    %2926 = vmatprep.subr.mxu0 0.0
    %2927 = vmatpush1.xpose.msra.mxu0 0.0
    %2928 = vmatprep.subr.mxu0 0.0
    %2929 = vmatpush1.xpose.msra.mxu0 0.0
    %2930 = vmatprep.subr.mxu0 0.0
    %2931 = vmatpush1.xpose.msra.mxu0 0.0
    %2932 = vmatprep.subr.mxu0 0.0
    %2933 = vmatpush1.xpose.msra.mxu0 0.0
    %2934 = vmatprep.subr.mxu0 0.0
    %2935 = vmatpush1.xpose.msra.mxu0 0.0
    %2936 = vmatprep.subr.mxu0 0.0
    %2937 = vmatpush1.xpose.msra.mxu0 0.0
    %2938 = vmatprep.subr.mxu0 0.0
    %2939 = vmatpush1.xpose.msra.mxu0 0.0
    %2940 = vmatprep.subr.mxu0 0.0
    %2941 = vmatpush1.xpose.msra.mxu0 0.0
    %2942 = vmatprep.subr.mxu0 0.0
    %2943 = vmatpush1.xpose.msra.mxu0 0.0
    %2944 = vmatprep.subr.mxu0 0.0
    %2945 = vmatpush1.xpose.msra.mxu0 0.0
    %2946 = vmatprep.subr.mxu0 0.0
    %2947 = vmatpush1.xpose.msra.mxu0 0.0
    %2948 = vmatprep.subr.mxu0 0.0
    %2949 = vmatpush1.xpose.msra.mxu0 0.0
    %2950 = vmatprep.subr.mxu0 0.0
    %2951 = vmatpush1.xpose.msra.mxu0 0.0
    %2952 = vmatprep.subr.mxu0 0.0
    %2953 = vmatpush1.xpose.msra.mxu0 0.0
    %2954 = vmatprep.subr.mxu0 0.0
    %2955 = vmatpush1.xpose.msra.mxu0 0.0
    %2956 = vmatprep.subr.mxu0 0.0
    %2957 = vmatpush1.xpose.msra.mxu0 0.0
    %2958 = vmatprep.subr.mxu0 0.0
    %2959 = vmatpush1.xpose.msra.mxu0 0.0
    %2960 = vmatprep.mubr.f32.mxu0 0.0
    %v2961 = vand.u32 %v840, 4294901760
    %v2962 = vsub.f32 %v840, %v2961
    %v2963 = vand.u32 %v2962, 4294901760
    %2964 = vmatmul.mubr.f32.gmra.mrb[0].mxu0 %v2963
    %v2965 = vpop.f32.mrb[0].mxu0
    %v2966 = vadd.f32 %v2892, %v2965
    %v2967 = vpop.f32.mrb[0].mxu0
    %2968 = vdwg.mxu0
    %2969 = vmatprep.subr.mxu0 0.0
    %v2970 = vand.u32 %v1530, 4294901760
    %v2971 = vsub.f32 %v1530, %v2970
    %v2972 = vand.u32 %v2971, 4294901760
    %2973 = vmatpush1.xpose.msra.mxu0 %v2972
    %2974 = vmatprep.subr.mxu0 0.0
    %2975 = vmatpush1.xpose.msra.mxu0 0.0
    %2976 = vmatprep.subr.mxu0 0.0
    %2977 = vmatpush1.xpose.msra.mxu0 0.0
    %2978 = vmatprep.subr.mxu0 0.0
    %2979 = vmatpush1.xpose.msra.mxu0 0.0
    %2980 = vmatprep.subr.mxu0 0.0
    %2981 = vmatpush1.xpose.msra.mxu0 0.0
    %2982 = vmatprep.subr.mxu0 0.0
    %2983 = vmatpush1.xpose.msra.mxu0 0.0
    %2984 = vmatprep.subr.mxu0 0.0
    %2985 = vmatpush1.xpose.msra.mxu0 0.0
    %2986 = vmatprep.subr.mxu0 0.0
    %2987 = vmatpush1.xpose.msra.mxu0 0.0
    %2988 = vmatprep.subr.mxu0 0.0
    %2989 = vmatpush1.xpose.msra.mxu0 0.0
    %2990 = vmatprep.subr.mxu0 0.0
    %2991 = vmatpush1.xpose.msra.mxu0 0.0
    %2992 = vmatprep.subr.mxu0 0.0
    %2993 = vmatpush1.xpose.msra.mxu0 0.0
    %2994 = vmatprep.subr.mxu0 0.0
    %2995 = vmatpush1.xpose.msra.mxu0 0.0
    %2996 = vmatprep.subr.mxu0 0.0
    %2997 = vmatpush1.xpose.msra.mxu0 0.0
    %2998 = vmatprep.subr.mxu0 0.0
    %2999 = vmatpush1.xpose.msra.mxu0 0.0
    %3000 = vmatprep.subr.mxu0 0.0
    %3001 = vmatpush1.xpose.msra.mxu0 0.0
    %3002 = vmatprep.subr.mxu0 0.0
    %3003 = vmatpush1.xpose.msra.mxu0 0.0
    %3004 = vmatprep.subr.mxu0 0.0
    %3005 = vmatpush1.xpose.msra.mxu0 0.0
    %3006 = vmatprep.subr.mxu0 0.0
    %3007 = vmatpush1.xpose.msra.mxu0 0.0
    %3008 = vmatprep.subr.mxu0 0.0
    %3009 = vmatpush1.xpose.msra.mxu0 0.0
    %3010 = vmatprep.subr.mxu0 0.0
    %3011 = vmatpush1.xpose.msra.mxu0 0.0
    %3012 = vmatprep.subr.mxu0 0.0
    %3013 = vmatpush1.xpose.msra.mxu0 0.0
    %3014 = vmatprep.subr.mxu0 0.0
    %3015 = vmatpush1.xpose.msra.mxu0 0.0
    %3016 = vmatprep.subr.mxu0 0.0
    %3017 = vmatpush1.xpose.msra.mxu0 0.0
    %3018 = vmatprep.subr.mxu0 0.0
    %3019 = vmatpush1.xpose.msra.mxu0 0.0
    %3020 = vmatprep.subr.mxu0 0.0
    %3021 = vmatpush1.xpose.msra.mxu0 0.0
    %3022 = vmatprep.subr.mxu0 0.0
    %3023 = vmatpush1.xpose.msra.mxu0 0.0
    %3024 = vmatprep.subr.mxu0 0.0
    %3025 = vmatpush1.xpose.msra.mxu0 0.0
    %3026 = vmatprep.subr.mxu0 0.0
    %3027 = vmatpush1.xpose.msra.mxu0 0.0
    %3028 = vmatprep.subr.mxu0 0.0
    %3029 = vmatpush1.xpose.msra.mxu0 0.0
    %3030 = vmatprep.subr.mxu0 0.0
    %3031 = vmatpush1.xpose.msra.mxu0 0.0
    %3032 = vmatprep.subr.mxu0 0.0
    %3033 = vmatpush1.xpose.msra.mxu0 0.0
    %3034 = vmatprep.subr.mxu0 0.0
    %3035 = vmatpush1.xpose.msra.mxu0 0.0
    %3036 = vmatprep.mubr.f32.mxu0 0.0
    %v3037 = vand.u32 %v840, 4294901760
    %3038 = vmatmul.mubr.f32.gmra.mrb[0].mxu0 %v3037
    %v3039 = vpop.f32.mrb[0].mxu0
    %v3040 = vadd.f32 %v2966, %v3039
    %v3041 = vpop.f32.mrb[0].mxu0
    %3042 = vdwg.mxu0
    %3043 = vmatprep.subr.mxu0 0.0
    %v3044 = vand.u32 %v1530, 4294901760
    %3045 = vmatpush1.xpose.msra.mxu0 %v3044
    %3046 = vmatprep.subr.mxu0 0.0
    %3047 = vmatpush1.xpose.msra.mxu0 0.0
    %3048 = vmatprep.subr.mxu0 0.0
    %3049 = vmatpush1.xpose.msra.mxu0 0.0
    %3050 = vmatprep.subr.mxu0 0.0
    %3051 = vmatpush1.xpose.msra.mxu0 0.0
    %3052 = vmatprep.subr.mxu0 0.0
    %3053 = vmatpush1.xpose.msra.mxu0 0.0
    %3054 = vmatprep.subr.mxu0 0.0
    %3055 = vmatpush1.xpose.msra.mxu0 0.0
    %3056 = vmatprep.subr.mxu0 0.0
    %3057 = vmatpush1.xpose.msra.mxu0 0.0
    %3058 = vmatprep.subr.mxu0 0.0
    %3059 = vmatpush1.xpose.msra.mxu0 0.0
    %3060 = vmatprep.subr.mxu0 0.0
    %3061 = vmatpush1.xpose.msra.mxu0 0.0
    %3062 = vmatprep.subr.mxu0 0.0
    %3063 = vmatpush1.xpose.msra.mxu0 0.0
    %3064 = vmatprep.subr.mxu0 0.0
    %3065 = vmatpush1.xpose.msra.mxu0 0.0
    %3066 = vmatprep.subr.mxu0 0.0
    %3067 = vmatpush1.xpose.msra.mxu0 0.0
    %3068 = vmatprep.subr.mxu0 0.0
    %3069 = vmatpush1.xpose.msra.mxu0 0.0
    %3070 = vmatprep.subr.mxu0 0.0
    %3071 = vmatpush1.xpose.msra.mxu0 0.0
    %3072 = vmatprep.subr.mxu0 0.0
    %3073 = vmatpush1.xpose.msra.mxu0 0.0
    %3074 = vmatprep.subr.mxu0 0.0
    %3075 = vmatpush1.xpose.msra.mxu0 0.0
    %3076 = vmatprep.subr.mxu0 0.0
    %3077 = vmatpush1.xpose.msra.mxu0 0.0
    %3078 = vmatprep.subr.mxu0 0.0
    %3079 = vmatpush1.xpose.msra.mxu0 0.0
    %3080 = vmatprep.subr.mxu0 0.0
    %3081 = vmatpush1.xpose.msra.mxu0 0.0
    %3082 = vmatprep.subr.mxu0 0.0
    %3083 = vmatpush1.xpose.msra.mxu0 0.0
    %3084 = vmatprep.subr.mxu0 0.0
    %3085 = vmatpush1.xpose.msra.mxu0 0.0
    %3086 = vmatprep.subr.mxu0 0.0
    %3087 = vmatpush1.xpose.msra.mxu0 0.0
    %3088 = vmatprep.subr.mxu0 0.0
    %3089 = vmatpush1.xpose.msra.mxu0 0.0
    %3090 = vmatprep.subr.mxu0 0.0
    %3091 = vmatpush1.xpose.msra.mxu0 0.0
    %3092 = vmatprep.subr.mxu0 0.0
    %3093 = vmatpush1.xpose.msra.mxu0 0.0
    %3094 = vmatprep.subr.mxu0 0.0
    %3095 = vmatpush1.xpose.msra.mxu0 0.0
    %3096 = vmatprep.subr.mxu0 0.0
    %3097 = vmatpush1.xpose.msra.mxu0 0.0
    %3098 = vmatprep.subr.mxu0 0.0
    %3099 = vmatpush1.xpose.msra.mxu0 0.0
    %3100 = vmatprep.subr.mxu0 0.0
    %3101 = vmatpush1.xpose.msra.mxu0 0.0
    %3102 = vmatprep.subr.mxu0 0.0
    %3103 = vmatpush1.xpose.msra.mxu0 0.0
    %3104 = vmatprep.subr.mxu0 0.0
    %3105 = vmatpush1.xpose.msra.mxu0 0.0
    %3106 = vmatprep.subr.mxu0 0.0
    %3107 = vmatpush1.xpose.msra.mxu0 0.0
    %3108 = vmatprep.mubr.f32.mxu0 0.0
    %v3109 = vand.u32 %v840, 4294901760
    %3110 = vmatmul.mubr.f32.gmra.mrb[0].mxu0 %v3109
    %v3111 = vpop.f32.mrb[0].mxu0
    %v3112 = vadd.f32 %v3040, %v3111
    %v3113 = vpop.f32.mrb[0].mxu0
    %3114 = vdwg.mxu0
    %vm3115 = vcmask 64512
    %v3116 = vsel %vm3115, %v2666, -inf
    %3117 = vmax.xlane.f32.xlu0 %v3116
    %v3118 = vpop.xlane.xlu0 %3117
    %v3119 = vsel %vm3115, %v3112, -inf
    %3120 = vmax.xlane.f32.xlu0 %v3119
    %v3121 = vpop.xlane.xlu0 %3120
    %v3122 = vsub.f32 %v2666, %v3118
    %v3123 = vsub.f32 %v3112, %v3121
    %v3124 = vmul.f32 %v3122, 1.442695
    %v3125 = vpow.pop %v3124
    %v3126 = vmul.f32 %v3123, 1.442695
    %v3127 = vpow.pop %v3126
    %v3128 = vsel %vm3115, %v3125, 0.0
    %3129 = vadd.xlane.f32.xlu0 %v3128
    %v3130 = vpop.xlane.xlu0 %3129
    %v3131 = vsel %vm3115, %v3127, 0.0
    %3132 = vadd.xlane.f32.xlu0 %v3131
    %v3133 = vpop.xlane.xlu0 %3132
    %v3134 = vrcp.pop %v3130
    %v3135 = vrcp.pop %v3133
    %v3136 = vmul.f32 %v3125, %v3134
    %v3137 = vmul.f32 %v3127, %v3135
    %v3139 = vsel %vm3115, %v3136, 0
    %3141 = vmatprep.subr.mxu0 0.0
    %v3142 = vand.u32 %v2214, 4294901760
    %3143 = vmatpush1.msra.mxu0 %v3142
    %3144 = vmatprep.subr.mxu0 0.0
    %3145 = vmatpush1.msra.mxu0 0.0
    %3146 = vmatprep.subr.mxu0 0.0
    %3147 = vmatpush1.msra.mxu0 0.0
    %3148 = vmatprep.subr.mxu0 0.0
    %3149 = vmatpush1.msra.mxu0 0.0
    %3150 = vmatprep.subr.mxu0 0.0
    %3151 = vmatpush1.msra.mxu0 0.0
    %3152 = vmatprep.subr.mxu0 0.0
    %3153 = vmatpush1.msra.mxu0 0.0
    %3154 = vmatprep.subr.mxu0 0.0
    %3155 = vmatpush1.msra.mxu0 0.0
    %3156 = vmatprep.subr.mxu0 0.0
    %3157 = vmatpush1.msra.mxu0 0.0
    %3158 = vmatprep.subr.mxu0 0.0
    %3159 = vmatpush1.msra.mxu0 0.0
    %3160 = vmatprep.subr.mxu0 0.0
    %3161 = vmatpush1.msra.mxu0 0.0
    %3162 = vmatprep.subr.mxu0 0.0
    %3163 = vmatpush1.msra.mxu0 0.0
    %3164 = vmatprep.subr.mxu0 0.0
    %3165 = vmatpush1.msra.mxu0 0.0
    %3166 = vmatprep.subr.mxu0 0.0
    %3167 = vmatpush1.msra.mxu0 0.0
    %3168 = vmatprep.subr.mxu0 0.0
    %3169 = vmatpush1.msra.mxu0 0.0
    %3170 = vmatprep.subr.mxu0 0.0
    %3171 = vmatpush1.msra.mxu0 0.0
    %3172 = vmatprep.subr.mxu0 0.0
    %3173 = vmatpush1.msra.mxu0 0.0
    %3174 = vmatprep.subr.mxu0 0.0
    %3175 = vmatpush1.msra.mxu0 0.0
    %3176 = vmatprep.subr.mxu0 0.0
    %3177 = vmatpush1.msra.mxu0 0.0
    %3178 = vmatprep.subr.mxu0 0.0
    %3179 = vmatpush1.msra.mxu0 0.0
    %3180 = vmatprep.subr.mxu0 0.0
    %3181 = vmatpush1.msra.mxu0 0.0
    %3182 = vmatprep.subr.mxu0 0.0
    %3183 = vmatpush1.msra.mxu0 0.0
    %3184 = vmatprep.subr.mxu0 0.0
    %3185 = vmatpush1.msra.mxu0 0.0
    %3186 = vmatprep.subr.mxu0 0.0
    %3187 = vmatpush1.msra.mxu0 0.0
    %3188 = vmatprep.subr.mxu0 0.0
    %3189 = vmatpush1.msra.mxu0 0.0
    %3190 = vmatprep.subr.mxu0 0.0
    %3191 = vmatpush1.msra.mxu0 0.0
    %3192 = vmatprep.subr.mxu0 0.0
    %3193 = vmatpush1.msra.mxu0 0.0
    %3194 = vmatprep.subr.mxu0 0.0
    %3195 = vmatpush1.msra.mxu0 0.0
    %3196 = vmatprep.subr.mxu0 0.0
    %3197 = vmatpush1.msra.mxu0 0.0
    %3198 = vmatprep.subr.mxu0 0.0
    %3199 = vmatpush1.msra.mxu0 0.0
    %3200 = vmatprep.subr.mxu0 0.0
    %3201 = vmatpush1.msra.mxu0 0.0
    %3202 = vmatprep.subr.mxu0 0.0
    %3203 = vmatpush1.msra.mxu0 0.0
    %3204 = vmatprep.subr.mxu0 0.0
    %3205 = vmatpush1.msra.mxu0 0.0
    %3206 = vmatprep.mubr.f32.mxu0 0.0
    %v3207 = vand.u32 %v3139, 4294901760
    %v3208 = vsub.f32 %v3139, %v3207
    %v3209 = vand.u32 %v3208, 4294901760
    %v3210 = vsub.f32 %v3208, %v3209
    %v3211 = vand.u32 %v3210, 4294901760
    %3212 = vmatmul.mubr.f32.gmra.mrb[0].mxu0 %v3211
    %v3213 = vpop.f32.mrb[0].mxu0
    %v3214 = vadd.f32 0.0, %v3213
    %v3215 = vpop.f32.mrb[0].mxu0
    %3216 = vdwg.mxu0
    %3217 = vmatprep.subr.mxu0 0.0
    %v3218 = vand.u32 %v2214, 4294901760
    %v3219 = vsub.f32 %v2214, %v3218
    %v3220 = vand.u32 %v3219, 4294901760
    %v3221 = vsub.f32 %v3219, %v3220
    %v3222 = vand.u32 %v3221, 4294901760
    %3223 = vmatpush1.msra.mxu0 %v3222
    %3224 = vmatprep.subr.mxu0 0.0
    %3225 = vmatpush1.msra.mxu0 0.0
    %3226 = vmatprep.subr.mxu0 0.0
    %3227 = vmatpush1.msra.mxu0 0.0
    %3228 = vmatprep.subr.mxu0 0.0
    %3229 = vmatpush1.msra.mxu0 0.0
    %3230 = vmatprep.subr.mxu0 0.0
    %3231 = vmatpush1.msra.mxu0 0.0
    %3232 = vmatprep.subr.mxu0 0.0
    %3233 = vmatpush1.msra.mxu0 0.0
    %3234 = vmatprep.subr.mxu0 0.0
    %3235 = vmatpush1.msra.mxu0 0.0
    %3236 = vmatprep.subr.mxu0 0.0
    %3237 = vmatpush1.msra.mxu0 0.0
    %3238 = vmatprep.subr.mxu0 0.0
    %3239 = vmatpush1.msra.mxu0 0.0
    %3240 = vmatprep.subr.mxu0 0.0
    %3241 = vmatpush1.msra.mxu0 0.0
    %3242 = vmatprep.subr.mxu0 0.0
    %3243 = vmatpush1.msra.mxu0 0.0
    %3244 = vmatprep.subr.mxu0 0.0
    %3245 = vmatpush1.msra.mxu0 0.0
    %3246 = vmatprep.subr.mxu0 0.0
    %3247 = vmatpush1.msra.mxu0 0.0
    %3248 = vmatprep.subr.mxu0 0.0
    %3249 = vmatpush1.msra.mxu0 0.0
    %3250 = vmatprep.subr.mxu0 0.0
    %3251 = vmatpush1.msra.mxu0 0.0
    %3252 = vmatprep.subr.mxu0 0.0
    %3253 = vmatpush1.msra.mxu0 0.0
    %3254 = vmatprep.subr.mxu0 0.0
    %3255 = vmatpush1.msra.mxu0 0.0
    %3256 = vmatprep.subr.mxu0 0.0
    %3257 = vmatpush1.msra.mxu0 0.0
    %3258 = vmatprep.subr.mxu0 0.0
    %3259 = vmatpush1.msra.mxu0 0.0
    %3260 = vmatprep.subr.mxu0 0.0
    %3261 = vmatpush1.msra.mxu0 0.0
    %3262 = vmatprep.subr.mxu0 0.0
    %3263 = vmatpush1.msra.mxu0 0.0
    %3264 = vmatprep.subr.mxu0 0.0
    %3265 = vmatpush1.msra.mxu0 0.0
    %3266 = vmatprep.subr.mxu0 0.0
    %3267 = vmatpush1.msra.mxu0 0.0
    %3268 = vmatprep.subr.mxu0 0.0
    %3269 = vmatpush1.msra.mxu0 0.0
    %3270 = vmatprep.subr.mxu0 0.0
    %3271 = vmatpush1.msra.mxu0 0.0
    %3272 = vmatprep.subr.mxu0 0.0
    %3273 = vmatpush1.msra.mxu0 0.0
    %3274 = vmatprep.subr.mxu0 0.0
    %3275 = vmatpush1.msra.mxu0 0.0
    %3276 = vmatprep.subr.mxu0 0.0
    %3277 = vmatpush1.msra.mxu0 0.0
    %3278 = vmatprep.subr.mxu0 0.0
    %3279 = vmatpush1.msra.mxu0 0.0
    %3280 = vmatprep.subr.mxu0 0.0
    %3281 = vmatpush1.msra.mxu0 0.0
    %3282 = vmatprep.subr.mxu0 0.0
    %3283 = vmatpush1.msra.mxu0 0.0
    %3284 = vmatprep.subr.mxu0 0.0
    %3285 = vmatpush1.msra.mxu0 0.0
    %3286 = vmatprep.mubr.f32.mxu0 0.0
    %v3287 = vand.u32 %v3139, 4294901760
    %3288 = vmatmul.mubr.f32.gmra.mrb[0].mxu0 %v3287
    %v3289 = vpop.f32.mrb[0].mxu0
    %v3290 = vadd.f32 %v3214, %v3289
    %v3291 = vpop.f32.mrb[0].mxu0
    %3292 = vdwg.mxu0
    %3293 = vmatprep.subr.mxu0 0.0
    %v3294 = vand.u32 %v2214, 4294901760
    %v3295 = vsub.f32 %v2214, %v3294
    %3296 = vmatpush1.msra.mxu0 %v3295
    %3297 = vmatprep.subr.mxu0 0.0
    %3298 = vmatpush1.msra.mxu0 0.0
    %3299 = vmatprep.subr.mxu0 0.0
    %3300 = vmatpush1.msra.mxu0 0.0
    %3301 = vmatprep.subr.mxu0 0.0
    %3302 = vmatpush1.msra.mxu0 0.0
    %3303 = vmatprep.subr.mxu0 0.0
    %3304 = vmatpush1.msra.mxu0 0.0
    %3305 = vmatprep.subr.mxu0 0.0
    %3306 = vmatpush1.msra.mxu0 0.0
    %3307 = vmatprep.subr.mxu0 0.0
    %3308 = vmatpush1.msra.mxu0 0.0
    %3309 = vmatprep.subr.mxu0 0.0
    %3310 = vmatpush1.msra.mxu0 0.0
    %3311 = vmatprep.subr.mxu0 0.0
    %3312 = vmatpush1.msra.mxu0 0.0
    %3313 = vmatprep.subr.mxu0 0.0
    %3314 = vmatpush1.msra.mxu0 0.0
    %3315 = vmatprep.subr.mxu0 0.0
    %3316 = vmatpush1.msra.mxu0 0.0
    %3317 = vmatprep.subr.mxu0 0.0
    %3318 = vmatpush1.msra.mxu0 0.0
    %3319 = vmatprep.subr.mxu0 0.0
    %3320 = vmatpush1.msra.mxu0 0.0
    %3321 = vmatprep.subr.mxu0 0.0
    %3322 = vmatpush1.msra.mxu0 0.0
    %3323 = vmatprep.subr.mxu0 0.0
    %3324 = vmatpush1.msra.mxu0 0.0
    %3325 = vmatprep.subr.mxu0 0.0
    %3326 = vmatpush1.msra.mxu0 0.0
    %3327 = vmatprep.subr.mxu0 0.0
    %3328 = vmatpush1.msra.mxu0 0.0
    %3329 = vmatprep.subr.mxu0 0.0
    %3330 = vmatpush1.msra.mxu0 0.0
    %3331 = vmatprep.subr.mxu0 0.0
    %3332 = vmatpush1.msra.mxu0 0.0
    %3333 = vmatprep.subr.mxu0 0.0
    %3334 = vmatpush1.msra.mxu0 0.0
    %3335 = vmatprep.subr.mxu0 0.0
    %3336 = vmatpush1.msra.mxu0 0.0
    %3337 = vmatprep.subr.mxu0 0.0
    %3338 = vmatpush1.msra.mxu0 0.0
    %3339 = vmatprep.subr.mxu0 0.0
    %3340 = vmatpush1.msra.mxu0 0.0
    %3341 = vmatprep.subr.mxu0 0.0
    %3342 = vmatpush1.msra.mxu0 0.0
    %3343 = vmatprep.subr.mxu0 0.0
    %3344 = vmatpush1.msra.mxu0 0.0
    %3345 = vmatprep.subr.mxu0 0.0
    %3346 = vmatpush1.msra.mxu0 0.0
    %3347 = vmatprep.subr.mxu0 0.0
    %3348 = vmatpush1.msra.mxu0 0.0
    %3349 = vmatprep.subr.mxu0 0.0
    %3350 = vmatpush1.msra.mxu0 0.0
    %3351 = vmatprep.subr.mxu0 0.0
    %3352 = vmatpush1.msra.mxu0 0.0
    %3353 = vmatprep.subr.mxu0 0.0
    %3354 = vmatpush1.msra.mxu0 0.0
    %3355 = vmatprep.subr.mxu0 0.0
    %3356 = vmatpush1.msra.mxu0 0.0
    %3357 = vmatprep.subr.mxu0 0.0
    %3358 = vmatpush1.msra.mxu0 0.0
    %3359 = vmatprep.mubr.f32.mxu0 0.0
    %v3360 = vand.u32 %v3139, 4294901760
    %v3361 = vsub.f32 %v3139, %v3360
    %3362 = vmatmul.mubr.f32.gmra.mrb[0].mxu0 %v3361
    %v3363 = vpop.f32.mrb[0].mxu0
    %v3364 = vadd.f32 %v3290, %v3363
    %v3365 = vpop.f32.mrb[0].mxu0
    %3366 = vdwg.mxu0
    %3367 = vmatprep.subr.mxu0 0.0
    %v3368 = vand.u32 %v2214, 4294901760
    %3369 = vmatpush1.msra.mxu0 %v3368
    %3370 = vmatprep.subr.mxu0 0.0
    %3371 = vmatpush1.msra.mxu0 0.0
    %3372 = vmatprep.subr.mxu0 0.0
    %3373 = vmatpush1.msra.mxu0 0.0
    %3374 = vmatprep.subr.mxu0 0.0
    %3375 = vmatpush1.msra.mxu0 0.0
    %3376 = vmatprep.subr.mxu0 0.0
    %3377 = vmatpush1.msra.mxu0 0.0
    %3378 = vmatprep.subr.mxu0 0.0
    %3379 = vmatpush1.msra.mxu0 0.0
    %3380 = vmatprep.subr.mxu0 0.0
    %3381 = vmatpush1.msra.mxu0 0.0
    %3382 = vmatprep.subr.mxu0 0.0
    %3383 = vmatpush1.msra.mxu0 0.0
    %3384 = vmatprep.subr.mxu0 0.0
    %3385 = vmatpush1.msra.mxu0 0.0
    %3386 = vmatprep.subr.mxu0 0.0
    %3387 = vmatpush1.msra.mxu0 0.0
    %3388 = vmatprep.subr.mxu0 0.0
    %3389 = vmatpush1.msra.mxu0 0.0
    %3390 = vmatprep.subr.mxu0 0.0
    %3391 = vmatpush1.msra.mxu0 0.0
    %3392 = vmatprep.subr.mxu0 0.0
    %3393 = vmatpush1.msra.mxu0 0.0
    %3394 = vmatprep.subr.mxu0 0.0
    %3395 = vmatpush1.msra.mxu0 0.0
    %3396 = vmatprep.subr.mxu0 0.0
    %3397 = vmatpush1.msra.mxu0 0.0
    %3398 = vmatprep.subr.mxu0 0.0
    %3399 = vmatpush1.msra.mxu0 0.0
    %3400 = vmatprep.subr.mxu0 0.0
    %3401 = vmatpush1.msra.mxu0 0.0
    %3402 = vmatprep.subr.mxu0 0.0
    %3403 = vmatpush1.msra.mxu0 0.0
    %3404 = vmatprep.subr.mxu0 0.0
    %3405 = vmatpush1.msra.mxu0 0.0
    %3406 = vmatprep.subr.mxu0 0.0
    %3407 = vmatpush1.msra.mxu0 0.0
    %3408 = vmatprep.subr.mxu0 0.0
    %3409 = vmatpush1.msra.mxu0 0.0
    %3410 = vmatprep.subr.mxu0 0.0
    %3411 = vmatpush1.msra.mxu0 0.0
    %3412 = vmatprep.subr.mxu0 0.0
    %3413 = vmatpush1.msra.mxu0 0.0
    %3414 = vmatprep.subr.mxu0 0.0
    %3415 = vmatpush1.msra.mxu0 0.0
    %3416 = vmatprep.subr.mxu0 0.0
    %3417 = vmatpush1.msra.mxu0 0.0
    %3418 = vmatprep.subr.mxu0 0.0
    %3419 = vmatpush1.msra.mxu0 0.0
    %3420 = vmatprep.subr.mxu0 0.0
    %3421 = vmatpush1.msra.mxu0 0.0
    %3422 = vmatprep.subr.mxu0 0.0
    %3423 = vmatpush1.msra.mxu0 0.0
    %3424 = vmatprep.subr.mxu0 0.0
    %3425 = vmatpush1.msra.mxu0 0.0
    %3426 = vmatprep.subr.mxu0 0.0
    %3427 = vmatpush1.msra.mxu0 0.0
    %3428 = vmatprep.subr.mxu0 0.0
    %3429 = vmatpush1.msra.mxu0 0.0
    %3430 = vmatprep.subr.mxu0 0.0
    %3431 = vmatpush1.msra.mxu0 0.0
    %3432 = vmatprep.mubr.f32.mxu0 0.0
    %v3433 = vand.u32 %v3139, 4294901760
    %v3434 = vsub.f32 %v3139, %v3433
    %v3435 = vand.u32 %v3434, 4294901760
    %3436 = vmatmul.mubr.f32.gmra.mrb[0].mxu0 %v3435
    %v3437 = vpop.f32.mrb[0].mxu0
    %v3438 = vadd.f32 %v3364, %v3437
    %v3439 = vpop.f32.mrb[0].mxu0
    %3440 = vdwg.mxu0
    %3441 = vmatprep.subr.mxu0 0.0
    %v3442 = vand.u32 %v2214, 4294901760
    %v3443 = vsub.f32 %v2214, %v3442
    %v3444 = vand.u32 %v3443, 4294901760
    %3445 = vmatpush1.msra.mxu0 %v3444
    %3446 = vmatprep.subr.mxu0 0.0
    %3447 = vmatpush1.msra.mxu0 0.0
    %3448 = vmatprep.subr.mxu0 0.0
    %3449 = vmatpush1.msra.mxu0 0.0
    %3450 = vmatprep.subr.mxu0 0.0
    %3451 = vmatpush1.msra.mxu0 0.0
    %3452 = vmatprep.subr.mxu0 0.0
    %3453 = vmatpush1.msra.mxu0 0.0
    %3454 = vmatprep.subr.mxu0 0.0
    %3455 = vmatpush1.msra.mxu0 0.0
    %3456 = vmatprep.subr.mxu0 0.0
    %3457 = vmatpush1.msra.mxu0 0.0
    %3458 = vmatprep.subr.mxu0 0.0
    %3459 = vmatpush1.msra.mxu0 0.0
    %3460 = vmatprep.subr.mxu0 0.0
    %3461 = vmatpush1.msra.mxu0 0.0
    %3462 = vmatprep.subr.mxu0 0.0
    %3463 = vmatpush1.msra.mxu0 0.0
    %3464 = vmatprep.subr.mxu0 0.0
    %3465 = vmatpush1.msra.mxu0 0.0
    %3466 = vmatprep.subr.mxu0 0.0
    %3467 = vmatpush1.msra.mxu0 0.0
    %3468 = vmatprep.subr.mxu0 0.0
    %3469 = vmatpush1.msra.mxu0 0.0
    %3470 = vmatprep.subr.mxu0 0.0
    %3471 = vmatpush1.msra.mxu0 0.0
    %3472 = vmatprep.subr.mxu0 0.0
    %3473 = vmatpush1.msra.mxu0 0.0
    %3474 = vmatprep.subr.mxu0 0.0
    %3475 = vmatpush1.msra.mxu0 0.0
    %3476 = vmatprep.subr.mxu0 0.0
    %3477 = vmatpush1.msra.mxu0 0.0
    %3478 = vmatprep.subr.mxu0 0.0
    %3479 = vmatpush1.msra.mxu0 0.0
    %3480 = vmatprep.subr.mxu0 0.0
    %3481 = vmatpush1.msra.mxu0 0.0
    %3482 = vmatprep.subr.mxu0 0.0
    %3483 = vmatpush1.msra.mxu0 0.0
    %3484 = vmatprep.subr.mxu0 0.0
    %3485 = vmatpush1.msra.mxu0 0.0
    %3486 = vmatprep.subr.mxu0 0.0
    %3487 = vmatpush1.msra.mxu0 0.0
    %3488 = vmatprep.subr.mxu0 0.0
    %3489 = vmatpush1.msra.mxu0 0.0
    %3490 = vmatprep.subr.mxu0 0.0
    %3491 = vmatpush1.msra.mxu0 0.0
    %3492 = vmatprep.subr.mxu0 0.0
    %3493 = vmatpush1.msra.mxu0 0.0
    %3494 = vmatprep.subr.mxu0 0.0
    %3495 = vmatpush1.msra.mxu0 0.0
    %3496 = vmatprep.subr.mxu0 0.0
    %3497 = vmatpush1.msra.mxu0 0.0
    %3498 = vmatprep.subr.mxu0 0.0
    %3499 = vmatpush1.msra.mxu0 0.0
    %3500 = vmatprep.subr.mxu0 0.0
    %3501 = vmatpush1.msra.mxu0 0.0
    %3502 = vmatprep.subr.mxu0 0.0
    %3503 = vmatpush1.msra.mxu0 0.0
    %3504 = vmatprep.subr.mxu0 0.0
    %3505 = vmatpush1.msra.mxu0 0.0
    %3506 = vmatprep.subr.mxu0 0.0
    %3507 = vmatpush1.msra.mxu0 0.0
    %3508 = vmatprep.mubr.f32.mxu0 0.0
    %v3509 = vand.u32 %v3139, 4294901760
    %3510 = vmatmul.mubr.f32.gmra.mrb[0].mxu0 %v3509
    %v3511 = vpop.f32.mrb[0].mxu0
    %v3512 = vadd.f32 %v3438, %v3511
    %v3513 = vpop.f32.mrb[0].mxu0
    %3514 = vdwg.mxu0
    %3515 = vmatprep.subr.mxu0 0.0
    %v3516 = vand.u32 %v2214, 4294901760
    %3517 = vmatpush1.msra.mxu0 %v3516
    %3518 = vmatprep.subr.mxu0 0.0
    %3519 = vmatpush1.msra.mxu0 0.0
    %3520 = vmatprep.subr.mxu0 0.0
    %3521 = vmatpush1.msra.mxu0 0.0
    %3522 = vmatprep.subr.mxu0 0.0
    %3523 = vmatpush1.msra.mxu0 0.0
    %3524 = vmatprep.subr.mxu0 0.0
    %3525 = vmatpush1.msra.mxu0 0.0
    %3526 = vmatprep.subr.mxu0 0.0
    %3527 = vmatpush1.msra.mxu0 0.0
    %3528 = vmatprep.subr.mxu0 0.0
    %3529 = vmatpush1.msra.mxu0 0.0
    %3530 = vmatprep.subr.mxu0 0.0
    %3531 = vmatpush1.msra.mxu0 0.0
    %3532 = vmatprep.subr.mxu0 0.0
    %3533 = vmatpush1.msra.mxu0 0.0
    %3534 = vmatprep.subr.mxu0 0.0
    %3535 = vmatpush1.msra.mxu0 0.0
    %3536 = vmatprep.subr.mxu0 0.0
    %3537 = vmatpush1.msra.mxu0 0.0
    %3538 = vmatprep.subr.mxu0 0.0
    %3539 = vmatpush1.msra.mxu0 0.0
    %3540 = vmatprep.subr.mxu0 0.0
    %3541 = vmatpush1.msra.mxu0 0.0
    %3542 = vmatprep.subr.mxu0 0.0
    %3543 = vmatpush1.msra.mxu0 0.0
    %3544 = vmatprep.subr.mxu0 0.0
    %3545 = vmatpush1.msra.mxu0 0.0
    %3546 = vmatprep.subr.mxu0 0.0
    %3547 = vmatpush1.msra.mxu0 0.0
    %3548 = vmatprep.subr.mxu0 0.0
    %3549 = vmatpush1.msra.mxu0 0.0
    %3550 = vmatprep.subr.mxu0 0.0
    %3551 = vmatpush1.msra.mxu0 0.0
    %3552 = vmatprep.subr.mxu0 0.0
    %3553 = vmatpush1.msra.mxu0 0.0
    %3554 = vmatprep.subr.mxu0 0.0
    %3555 = vmatpush1.msra.mxu0 0.0
    %3556 = vmatprep.subr.mxu0 0.0
    %3557 = vmatpush1.msra.mxu0 0.0
    %3558 = vmatprep.subr.mxu0 0.0
    %3559 = vmatpush1.msra.mxu0 0.0
    %3560 = vmatprep.subr.mxu0 0.0
    %3561 = vmatpush1.msra.mxu0 0.0
    %3562 = vmatprep.subr.mxu0 0.0
    %3563 = vmatpush1.msra.mxu0 0.0
    %3564 = vmatprep.subr.mxu0 0.0
    %3565 = vmatpush1.msra.mxu0 0.0
    %3566 = vmatprep.subr.mxu0 0.0
    %3567 = vmatpush1.msra.mxu0 0.0
    %3568 = vmatprep.subr.mxu0 0.0
    %3569 = vmatpush1.msra.mxu0 0.0
    %3570 = vmatprep.subr.mxu0 0.0
    %3571 = vmatpush1.msra.mxu0 0.0
    %3572 = vmatprep.subr.mxu0 0.0
    %3573 = vmatpush1.msra.mxu0 0.0
    %3574 = vmatprep.subr.mxu0 0.0
    %3575 = vmatpush1.msra.mxu0 0.0
    %3576 = vmatprep.subr.mxu0 0.0
    %3577 = vmatpush1.msra.mxu0 0.0
    %3578 = vmatprep.subr.mxu0 0.0
    %3579 = vmatpush1.msra.mxu0 0.0
    %3580 = vmatprep.mubr.f32.mxu0 0.0
    %v3581 = vand.u32 %v3139, 4294901760
    %3582 = vmatmul.mubr.f32.gmra.mrb[0].mxu0 %v3581
    %v3583 = vpop.f32.mrb[0].mxu0
    %v3584 = vadd.f32 %v3512, %v3583
    %v3585 = vpop.f32.mrb[0].mxu0
    %3586 = vdwg.mxu0
    %v3588 = vsel %vm3115, %v3137, 0
    %3590 = vmatprep.subr.mxu0 0.0
    %v3591 = vand.u32 %v2220, 4294901760
    %3592 = vmatpush1.msra.mxu0 %v3591
    %3593 = vmatprep.subr.mxu0 0.0
    %3594 = vmatpush1.msra.mxu0 0.0
    %3595 = vmatprep.subr.mxu0 0.0
    %3596 = vmatpush1.msra.mxu0 0.0
    %3597 = vmatprep.subr.mxu0 0.0
    %3598 = vmatpush1.msra.mxu0 0.0
    %3599 = vmatprep.subr.mxu0 0.0
    %3600 = vmatpush1.msra.mxu0 0.0
    %3601 = vmatprep.subr.mxu0 0.0
    %3602 = vmatpush1.msra.mxu0 0.0
    %3603 = vmatprep.subr.mxu0 0.0
    %3604 = vmatpush1.msra.mxu0 0.0
    %3605 = vmatprep.subr.mxu0 0.0
    %3606 = vmatpush1.msra.mxu0 0.0
    %3607 = vmatprep.subr.mxu0 0.0
    %3608 = vmatpush1.msra.mxu0 0.0
    %3609 = vmatprep.subr.mxu0 0.0
    %3610 = vmatpush1.msra.mxu0 0.0
    %3611 = vmatprep.subr.mxu0 0.0
    %3612 = vmatpush1.msra.mxu0 0.0
    %3613 = vmatprep.subr.mxu0 0.0
    %3614 = vmatpush1.msra.mxu0 0.0
    %3615 = vmatprep.subr.mxu0 0.0
    %3616 = vmatpush1.msra.mxu0 0.0
    %3617 = vmatprep.subr.mxu0 0.0
    %3618 = vmatpush1.msra.mxu0 0.0
    %3619 = vmatprep.subr.mxu0 0.0
    %3620 = vmatpush1.msra.mxu0 0.0
    %3621 = vmatprep.subr.mxu0 0.0
    %3622 = vmatpush1.msra.mxu0 0.0
    %3623 = vmatprep.subr.mxu0 0.0
    %3624 = vmatpush1.msra.mxu0 0.0
    %3625 = vmatprep.subr.mxu0 0.0
    %3626 = vmatpush1.msra.mxu0 0.0
    %3627 = vmatprep.subr.mxu0 0.0
    %3628 = vmatpush1.msra.mxu0 0.0
    %3629 = vmatprep.subr.mxu0 0.0
    %3630 = vmatpush1.msra.mxu0 0.0
    %3631 = vmatprep.subr.mxu0 0.0
    %3632 = vmatpush1.msra.mxu0 0.0
    %3633 = vmatprep.subr.mxu0 0.0
    %3634 = vmatpush1.msra.mxu0 0.0
    %3635 = vmatprep.subr.mxu0 0.0
    %3636 = vmatpush1.msra.mxu0 0.0
    %3637 = vmatprep.subr.mxu0 0.0
    %3638 = vmatpush1.msra.mxu0 0.0
    %3639 = vmatprep.subr.mxu0 0.0
    %3640 = vmatpush1.msra.mxu0 0.0
    %3641 = vmatprep.subr.mxu0 0.0
    %3642 = vmatpush1.msra.mxu0 0.0
    %3643 = vmatprep.subr.mxu0 0.0
    %3644 = vmatpush1.msra.mxu0 0.0
    %3645 = vmatprep.subr.mxu0 0.0
    %3646 = vmatpush1.msra.mxu0 0.0
    %3647 = vmatprep.subr.mxu0 0.0
    %3648 = vmatpush1.msra.mxu0 0.0
    %3649 = vmatprep.subr.mxu0 0.0
    %3650 = vmatpush1.msra.mxu0 0.0
    %3651 = vmatprep.subr.mxu0 0.0
    %3652 = vmatpush1.msra.mxu0 0.0
    %3653 = vmatprep.subr.mxu0 0.0
    %3654 = vmatpush1.msra.mxu0 0.0
    %3655 = vmatprep.mubr.f32.mxu0 0.0
    %v3656 = vand.u32 %v3588, 4294901760
    %v3657 = vsub.f32 %v3588, %v3656
    %v3658 = vand.u32 %v3657, 4294901760
    %v3659 = vsub.f32 %v3657, %v3658
    %v3660 = vand.u32 %v3659, 4294901760
    %3661 = vmatmul.mubr.f32.gmra.mrb[0].mxu0 %v3660
    %v3662 = vpop.f32.mrb[0].mxu0
    %v3663 = vadd.f32 0.0, %v3662
    %v3664 = vpop.f32.mrb[0].mxu0
    %3665 = vdwg.mxu0
    %3666 = vmatprep.subr.mxu0 0.0
    %v3667 = vand.u32 %v2220, 4294901760
    %v3668 = vsub.f32 %v2220, %v3667
    %v3669 = vand.u32 %v3668, 4294901760
    %v3670 = vsub.f32 %v3668, %v3669
    %v3671 = vand.u32 %v3670, 4294901760
    %3672 = vmatpush1.msra.mxu0 %v3671
    %3673 = vmatprep.subr.mxu0 0.0
    %3674 = vmatpush1.msra.mxu0 0.0
    %3675 = vmatprep.subr.mxu0 0.0
    %3676 = vmatpush1.msra.mxu0 0.0
    %3677 = vmatprep.subr.mxu0 0.0
    %3678 = vmatpush1.msra.mxu0 0.0
    %3679 = vmatprep.subr.mxu0 0.0
    %3680 = vmatpush1.msra.mxu0 0.0
    %3681 = vmatprep.subr.mxu0 0.0
    %3682 = vmatpush1.msra.mxu0 0.0
    %3683 = vmatprep.subr.mxu0 0.0
    %3684 = vmatpush1.msra.mxu0 0.0
    %3685 = vmatprep.subr.mxu0 0.0
    %3686 = vmatpush1.msra.mxu0 0.0
    %3687 = vmatprep.subr.mxu0 0.0
    %3688 = vmatpush1.msra.mxu0 0.0
    %3689 = vmatprep.subr.mxu0 0.0
    %3690 = vmatpush1.msra.mxu0 0.0
    %3691 = vmatprep.subr.mxu0 0.0
    %3692 = vmatpush1.msra.mxu0 0.0
    %3693 = vmatprep.subr.mxu0 0.0
    %3694 = vmatpush1.msra.mxu0 0.0
    %3695 = vmatprep.subr.mxu0 0.0
    %3696 = vmatpush1.msra.mxu0 0.0
    %3697 = vmatprep.subr.mxu0 0.0
    %3698 = vmatpush1.msra.mxu0 0.0
    %3699 = vmatprep.subr.mxu0 0.0
    %3700 = vmatpush1.msra.mxu0 0.0
    %3701 = vmatprep.subr.mxu0 0.0
    %3702 = vmatpush1.msra.mxu0 0.0
    %3703 = vmatprep.subr.mxu0 0.0
    %3704 = vmatpush1.msra.mxu0 0.0
    %3705 = vmatprep.subr.mxu0 0.0
    %3706 = vmatpush1.msra.mxu0 0.0
    %3707 = vmatprep.subr.mxu0 0.0
    %3708 = vmatpush1.msra.mxu0 0.0
    %3709 = vmatprep.subr.mxu0 0.0
    %3710 = vmatpush1.msra.mxu0 0.0
    %3711 = vmatprep.subr.mxu0 0.0
    %3712 = vmatpush1.msra.mxu0 0.0
    %3713 = vmatprep.subr.mxu0 0.0
    %3714 = vmatpush1.msra.mxu0 0.0
    %3715 = vmatprep.subr.mxu0 0.0
    %3716 = vmatpush1.msra.mxu0 0.0
    %3717 = vmatprep.subr.mxu0 0.0
    %3718 = vmatpush1.msra.mxu0 0.0
    %3719 = vmatprep.subr.mxu0 0.0
    %3720 = vmatpush1.msra.mxu0 0.0
    %3721 = vmatprep.subr.mxu0 0.0
    %3722 = vmatpush1.msra.mxu0 0.0
    %3723 = vmatprep.subr.mxu0 0.0
    %3724 = vmatpush1.msra.mxu0 0.0
    %3725 = vmatprep.subr.mxu0 0.0
    %3726 = vmatpush1.msra.mxu0 0.0
    %3727 = vmatprep.subr.mxu0 0.0
    %3728 = vmatpush1.msra.mxu0 0.0
    %3729 = vmatprep.subr.mxu0 0.0
    %3730 = vmatpush1.msra.mxu0 0.0
    %3731 = vmatprep.subr.mxu0 0.0
    %3732 = vmatpush1.msra.mxu0 0.0
    %3733 = vmatprep.subr.mxu0 0.0
    %3734 = vmatpush1.msra.mxu0 0.0
    %3735 = vmatprep.mubr.f32.mxu0 0.0
    %v3736 = vand.u32 %v3588, 4294901760
    %3737 = vmatmul.mubr.f32.gmra.mrb[0].mxu0 %v3736
    %v3738 = vpop.f32.mrb[0].mxu0
    %v3739 = vadd.f32 %v3663, %v3738
    %v3740 = vpop.f32.mrb[0].mxu0
    %3741 = vdwg.mxu0
    %3742 = vmatprep.subr.mxu0 0.0
    %v3743 = vand.u32 %v2220, 4294901760
    %v3744 = vsub.f32 %v2220, %v3743
    %3745 = vmatpush1.msra.mxu0 %v3744
    %3746 = vmatprep.subr.mxu0 0.0
    %3747 = vmatpush1.msra.mxu0 0.0
    %3748 = vmatprep.subr.mxu0 0.0
    %3749 = vmatpush1.msra.mxu0 0.0
    %3750 = vmatprep.subr.mxu0 0.0
    %3751 = vmatpush1.msra.mxu0 0.0
    %3752 = vmatprep.subr.mxu0 0.0
    %3753 = vmatpush1.msra.mxu0 0.0
    %3754 = vmatprep.subr.mxu0 0.0
    %3755 = vmatpush1.msra.mxu0 0.0
    %3756 = vmatprep.subr.mxu0 0.0
    %3757 = vmatpush1.msra.mxu0 0.0
    %3758 = vmatprep.subr.mxu0 0.0
    %3759 = vmatpush1.msra.mxu0 0.0
    %3760 = vmatprep.subr.mxu0 0.0
    %3761 = vmatpush1.msra.mxu0 0.0
    %3762 = vmatprep.subr.mxu0 0.0
    %3763 = vmatpush1.msra.mxu0 0.0
    %3764 = vmatprep.subr.mxu0 0.0
    %3765 = vmatpush1.msra.mxu0 0.0
    %3766 = vmatprep.subr.mxu0 0.0
    %3767 = vmatpush1.msra.mxu0 0.0
    %3768 = vmatprep.subr.mxu0 0.0
    %3769 = vmatpush1.msra.mxu0 0.0
    %3770 = vmatprep.subr.mxu0 0.0
    %3771 = vmatpush1.msra.mxu0 0.0
    %3772 = vmatprep.subr.mxu0 0.0
    %3773 = vmatpush1.msra.mxu0 0.0
    %3774 = vmatprep.subr.mxu0 0.0
    %3775 = vmatpush1.msra.mxu0 0.0
    %3776 = vmatprep.subr.mxu0 0.0
    %3777 = vmatpush1.msra.mxu0 0.0
    %3778 = vmatprep.subr.mxu0 0.0
    %3779 = vmatpush1.msra.mxu0 0.0
    %3780 = vmatprep.subr.mxu0 0.0
    %3781 = vmatpush1.msra.mxu0 0.0
    %3782 = vmatprep.subr.mxu0 0.0
    %3783 = vmatpush1.msra.mxu0 0.0
    %3784 = vmatprep.subr.mxu0 0.0
    %3785 = vmatpush1.msra.mxu0 0.0
    %3786 = vmatprep.subr.mxu0 0.0
    %3787 = vmatpush1.msra.mxu0 0.0
    %3788 = vmatprep.subr.mxu0 0.0
    %3789 = vmatpush1.msra.mxu0 0.0
    %3790 = vmatprep.subr.mxu0 0.0
    %3791 = vmatpush1.msra.mxu0 0.0
    %3792 = vmatprep.subr.mxu0 0.0
    %3793 = vmatpush1.msra.mxu0 0.0
    %3794 = vmatprep.subr.mxu0 0.0
    %3795 = vmatpush1.msra.mxu0 0.0
    %3796 = vmatprep.subr.mxu0 0.0
    %3797 = vmatpush1.msra.mxu0 0.0
    %3798 = vmatprep.subr.mxu0 0.0
    %3799 = vmatpush1.msra.mxu0 0.0
    %3800 = vmatprep.subr.mxu0 0.0
    %3801 = vmatpush1.msra.mxu0 0.0
    %3802 = vmatprep.subr.mxu0 0.0
    %3803 = vmatpush1.msra.mxu0 0.0
    %3804 = vmatprep.subr.mxu0 0.0
    %3805 = vmatpush1.msra.mxu0 0.0
    %3806 = vmatprep.subr.mxu0 0.0
    %3807 = vmatpush1.msra.mxu0 0.0
    %3808 = vmatprep.mubr.f32.mxu0 0.0
    %v3809 = vand.u32 %v3588, 4294901760
    %v3810 = vsub.f32 %v3588, %v3809
    %3811 = vmatmul.mubr.f32.gmra.mrb[0].mxu0 %v3810
    %v3812 = vpop.f32.mrb[0].mxu0
    %v3813 = vadd.f32 %v3739, %v3812
    %v3814 = vpop.f32.mrb[0].mxu0
    %3815 = vdwg.mxu0
    %3816 = vmatprep.subr.mxu0 0.0
    %v3817 = vand.u32 %v2220, 4294901760
    %3818 = vmatpush1.msra.mxu0 %v3817
    %3819 = vmatprep.subr.mxu0 0.0
    %3820 = vmatpush1.msra.mxu0 0.0
    %3821 = vmatprep.subr.mxu0 0.0
    %3822 = vmatpush1.msra.mxu0 0.0
    %3823 = vmatprep.subr.mxu0 0.0
    %3824 = vmatpush1.msra.mxu0 0.0
    %3825 = vmatprep.subr.mxu0 0.0
    %3826 = vmatpush1.msra.mxu0 0.0
    %3827 = vmatprep.subr.mxu0 0.0
    %3828 = vmatpush1.msra.mxu0 0.0
    %3829 = vmatprep.subr.mxu0 0.0
    %3830 = vmatpush1.msra.mxu0 0.0
    %3831 = vmatprep.subr.mxu0 0.0
    %3832 = vmatpush1.msra.mxu0 0.0
    %3833 = vmatprep.subr.mxu0 0.0
    %3834 = vmatpush1.msra.mxu0 0.0
    %3835 = vmatprep.subr.mxu0 0.0
    %3836 = vmatpush1.msra.mxu0 0.0
    %3837 = vmatprep.subr.mxu0 0.0
    %3838 = vmatpush1.msra.mxu0 0.0
    %3839 = vmatprep.subr.mxu0 0.0
    %3840 = vmatpush1.msra.mxu0 0.0
    %3841 = vmatprep.subr.mxu0 0.0
    %3842 = vmatpush1.msra.mxu0 0.0
    %3843 = vmatprep.subr.mxu0 0.0
    %3844 = vmatpush1.msra.mxu0 0.0
    %3845 = vmatprep.subr.mxu0 0.0
    %3846 = vmatpush1.msra.mxu0 0.0
    %3847 = vmatprep.subr.mxu0 0.0
    %3848 = vmatpush1.msra.mxu0 0.0
    %3849 = vmatprep.subr.mxu0 0.0
    %3850 = vmatpush1.msra.mxu0 0.0
    %3851 = vmatprep.subr.mxu0 0.0
    %3852 = vmatpush1.msra.mxu0 0.0
    %3853 = vmatprep.subr.mxu0 0.0
    %3854 = vmatpush1.msra.mxu0 0.0
    %3855 = vmatprep.subr.mxu0 0.0
    %3856 = vmatpush1.msra.mxu0 0.0
    %3857 = vmatprep.subr.mxu0 0.0
    %3858 = vmatpush1.msra.mxu0 0.0
    %3859 = vmatprep.subr.mxu0 0.0
    %3860 = vmatpush1.msra.mxu0 0.0
    %3861 = vmatprep.subr.mxu0 0.0
    %3862 = vmatpush1.msra.mxu0 0.0
    %3863 = vmatprep.subr.mxu0 0.0
    %3864 = vmatpush1.msra.mxu0 0.0
    %3865 = vmatprep.subr.mxu0 0.0
    %3866 = vmatpush1.msra.mxu0 0.0
    %3867 = vmatprep.subr.mxu0 0.0
    %3868 = vmatpush1.msra.mxu0 0.0
    %3869 = vmatprep.subr.mxu0 0.0
    %3870 = vmatpush1.msra.mxu0 0.0
    %3871 = vmatprep.subr.mxu0 0.0
    %3872 = vmatpush1.msra.mxu0 0.0
    %3873 = vmatprep.subr.mxu0 0.0
    %3874 = vmatpush1.msra.mxu0 0.0
    %3875 = vmatprep.subr.mxu0 0.0
    %3876 = vmatpush1.msra.mxu0 0.0
    %3877 = vmatprep.subr.mxu0 0.0
    %3878 = vmatpush1.msra.mxu0 0.0
    %3879 = vmatprep.subr.mxu0 0.0
    %3880 = vmatpush1.msra.mxu0 0.0
    %3881 = vmatprep.mubr.f32.mxu0 0.0
    %v3882 = vand.u32 %v3588, 4294901760
    %v3883 = vsub.f32 %v3588, %v3882
    %v3884 = vand.u32 %v3883, 4294901760
    %3885 = vmatmul.mubr.f32.gmra.mrb[0].mxu0 %v3884
    %v3886 = vpop.f32.mrb[0].mxu0
    %v3887 = vadd.f32 %v3813, %v3886
    %v3888 = vpop.f32.mrb[0].mxu0
    %3889 = vdwg.mxu0
    %3890 = vmatprep.subr.mxu0 0.0
    %v3891 = vand.u32 %v2220, 4294901760
    %v3892 = vsub.f32 %v2220, %v3891
    %v3893 = vand.u32 %v3892, 4294901760
    %3894 = vmatpush1.msra.mxu0 %v3893
    %3895 = vmatprep.subr.mxu0 0.0
    %3896 = vmatpush1.msra.mxu0 0.0
    %3897 = vmatprep.subr.mxu0 0.0
    %3898 = vmatpush1.msra.mxu0 0.0
    %3899 = vmatprep.subr.mxu0 0.0
    %3900 = vmatpush1.msra.mxu0 0.0
    %3901 = vmatprep.subr.mxu0 0.0
    %3902 = vmatpush1.msra.mxu0 0.0
    %3903 = vmatprep.subr.mxu0 0.0
    %3904 = vmatpush1.msra.mxu0 0.0
    %3905 = vmatprep.subr.mxu0 0.0
    %3906 = vmatpush1.msra.mxu0 0.0
    %3907 = vmatprep.subr.mxu0 0.0
    %3908 = vmatpush1.msra.mxu0 0.0
    %3909 = vmatprep.subr.mxu0 0.0
    %3910 = vmatpush1.msra.mxu0 0.0
    %3911 = vmatprep.subr.mxu0 0.0
    %3912 = vmatpush1.msra.mxu0 0.0
    %3913 = vmatprep.subr.mxu0 0.0
    %3914 = vmatpush1.msra.mxu0 0.0
    %3915 = vmatprep.subr.mxu0 0.0
    %3916 = vmatpush1.msra.mxu0 0.0
    %3917 = vmatprep.subr.mxu0 0.0
    %3918 = vmatpush1.msra.mxu0 0.0
    %3919 = vmatprep.subr.mxu0 0.0
    %3920 = vmatpush1.msra.mxu0 0.0
    %3921 = vmatprep.subr.mxu0 0.0
    %3922 = vmatpush1.msra.mxu0 0.0
    %3923 = vmatprep.subr.mxu0 0.0
    %3924 = vmatpush1.msra.mxu0 0.0
    %3925 = vmatprep.subr.mxu0 0.0
    %3926 = vmatpush1.msra.mxu0 0.0
    %3927 = vmatprep.subr.mxu0 0.0
    %3928 = vmatpush1.msra.mxu0 0.0
    %3929 = vmatprep.subr.mxu0 0.0
    %3930 = vmatpush1.msra.mxu0 0.0
    %3931 = vmatprep.subr.mxu0 0.0
    %3932 = vmatpush1.msra.mxu0 0.0
    %3933 = vmatprep.subr.mxu0 0.0
    %3934 = vmatpush1.msra.mxu0 0.0
    %3935 = vmatprep.subr.mxu0 0.0
    %3936 = vmatpush1.msra.mxu0 0.0
    %3937 = vmatprep.subr.mxu0 0.0
    %3938 = vmatpush1.msra.mxu0 0.0
    %3939 = vmatprep.subr.mxu0 0.0
    %3940 = vmatpush1.msra.mxu0 0.0
    %3941 = vmatprep.subr.mxu0 0.0
    %3942 = vmatpush1.msra.mxu0 0.0
    %3943 = vmatprep.subr.mxu0 0.0
    %3944 = vmatpush1.msra.mxu0 0.0
    %3945 = vmatprep.subr.mxu0 0.0
    %3946 = vmatpush1.msra.mxu0 0.0
    %3947 = vmatprep.subr.mxu0 0.0
    %3948 = vmatpush1.msra.mxu0 0.0
    %3949 = vmatprep.subr.mxu0 0.0
    %3950 = vmatpush1.msra.mxu0 0.0
    %3951 = vmatprep.subr.mxu0 0.0
    %3952 = vmatpush1.msra.mxu0 0.0
    %3953 = vmatprep.subr.mxu0 0.0
    %3954 = vmatpush1.msra.mxu0 0.0
    %3955 = vmatprep.subr.mxu0 0.0
    %3956 = vmatpush1.msra.mxu0 0.0
    %3957 = vmatprep.mubr.f32.mxu0 0.0
    %v3958 = vand.u32 %v3588, 4294901760
    %3959 = vmatmul.mubr.f32.gmra.mrb[0].mxu0 %v3958
    %v3960 = vpop.f32.mrb[0].mxu0
    %v3961 = vadd.f32 %v3887, %v3960
    %v3962 = vpop.f32.mrb[0].mxu0
    %3963 = vdwg.mxu0
    %3964 = vmatprep.subr.mxu0 0.0
    %v3965 = vand.u32 %v2220, 4294901760
    %3966 = vmatpush1.msra.mxu0 %v3965
    %3967 = vmatprep.subr.mxu0 0.0
    %3968 = vmatpush1.msra.mxu0 0.0
    %3969 = vmatprep.subr.mxu0 0.0
    %3970 = vmatpush1.msra.mxu0 0.0
    %3971 = vmatprep.subr.mxu0 0.0
    %3972 = vmatpush1.msra.mxu0 0.0
    %3973 = vmatprep.subr.mxu0 0.0
    %3974 = vmatpush1.msra.mxu0 0.0
    %3975 = vmatprep.subr.mxu0 0.0
    %3976 = vmatpush1.msra.mxu0 0.0
    %3977 = vmatprep.subr.mxu0 0.0
    %3978 = vmatpush1.msra.mxu0 0.0
    %3979 = vmatprep.subr.mxu0 0.0
    %3980 = vmatpush1.msra.mxu0 0.0
    %3981 = vmatprep.subr.mxu0 0.0
    %3982 = vmatpush1.msra.mxu0 0.0
    %3983 = vmatprep.subr.mxu0 0.0
    %3984 = vmatpush1.msra.mxu0 0.0
    %3985 = vmatprep.subr.mxu0 0.0
    %3986 = vmatpush1.msra.mxu0 0.0
    %3987 = vmatprep.subr.mxu0 0.0
    %3988 = vmatpush1.msra.mxu0 0.0
    %3989 = vmatprep.subr.mxu0 0.0
    %3990 = vmatpush1.msra.mxu0 0.0
    %3991 = vmatprep.subr.mxu0 0.0
    %3992 = vmatpush1.msra.mxu0 0.0
    %3993 = vmatprep.subr.mxu0 0.0
    %3994 = vmatpush1.msra.mxu0 0.0
    %3995 = vmatprep.subr.mxu0 0.0
    %3996 = vmatpush1.msra.mxu0 0.0
    %3997 = vmatprep.subr.mxu0 0.0
    %3998 = vmatpush1.msra.mxu0 0.0
    %3999 = vmatprep.subr.mxu0 0.0
    %4000 = vmatpush1.msra.mxu0 0.0
    %4001 = vmatprep.subr.mxu0 0.0
    %4002 = vmatpush1.msra.mxu0 0.0
    %4003 = vmatprep.subr.mxu0 0.0
    %4004 = vmatpush1.msra.mxu0 0.0
    %4005 = vmatprep.subr.mxu0 0.0
    %4006 = vmatpush1.msra.mxu0 0.0
    %4007 = vmatprep.subr.mxu0 0.0
    %4008 = vmatpush1.msra.mxu0 0.0
    %4009 = vmatprep.subr.mxu0 0.0
    %4010 = vmatpush1.msra.mxu0 0.0
    %4011 = vmatprep.subr.mxu0 0.0
    %4012 = vmatpush1.msra.mxu0 0.0
    %4013 = vmatprep.subr.mxu0 0.0
    %4014 = vmatpush1.msra.mxu0 0.0
    %4015 = vmatprep.subr.mxu0 0.0
    %4016 = vmatpush1.msra.mxu0 0.0
    %4017 = vmatprep.subr.mxu0 0.0
    %4018 = vmatpush1.msra.mxu0 0.0
    %4019 = vmatprep.subr.mxu0 0.0
    %4020 = vmatpush1.msra.mxu0 0.0
    %4021 = vmatprep.subr.mxu0 0.0
    %4022 = vmatpush1.msra.mxu0 0.0
    %4023 = vmatprep.subr.mxu0 0.0
    %4024 = vmatpush1.msra.mxu0 0.0
    %4025 = vmatprep.subr.mxu0 0.0
    %4026 = vmatpush1.msra.mxu0 0.0
    %4027 = vmatprep.subr.mxu0 0.0
    %4028 = vmatpush1.msra.mxu0 0.0
    %4029 = vmatprep.mubr.f32.mxu0 0.0
    %v4030 = vand.u32 %v3588, 4294901760
    %4031 = vmatmul.mubr.f32.gmra.mrb[0].mxu0 %v4030
    %v4032 = vpop.f32.mrb[0].mxu0
    %v4033 = vadd.f32 %v3961, %v4032
    %v4034 = vpop.f32.mrb[0].mxu0
    %4035 = vdwg.mxu0
    %v4036 = vadd.f32 %v98, %v3584
    %v4037 = vadd.f32 %v99, %v4033
    %4038 = vst [vmem:[#allocation11] sm:$0xff] %v4036
    %4039 = vst [vmem:[#allocation11 + $0x8] sm:$0xff] %v4037
    // Predicated region
    $region54: #{tpu_custom_call.1} parent=1 // pred_check
      _
    $region55: #{tpu_custom_call.1} parent=1 // pred_check_branch
      %4041 = sbr.rel (0) target = $region57
    $region56: #{tpu_custom_call.1} parent=1 // pred_region
      %s4043 = ssub.s32 256, 256
      %4044 = vsyncadd [#allocation4], %s4043
      %s4045 = sshll.u32 [#allocation11], 4
      %s4046 = int_to_ptr.vmem [resolvable:$true] %s4045
      %4051 = dma.vmem_to_hbm [thread:$0]  %s4046, 256, %s8, [#allocation4], 128, 128, 8
    $region57: #{tpu_custom_call.1} parent=1 // pred_fallthru
      _
    // Predicated region
    $region58: #{tpu_custom_call.1} parent=1 // pred_check
      _
    $region59: #{tpu_custom_call.1} parent=1 // pred_check_branch
      %4053 = sbr.rel (0) target = $region61
    $region60: #{tpu_custom_call.1} parent=1 // pred_region
      %4054 = dma.done [#allocation4], 256
    $region61: #{tpu_custom_call.1} parent=1 // pred_fallthru
      _
    %4055 = vsyncpa [#allocation3], 1
    %4056 = vsyncpa [#allocation6], 1
    %4057 = vsyncpa [#allocation9], 1
    %4058 = vsyncpa [#allocation4], 1

</llo_original>
